<compile_context>
chip_gen: v7x
topology: tpu7x:2x2x1
jax: 0.10.0
libtpu: 0.0.40
codegen_flags: <defaults>
</compile_context>

<pallas_src>
import math
from functools import partial

import jax
import jax.numpy as jnp
from jax.experimental import pallas as pl
from jax.experimental.pallas import tpu as pltpu


# --------------------------------------------------------------------------
# helpers
# --------------------------------------------------------------------------

def _row_tile(m):
    """Row tile for (rows, C) kernels: >1 grid step lets "parallel" shard the
    work over v7x's two TensorCores; essentially free on v5e/v6e."""
    for t in (256, 128, 64):
        if m > t and m % t == 0:
            return t
    return m


def _layernorm(x, g, b, eps):
    mu = jnp.mean(x, axis=-1, keepdims=True)
    xc = x - mu
    var = jnp.mean(xc * xc, axis=-1, keepdims=True)
    return xc * jax.lax.rsqrt(var + eps) * g + b


_PAR1 = pltpu.CompilerParams(dimension_semantics=("parallel",))


# --------------------------------------------------------------------------
# fused elementwise / matmul kernels (row-tiled, parallel grid)
# --------------------------------------------------------------------------

def _ln_matmul_kernel(x_ref, g_ref, b_ref, w_ref, o_ref, *, eps):
    ln = _layernorm(x_ref[...], g_ref[...], b_ref[...], eps)
    o_ref[...] = jnp.dot(ln.astype(w_ref.dtype), w_ref[...],
                         preferred_element_type=jnp.float32)


def ln_matmul(x2d, g, b, w, eps):
    """LayerNorm followed by a dense projection (fused)."""
    M, C = x2d.shape
    Nw = w.shape[1]
    bm = _row_tile(M)
    return pl.pallas_call(
        partial(_ln_matmul_kernel, eps=eps),
        out_shape=jax.ShapeDtypeStruct((M, Nw), jnp.float32),
        grid=(M // bm,),
        in_specs=[pl.BlockSpec((bm, C), lambda i: (i, 0)),
                  pl.BlockSpec((1, C), lambda i: (0, 0)),
                  pl.BlockSpec((1, C), lambda i: (0, 0)),
                  pl.BlockSpec((C, Nw), lambda i: (0, 0))],
        out_specs=pl.BlockSpec((bm, Nw), lambda i: (i, 0)),
        compiler_params=_PAR1,
    )(x2d, g, b, w)


def _matmul_kernel(x_ref, w_ref, o_ref):
    o_ref[...] = jnp.dot(x_ref[...].astype(w_ref.dtype), w_ref[...],
                         preferred_element_type=jnp.float32)


def matmul(x, w):
    M, Kd = x.shape
    Nw = w.shape[1]
    bm = _row_tile(M)
    return pl.pallas_call(
        _matmul_kernel,
        out_shape=jax.ShapeDtypeStruct((M, Nw), jnp.float32),
        grid=(M // bm,),
        in_specs=[pl.BlockSpec((bm, Kd), lambda i: (i, 0)),
                  pl.BlockSpec((Kd, Nw), lambda i: (0, 0))],
        out_specs=pl.BlockSpec((bm, Nw), lambda i: (i, 0)),
        compiler_params=_PAR1,
    )(x, w)


def _gate_out_kernel(y_ref, z_ref, g_ref, b_ref, w_ref, o_ref, *, eps):
    ln = _layernorm(y_ref[...], g_ref[...], b_ref[...], eps)
    z = z_ref[...]
    gated = ln * (z * jax.nn.sigmoid(z))            # LN(y) * SiLU(z)
    o_ref[...] = jnp.dot(gated.astype(w_ref.dtype), w_ref[...],
                         preferred_element_type=jnp.float32)


def gate_out(y2d, z2d, g, b, w, eps):
    """SS2D tail: out_norm(y) * SiLU(z) followed by out_proj (fused)."""
    M, D = y2d.shape
    C = w.shape[1]
    bm = _row_tile(M)
    return pl.pallas_call(
        partial(_gate_out_kernel, eps=eps),
        out_shape=jax.ShapeDtypeStruct((M, C), jnp.float32),
        grid=(M // bm,),
        in_specs=[pl.BlockSpec((bm, D), lambda i: (i, 0)),
                  pl.BlockSpec((bm, D), lambda i: (i, 0)),
                  pl.BlockSpec((1, D), lambda i: (0, 0)),
                  pl.BlockSpec((1, D), lambda i: (0, 0)),
                  pl.BlockSpec((D, C), lambda i: (0, 0))],
        out_specs=pl.BlockSpec((bm, C), lambda i: (i, 0)),
        compiler_params=_PAR1,
    )(y2d, z2d, g, b, w)


def _res_ln_matmul_kernel(x_ref, s_ref, a_ref, g_ref, b_ref, w_ref,
                          xres_ref, h_ref, *, eps):
    xr = x_ref[...] * s_ref[...] + a_ref[...]       # scaled residual (drop_path=0)
    xres_ref[...] = xr
    ln = _layernorm(xr, g_ref[...], b_ref[...], eps)
    h_ref[...] = jnp.dot(ln.astype(w_ref.dtype), w_ref[...],
                         preferred_element_type=jnp.float32)


def res_ln_matmul(x2d, scale, attn2d, g, b, w, eps):
    """x*skip + attn, then LN2 and the MGCB 1x1 project_in (fused).
    Returns (residual, project_in output)."""
    M, C = x2d.shape
    Nw = w.shape[1]
    bm = _row_tile(M)
    return pl.pallas_call(
        partial(_res_ln_matmul_kernel, eps=eps),
        out_shape=(jax.ShapeDtypeStruct((M, C), jnp.float32),
                   jax.ShapeDtypeStruct((M, Nw), jnp.float32)),
        grid=(M // bm,),
        in_specs=[pl.BlockSpec((bm, C), lambda i: (i, 0)),
                  pl.BlockSpec((1, C), lambda i: (0, 0)),
                  pl.BlockSpec((bm, C), lambda i: (i, 0)),
                  pl.BlockSpec((1, C), lambda i: (0, 0)),
                  pl.BlockSpec((1, C), lambda i: (0, 0)),
                  pl.BlockSpec((C, Nw), lambda i: (0, 0))],
        out_specs=[pl.BlockSpec((bm, C), lambda i: (i, 0)),
                   pl.BlockSpec((bm, Nw), lambda i: (i, 0))],
        compiler_params=_PAR1,
    )(x2d, scale, attn2d, g, b, w)


# --------------------------------------------------------------------------
# depthwise convolution (NHWC, 'same', cross-correlation like nn.Conv2d)
# --------------------------------------------------------------------------

def _dwconv_kernel(xp_ref, w_ref, b_ref, o_ref, *, H, W, k, act):
    C = o_ref.shape[-1]
    acc = jnp.zeros((H, W, C), jnp.float32)
    for i in range(k):                               # static taps (VPU FMAs)
        for j in range(k):
            tap = w_ref[i * k + j:i * k + j + 1, :]  # (1, C)
            acc = acc + xp_ref[0, i:i + H, j:j + W, :] * tap
    acc = acc + b_ref[...]
    if act == "silu":
        acc = acc * jax.nn.sigmoid(acc)
    o_ref[0] = acc


def dwconv(x, w, b, k, act=None):
    B, H, W, C = x.shape
    p = (k - 1) // 2
    xp = jnp.pad(x, ((0, 0), (p, p), (p, p), (0, 0)))
    Hp, Wp = H + 2 * p, W + 2 * p
    return pl.pallas_call(
        partial(_dwconv_kernel, H=H, W=W, k=k, act=act),
        out_shape=jax.ShapeDtypeStruct((B, H, W, C), jnp.float32),
        grid=(B,),
        in_specs=[pl.BlockSpec((1, Hp, Wp, C), lambda bb: (bb, 0, 0, 0)),
                  pl.BlockSpec((k * k, C), lambda bb: (0, 0)),
                  pl.BlockSpec((1, C), lambda bb: (0, 0))],
        out_specs=pl.BlockSpec((1, H, W, C), lambda bb: (bb, 0, 0, 0)),
        compiler_params=_PAR1,
    )(xp, w, b)


# --------------------------------------------------------------------------
# selective scan — 4 directions folded onto the lane axis (K*Din lanes)
# --------------------------------------------------------------------------

def _selective_scan_kernel(u_ref, dt_ref, A_ref, bc_ref, D_ref, dtb_ref,
                           y_ref, dt_s, dtu_s, dA_s, dh_s, *, L, K, Din, N):
    # u_ref/dt_ref/y_ref: (1, L, K*Din)   A_ref: (N, K*Din)
    # bc_ref: (1, L, N, 2K)  ([..., :K] = B, [..., K:] = C per direction)
    # D_ref/dtb_ref: (1, K*Din)
    # dt_s/dtu_s: (L, K*Din) scratch;  dA_s/dh_s: (L, N, K*Din) scratch
    KD = K * Din

    # 1) vectorised prologue: softplus(dt + bias) and dt*u in one EUP/VPU pass.
    u = u_ref[0]
    dt_raw = dt_ref[0] + dtb_ref[...]
    dt = jnp.where(dt_raw > 20.0, dt_raw, jnp.log1p(jnp.exp(dt_raw)))
    dt_s[...] = dt
    dtu_s[...] = dt * u
    A = A_ref[...]

    def _bcast_dirs(row_nk):
        # (N, K) -> (N, K*Din): per-direction value broadcast over that
        # direction's Din lanes (minor-dim broadcasts + lane concat only).
        return jnp.concatenate(
            [jnp.broadcast_to(row_nk[:, k:k + 1], (N, Din)) for k in range(K)],
            axis=-1)

    # 2) non-recurrent fill (pipelines freely): dA_t = exp(A*dt_t),
    #    dBu_t = B_t * dt_t * u_t, written as dense (N, K*Din) slabs.
    def _fill(l, carry):
        dt_row = dt_s[pl.ds(l, 1), :]                 # (1, KD)
        dtu_row = dtu_s[pl.ds(l, 1), :]               # (1, KD)
        dA_s[l] = jnp.exp(A * dt_row)                 # (N, KD)
        bcl = bc_ref[0, pl.ds(l, 1), :, :][0]         # (N, 2K)
        dh_s[l] = _bcast_dirs(bcl[:, :K]) * dtu_row   # (N, KD)
        return carry
    jax.lax.fori_loop(0, L, _fill, 0)

    # 3) serial scan: a single (N, K*Din) FMA per step on the critical chain;
    #    h_t overwrites dh_s[t] (dense store) for the epilogue.
    def _step(t, h):
        h = dA_s[t] * h + dh_s[t]
        dh_s[t] = h
        return h
    jax.lax.fori_loop(0, L, _step, jnp.zeros((N, KD), jnp.float32))

    # 4) epilogue (off the serial chain): y_t = C_t . h_t + D*u_t as a VPU/XLU
    #    sublane reduction; stores are lane-dense (K*Din = 256 lanes).
    Dv = D_ref[...]
    def _emit(l, carry):
        bcl = bc_ref[0, pl.ds(l, 1), :, :][0]         # (N, 2K)
        prod = dh_s[l] * _bcast_dirs(bcl[:, K:])      # (N, KD)
        y_row = jnp.sum(prod, axis=0, keepdims=True)  # (1, KD)
        u_row = u_ref[0, pl.ds(l, 1), :]
        y_ref[0, pl.ds(l, 1), :] = y_row + Dv * u_row
        return carry
    jax.lax.fori_loop(0, L, _emit, 0)


def selective_scan(u_fold, delta_fold, A_fold, bc, D_fold, dtb_fold):
    """u_fold/delta_fold: (B, L, K*Din); A_fold: (N, K*Din);
    bc: (B, L, N, 2K); D_fold/dtb_fold: (1, K*Din)."""
    B, L, KD = u_fold.shape
    N = A_fold.shape[0]
    K2 = bc.shape[-1]
    K = K2 // 2
    Din = KD // K
    return pl.pallas_call(
        partial(_selective_scan_kernel, L=L, K=K, Din=Din, N=N),
        out_shape=jax.ShapeDtypeStruct((B, L, KD), jnp.float32),
        grid=(B,),
        in_specs=[pl.BlockSpec((1, L, KD), lambda b: (b, 0, 0)),
                  pl.BlockSpec((1, L, KD), lambda b: (b, 0, 0)),
                  pl.BlockSpec((N, KD), lambda b: (0, 0)),
                  pl.BlockSpec((1, L, N, K2), lambda b: (b, 0, 0, 0)),
                  pl.BlockSpec((1, KD), lambda b: (0, 0)),
                  pl.BlockSpec((1, KD), lambda b: (0, 0))],
        out_specs=pl.BlockSpec((1, L, KD), lambda b: (b, 0, 0)),
        scratch_shapes=[pltpu.VMEM((L, KD), jnp.float32),
                        pltpu.VMEM((L, KD), jnp.float32),
                        pltpu.VMEM((L, N, KD), jnp.float32),
                        pltpu.VMEM((L, N, KD), jnp.float32)],
        compiler_params=_PAR1,
    )(u_fold, delta_fold, A_fold, bc, D_fold, dtb_fold)


# --------------------------------------------------------------------------
# MGCB tail: project_out (1x1) + channel attention + scaled residual (fused)
# --------------------------------------------------------------------------

def _projout_ca_res_kernel(g_ref, w_ref, w1_ref, b1_ref, w2_ref, b2_ref,
                           x_ref, s_ref, o_ref):
    t = jnp.dot(g_ref[0].astype(w_ref.dtype), w_ref[...],
                preferred_element_type=jnp.float32)           # (HW, C)
    pooled = jnp.mean(t, axis=0, keepdims=True)               # (1, C)
    # squeeze/expand 1x1 convs kept on the VPU/XLU (Cs = C//30 is tiny)
    a1 = jnp.maximum(
        jnp.sum(pooled * w1_ref[...], axis=-1, keepdims=True) + b1_ref[...],
        0.0)                                                  # (Cs, 1)
    a2 = jax.nn.sigmoid(
        jnp.sum(a1 * w2_ref[...], axis=0, keepdims=True) + b2_ref[...])  # (1, C)
    o_ref[0] = x_ref[0] * s_ref[...] + t * a2                 # x*skip2 + CA(out)


def projout_ca_res(gated, w, w1, b1, w2, b2, x_res, skip2):
    B, HW, hf = gated.shape
    C = w.shape[1]
    Cs = w1.shape[0]
    return pl.pallas_call(
        _projout_ca_res_kernel,
        out_shape=jax.ShapeDtypeStruct((B, HW, C), jnp.float32),
        grid=(B,),
        in_specs=[pl.BlockSpec((1, HW, hf), lambda b: (b, 0, 0)),
                  pl.BlockSpec((hf, C), lambda b: (0, 0)),
                  pl.BlockSpec((Cs, C), lambda b: (0, 0)),
                  pl.BlockSpec((Cs, 1), lambda b: (0, 0)),
                  pl.BlockSpec((Cs, C), lambda b: (0, 0)),
                  pl.BlockSpec((1, C), lambda b: (0, 0)),
                  pl.BlockSpec((1, HW, C), lambda b: (b, 0, 0)),
                  pl.BlockSpec((1, C), lambda b: (0, 0))],
        out_specs=pl.BlockSpec((1, HW, C), lambda b: (b, 0, 0)),
        compiler_params=_PAR1,
    )(gated, w, w1, b1, w2, b2, x_res, skip2)


# --------------------------------------------------------------------------
# SSB forward (JAX glue around the Pallas kernels)
# --------------------------------------------------------------------------

def ssb_forward(inp, x_size, p):
    """inp: (B, L, C);  x_size = (H, W)."""
    B, Lt, C = inp.shape
    H, W = x_size
    L = H * W
    M = B * L
    bf16 = jnp.bfloat16
    x2d = inp.reshape(M, C)

    sp = p["ss2d"]
    Din = sp["conv2d_w"].shape[1]
    N = sp["A"].shape[0]
    K = 4
    KD = K * Din
    G = sp["xdt_proj_w"].shape[1] // K              # Din + 2N per direction

    # ---- SS2D -------------------------------------------------------------
    # LN1 + in_proj (fused)
    xz = ln_matmul(x2d, p["ln1_g"], p["ln1_b"],
                   sp["in_proj_w"].astype(bf16), eps=1e-6)     # (M, 2*Din)
    x_in, z = xz[:, :Din], xz[:, Din:]

    # depthwise 3x3 + SiLU
    xc = dwconv(x_in.reshape(B, H, W, Din), sp["conv2d_w"], sp["conv2d_b"],
                k=3, act="silu")

    # build the 4 scan directions, folded onto the lane axis (K*Din = 256)
    d0 = xc.reshape(B, L, Din)
    d1 = xc.transpose(0, 2, 1, 3).reshape(B, L, Din)
    u_fold = jnp.concatenate([d0, d1, d0[:, ::-1], d1[:, ::-1]], axis=-1)

    # fused (x_proj o dt_proj) for all 4 directions: one block-diagonal matmul
    x_comb = matmul(u_fold.reshape(M, KD), sp["xdt_proj_w"].astype(bf16))
    xc4 = x_comb.reshape(B, L, K, G)
    delta_fold = xc4[..., :Din].reshape(B, L, KD)
    b_lnk = xc4[..., Din:Din + N].transpose(0, 1, 3, 2)        # (B, L, N, K)
    c_lnk = xc4[..., Din + N:].transpose(0, 1, 3, 2)           # (B, L, N, K)
    bc = jnp.concatenate([b_lnk, c_lnk], axis=-1)              # (B, L, N, 2K)

    y_fold = selective_scan(u_fold, delta_fold, sp["A"], bc,
                            sp["Ds"], sp["dt_bias"])           # (B, L, KD)

    # undo the direction permutations (cheap XLA reshapes) and sum
    inv = lambda t: t.reshape(B, W, H, Din).transpose(0, 2, 1, 3).reshape(B, L, Din)
    y = (y_fold[..., :Din]
         + y_fold[..., 2 * Din:3 * Din][:, ::-1]
         + inv(y_fold[..., Din:2 * Din])
         + inv(y_fold[..., 3 * Din:][:, ::-1]))

    # out_norm * SiLU(z) + out_proj (fused)
    attn = gate_out(y.reshape(M, Din), z, sp["out_norm_g"], sp["out_norm_b"],
                    sp["out_proj_w"].astype(bf16), eps=1e-5)   # (M, C)

    # ---- residual 1 + LN2 + MGCB project_in (fused) ------------------------
    mp = p["mgcb"]
    x_res, h = res_ln_matmul(x2d, p["skip_scale"], attn,
                             p["ln2_g"], p["ln2_b"],
                             mp["proj_in_w"].astype(bf16), eps=1e-5)

    # ---- MGCB ---------------------------------------------------------------
    hf = mp["proj_out_w"].shape[0]                  # hidden_features = 2*C
    # merged dw3x3 (3C ch) / dw5x5 (C ch) depthwise conv, 4C lane-dense channels
    conv = dwconv(h.reshape(B, H, W, 2 * hf), mp["dw_w"],
                  jnp.zeros((1, 2 * hf), jnp.float32), k=5, act=None)
    # TODO(synk): exact erf-based GELU (nn.GELU default) kept in XLA glue since
    # lax.erf has no guaranteed Mosaic lowering.
    gated = jax.nn.gelu(conv[..., :hf], approximate=False) * conv[..., hf:]

    # project_out + channel attention + scaled residual 2 (fused)
    out = projout_ca_res(gated.reshape(B, L, hf), mp["proj_out_w"].astype(bf16),
                         mp["ca_w1"], mp["ca_b1"], mp["ca_w2"], mp["ca_b2"],
                         x_res.reshape(B, L, C), p["skip_scale2"])
    return out.reshape(B, Lt, C)


# --------------------------------------------------------------------------
# deterministic synthetic parameters (pre-folded into the kernel layouts)
# --------------------------------------------------------------------------

def init_params(key, C, d_state=16, expand=2.0):
    Din = int(expand * C)
    R = math.ceil(C / 16)                            # dt_rank
    N = d_state
    K = 4
    KD = K * Din
    G = Din + 2 * N
    hf = 2 * C                                       # MGCB hidden_features
    Cs = max(C // 30, 1)
    ks = jax.random.split(key, 12)

    def w(k, shape, scale=0.05):
        return (scale * jax.random.normal(k, shape)).astype(jnp.float32)

    # fold per-direction x_proj (Din->R+2N) and dt_proj (R->Din) into a single
    # block-diagonal weight whose columns per direction are [dt | B | C]
    x_proj_w = w(ks[2], (K, Din, R + 2 * N))
    dt_proj_w = w(ks[3], (K, R, Din), scale=0.5)
    xdt = jnp.zeros((KD, K * G), jnp.float32)
    for kk in range(K):
        blk = jnp.concatenate(
            [x_proj_w[kk][:, :R] @ dt_proj_w[kk], x_proj_w[kk][:, R:]], axis=1)
        xdt = xdt.at[kk * Din:(kk + 1) * Din, kk * G:(kk + 1) * G].set(blk)

    # A = -exp(A_log), transposed and lane-folded: (N, K*Din)
    A_fold = -jnp.broadcast_to(
        jnp.arange(1, N + 1, dtype=jnp.float32)[:, None], (N, KD))

    # MGCB dw3x3 (3C ch, bias=False) embedded into the centre of a merged 5x5
    # depthwise weight shared with dw5x5 (C ch)  ->  (25, 4C) lane-dense.
    dw3 = w(ks[7], (9, 3 * C))
    dw5 = w(ks[8], (25, C))
    dw = jnp.zeros((25, 4 * C), jnp.float32)
    for i in range(3):
        for j in range(3):
            dw = dw.at[(i + 1) * 5 + (j + 1), :3 * C].set(dw3[i * 3 + j])
    dw = dw.at[:, 3 * C:].set(dw5)

    return {
        "ln1_g": jnp.ones((1, C), jnp.float32), "ln1_b": jnp.zeros((1, C), jnp.float32),
        "ln2_g": jnp.ones((1, C), jnp.float32), "ln2_b": jnp.zeros((1, C), jnp.float32),
        "skip_scale": jnp.ones((1, C), jnp.float32),
        "skip_scale2": jnp.ones((1, C), jnp.float32),
        "ss2d": {
            "in_proj_w": w(ks[0], (C, 2 * Din)),
            "conv2d_w": w(ks[1], (9, Din)),
            "conv2d_b": jnp.zeros((1, Din), jnp.float32),
            "xdt_proj_w": xdt,                       # (K*Din, K*(Din+2N)) block-diag
            "dt_bias": w(ks[4], (1, KD), scale=0.1),
            "A": A_fold,                             # (N, K*Din)
            "Ds": jnp.ones((1, KD), jnp.float32),
            "out_norm_g": jnp.ones((1, Din), jnp.float32),
            "out_norm_b": jnp.zeros((1, Din), jnp.float32),
            "out_proj_w": w(ks[5], (Din, C)),
        },
        "mgcb": {
            "proj_in_w": w(ks[6], (C, 4 * C)),       # 1x1 conv, bias=False
            "dw_w": dw,                              # merged depthwise weight
            "proj_out_w": w(ks[9], (hf, C)),         # 1x1 conv, bias=False
            "ca_w1": w(ks[10], (Cs, C)),             # squeeze conv (C -> Cs)
            "ca_b1": jnp.zeros((Cs, 1), jnp.float32),
            "ca_w2": w(ks[11], (Cs, C)),             # expand conv (Cs -> C), transposed
            "ca_b2": jnp.zeros((1, C), jnp.float32),
        },
    }


if __name__ == "__main__":
    key = jax.random.PRNGKey(0)
    kp, kx = jax.random.split(key)

    B, H, W, C = 2, 8, 8, 32                         # hidden_dim=32, spatial 8x8
    params = init_params(kp, C)
    inp = jax.random.normal(kx, (B, H * W, C), jnp.float32)

    fwd = jax.jit(lambda a: ssb_forward(a, (H, W), params))
    out = jax.block_until_ready(fwd(inp))

    assert out.shape == (B, H * W, C)
    assert bool(jnp.all(jnp.isfinite(out)))
    print("KERNEL_OK")
</pallas_src>

<mosaic_0001>
module attributes {stable_mosaic.version = 11 : i64} {
  func.func @_ln_matmul_kernel(%arg0: i32, %arg1: memref<64x32xf32, #tpu.memory_space<vmem>>, %arg2: memref<1x32xf32, #tpu.memory_space<vmem>>, %arg3: memref<1x32xf32, #tpu.memory_space<vmem>>, %arg4: memref<32x128xbf16, #tpu.memory_space<vmem>>, %arg5: memref<64x128xf32, #tpu.memory_space<vmem>>) attributes {dimension_semantics = [#tpu.dimension_semantics<parallel>], iteration_bounds = array<i64: 2>, scalar_prefetch = 0 : i64, scratch_operands = 0 : i64, tpu.core_type = #tpu.core_type<tc>, window_params = [{transform_indices = @transform_0, window_bounds = array<i64: 64, 32>}, {pipeline_mode = #tpu.pipeline_mode<synchronous>, transform_indices = @transform_1, window_bounds = array<i64: 1, 32>}, {pipeline_mode = #tpu.pipeline_mode<synchronous>, transform_indices = @transform_2, window_bounds = array<i64: 1, 32>}, {pipeline_mode = #tpu.pipeline_mode<synchronous>, transform_indices = @transform_3, window_bounds = array<i64: 32, 128>}, {transform_indices = @transform_4, window_bounds = array<i64: 64, 128>}]} {
    %c0 = arith.constant 0 : index
    %c0_0 = arith.constant 0 : index
    %0 = vector.load %arg1[%c0, %c0_0] : memref<64x32xf32, #tpu.memory_space<vmem>>, vector<64x32xf32>
    %c0_1 = arith.constant 0 : index
    %c0_2 = arith.constant 0 : index
    %1 = vector.load %arg2[%c0_1, %c0_2] : memref<1x32xf32, #tpu.memory_space<vmem>>, vector<1x32xf32>
    %c0_3 = arith.constant 0 : index
    %c0_4 = arith.constant 0 : index
    %2 = vector.load %arg3[%c0_3, %c0_4] : memref<1x32xf32, #tpu.memory_space<vmem>>, vector<1x32xf32>
    %cst = arith.constant dense<0.000000e+00> : vector<64xf32>
    %3 = vector.multi_reduction <add>, %0, %cst [1] : vector<64x32xf32> to vector<64xf32>
    %4 = vector.shape_cast %3 : vector<64xf32> to vector<64x1xf32>
    %cst_5 = arith.constant 3.200000e+01 : f32
    %5 = vector.broadcast %cst_5 : f32 to vector<64x1xf32>
    %6 = arith.divf %4, %5 : vector<64x1xf32>
    %7 = vector.broadcast %6 : vector<64x1xf32> to vector<64x32xf32>
    %8 = arith.subf %0, %7 : vector<64x32xf32>
    %9 = arith.mulf %8, %8 : vector<64x32xf32>
    %cst_6 = arith.constant dense<0.000000e+00> : vector<64xf32>
    %10 = vector.multi_reduction <add>, %9, %cst_6 [1] : vector<64x32xf32> to vector<64xf32>
    %11 = vector.shape_cast %10 : vector<64xf32> to vector<64x1xf32>
    %cst_7 = arith.constant 3.200000e+01 : f32
    %12 = vector.broadcast %cst_7 : f32 to vector<64x1xf32>
    %13 = arith.divf %11, %12 : vector<64x1xf32>
    %cst_8 = arith.constant 9.99999997E-7 : f32
    %14 = vector.broadcast %cst_8 : f32 to vector<64x1xf32>
    %15 = arith.addf %13, %14 : vector<64x1xf32>
    %16 = math.rsqrt %15 : vector<64x1xf32>
    %17 = vector.broadcast %16 : vector<64x1xf32> to vector<64x32xf32>
    %18 = arith.mulf %8, %17 : vector<64x32xf32>
    %19 = vector.broadcast %1 : vector<1x32xf32> to vector<64x32xf32>
    %20 = arith.mulf %18, %19 : vector<64x32xf32>
    %21 = vector.broadcast %2 : vector<1x32xf32> to vector<64x32xf32>
    %22 = arith.addf %20, %21 : vector<64x32xf32>
    %23 = arith.truncf %22 : vector<64x32xf32> to vector<64x32xbf16>
    %c0_9 = arith.constant 0 : index
    %c0_10 = arith.constant 0 : index
    %24 = vector.load %arg4[%c0_9, %c0_10] : memref<32x128xbf16, #tpu.memory_space<vmem>>, vector<32x128xbf16>
    %cst_11 = arith.constant dense<0.000000e+00> : vector<64x128xf32>
    %25 = tpu.matmul %23, %24, %cst_11 {dimension_numbers = #tpu.dot_dimension_numbers<[1], [0], [0], [1], [0, 0, 1, 1], [], []>} : vector<64x32xbf16>, vector<32x128xbf16>, vector<64x128xf32> -> vector<64x128xf32>
    %c0_12 = arith.constant 0 : index
    %c0_13 = arith.constant 0 : index
    %26 = vector.load %arg5[%c0_12, %c0_13] : memref<64x128xf32, #tpu.memory_space<vmem>>, vector<64x128xf32>
    tpu.vector_store %arg5[%c0_12, %c0_13], %25 {strides = array<i32>} : memref<64x128xf32, #tpu.memory_space<vmem>>, vector<64x128xf32>,
    return
  }
  func.func @transform_0(%arg0: i32) -> (i32, i32) {
    %c0_i32 = arith.constant 0 : i32
    %c0_i32_0 = arith.constant 0 : i32
    return %arg0, %c0_i32 : i32, i32
  }
  func.func @transform_1(%arg0: i32) -> (i32, i32) {
    %c0_i32 = arith.constant 0 : i32
    %c0_i32_0 = arith.constant 0 : i32
    %c0_i32_1 = arith.constant 0 : i32
    return %c0_i32, %c0_i32_0 : i32, i32
  }
  func.func @transform_2(%arg0: i32) -> (i32, i32) {
    %c0_i32 = arith.constant 0 : i32
    %c0_i32_0 = arith.constant 0 : i32
    %c0_i32_1 = arith.constant 0 : i32
    return %c0_i32, %c0_i32_0 : i32, i32
  }
  func.func @transform_3(%arg0: i32) -> (i32, i32) {
    %c0_i32 = arith.constant 0 : i32
    %c0_i32_0 = arith.constant 0 : i32
    %c0_i32_1 = arith.constant 0 : i32
    return %c0_i32, %c0_i32_0 : i32, i32
  }
  func.func @transform_4(%arg0: i32) -> (i32, i32) {
    %c0_i32 = arith.constant 0 : i32
    %c0_i32_0 = arith.constant 0 : i32
    return %arg0, %c0_i32 : i32, i32
  }
}

module attributes {stable_mosaic.version = 11 : i64} {
  func.func @_dwconv_kernel(%arg0: i32, %arg1: memref<1x10x10x64xf32, #tpu.memory_space<vmem>>, %arg2: memref<9x64xf32, #tpu.memory_space<vmem>>, %arg3: memref<1x64xf32, #tpu.memory_space<vmem>>, %arg4: memref<1x8x8x64xf32, #tpu.memory_space<vmem>>) attributes {dimension_semantics = [#tpu.dimension_semantics<parallel>], iteration_bounds = array<i64: 2>, scalar_prefetch = 0 : i64, scratch_operands = 0 : i64, tpu.core_type = #tpu.core_type<tc>, window_params = [{transform_indices = @transform_0, window_bounds = array<i64: 1, 10, 10, 64>}, {pipeline_mode = #tpu.pipeline_mode<synchronous>, transform_indices = @transform_1, window_bounds = array<i64: 9, 64>}, {pipeline_mode = #tpu.pipeline_mode<synchronous>, transform_indices = @transform_2, window_bounds = array<i64: 1, 64>}, {transform_indices = @transform_3, window_bounds = array<i64: 1, 8, 8, 64>}]} {
    %cst = arith.constant 0.000000e+00 : f32
    %0 = vector.broadcast %cst : f32 to vector<8x8x64xf32>
    %c0 = arith.constant 0 : index
    %c0_0 = arith.constant 0 : index
    %1 = vector.load %arg2[%c0, %c0_0] : memref<9x64xf32, #tpu.memory_space<vmem>>, vector<1x64xf32>
    %c0_1 = arith.constant 0 : index
    %c0_2 = arith.constant 0 : index
    %c0_3 = arith.constant 0 : index
    %c0_4 = arith.constant 0 : index
    %2 = vector.load %arg1[%c0_1, %c0_2, %c0_3, %c0_4] : memref<1x10x10x64xf32, #tpu.memory_space<vmem>>, vector<1x8x8x64xf32>
    %3 = vector.shape_cast %2 : vector<1x8x8x64xf32> to vector<8x8x64xf32>
    %4 = vector.shape_cast %1 : vector<1x64xf32> to vector<1x1x64xf32>
    %5 = vector.broadcast %4 : vector<1x1x64xf32> to vector<8x8x64xf32>
    %6 = arith.mulf %3, %5 : vector<8x8x64xf32>
    %7 = arith.addf %0, %6 : vector<8x8x64xf32>
    %c1 = arith.constant 1 : index
    %c0_5 = arith.constant 0 : index
    %8 = vector.load %arg2[%c1, %c0_5] : memref<9x64xf32, #tpu.memory_space<vmem>>, vector<1x64xf32>
    %c0_6 = arith.constant 0 : index
    %c0_7 = arith.constant 0 : index
    %c1_8 = arith.constant 1 : index
    %c0_9 = arith.constant 0 : index
    %9 = vector.load %arg1[%c0_6, %c0_7, %c1_8, %c0_9] : memref<1x10x10x64xf32, #tpu.memory_space<vmem>>, vector<1x8x8x64xf32>
    %10 = vector.shape_cast %9 : vector<1x8x8x64xf32> to vector<8x8x64xf32>
    %11 = vector.shape_cast %8 : vector<1x64xf32> to vector<1x1x64xf32>
    %12 = vector.broadcast %11 : vector<1x1x64xf32> to vector<8x8x64xf32>
    %13 = arith.mulf %10, %12 : vector<8x8x64xf32>
    %14 = arith.addf %7, %13 : vector<8x8x64xf32>
    %c2 = arith.constant 2 : index
    %c0_10 = arith.constant 0 : index
    %15 = vector.load %arg2[%c2, %c0_10] : memref<9x64xf32, #tpu.memory_space<vmem>>, vector<1x64xf32>
    %c0_11 = arith.constant 0 : index
    %c0_12 = arith.constant 0 : index
    %c2_13 = arith.constant 2 : index
    %c0_14 = arith.constant 0 : index
    %16 = vector.load %arg1[%c0_11, %c0_12, %c2_13, %c0_14] : memref<1x10x10x64xf32, #tpu.memory_space<vmem>>, vector<1x8x8x64xf32>
    %17 = vector.shape_cast %16 : vector<1x8x8x64xf32> to vector<8x8x64xf32>
    %18 = vector.shape_cast %15 : vector<1x64xf32> to vector<1x1x64xf32>
    %19 = vector.broadcast %18 : vector<1x1x64xf32> to vector<8x8x64xf32>
    %20 = arith.mulf %17, %19 : vector<8x8x64xf32>
    %21 = arith.addf %14, %20 : vector<8x8x64xf32>
    %c3 = arith.constant 3 : index
    %c0_15 = arith.constant 0 : index
    %22 = vector.load %arg2[%c3, %c0_15] : memref<9x64xf32, #tpu.memory_space<vmem>>, vector<1x64xf32>
    %c0_16 = arith.constant 0 : index
    %c1_17 = arith.constant 1 : index
    %c0_18 = arith.constant 0 : index
    %c0_19 = arith.constant 0 : index
    %23 = vector.load %arg1[%c0_16, %c1_17, %c0_18, %c0_19] : memref<1x10x10x64xf32, #tpu.memory_space<vmem>>, vector<1x8x8x64xf32>
    %24 = vector.shape_cast %23 : vector<1x8x8x64xf32> to vector<8x8x64xf32>
    %25 = vector.shape_cast %22 : vector<1x64xf32> to vector<1x1x64xf32>
    %26 = vector.broadcast %25 : vector<1x1x64xf32> to vector<8x8x64xf32>
    %27 = arith.mulf %24, %26 : vector<8x8x64xf32>
    %28 = arith.addf %21, %27 : vector<8x8x64xf32>
    %c4 = arith.constant 4 : index
    %c0_20 = arith.constant 0 : index
    %29 = vector.load %arg2[%c4, %c0_20] : memref<9x64xf32, #tpu.memory_space<vmem>>, vector<1x64xf32>
    %c0_21 = arith.constant 0 : index
    %c1_22 = arith.constant 1 : index
    %c1_23 = arith.constant 1 : index
    %c0_24 = arith.constant 0 : index
    %30 = vector.load %arg1[%c0_21, %c1_22, %c1_23, %c0_24] : memref<1x10x10x64xf32, #tpu.memory_space<vmem>>, vector<1x8x8x64xf32>
    %31 = vector.shape_cast %30 : vector<1x8x8x64xf32> to vector<8x8x64xf32>
    %32 = vector.shape_cast %29 : vector<1x64xf32> to vector<1x1x64xf32>
    %33 = vector.broadcast %32 : vector<1x1x64xf32> to vector<8x8x64xf32>
    %34 = arith.mulf %31, %33 : vector<8x8x64xf32>
    %35 = arith.addf %28, %34 : vector<8x8x64xf32>
    %c5 = arith.constant 5 : index
    %c0_25 = arith.constant 0 : index
    %36 = vector.load %arg2[%c5, %c0_25] : memref<9x64xf32, #tpu.memory_space<vmem>>, vector<1x64xf32>
    %c0_26 = arith.constant 0 : index
    %c1_27 = arith.constant 1 : index
    %c2_28 = arith.constant 2 : index
    %c0_29 = arith.constant 0 : index
    %37 = vector.load %arg1[%c0_26, %c1_27, %c2_28, %c0_29] : memref<1x10x10x64xf32, #tpu.memory_space<vmem>>, vector<1x8x8x64xf32>
    %38 = vector.shape_cast %37 : vector<1x8x8x64xf32> to vector<8x8x64xf32>
    %39 = vector.shape_cast %36 : vector<1x64xf32> to vector<1x1x64xf32>
    %40 = vector.broadcast %39 : vector<1x1x64xf32> to vector<8x8x64xf32>
    %41 = arith.mulf %38, %40 : vector<8x8x64xf32>
    %42 = arith.addf %35, %41 : vector<8x8x64xf32>
    %c6 = arith.constant 6 : index
    %c0_30 = arith.constant 0 : index
    %43 = vector.load %arg2[%c6, %c0_30] : memref<9x64xf32, #tpu.memory_space<vmem>>, vector<1x64xf32>
    %c0_31 = arith.constant 0 : index
    %c2_32 = arith.constant 2 : index
    %c0_33 = arith.constant 0 : index
    %c0_34 = arith.constant 0 : index
    %44 = vector.load %arg1[%c0_31, %c2_32, %c0_33, %c0_34] : memref<1x10x10x64xf32, #tpu.memory_space<vmem>>, vector<1x8x8x64xf32>
    %45 = vector.shape_cast %44 : vector<1x8x8x64xf32> to vector<8x8x64xf32>
    %46 = vector.shape_cast %43 : vector<1x64xf32> to vector<1x1x64xf32>
    %47 = vector.broadcast %46 : vector<1x1x64xf32> to vector<8x8x64xf32>
    %48 = arith.mulf %45, %47 : vector<8x8x64xf32>
    %49 = arith.addf %42, %48 : vector<8x8x64xf32>
    %c7 = arith.constant 7 : index
    %c0_35 = arith.constant 0 : index
    %50 = vector.load %arg2[%c7, %c0_35] : memref<9x64xf32, #tpu.memory_space<vmem>>, vector<1x64xf32>
    %c0_36 = arith.constant 0 : index
    %c2_37 = arith.constant 2 : index
    %c1_38 = arith.constant 1 : index
    %c0_39 = arith.constant 0 : index
    %51 = vector.load %arg1[%c0_36, %c2_37, %c1_38, %c0_39] : memref<1x10x10x64xf32, #tpu.memory_space<vmem>>, vector<1x8x8x64xf32>
    %52 = vector.shape_cast %51 : vector<1x8x8x64xf32> to vector<8x8x64xf32>
    %53 = vector.shape_cast %50 : vector<1x64xf32> to vector<1x1x64xf32>
    %54 = vector.broadcast %53 : vector<1x1x64xf32> to vector<8x8x64xf32>
    %55 = arith.mulf %52, %54 : vector<8x8x64xf32>
    %56 = arith.addf %49, %55 : vector<8x8x64xf32>
    %c8 = arith.constant 8 : index
    %c0_40 = arith.constant 0 : index
    %57 = vector.load %arg2[%c8, %c0_40] : memref<9x64xf32, #tpu.memory_space<vmem>>, vector<1x64xf32>
    %c0_41 = arith.constant 0 : index
    %c2_42 = arith.constant 2 : index
    %c2_43 = arith.constant 2 : index
    %c0_44 = arith.constant 0 : index
    %58 = vector.load %arg1[%c0_41, %c2_42, %c2_43, %c0_44] : memref<1x10x10x64xf32, #tpu.memory_space<vmem>>, vector<1x8x8x64xf32>
    %59 = vector.shape_cast %58 : vector<1x8x8x64xf32> to vector<8x8x64xf32>
    %60 = vector.shape_cast %57 : vector<1x64xf32> to vector<1x1x64xf32>
    %61 = vector.broadcast %60 : vector<1x1x64xf32> to vector<8x8x64xf32>
    %62 = arith.mulf %59, %61 : vector<8x8x64xf32>
    %63 = arith.addf %56, %62 : vector<8x8x64xf32>
    %c0_45 = arith.constant 0 : index
    %c0_46 = arith.constant 0 : index
    %64 = vector.load %arg3[%c0_45, %c0_46] : memref<1x64xf32, #tpu.memory_space<vmem>>, vector<1x64xf32>
    %65 = vector.shape_cast %64 : vector<1x64xf32> to vector<1x1x64xf32>
    %66 = vector.broadcast %65 : vector<1x1x64xf32> to vector<8x8x64xf32>
    %67 = arith.addf %63, %66 : vector<8x8x64xf32>
    %68 = arith.negf %67 : vector<8x8x64xf32>
    %69 = math.exp %68 : vector<8x8x64xf32>
    %cst_47 = arith.constant 1.000000e+00 : f32
    %70 = vector.broadcast %cst_47 : f32 to vector<8x8x64xf32>
    %71 = arith.addf %70, %69 : vector<8x8x64xf32>
    %72 = arith.divf %70, %71 : vector<8x8x64xf32>
    %73 = arith.mulf %67, %72 : vector<8x8x64xf32>
    %c0_48 = arith.constant 0 : index
    %c0_49 = arith.constant 0 : index
    %c0_50 = arith.constant 0 : index
    %c0_51 = arith.constant 0 : index
    %74 = vector.load %arg4[%c0_48, %c0_49, %c0_50, %c0_51] : memref<1x8x8x64xf32, #tpu.memory_space<vmem>>, vector<1x8x8x64xf32>
    %75 = vector.shape_cast %74 : vector<1x8x8x64xf32> to vector<8x8x64xf32>
    %76 = vector.shape_cast %73 : vector<8x8x64xf32> to vector<1x8x8x64xf32>
    tpu.vector_store %arg4[%c0_48, %c0_49, %c0_50, %c0_51], %76 {strides = array<i32>} : memref<1x8x8x64xf32, #tpu.memory_space<vmem>>, vector<1x8x8x64xf32>,
    return
  }
  func.func @transform_0(%arg0: i32) -> (i32, i32, i32, i32) {
    %c0_i32 = arith.constant 0 : i32
    %c0_i32_0 = arith.constant 0 : i32
    %c0_i32_1 = arith.constant 0 : i32
    %c0_i32_2 = arith.constant 0 : i32
    return %arg0, %c0_i32, %c0_i32_0, %c0_i32_1 : i32, i32, i32, i32
  }
  func.func @transform_1(%arg0: i32) -> (i32, i32) {
    %c0_i32 = arith.constant 0 : i32
    %c0_i32_0 = arith.constant 0 : i32
    %c0_i32_1 = arith.constant 0 : i32
    return %c0_i32, %c0_i32_0 : i32, i32
  }
  func.func @transform_2(%arg0: i32) -> (i32, i32) {
    %c0_i32 = arith.constant 0 : i32
    %c0_i32_0 = arith.constant 0 : i32
    %c0_i32_1 = arith.constant 0 : i32
    return %c0_i32, %c0_i32_0 : i32, i32
  }
  func.func @transform_3(%arg0: i32) -> (i32, i32, i32, i32) {
    %c0_i32 = arith.constant 0 : i32
    %c0_i32_0 = arith.constant 0 : i32
    %c0_i32_1 = arith.constant 0 : i32
    %c0_i32_2 = arith.constant 0 : i32
    return %arg0, %c0_i32, %c0_i32_0, %c0_i32_1 : i32, i32, i32, i32
  }
}

module attributes {stable_mosaic.version = 11 : i64} {
  func.func @_matmul_kernel(%arg0: i32, %arg1: memref<64x256xf32, #tpu.memory_space<vmem>>, %arg2: memref<256x384xbf16, #tpu.memory_space<vmem>>, %arg3: memref<64x384xf32, #tpu.memory_space<vmem>>) attributes {dimension_semantics = [#tpu.dimension_semantics<parallel>], iteration_bounds = array<i64: 2>, scalar_prefetch = 0 : i64, scratch_operands = 0 : i64, tpu.core_type = #tpu.core_type<tc>, window_params = [{transform_indices = @transform_0, window_bounds = array<i64: 64, 256>}, {pipeline_mode = #tpu.pipeline_mode<synchronous>, transform_indices = @transform_1, window_bounds = array<i64: 256, 384>}, {transform_indices = @transform_2, window_bounds = array<i64: 64, 384>}]} {
    %c0 = arith.constant 0 : index
    %c0_0 = arith.constant 0 : index
    %0 = vector.load %arg1[%c0, %c0_0] : memref<64x256xf32, #tpu.memory_space<vmem>>, vector<64x256xf32>
    %1 = arith.truncf %0 : vector<64x256xf32> to vector<64x256xbf16>
    %c0_1 = arith.constant 0 : index
    %c0_2 = arith.constant 0 : index
    %2 = vector.load %arg2[%c0_1, %c0_2] : memref<256x384xbf16, #tpu.memory_space<vmem>>, vector<256x384xbf16>
    %cst = arith.constant dense<0.000000e+00> : vector<64x384xf32>
    %3 = tpu.matmul %1, %2, %cst {dimension_numbers = #tpu.dot_dimension_numbers<[1], [0], [0], [1], [0, 0, 1, 1], [], []>} : vector<64x256xbf16>, vector<256x384xbf16>, vector<64x384xf32> -> vector<64x384xf32>
    %c0_3 = arith.constant 0 : index
    %c0_4 = arith.constant 0 : index
    %4 = vector.load %arg3[%c0_3, %c0_4] : memref<64x384xf32, #tpu.memory_space<vmem>>, vector<64x384xf32>
    tpu.vector_store %arg3[%c0_3, %c0_4], %3 {strides = array<i32>} : memref<64x384xf32, #tpu.memory_space<vmem>>, vector<64x384xf32>,
    return
  }
  func.func @transform_0(%arg0: i32) -> (i32, i32) {
    %c0_i32 = arith.constant 0 : i32
    %c0_i32_0 = arith.constant 0 : i32
    return %arg0, %c0_i32 : i32, i32
  }
  func.func @transform_1(%arg0: i32) -> (i32, i32) {
    %c0_i32 = arith.constant 0 : i32
    %c0_i32_0 = arith.constant 0 : i32
    %c0_i32_1 = arith.constant 0 : i32
    return %c0_i32, %c0_i32_0 : i32, i32
  }
  func.func @transform_2(%arg0: i32) -> (i32, i32) {
    %c0_i32 = arith.constant 0 : i32
    %c0_i32_0 = arith.constant 0 : i32
    return %arg0, %c0_i32 : i32, i32
  }
}

module attributes {stable_mosaic.version = 11 : i64} {
  func.func @_selective_scan_kernel(%arg0: i32, %arg1: memref<1x64x256xf32, #tpu.memory_space<vmem>>, %arg2: memref<1x64x256xf32, #tpu.memory_space<vmem>>, %arg3: memref<16x256xf32, #tpu.memory_space<vmem>>, %arg4: memref<1x64x16x8xf32, #tpu.memory_space<vmem>>, %arg5: memref<1x256xf32, #tpu.memory_space<vmem>>, %arg6: memref<1x256xf32, #tpu.memory_space<vmem>>, %arg7: memref<1x64x256xf32, #tpu.memory_space<vmem>>, %arg8: memref<64x256xf32, #tpu.memory_space<vmem>>, %arg9: memref<64x256xf32, #tpu.memory_space<vmem>>, %arg10: memref<64x16x256xf32, #tpu.memory_space<vmem>>, %arg11: memref<64x16x256xf32, #tpu.memory_space<vmem>>) attributes {dimension_semantics = [#tpu.dimension_semantics<parallel>], iteration_bounds = array<i64: 2>, scalar_prefetch = 0 : i64, scratch_operands = 4 : i64, tpu.core_type = #tpu.core_type<tc>, window_params = [{transform_indices = @transform_0, window_bounds = array<i64: 1, 64, 256>}, {transform_indices = @transform_1, window_bounds = array<i64: 1, 64, 256>}, {pipeline_mode = #tpu.pipeline_mode<synchronous>, transform_indices = @transform_2, window_bounds = array<i64: 16, 256>}, {transform_indices = @transform_3, window_bounds = array<i64: 1, 64, 16, 8>}, {pipeline_mode = #tpu.pipeline_mode<synchronous>, transform_indices = @transform_4, window_bounds = array<i64: 1, 256>}, {pipeline_mode = #tpu.pipeline_mode<synchronous>, transform_indices = @transform_5, window_bounds = array<i64: 1, 256>}, {transform_indices = @transform_6, window_bounds = array<i64: 1, 64, 256>}]} {
    %c0 = arith.constant 0 : index
    %c0_0 = arith.constant 0 : index
    %c0_1 = arith.constant 0 : index
    %0 = vector.load %arg1[%c0, %c0_0, %c0_1] : memref<1x64x256xf32, #tpu.memory_space<vmem>>, vector<1x64x256xf32>
    %1 = vector.shape_cast %0 : vector<1x64x256xf32> to vector<64x256xf32>
    %c0_2 = arith.constant 0 : index
    %c0_3 = arith.constant 0 : index
    %c0_4 = arith.constant 0 : index
    %2 = vector.load %arg2[%c0_2, %c0_3, %c0_4] : memref<1x64x256xf32, #tpu.memory_space<vmem>>, vector<1x64x256xf32>
    %3 = vector.shape_cast %2 : vector<1x64x256xf32> to vector<64x256xf32>
    %c0_5 = arith.constant 0 : index
    %c0_6 = arith.constant 0 : index
    %4 = vector.load %arg6[%c0_5, %c0_6] : memref<1x256xf32, #tpu.memory_space<vmem>>, vector<1x256xf32>
    %5 = vector.broadcast %4 : vector<1x256xf32> to vector<64x256xf32>
    %6 = arith.addf %3, %5 : vector<64x256xf32>
    %cst = arith.constant 2.000000e+01 : f32
    %7 = vector.broadcast %cst : f32 to vector<64x256xf32>
    %8 = arith.cmpf ogt, %6, %7 : vector<64x256xf32>
    %9 = math.exp %6 : vector<64x256xf32>
    %10 = math.log1p %9 : vector<64x256xf32>
    %11 = arith.select %8, %6, %10 : vector<64x256xi1>, vector<64x256xf32>
    %c0_7 = arith.constant 0 : index
    %c0_8 = arith.constant 0 : index
    %12 = vector.load %arg8[%c0_7, %c0_8] : memref<64x256xf32, #tpu.memory_space<vmem>>, vector<64x256xf32>
    tpu.vector_store %arg8[%c0_7, %c0_8], %11 {strides = array<i32>} : memref<64x256xf32, #tpu.memory_space<vmem>>, vector<64x256xf32>,
    %13 = arith.mulf %11, %1 : vector<64x256xf32>
    %c0_9 = arith.constant 0 : index
    %c0_10 = arith.constant 0 : index
    %14 = vector.load %arg9[%c0_9, %c0_10] : memref<64x256xf32, #tpu.memory_space<vmem>>, vector<64x256xf32>
    tpu.vector_store %arg9[%c0_9, %c0_10], %13 {strides = array<i32>} : memref<64x256xf32, #tpu.memory_space<vmem>>, vector<64x256xf32>,
    %c0_11 = arith.constant 0 : index
    %c0_12 = arith.constant 0 : index
    %15 = vector.load %arg3[%c0_11, %c0_12] : memref<16x256xf32, #tpu.memory_space<vmem>>, vector<16x256xf32>
    %c0_i32 = arith.constant 0 : i32
    %c64_i32 = arith.constant 64 : i32
    %16 = arith.addi %c0_i32, %c64_i32 : i32
    %c1_i32 = arith.constant 1 : i32
    scf.for %arg12 = %c0_i32 to %16 step %c1_i32  : i32 {
      %22 = arith.index_cast %arg12 : i32 to index
      %c0_25 = arith.constant 0 : index
      %23 = vector.load %arg8[%22, %c0_25] : memref<64x256xf32, #tpu.memory_space<vmem>>, vector<1x256xf32>
      %24 = arith.index_cast %arg12 : i32 to index
      %c0_26 = arith.constant 0 : index
      %25 = vector.load %arg9[%24, %c0_26] : memref<64x256xf32, #tpu.memory_space<vmem>>, vector<1x256xf32>
      %26 = vector.broadcast %23 : vector<1x256xf32> to vector<16x256xf32>
      %27 = arith.mulf %15, %26 : vector<16x256xf32>
      %28 = math.exp %27 : vector<16x256xf32>
      %29 = arith.index_cast %arg12 : i32 to index
      %c0_27 = arith.constant 0 : index
      %c0_28 = arith.constant 0 : index
      %30 = vector.load %arg10[%29, %c0_27, %c0_28] : memref<64x16x256xf32, #tpu.memory_space<vmem>>, vector<1x16x256xf32>
      %31 = vector.shape_cast %30 : vector<1x16x256xf32> to vector<16x256xf32>
      %32 = vector.shape_cast %28 : vector<16x256xf32> to vector<1x16x256xf32>
      tpu.vector_store %arg10[%29, %c0_27, %c0_28], %32 {strides = array<i32>} : memref<64x16x256xf32, #tpu.memory_space<vmem>>, vector<1x16x256xf32>,
      %c0_29 = arith.constant 0 : index
      %33 = arith.index_cast %arg12 : i32 to index
      %c0_30 = arith.constant 0 : index
      %c0_31 = arith.constant 0 : index
      %34 = vector.load %arg4[%c0_29, %33, %c0_30, %c0_31] : memref<1x64x16x8xf32, #tpu.memory_space<vmem>>, vector<1x1x16x8xf32>
      %35 = vector.shape_cast %34 : vector<1x1x16x8xf32> to vector<1x16x8xf32>
      %36 = vector.shape_cast %35 : vector<1x16x8xf32> to vector<16x8xf32>
      %37 = vector.extract_strided_slice %36 {offsets = [0, 0], sizes = [16, 4], strides = [1, 1]} : vector<16x8xf32> to vector<16x4xf32>
      %38 = vector.extract_strided_slice %37 {offsets = [0, 0], sizes = [16, 1], strides = [1, 1]} : vector<16x4xf32> to vector<16x1xf32>
      %39 = vector.shape_cast %38 : vector<16x1xf32> to vector<16x1xf32>
      %40 = vector.broadcast %39 : vector<16x1xf32> to vector<16x64xf32>
      %41 = vector.extract_strided_slice %37 {offsets = [0, 1], sizes = [16, 1], strides = [1, 1]} : vector<16x4xf32> to vector<16x1xf32>
      %42 = vector.shape_cast %41 : vector<16x1xf32> to vector<16x1xf32>
      %43 = vector.broadcast %42 : vector<16x1xf32> to vector<16x64xf32>
      %44 = vector.extract_strided_slice %37 {offsets = [0, 2], sizes = [16, 1], strides = [1, 1]} : vector<16x4xf32> to vector<16x1xf32>
      %45 = vector.shape_cast %44 : vector<16x1xf32> to vector<16x1xf32>
      %46 = vector.broadcast %45 : vector<16x1xf32> to vector<16x64xf32>
      %47 = vector.extract_strided_slice %37 {offsets = [0, 3], sizes = [16, 1], strides = [1, 1]} : vector<16x4xf32> to vector<16x1xf32>
      %48 = vector.shape_cast %47 : vector<16x1xf32> to vector<16x1xf32>
      %49 = vector.broadcast %48 : vector<16x1xf32> to vector<16x64xf32>
      %50 = tpu.concatenate %40, %43, %46, %49 in 1 : vector<16x64xf32>, vector<16x64xf32>, vector<16x64xf32>, vector<16x64xf32> -> vector<16x256xf32>
      %51 = vector.broadcast %25 : vector<1x256xf32> to vector<16x256xf32>
      %52 = arith.mulf %50, %51 : vector<16x256xf32>
      %53 = arith.index_cast %arg12 : i32 to index
      %c0_32 = arith.constant 0 : index
      %c0_33 = arith.constant 0 : index
      %54 = vector.load %arg11[%53, %c0_32, %c0_33] : memref<64x16x256xf32, #tpu.memory_space<vmem>>, vector<1x16x256xf32>
      %55 = vector.shape_cast %54 : vector<1x16x256xf32> to vector<16x256xf32>
      %56 = vector.shape_cast %52 : vector<16x256xf32> to vector<1x16x256xf32>
      tpu.vector_store %arg11[%53, %c0_32, %c0_33], %56 {strides = array<i32>} : memref<64x16x256xf32, #tpu.memory_space<vmem>>, vector<1x16x256xf32>,
    }
    %c64_i32_13 = arith.constant 64 : i32
    %cst_14 = arith.constant 0.000000e+00 : f32
    %17 = vector.broadcast %cst_14 : f32 to vector<16x256xf32>
    %c0_i32_15 = arith.constant 0 : i32
    %c64_i32_16 = arith.constant 64 : i32
    %18 = arith.addi %c0_i32_15, %c64_i32_16 : i32
    %c1_i32_17 = arith.constant 1 : i32
    %19 = scf.for %arg12 = %c0_i32_15 to %18 step %c1_i32_17 iter_args(%arg13 = %17) -> (vector<16x256xf32>)  : i32 {
      %22 = arith.index_cast %arg12 : i32 to index
      %c0_25 = arith.constant 0 : index
      %c0_26 = arith.constant 0 : index
      %23 = vector.load %arg10[%22, %c0_25, %c0_26] : memref<64x16x256xf32, #tpu.memory_space<vmem>>, vector<1x16x256xf32>
      %24 = vector.shape_cast %23 : vector<1x16x256xf32> to vector<16x256xf32>
      %25 = arith.mulf %24, %arg13 : vector<16x256xf32>
      %26 = arith.index_cast %arg12 : i32 to index
      %c0_27 = arith.constant 0 : index
      %c0_28 = arith.constant 0 : index
      %27 = vector.load %arg11[%26, %c0_27, %c0_28] : memref<64x16x256xf32, #tpu.memory_space<vmem>>, vector<1x16x256xf32>
      %28 = vector.shape_cast %27 : vector<1x16x256xf32> to vector<16x256xf32>
      %29 = arith.addf %25, %28 : vector<16x256xf32>
      %30 = arith.index_cast %arg12 : i32 to index
      %c0_29 = arith.constant 0 : index
      %c0_30 = arith.constant 0 : index
      %31 = vector.load %arg11[%30, %c0_29, %c0_30] : memref<64x16x256xf32, #tpu.memory_space<vmem>>, vector<1x16x256xf32>
      %32 = vector.shape_cast %31 : vector<1x16x256xf32> to vector<16x256xf32>
      %33 = vector.shape_cast %29 : vector<16x256xf32> to vector<1x16x256xf32>
      tpu.vector_store %arg11[%30, %c0_29, %c0_30], %33 {strides = array<i32>} : memref<64x16x256xf32, #tpu.memory_space<vmem>>, vector<1x16x256xf32>,
      scf.yield %29 : vector<16x256xf32>
    }
    %c64_i32_18 = arith.constant 64 : i32
    %c0_19 = arith.constant 0 : index
    %c0_20 = arith.constant 0 : index
    %20 = vector.load %arg5[%c0_19, %c0_20] : memref<1x256xf32, #tpu.memory_space<vmem>>, vector<1x256xf32>
    %c0_i32_21 = arith.constant 0 : i32
    %c64_i32_22 = arith.constant 64 : i32
    %21 = arith.addi %c0_i32_21, %c64_i32_22 : i32
    %c1_i32_23 = arith.constant 1 : i32
    scf.for %arg12 = %c0_i32_21 to %21 step %c1_i32_23  : i32 {
      %c0_25 = arith.constant 0 : index
      %22 = arith.index_cast %arg12 : i32 to index
      %c0_26 = arith.constant 0 : index
      %c0_27 = arith.constant 0 : index
      %23 = vector.load %arg4[%c0_25, %22, %c0_26, %c0_27] : memref<1x64x16x8xf32, #tpu.memory_space<vmem>>, vector<1x1x16x8xf32>
      %24 = vector.shape_cast %23 : vector<1x1x16x8xf32> to vector<1x16x8xf32>
      %25 = vector.shape_cast %24 : vector<1x16x8xf32> to vector<16x8xf32>
      %26 = arith.index_cast %arg12 : i32 to index
      %c0_28 = arith.constant 0 : index
      %c0_29 = arith.constant 0 : index
      %27 = vector.load %arg11[%26, %c0_28, %c0_29] : memref<64x16x256xf32, #tpu.memory_space<vmem>>, vector<1x16x256xf32>
      %28 = vector.shape_cast %27 : vector<1x16x256xf32> to vector<16x256xf32>
      %29 = vector.extract_strided_slice %25 {offsets = [0, 4], sizes = [16, 4], strides = [1, 1]} : vector<16x8xf32> to vector<16x4xf32>
      %30 = vector.extract_strided_slice %29 {offsets = [0, 0], sizes = [16, 1], strides = [1, 1]} : vector<16x4xf32> to vector<16x1xf32>
      %31 = vector.shape_cast %30 : vector<16x1xf32> to vector<16x1xf32>
      %32 = vector.broadcast %31 : vector<16x1xf32> to vector<16x64xf32>
      %33 = vector.extract_strided_slice %29 {offsets = [0, 1], sizes = [16, 1], strides = [1, 1]} : vector<16x4xf32> to vector<16x1xf32>
      %34 = vector.shape_cast %33 : vector<16x1xf32> to vector<16x1xf32>
      %35 = vector.broadcast %34 : vector<16x1xf32> to vector<16x64xf32>
      %36 = vector.extract_strided_slice %29 {offsets = [0, 2], sizes = [16, 1], strides = [1, 1]} : vector<16x4xf32> to vector<16x1xf32>
      %37 = vector.shape_cast %36 : vector<16x1xf32> to vector<16x1xf32>
      %38 = vector.broadcast %37 : vector<16x1xf32> to vector<16x64xf32>
      %39 = vector.extract_strided_slice %29 {offsets = [0, 3], sizes = [16, 1], strides = [1, 1]} : vector<16x4xf32> to vector<16x1xf32>
      %40 = vector.shape_cast %39 : vector<16x1xf32> to vector<16x1xf32>
      %41 = vector.broadcast %40 : vector<16x1xf32> to vector<16x64xf32>
      %42 = tpu.concatenate %32, %35, %38, %41 in 1 : vector<16x64xf32>, vector<16x64xf32>, vector<16x64xf32>, vector<16x64xf32> -> vector<16x256xf32>
      %43 = arith.mulf %28, %42 : vector<16x256xf32>
      %cst_30 = arith.constant dense<0.000000e+00> : vector<256xf32>
      %44 = vector.multi_reduction <add>, %43, %cst_30 [0] : vector<16x256xf32> to vector<256xf32>
      %45 = vector.shape_cast %44 : vector<256xf32> to vector<1x256xf32>
      %c0_31 = arith.constant 0 : index
      %46 = arith.index_cast %arg12 : i32 to index
      %c0_32 = arith.constant 0 : index
      %47 = vector.load %arg1[%c0_31, %46, %c0_32] : memref<1x64x256xf32, #tpu.memory_space<vmem>>, vector<1x1x256xf32>
      %48 = vector.shape_cast %47 : vector<1x1x256xf32> to vector<1x256xf32>
      %49 = arith.mulf %20, %48 : vector<1x256xf32>
      %50 = arith.addf %45, %49 : vector<1x256xf32>
      %c0_33 = arith.constant 0 : index
      %51 = arith.index_cast %arg12 : i32 to index
      %c0_34 = arith.constant 0 : index
      %52 = vector.load %arg7[%c0_33, %51, %c0_34] : memref<1x64x256xf32, #tpu.memory_space<vmem>>, vector<1x1x256xf32>
      %53 = vector.shape_cast %52 : vector<1x1x256xf32> to vector<1x256xf32>
      %54 = vector.shape_cast %50 : vector<1x256xf32> to vector<1x1x256xf32>
      tpu.vector_store %arg7[%c0_33, %51, %c0_34], %54 {strides = array<i32>} : memref<1x64x256xf32, #tpu.memory_space<vmem>>, vector<1x1x256xf32>,
    }
    %c64_i32_24 = arith.constant 64 : i32
    return
  }
  func.func @transform_0(%arg0: i32) -> (i32, i32, i32) {
    %c0_i32 = arith.constant 0 : i32
    %c0_i32_0 = arith.constant 0 : i32
    %c0_i32_1 = arith.constant 0 : i32
    return %arg0, %c0_i32, %c0_i32_0 : i32, i32, i32
  }
  func.func @transform_1(%arg0: i32) -> (i32, i32, i32) {
    %c0_i32 = arith.constant 0 : i32
    %c0_i32_0 = arith.constant 0 : i32
    %c0_i32_1 = arith.constant 0 : i32
    return %arg0, %c0_i32, %c0_i32_0 : i32, i32, i32
  }
  func.func @transform_2(%arg0: i32) -> (i32, i32) {
    %c0_i32 = arith.constant 0 : i32
    %c0_i32_0 = arith.constant 0 : i32
    %c0_i32_1 = arith.constant 0 : i32
    return %c0_i32, %c0_i32_0 : i32, i32
  }
  func.func @transform_3(%arg0: i32) -> (i32, i32, i32, i32) {
    %c0_i32 = arith.constant 0 : i32
    %c0_i32_0 = arith.constant 0 : i32
    %c0_i32_1 = arith.constant 0 : i32
    %c0_i32_2 = arith.constant 0 : i32
    return %arg0, %c0_i32, %c0_i32_0, %c0_i32_1 : i32, i32, i32, i32
  }
  func.func @transform_4(%arg0: i32) -> (i32, i32) {
    %c0_i32 = arith.constant 0 : i32
    %c0_i32_0 = arith.constant 0 : i32
    %c0_i32_1 = arith.constant 0 : i32
    return %c0_i32, %c0_i32_0 : i32, i32
  }
  func.func @transform_5(%arg0: i32) -> (i32, i32) {
    %c0_i32 = arith.constant 0 : i32
    %c0_i32_0 = arith.constant 0 : i32
    %c0_i32_1 = arith.constant 0 : i32
    return %c0_i32, %c0_i32_0 : i32, i32
  }
  func.func @transform_6(%arg0: i32) -> (i32, i32, i32) {
    %c0_i32 = arith.constant 0 : i32
    %c0_i32_0 = arith.constant 0 : i32
    %c0_i32_1 = arith.constant 0 : i32
    return %arg0, %c0_i32, %c0_i32_0 : i32, i32, i32
  }
}

module attributes {stable_mosaic.version = 11 : i64} {
  func.func @_gate_out_kernel(%arg0: i32, %arg1: memref<64x64xf32, #tpu.memory_space<vmem>>, %arg2: memref<64x64xf32, #tpu.memory_space<vmem>>, %arg3: memref<1x64xf32, #tpu.memory_space<vmem>>, %arg4: memref<1x64xf32, #tpu.memory_space<vmem>>, %arg5: memref<64x32xbf16, #tpu.memory_space<vmem>>, %arg6: memref<64x32xf32, #tpu.memory_space<vmem>>) attributes {dimension_semantics = [#tpu.dimension_semantics<parallel>], iteration_bounds = array<i64: 2>, scalar_prefetch = 0 : i64, scratch_operands = 0 : i64, tpu.core_type = #tpu.core_type<tc>, window_params = [{transform_indices = @transform_0, window_bounds = array<i64: 64, 64>}, {transform_indices = @transform_1, window_bounds = array<i64: 64, 64>}, {pipeline_mode = #tpu.pipeline_mode<synchronous>, transform_indices = @transform_2, window_bounds = array<i64: 1, 64>}, {pipeline_mode = #tpu.pipeline_mode<synchronous>, transform_indices = @transform_3, window_bounds = array<i64: 1, 64>}, {pipeline_mode = #tpu.pipeline_mode<synchronous>, transform_indices = @transform_4, window_bounds = array<i64: 64, 32>}, {transform_indices = @transform_5, window_bounds = array<i64: 64, 32>}]} {
    %c0 = arith.constant 0 : index
    %c0_0 = arith.constant 0 : index
    %0 = vector.load %arg1[%c0, %c0_0] : memref<64x64xf32, #tpu.memory_space<vmem>>, vector<64x64xf32>
    %c0_1 = arith.constant 0 : index
    %c0_2 = arith.constant 0 : index
    %1 = vector.load %arg3[%c0_1, %c0_2] : memref<1x64xf32, #tpu.memory_space<vmem>>, vector<1x64xf32>
    %c0_3 = arith.constant 0 : index
    %c0_4 = arith.constant 0 : index
    %2 = vector.load %arg4[%c0_3, %c0_4] : memref<1x64xf32, #tpu.memory_space<vmem>>, vector<1x64xf32>
    %cst = arith.constant dense<0.000000e+00> : vector<64xf32>
    %3 = vector.multi_reduction <add>, %0, %cst [1] : vector<64x64xf32> to vector<64xf32>
    %4 = vector.shape_cast %3 : vector<64xf32> to vector<64x1xf32>
    %cst_5 = arith.constant 6.400000e+01 : f32
    %5 = vector.broadcast %cst_5 : f32 to vector<64x1xf32>
    %6 = arith.divf %4, %5 : vector<64x1xf32>
    %7 = vector.broadcast %6 : vector<64x1xf32> to vector<64x64xf32>
    %8 = arith.subf %0, %7 : vector<64x64xf32>
    %9 = arith.mulf %8, %8 : vector<64x64xf32>
    %cst_6 = arith.constant dense<0.000000e+00> : vector<64xf32>
    %10 = vector.multi_reduction <add>, %9, %cst_6 [1] : vector<64x64xf32> to vector<64xf32>
    %11 = vector.shape_cast %10 : vector<64xf32> to vector<64x1xf32>
    %cst_7 = arith.constant 6.400000e+01 : f32
    %12 = vector.broadcast %cst_7 : f32 to vector<64x1xf32>
    %13 = arith.divf %11, %12 : vector<64x1xf32>
    %cst_8 = arith.constant 9.99999974E-6 : f32
    %14 = vector.broadcast %cst_8 : f32 to vector<64x1xf32>
    %15 = arith.addf %13, %14 : vector<64x1xf32>
    %16 = math.rsqrt %15 : vector<64x1xf32>
    %17 = vector.broadcast %16 : vector<64x1xf32> to vector<64x64xf32>
    %18 = arith.mulf %8, %17 : vector<64x64xf32>
    %19 = vector.broadcast %1 : vector<1x64xf32> to vector<64x64xf32>
    %20 = arith.mulf %18, %19 : vector<64x64xf32>
    %21 = vector.broadcast %2 : vector<1x64xf32> to vector<64x64xf32>
    %22 = arith.addf %20, %21 : vector<64x64xf32>
    %c0_9 = arith.constant 0 : index
    %c0_10 = arith.constant 0 : index
    %23 = vector.load %arg2[%c0_9, %c0_10] : memref<64x64xf32, #tpu.memory_space<vmem>>, vector<64x64xf32>
    %24 = arith.negf %23 : vector<64x64xf32>
    %25 = math.exp %24 : vector<64x64xf32>
    %cst_11 = arith.constant 1.000000e+00 : f32
    %26 = vector.broadcast %cst_11 : f32 to vector<64x64xf32>
    %27 = arith.addf %26, %25 : vector<64x64xf32>
    %28 = arith.divf %26, %27 : vector<64x64xf32>
    %29 = arith.mulf %23, %28 : vector<64x64xf32>
    %30 = arith.mulf %22, %29 : vector<64x64xf32>
    %31 = arith.truncf %30 : vector<64x64xf32> to vector<64x64xbf16>
    %c0_12 = arith.constant 0 : index
    %c0_13 = arith.constant 0 : index
    %32 = vector.load %arg5[%c0_12, %c0_13] : memref<64x32xbf16, #tpu.memory_space<vmem>>, vector<64x32xbf16>
    %cst_14 = arith.constant dense<0.000000e+00> : vector<64x32xf32>
    %33 = tpu.matmul %31, %32, %cst_14 {dimension_numbers = #tpu.dot_dimension_numbers<[1], [0], [0], [1], [0, 0, 1, 1], [], []>} : vector<64x64xbf16>, vector<64x32xbf16>, vector<64x32xf32> -> vector<64x32xf32>
    %c0_15 = arith.constant 0 : index
    %c0_16 = arith.constant 0 : index
    %34 = vector.load %arg6[%c0_15, %c0_16] : memref<64x32xf32, #tpu.memory_space<vmem>>, vector<64x32xf32>
    tpu.vector_store %arg6[%c0_15, %c0_16], %33 {strides = array<i32>} : memref<64x32xf32, #tpu.memory_space<vmem>>, vector<64x32xf32>,
    return
  }
  func.func @transform_0(%arg0: i32) -> (i32, i32) {
    %c0_i32 = arith.constant 0 : i32
    %c0_i32_0 = arith.constant 0 : i32
    return %arg0, %c0_i32 : i32, i32
  }
  func.func @transform_1(%arg0: i32) -> (i32, i32) {
    %c0_i32 = arith.constant 0 : i32
    %c0_i32_0 = arith.constant 0 : i32
    return %arg0, %c0_i32 : i32, i32
  }
  func.func @transform_2(%arg0: i32) -> (i32, i32) {
    %c0_i32 = arith.constant 0 : i32
    %c0_i32_0 = arith.constant 0 : i32
    %c0_i32_1 = arith.constant 0 : i32
    return %c0_i32, %c0_i32_0 : i32, i32
  }
  func.func @transform_3(%arg0: i32) -> (i32, i32) {
    %c0_i32 = arith.constant 0 : i32
    %c0_i32_0 = arith.constant 0 : i32
    %c0_i32_1 = arith.constant 0 : i32
    return %c0_i32, %c0_i32_0 : i32, i32
  }
  func.func @transform_4(%arg0: i32) -> (i32, i32) {
    %c0_i32 = arith.constant 0 : i32
    %c0_i32_0 = arith.constant 0 : i32
    %c0_i32_1 = arith.constant 0 : i32
    return %c0_i32, %c0_i32_0 : i32, i32
  }
  func.func @transform_5(%arg0: i32) -> (i32, i32) {
    %c0_i32 = arith.constant 0 : i32
    %c0_i32_0 = arith.constant 0 : i32
    return %arg0, %c0_i32 : i32, i32
  }
}

module attributes {stable_mosaic.version = 11 : i64} {
  func.func @_res_ln_matmul_kernel(%arg0: i32, %arg1: memref<64x32xf32, #tpu.memory_space<vmem>>, %arg2: memref<1x32xf32, #tpu.memory_space<vmem>>, %arg3: memref<64x32xf32, #tpu.memory_space<vmem>>, %arg4: memref<1x32xf32, #tpu.memory_space<vmem>>, %arg5: memref<1x32xf32, #tpu.memory_space<vmem>>, %arg6: memref<32x128xbf16, #tpu.memory_space<vmem>>, %arg7: memref<64x32xf32, #tpu.memory_space<vmem>>, %arg8: memref<64x128xf32, #tpu.memory_space<vmem>>) attributes {dimension_semantics = [#tpu.dimension_semantics<parallel>], iteration_bounds = array<i64: 2>, scalar_prefetch = 0 : i64, scratch_operands = 0 : i64, tpu.core_type = #tpu.core_type<tc>, window_params = [{transform_indices = @transform_0, window_bounds = array<i64: 64, 32>}, {pipeline_mode = #tpu.pipeline_mode<synchronous>, transform_indices = @transform_1, window_bounds = array<i64: 1, 32>}, {transform_indices = @transform_2, window_bounds = array<i64: 64, 32>}, {pipeline_mode = #tpu.pipeline_mode<synchronous>, transform_indices = @transform_3, window_bounds = array<i64: 1, 32>}, {pipeline_mode = #tpu.pipeline_mode<synchronous>, transform_indices = @transform_4, window_bounds = array<i64: 1, 32>}, {pipeline_mode = #tpu.pipeline_mode<synchronous>, transform_indices = @transform_5, window_bounds = array<i64: 32, 128>}, {transform_indices = @transform_6, window_bounds = array<i64: 64, 32>}, {transform_indices = @transform_7, window_bounds = array<i64: 64, 128>}]} {
    %c0 = arith.constant 0 : index
    %c0_0 = arith.constant 0 : index
    %0 = vector.load %arg1[%c0, %c0_0] : memref<64x32xf32, #tpu.memory_space<vmem>>, vector<64x32xf32>
    %c0_1 = arith.constant 0 : index
    %c0_2 = arith.constant 0 : index
    %1 = vector.load %arg2[%c0_1, %c0_2] : memref<1x32xf32, #tpu.memory_space<vmem>>, vector<1x32xf32>
    %2 = vector.broadcast %1 : vector<1x32xf32> to vector<64x32xf32>
    %3 = arith.mulf %0, %2 : vector<64x32xf32>
    %c0_3 = arith.constant 0 : index
    %c0_4 = arith.constant 0 : index
    %4 = vector.load %arg3[%c0_3, %c0_4] : memref<64x32xf32, #tpu.memory_space<vmem>>, vector<64x32xf32>
    %5 = arith.addf %3, %4 : vector<64x32xf32>
    %c0_5 = arith.constant 0 : index
    %c0_6 = arith.constant 0 : index
    %6 = vector.load %arg7[%c0_5, %c0_6] : memref<64x32xf32, #tpu.memory_space<vmem>>, vector<64x32xf32>
    tpu.vector_store %arg7[%c0_5, %c0_6], %5 {strides = array<i32>} : memref<64x32xf32, #tpu.memory_space<vmem>>, vector<64x32xf32>,
    %c0_7 = arith.constant 0 : index
    %c0_8 = arith.constant 0 : index
    %7 = vector.load %arg4[%c0_7, %c0_8] : memref<1x32xf32, #tpu.memory_space<vmem>>, vector<1x32xf32>
    %c0_9 = arith.constant 0 : index
    %c0_10 = arith.constant 0 : index
    %8 = vector.load %arg5[%c0_9, %c0_10] : memref<1x32xf32, #tpu.memory_space<vmem>>, vector<1x32xf32>
    %cst = arith.constant dense<0.000000e+00> : vector<64xf32>
    %9 = vector.multi_reduction <add>, %5, %cst [1] : vector<64x32xf32> to vector<64xf32>
    %10 = vector.shape_cast %9 : vector<64xf32> to vector<64x1xf32>
    %cst_11 = arith.constant 3.200000e+01 : f32
    %11 = vector.broadcast %cst_11 : f32 to vector<64x1xf32>
    %12 = arith.divf %10, %11 : vector<64x1xf32>
    %13 = vector.broadcast %12 : vector<64x1xf32> to vector<64x32xf32>
    %14 = arith.subf %5, %13 : vector<64x32xf32>
    %15 = arith.mulf %14, %14 : vector<64x32xf32>
    %cst_12 = arith.constant dense<0.000000e+00> : vector<64xf32>
    %16 = vector.multi_reduction <add>, %15, %cst_12 [1] : vector<64x32xf32> to vector<64xf32>
    %17 = vector.shape_cast %16 : vector<64xf32> to vector<64x1xf32>
    %cst_13 = arith.constant 3.200000e+01 : f32
    %18 = vector.broadcast %cst_13 : f32 to vector<64x1xf32>
    %19 = arith.divf %17, %18 : vector<64x1xf32>
    %cst_14 = arith.constant 9.99999974E-6 : f32
    %20 = vector.broadcast %cst_14 : f32 to vector<64x1xf32>
    %21 = arith.addf %19, %20 : vector<64x1xf32>
    %22 = math.rsqrt %21 : vector<64x1xf32>
    %23 = vector.broadcast %22 : vector<64x1xf32> to vector<64x32xf32>
    %24 = arith.mulf %14, %23 : vector<64x32xf32>
    %25 = vector.broadcast %7 : vector<1x32xf32> to vector<64x32xf32>
    %26 = arith.mulf %24, %25 : vector<64x32xf32>
    %27 = vector.broadcast %8 : vector<1x32xf32> to vector<64x32xf32>
    %28 = arith.addf %26, %27 : vector<64x32xf32>
    %29 = arith.truncf %28 : vector<64x32xf32> to vector<64x32xbf16>
    %c0_15 = arith.constant 0 : index
    %c0_16 = arith.constant 0 : index
    %30 = vector.load %arg6[%c0_15, %c0_16] : memref<32x128xbf16, #tpu.memory_space<vmem>>, vector<32x128xbf16>
    %cst_17 = arith.constant dense<0.000000e+00> : vector<64x128xf32>
    %31 = tpu.matmul %29, %30, %cst_17 {dimension_numbers = #tpu.dot_dimension_numbers<[1], [0], [0], [1], [0, 0, 1, 1], [], []>} : vector<64x32xbf16>, vector<32x128xbf16>, vector<64x128xf32> -> vector<64x128xf32>
    %c0_18 = arith.constant 0 : index
    %c0_19 = arith.constant 0 : index
    %32 = vector.load %arg8[%c0_18, %c0_19] : memref<64x128xf32, #tpu.memory_space<vmem>>, vector<64x128xf32>
    tpu.vector_store %arg8[%c0_18, %c0_19], %31 {strides = array<i32>} : memref<64x128xf32, #tpu.memory_space<vmem>>, vector<64x128xf32>,
    return
  }
  func.func @transform_0(%arg0: i32) -> (i32, i32) {
    %c0_i32 = arith.constant 0 : i32
    %c0_i32_0 = arith.constant 0 : i32
    return %arg0, %c0_i32 : i32, i32
  }
  func.func @transform_1(%arg0: i32) -> (i32, i32) {
    %c0_i32 = arith.constant 0 : i32
    %c0_i32_0 = arith.constant 0 : i32
    %c0_i32_1 = arith.constant 0 : i32
    return %c0_i32, %c0_i32_0 : i32, i32
  }
  func.func @transform_2(%arg0: i32) -> (i32, i32) {
    %c0_i32 = arith.constant 0 : i32
    %c0_i32_0 = arith.constant 0 : i32
    return %arg0, %c0_i32 : i32, i32
  }
  func.func @transform_3(%arg0: i32) -> (i32, i32) {
    %c0_i32 = arith.constant 0 : i32
    %c0_i32_0 = arith.constant 0 : i32
    %c0_i32_1 = arith.constant 0 : i32
    return %c0_i32, %c0_i32_0 : i32, i32
  }
  func.func @transform_4(%arg0: i32) -> (i32, i32) {
    %c0_i32 = arith.constant 0 : i32
    %c0_i32_0 = arith.constant 0 : i32
    %c0_i32_1 = arith.constant 0 : i32
    return %c0_i32, %c0_i32_0 : i32, i32
  }
  func.func @transform_5(%arg0: i32) -> (i32, i32) {
    %c0_i32 = arith.constant 0 : i32
    %c0_i32_0 = arith.constant 0 : i32
    %c0_i32_1 = arith.constant 0 : i32
    return %c0_i32, %c0_i32_0 : i32, i32
  }
  func.func @transform_6(%arg0: i32) -> (i32, i32) {
    %c0_i32 = arith.constant 0 : i32
    %c0_i32_0 = arith.constant 0 : i32
    return %arg0, %c0_i32 : i32, i32
  }
  func.func @transform_7(%arg0: i32) -> (i32, i32) {
    %c0_i32 = arith.constant 0 : i32
    %c0_i32_0 = arith.constant 0 : i32
    return %arg0, %c0_i32 : i32, i32
  }
}

module attributes {stable_mosaic.version = 11 : i64} {
  func.func @_dwconv_kernel(%arg0: i32, %arg1: memref<1x12x12x128xf32, #tpu.memory_space<vmem>>, %arg2: memref<25x128xf32, #tpu.memory_space<vmem>>, %arg3: memref<1x128xf32, #tpu.memory_space<vmem>>, %arg4: memref<1x8x8x128xf32, #tpu.memory_space<vmem>>) attributes {dimension_semantics = [#tpu.dimension_semantics<parallel>], iteration_bounds = array<i64: 2>, scalar_prefetch = 0 : i64, scratch_operands = 0 : i64, tpu.core_type = #tpu.core_type<tc>, window_params = [{transform_indices = @transform_0, window_bounds = array<i64: 1, 12, 12, 128>}, {pipeline_mode = #tpu.pipeline_mode<synchronous>, transform_indices = @transform_1, window_bounds = array<i64: 25, 128>}, {pipeline_mode = #tpu.pipeline_mode<synchronous>, transform_indices = @transform_2, window_bounds = array<i64: 1, 128>}, {transform_indices = @transform_3, window_bounds = array<i64: 1, 8, 8, 128>}]} {
    %cst = arith.constant 0.000000e+00 : f32
    %0 = vector.broadcast %cst : f32 to vector<8x8x128xf32>
    %c0 = arith.constant 0 : index
    %c0_0 = arith.constant 0 : index
    %1 = vector.load %arg2[%c0, %c0_0] : memref<25x128xf32, #tpu.memory_space<vmem>>, vector<1x128xf32>
    %c0_1 = arith.constant 0 : index
    %c0_2 = arith.constant 0 : index
    %c0_3 = arith.constant 0 : index
    %c0_4 = arith.constant 0 : index
    %2 = vector.load %arg1[%c0_1, %c0_2, %c0_3, %c0_4] : memref<1x12x12x128xf32, #tpu.memory_space<vmem>>, vector<1x8x8x128xf32>
    %3 = vector.shape_cast %2 : vector<1x8x8x128xf32> to vector<8x8x128xf32>
    %4 = vector.shape_cast %1 : vector<1x128xf32> to vector<1x1x128xf32>
    %5 = vector.broadcast %4 : vector<1x1x128xf32> to vector<8x8x128xf32>
    %6 = arith.mulf %3, %5 : vector<8x8x128xf32>
    %7 = arith.addf %0, %6 : vector<8x8x128xf32>
    %c1 = arith.constant 1 : index
    %c0_5 = arith.constant 0 : index
    %8 = vector.load %arg2[%c1, %c0_5] : memref<25x128xf32, #tpu.memory_space<vmem>>, vector<1x128xf32>
    %c0_6 = arith.constant 0 : index
    %c0_7 = arith.constant 0 : index
    %c1_8 = arith.constant 1 : index
    %c0_9 = arith.constant 0 : index
    %9 = vector.load %arg1[%c0_6, %c0_7, %c1_8, %c0_9] : memref<1x12x12x128xf32, #tpu.memory_space<vmem>>, vector<1x8x8x128xf32>
    %10 = vector.shape_cast %9 : vector<1x8x8x128xf32> to vector<8x8x128xf32>
    %11 = vector.shape_cast %8 : vector<1x128xf32> to vector<1x1x128xf32>
    %12 = vector.broadcast %11 : vector<1x1x128xf32> to vector<8x8x128xf32>
    %13 = arith.mulf %10, %12 : vector<8x8x128xf32>
    %14 = arith.addf %7, %13 : vector<8x8x128xf32>
    %c2 = arith.constant 2 : index
    %c0_10 = arith.constant 0 : index
    %15 = vector.load %arg2[%c2, %c0_10] : memref<25x128xf32, #tpu.memory_space<vmem>>, vector<1x128xf32>
    %c0_11 = arith.constant 0 : index
    %c0_12 = arith.constant 0 : index
    %c2_13 = arith.constant 2 : index
    %c0_14 = arith.constant 0 : index
    %16 = vector.load %arg1[%c0_11, %c0_12, %c2_13, %c0_14] : memref<1x12x12x128xf32, #tpu.memory_space<vmem>>, vector<1x8x8x128xf32>
    %17 = vector.shape_cast %16 : vector<1x8x8x128xf32> to vector<8x8x128xf32>
    %18 = vector.shape_cast %15 : vector<1x128xf32> to vector<1x1x128xf32>
    %19 = vector.broadcast %18 : vector<1x1x128xf32> to vector<8x8x128xf32>
    %20 = arith.mulf %17, %19 : vector<8x8x128xf32>
    %21 = arith.addf %14, %20 : vector<8x8x128xf32>
    %c3 = arith.constant 3 : index
    %c0_15 = arith.constant 0 : index
    %22 = vector.load %arg2[%c3, %c0_15] : memref<25x128xf32, #tpu.memory_space<vmem>>, vector<1x128xf32>
    %c0_16 = arith.constant 0 : index
    %c0_17 = arith.constant 0 : index
    %c3_18 = arith.constant 3 : index
    %c0_19 = arith.constant 0 : index
    %23 = vector.load %arg1[%c0_16, %c0_17, %c3_18, %c0_19] : memref<1x12x12x128xf32, #tpu.memory_space<vmem>>, vector<1x8x8x128xf32>
    %24 = vector.shape_cast %23 : vector<1x8x8x128xf32> to vector<8x8x128xf32>
    %25 = vector.shape_cast %22 : vector<1x128xf32> to vector<1x1x128xf32>
    %26 = vector.broadcast %25 : vector<1x1x128xf32> to vector<8x8x128xf32>
    %27 = arith.mulf %24, %26 : vector<8x8x128xf32>
    %28 = arith.addf %21, %27 : vector<8x8x128xf32>
    %c4 = arith.constant 4 : index
    %c0_20 = arith.constant 0 : index
    %29 = vector.load %arg2[%c4, %c0_20] : memref<25x128xf32, #tpu.memory_space<vmem>>, vector<1x128xf32>
    %c0_21 = arith.constant 0 : index
    %c0_22 = arith.constant 0 : index
    %c4_23 = arith.constant 4 : index
    %c0_24 = arith.constant 0 : index
    %30 = vector.load %arg1[%c0_21, %c0_22, %c4_23, %c0_24] : memref<1x12x12x128xf32, #tpu.memory_space<vmem>>, vector<1x8x8x128xf32>
    %31 = vector.shape_cast %30 : vector<1x8x8x128xf32> to vector<8x8x128xf32>
    %32 = vector.shape_cast %29 : vector<1x128xf32> to vector<1x1x128xf32>
    %33 = vector.broadcast %32 : vector<1x1x128xf32> to vector<8x8x128xf32>
    %34 = arith.mulf %31, %33 : vector<8x8x128xf32>
    %35 = arith.addf %28, %34 : vector<8x8x128xf32>
    %c5 = arith.constant 5 : index
    %c0_25 = arith.constant 0 : index
    %36 = vector.load %arg2[%c5, %c0_25] : memref<25x128xf32, #tpu.memory_space<vmem>>, vector<1x128xf32>
    %c0_26 = arith.constant 0 : index
    %c1_27 = arith.constant 1 : index
    %c0_28 = arith.constant 0 : index
    %c0_29 = arith.constant 0 : index
    %37 = vector.load %arg1[%c0_26, %c1_27, %c0_28, %c0_29] : memref<1x12x12x128xf32, #tpu.memory_space<vmem>>, vector<1x8x8x128xf32>
    %38 = vector.shape_cast %37 : vector<1x8x8x128xf32> to vector<8x8x128xf32>
    %39 = vector.shape_cast %36 : vector<1x128xf32> to vector<1x1x128xf32>
    %40 = vector.broadcast %39 : vector<1x1x128xf32> to vector<8x8x128xf32>
    %41 = arith.mulf %38, %40 : vector<8x8x128xf32>
    %42 = arith.addf %35, %41 : vector<8x8x128xf32>
    %c6 = arith.constant 6 : index
    %c0_30 = arith.constant 0 : index
    %43 = vector.load %arg2[%c6, %c0_30] : memref<25x128xf32, #tpu.memory_space<vmem>>, vector<1x128xf32>
    %c0_31 = arith.constant 0 : index
    %c1_32 = arith.constant 1 : index
    %c1_33 = arith.constant 1 : index
    %c0_34 = arith.constant 0 : index
    %44 = vector.load %arg1[%c0_31, %c1_32, %c1_33, %c0_34] : memref<1x12x12x128xf32, #tpu.memory_space<vmem>>, vector<1x8x8x128xf32>
    %45 = vector.shape_cast %44 : vector<1x8x8x128xf32> to vector<8x8x128xf32>
    %46 = vector.shape_cast %43 : vector<1x128xf32> to vector<1x1x128xf32>
    %47 = vector.broadcast %46 : vector<1x1x128xf32> to vector<8x8x128xf32>
    %48 = arith.mulf %45, %47 : vector<8x8x128xf32>
    %49 = arith.addf %42, %48 : vector<8x8x128xf32>
    %c7 = arith.constant 7 : index
    %c0_35 = arith.constant 0 : index
    %50 = vector.load %arg2[%c7, %c0_35] : memref<25x128xf32, #tpu.memory_space<vmem>>, vector<1x128xf32>
    %c0_36 = arith.constant 0 : index
    %c1_37 = arith.constant 1 : index
    %c2_38 = arith.constant 2 : index
    %c0_39 = arith.constant 0 : index
    %51 = vector.load %arg1[%c0_36, %c1_37, %c2_38, %c0_39] : memref<1x12x12x128xf32, #tpu.memory_space<vmem>>, vector<1x8x8x128xf32>
    %52 = vector.shape_cast %51 : vector<1x8x8x128xf32> to vector<8x8x128xf32>
    %53 = vector.shape_cast %50 : vector<1x128xf32> to vector<1x1x128xf32>
    %54 = vector.broadcast %53 : vector<1x1x128xf32> to vector<8x8x128xf32>
    %55 = arith.mulf %52, %54 : vector<8x8x128xf32>
    %56 = arith.addf %49, %55 : vector<8x8x128xf32>
    %c8 = arith.constant 8 : index
    %c0_40 = arith.constant 0 : index
    %57 = vector.load %arg2[%c8, %c0_40] : memref<25x128xf32, #tpu.memory_space<vmem>>, vector<1x128xf32>
    %c0_41 = arith.constant 0 : index
    %c1_42 = arith.constant 1 : index
    %c3_43 = arith.constant 3 : index
    %c0_44 = arith.constant 0 : index
    %58 = vector.load %arg1[%c0_41, %c1_42, %c3_43, %c0_44] : memref<1x12x12x128xf32, #tpu.memory_space<vmem>>, vector<1x8x8x128xf32>
    %59 = vector.shape_cast %58 : vector<1x8x8x128xf32> to vector<8x8x128xf32>
    %60 = vector.shape_cast %57 : vector<1x128xf32> to vector<1x1x128xf32>
    %61 = vector.broadcast %60 : vector<1x1x128xf32> to vector<8x8x128xf32>
    %62 = arith.mulf %59, %61 : vector<8x8x128xf32>
    %63 = arith.addf %56, %62 : vector<8x8x128xf32>
    %c9 = arith.constant 9 : index
    %c0_45 = arith.constant 0 : index
    %64 = vector.load %arg2[%c9, %c0_45] : memref<25x128xf32, #tpu.memory_space<vmem>>, vector<1x128xf32>
    %c0_46 = arith.constant 0 : index
    %c1_47 = arith.constant 1 : index
    %c4_48 = arith.constant 4 : index
    %c0_49 = arith.constant 0 : index
    %65 = vector.load %arg1[%c0_46, %c1_47, %c4_48, %c0_49] : memref<1x12x12x128xf32, #tpu.memory_space<vmem>>, vector<1x8x8x128xf32>
    %66 = vector.shape_cast %65 : vector<1x8x8x128xf32> to vector<8x8x128xf32>
    %67 = vector.shape_cast %64 : vector<1x128xf32> to vector<1x1x128xf32>
    %68 = vector.broadcast %67 : vector<1x1x128xf32> to vector<8x8x128xf32>
    %69 = arith.mulf %66, %68 : vector<8x8x128xf32>
    %70 = arith.addf %63, %69 : vector<8x8x128xf32>
    %c10 = arith.constant 10 : index
    %c0_50 = arith.constant 0 : index
    %71 = vector.load %arg2[%c10, %c0_50] : memref<25x128xf32, #tpu.memory_space<vmem>>, vector<1x128xf32>
    %c0_51 = arith.constant 0 : index
    %c2_52 = arith.constant 2 : index
    %c0_53 = arith.constant 0 : index
    %c0_54 = arith.constant 0 : index
    %72 = vector.load %arg1[%c0_51, %c2_52, %c0_53, %c0_54] : memref<1x12x12x128xf32, #tpu.memory_space<vmem>>, vector<1x8x8x128xf32>
    %73 = vector.shape_cast %72 : vector<1x8x8x128xf32> to vector<8x8x128xf32>
    %74 = vector.shape_cast %71 : vector<1x128xf32> to vector<1x1x128xf32>
    %75 = vector.broadcast %74 : vector<1x1x128xf32> to vector<8x8x128xf32>
    %76 = arith.mulf %73, %75 : vector<8x8x128xf32>
    %77 = arith.addf %70, %76 : vector<8x8x128xf32>
    %c11 = arith.constant 11 : index
    %c0_55 = arith.constant 0 : index
    %78 = vector.load %arg2[%c11, %c0_55] : memref<25x128xf32, #tpu.memory_space<vmem>>, vector<1x128xf32>
    %c0_56 = arith.constant 0 : index
    %c2_57 = arith.constant 2 : index
    %c1_58 = arith.constant 1 : index
    %c0_59 = arith.constant 0 : index
    %79 = vector.load %arg1[%c0_56, %c2_57, %c1_58, %c0_59] : memref<1x12x12x128xf32, #tpu.memory_space<vmem>>, vector<1x8x8x128xf32>
    %80 = vector.shape_cast %79 : vector<1x8x8x128xf32> to vector<8x8x128xf32>
    %81 = vector.shape_cast %78 : vector<1x128xf32> to vector<1x1x128xf32>
    %82 = vector.broadcast %81 : vector<1x1x128xf32> to vector<8x8x128xf32>
    %83 = arith.mulf %80, %82 : vector<8x8x128xf32>
    %84 = arith.addf %77, %83 : vector<8x8x128xf32>
    %c12 = arith.constant 12 : index
    %c0_60 = arith.constant 0 : index
    %85 = vector.load %arg2[%c12, %c0_60] : memref<25x128xf32, #tpu.memory_space<vmem>>, vector<1x128xf32>
    %c0_61 = arith.constant 0 : index
    %c2_62 = arith.constant 2 : index
    %c2_63 = arith.constant 2 : index
    %c0_64 = arith.constant 0 : index
    %86 = vector.load %arg1[%c0_61, %c2_62, %c2_63, %c0_64] : memref<1x12x12x128xf32, #tpu.memory_space<vmem>>, vector<1x8x8x128xf32>
    %87 = vector.shape_cast %86 : vector<1x8x8x128xf32> to vector<8x8x128xf32>
    %88 = vector.shape_cast %85 : vector<1x128xf32> to vector<1x1x128xf32>
    %89 = vector.broadcast %88 : vector<1x1x128xf32> to vector<8x8x128xf32>
    %90 = arith.mulf %87, %89 : vector<8x8x128xf32>
    %91 = arith.addf %84, %90 : vector<8x8x128xf32>
    %c13 = arith.constant 13 : index
    %c0_65 = arith.constant 0 : index
    %92 = vector.load %arg2[%c13, %c0_65] : memref<25x128xf32, #tpu.memory_space<vmem>>, vector<1x128xf32>
    %c0_66 = arith.constant 0 : index
    %c2_67 = arith.constant 2 : index
    %c3_68 = arith.constant 3 : index
    %c0_69 = arith.constant 0 : index
    %93 = vector.load %arg1[%c0_66, %c2_67, %c3_68, %c0_69] : memref<1x12x12x128xf32, #tpu.memory_space<vmem>>, vector<1x8x8x128xf32>
    %94 = vector.shape_cast %93 : vector<1x8x8x128xf32> to vector<8x8x128xf32>
    %95 = vector.shape_cast %92 : vector<1x128xf32> to vector<1x1x128xf32>
    %96 = vector.broadcast %95 : vector<1x1x128xf32> to vector<8x8x128xf32>
    %97 = arith.mulf %94, %96 : vector<8x8x128xf32>
    %98 = arith.addf %91, %97 : vector<8x8x128xf32>
    %c14 = arith.constant 14 : index
    %c0_70 = arith.constant 0 : index
    %99 = vector.load %arg2[%c14, %c0_70] : memref<25x128xf32, #tpu.memory_space<vmem>>, vector<1x128xf32>
    %c0_71 = arith.constant 0 : index
    %c2_72 = arith.constant 2 : index
    %c4_73 = arith.constant 4 : index
    %c0_74 = arith.constant 0 : index
    %100 = vector.load %arg1[%c0_71, %c2_72, %c4_73, %c0_74] : memref<1x12x12x128xf32, #tpu.memory_space<vmem>>, vector<1x8x8x128xf32>
    %101 = vector.shape_cast %100 : vector<1x8x8x128xf32> to vector<8x8x128xf32>
    %102 = vector.shape_cast %99 : vector<1x128xf32> to vector<1x1x128xf32>
    %103 = vector.broadcast %102 : vector<1x1x128xf32> to vector<8x8x128xf32>
    %104 = arith.mulf %101, %103 : vector<8x8x128xf32>
    %105 = arith.addf %98, %104 : vector<8x8x128xf32>
    %c15 = arith.constant 15 : index
    %c0_75 = arith.constant 0 : index
    %106 = vector.load %arg2[%c15, %c0_75] : memref<25x128xf32, #tpu.memory_space<vmem>>, vector<1x128xf32>
    %c0_76 = arith.constant 0 : index
    %c3_77 = arith.constant 3 : index
    %c0_78 = arith.constant 0 : index
    %c0_79 = arith.constant 0 : index
    %107 = vector.load %arg1[%c0_76, %c3_77, %c0_78, %c0_79] : memref<1x12x12x128xf32, #tpu.memory_space<vmem>>, vector<1x8x8x128xf32>
    %108 = vector.shape_cast %107 : vector<1x8x8x128xf32> to vector<8x8x128xf32>
    %109 = vector.shape_cast %106 : vector<1x128xf32> to vector<1x1x128xf32>
    %110 = vector.broadcast %109 : vector<1x1x128xf32> to vector<8x8x128xf32>
    %111 = arith.mulf %108, %110 : vector<8x8x128xf32>
    %112 = arith.addf %105, %111 : vector<8x8x128xf32>
    %c16 = arith.constant 16 : index
    %c0_80 = arith.constant 0 : index
    %113 = vector.load %arg2[%c16, %c0_80] : memref<25x128xf32, #tpu.memory_space<vmem>>, vector<1x128xf32>
    %c0_81 = arith.constant 0 : index
    %c3_82 = arith.constant 3 : index
    %c1_83 = arith.constant 1 : index
    %c0_84 = arith.constant 0 : index
    %114 = vector.load %arg1[%c0_81, %c3_82, %c1_83, %c0_84] : memref<1x12x12x128xf32, #tpu.memory_space<vmem>>, vector<1x8x8x128xf32>
    %115 = vector.shape_cast %114 : vector<1x8x8x128xf32> to vector<8x8x128xf32>
    %116 = vector.shape_cast %113 : vector<1x128xf32> to vector<1x1x128xf32>
    %117 = vector.broadcast %116 : vector<1x1x128xf32> to vector<8x8x128xf32>
    %118 = arith.mulf %115, %117 : vector<8x8x128xf32>
    %119 = arith.addf %112, %118 : vector<8x8x128xf32>
    %c17 = arith.constant 17 : index
    %c0_85 = arith.constant 0 : index
    %120 = vector.load %arg2[%c17, %c0_85] : memref<25x128xf32, #tpu.memory_space<vmem>>, vector<1x128xf32>
    %c0_86 = arith.constant 0 : index
    %c3_87 = arith.constant 3 : index
    %c2_88 = arith.constant 2 : index
    %c0_89 = arith.constant 0 : index
    %121 = vector.load %arg1[%c0_86, %c3_87, %c2_88, %c0_89] : memref<1x12x12x128xf32, #tpu.memory_space<vmem>>, vector<1x8x8x128xf32>
    %122 = vector.shape_cast %121 : vector<1x8x8x128xf32> to vector<8x8x128xf32>
    %123 = vector.shape_cast %120 : vector<1x128xf32> to vector<1x1x128xf32>
    %124 = vector.broadcast %123 : vector<1x1x128xf32> to vector<8x8x128xf32>
    %125 = arith.mulf %122, %124 : vector<8x8x128xf32>
    %126 = arith.addf %119, %125 : vector<8x8x128xf32>
    %c18 = arith.constant 18 : index
    %c0_90 = arith.constant 0 : index
    %127 = vector.load %arg2[%c18, %c0_90] : memref<25x128xf32, #tpu.memory_space<vmem>>, vector<1x128xf32>
    %c0_91 = arith.constant 0 : index
    %c3_92 = arith.constant 3 : index
    %c3_93 = arith.constant 3 : index
    %c0_94 = arith.constant 0 : index
    %128 = vector.load %arg1[%c0_91, %c3_92, %c3_93, %c0_94] : memref<1x12x12x128xf32, #tpu.memory_space<vmem>>, vector<1x8x8x128xf32>
    %129 = vector.shape_cast %128 : vector<1x8x8x128xf32> to vector<8x8x128xf32>
    %130 = vector.shape_cast %127 : vector<1x128xf32> to vector<1x1x128xf32>
    %131 = vector.broadcast %130 : vector<1x1x128xf32> to vector<8x8x128xf32>
    %132 = arith.mulf %129, %131 : vector<8x8x128xf32>
    %133 = arith.addf %126, %132 : vector<8x8x128xf32>
    %c19 = arith.constant 19 : index
    %c0_95 = arith.constant 0 : index
    %134 = vector.load %arg2[%c19, %c0_95] : memref<25x128xf32, #tpu.memory_space<vmem>>, vector<1x128xf32>
    %c0_96 = arith.constant 0 : index
    %c3_97 = arith.constant 3 : index
    %c4_98 = arith.constant 4 : index
    %c0_99 = arith.constant 0 : index
    %135 = vector.load %arg1[%c0_96, %c3_97, %c4_98, %c0_99] : memref<1x12x12x128xf32, #tpu.memory_space<vmem>>, vector<1x8x8x128xf32>
    %136 = vector.shape_cast %135 : vector<1x8x8x128xf32> to vector<8x8x128xf32>
    %137 = vector.shape_cast %134 : vector<1x128xf32> to vector<1x1x128xf32>
    %138 = vector.broadcast %137 : vector<1x1x128xf32> to vector<8x8x128xf32>
    %139 = arith.mulf %136, %138 : vector<8x8x128xf32>
    %140 = arith.addf %133, %139 : vector<8x8x128xf32>
    %c20 = arith.constant 20 : index
    %c0_100 = arith.constant 0 : index
    %141 = vector.load %arg2[%c20, %c0_100] : memref<25x128xf32, #tpu.memory_space<vmem>>, vector<1x128xf32>
    %c0_101 = arith.constant 0 : index
    %c4_102 = arith.constant 4 : index
    %c0_103 = arith.constant 0 : index
    %c0_104 = arith.constant 0 : index
    %142 = vector.load %arg1[%c0_101, %c4_102, %c0_103, %c0_104] : memref<1x12x12x128xf32, #tpu.memory_space<vmem>>, vector<1x8x8x128xf32>
    %143 = vector.shape_cast %142 : vector<1x8x8x128xf32> to vector<8x8x128xf32>
    %144 = vector.shape_cast %141 : vector<1x128xf32> to vector<1x1x128xf32>
    %145 = vector.broadcast %144 : vector<1x1x128xf32> to vector<8x8x128xf32>
    %146 = arith.mulf %143, %145 : vector<8x8x128xf32>
    %147 = arith.addf %140, %146 : vector<8x8x128xf32>
    %c21 = arith.constant 21 : index
    %c0_105 = arith.constant 0 : index
    %148 = vector.load %arg2[%c21, %c0_105] : memref<25x128xf32, #tpu.memory_space<vmem>>, vector<1x128xf32>
    %c0_106 = arith.constant 0 : index
    %c4_107 = arith.constant 4 : index
    %c1_108 = arith.constant 1 : index
    %c0_109 = arith.constant 0 : index
    %149 = vector.load %arg1[%c0_106, %c4_107, %c1_108, %c0_109] : memref<1x12x12x128xf32, #tpu.memory_space<vmem>>, vector<1x8x8x128xf32>
    %150 = vector.shape_cast %149 : vector<1x8x8x128xf32> to vector<8x8x128xf32>
    %151 = vector.shape_cast %148 : vector<1x128xf32> to vector<1x1x128xf32>
    %152 = vector.broadcast %151 : vector<1x1x128xf32> to vector<8x8x128xf32>
    %153 = arith.mulf %150, %152 : vector<8x8x128xf32>
    %154 = arith.addf %147, %153 : vector<8x8x128xf32>
    %c22 = arith.constant 22 : index
    %c0_110 = arith.constant 0 : index
    %155 = vector.load %arg2[%c22, %c0_110] : memref<25x128xf32, #tpu.memory_space<vmem>>, vector<1x128xf32>
    %c0_111 = arith.constant 0 : index
    %c4_112 = arith.constant 4 : index
    %c2_113 = arith.constant 2 : index
    %c0_114 = arith.constant 0 : index
    %156 = vector.load %arg1[%c0_111, %c4_112, %c2_113, %c0_114] : memref<1x12x12x128xf32, #tpu.memory_space<vmem>>, vector<1x8x8x128xf32>
    %157 = vector.shape_cast %156 : vector<1x8x8x128xf32> to vector<8x8x128xf32>
    %158 = vector.shape_cast %155 : vector<1x128xf32> to vector<1x1x128xf32>
    %159 = vector.broadcast %158 : vector<1x1x128xf32> to vector<8x8x128xf32>
    %160 = arith.mulf %157, %159 : vector<8x8x128xf32>
    %161 = arith.addf %154, %160 : vector<8x8x128xf32>
    %c23 = arith.constant 23 : index
    %c0_115 = arith.constant 0 : index
    %162 = vector.load %arg2[%c23, %c0_115] : memref<25x128xf32, #tpu.memory_space<vmem>>, vector<1x128xf32>
    %c0_116 = arith.constant 0 : index
    %c4_117 = arith.constant 4 : index
    %c3_118 = arith.constant 3 : index
    %c0_119 = arith.constant 0 : index
    %163 = vector.load %arg1[%c0_116, %c4_117, %c3_118, %c0_119] : memref<1x12x12x128xf32, #tpu.memory_space<vmem>>, vector<1x8x8x128xf32>
    %164 = vector.shape_cast %163 : vector<1x8x8x128xf32> to vector<8x8x128xf32>
    %165 = vector.shape_cast %162 : vector<1x128xf32> to vector<1x1x128xf32>
    %166 = vector.broadcast %165 : vector<1x1x128xf32> to vector<8x8x128xf32>
    %167 = arith.mulf %164, %166 : vector<8x8x128xf32>
    %168 = arith.addf %161, %167 : vector<8x8x128xf32>
    %c24 = arith.constant 24 : index
    %c0_120 = arith.constant 0 : index
    %169 = vector.load %arg2[%c24, %c0_120] : memref<25x128xf32, #tpu.memory_space<vmem>>, vector<1x128xf32>
    %c0_121 = arith.constant 0 : index
    %c4_122 = arith.constant 4 : index
    %c4_123 = arith.constant 4 : index
    %c0_124 = arith.constant 0 : index
    %170 = vector.load %arg1[%c0_121, %c4_122, %c4_123, %c0_124] : memref<1x12x12x128xf32, #tpu.memory_space<vmem>>, vector<1x8x8x128xf32>
    %171 = vector.shape_cast %170 : vector<1x8x8x128xf32> to vector<8x8x128xf32>
    %172 = vector.shape_cast %169 : vector<1x128xf32> to vector<1x1x128xf32>
    %173 = vector.broadcast %172 : vector<1x1x128xf32> to vector<8x8x128xf32>
    %174 = arith.mulf %171, %173 : vector<8x8x128xf32>
    %175 = arith.addf %168, %174 : vector<8x8x128xf32>
    %c0_125 = arith.constant 0 : index
    %c0_126 = arith.constant 0 : index
    %176 = vector.load %arg3[%c0_125, %c0_126] : memref<1x128xf32, #tpu.memory_space<vmem>>, vector<1x128xf32>
    %177 = vector.shape_cast %176 : vector<1x128xf32> to vector<1x1x128xf32>
    %178 = vector.broadcast %177 : vector<1x1x128xf32> to vector<8x8x128xf32>
    %179 = arith.addf %175, %178 : vector<8x8x128xf32>
    %c0_127 = arith.constant 0 : index
    %c0_128 = arith.constant 0 : index
    %c0_129 = arith.constant 0 : index
    %c0_130 = arith.constant 0 : index
    %180 = vector.load %arg4[%c0_127, %c0_128, %c0_129, %c0_130] : memref<1x8x8x128xf32, #tpu.memory_space<vmem>>, vector<1x8x8x128xf32>
    %181 = vector.shape_cast %180 : vector<1x8x8x128xf32> to vector<8x8x128xf32>
    %182 = vector.shape_cast %179 : vector<8x8x128xf32> to vector<1x8x8x128xf32>
    tpu.vector_store %arg4[%c0_127, %c0_128, %c0_129, %c0_130], %182 {strides = array<i32>} : memref<1x8x8x128xf32, #tpu.memory_space<vmem>>, vector<1x8x8x128xf32>,
    return
  }
  func.func @transform_0(%arg0: i32) -> (i32, i32, i32, i32) {
    %c0_i32 = arith.constant 0 : i32
    %c0_i32_0 = arith.constant 0 : i32
    %c0_i32_1 = arith.constant 0 : i32
    %c0_i32_2 = arith.constant 0 : i32
    return %arg0, %c0_i32, %c0_i32_0, %c0_i32_1 : i32, i32, i32, i32
  }
  func.func @transform_1(%arg0: i32) -> (i32, i32) {
    %c0_i32 = arith.constant 0 : i32
    %c0_i32_0 = arith.constant 0 : i32
    %c0_i32_1 = arith.constant 0 : i32
    return %c0_i32, %c0_i32_0 : i32, i32
  }
  func.func @transform_2(%arg0: i32) -> (i32, i32) {
    %c0_i32 = arith.constant 0 : i32
    %c0_i32_0 = arith.constant 0 : i32
    %c0_i32_1 = arith.constant 0 : i32
    return %c0_i32, %c0_i32_0 : i32, i32
  }
  func.func @transform_3(%arg0: i32) -> (i32, i32, i32, i32) {
    %c0_i32 = arith.constant 0 : i32
    %c0_i32_0 = arith.constant 0 : i32
    %c0_i32_1 = arith.constant 0 : i32
    %c0_i32_2 = arith.constant 0 : i32
    return %arg0, %c0_i32, %c0_i32_0, %c0_i32_1 : i32, i32, i32, i32
  }
}

module attributes {stable_mosaic.version = 11 : i64} {
  func.func @_projout_ca_res_kernel(%arg0: i32, %arg1: memref<1x64x64xf32, #tpu.memory_space<vmem>>, %arg2: memref<64x32xbf16, #tpu.memory_space<vmem>>, %arg3: memref<1x32xf32, #tpu.memory_space<vmem>>, %arg4: memref<1x1xf32, #tpu.memory_space<vmem>>, %arg5: memref<1x32xf32, #tpu.memory_space<vmem>>, %arg6: memref<1x32xf32, #tpu.memory_space<vmem>>, %arg7: memref<1x64x32xf32, #tpu.memory_space<vmem>>, %arg8: memref<1x32xf32, #tpu.memory_space<vmem>>, %arg9: memref<1x64x32xf32, #tpu.memory_space<vmem>>) attributes {dimension_semantics = [#tpu.dimension_semantics<parallel>], iteration_bounds = array<i64: 2>, scalar_prefetch = 0 : i64, scratch_operands = 0 : i64, tpu.core_type = #tpu.core_type<tc>, window_params = [{transform_indices = @transform_0, window_bounds = array<i64: 1, 64, 64>}, {pipeline_mode = #tpu.pipeline_mode<synchronous>, transform_indices = @transform_1, window_bounds = array<i64: 64, 32>}, {pipeline_mode = #tpu.pipeline_mode<synchronous>, transform_indices = @transform_2, window_bounds = array<i64: 1, 32>}, {pipeline_mode = #tpu.pipeline_mode<synchronous>, transform_indices = @transform_3, window_bounds = array<i64: 1, 1>}, {pipeline_mode = #tpu.pipeline_mode<synchronous>, transform_indices = @transform_4, window_bounds = array<i64: 1, 32>}, {pipeline_mode = #tpu.pipeline_mode<synchronous>, transform_indices = @transform_5, window_bounds = array<i64: 1, 32>}, {transform_indices = @transform_6, window_bounds = array<i64: 1, 64, 32>}, {pipeline_mode = #tpu.pipeline_mode<synchronous>, transform_indices = @transform_7, window_bounds = array<i64: 1, 32>}, {transform_indices = @transform_8, window_bounds = array<i64: 1, 64, 32>}]} {
    %c0 = arith.constant 0 : index
    %c0_0 = arith.constant 0 : index
    %c0_1 = arith.constant 0 : index
    %0 = vector.load %arg1[%c0, %c0_0, %c0_1] : memref<1x64x64xf32, #tpu.memory_space<vmem>>, vector<1x64x64xf32>
    %1 = vector.shape_cast %0 : vector<1x64x64xf32> to vector<64x64xf32>
    %2 = arith.truncf %1 : vector<64x64xf32> to vector<64x64xbf16>
    %c0_2 = arith.constant 0 : index
    %c0_3 = arith.constant 0 : index
    %3 = vector.load %arg2[%c0_2, %c0_3] : memref<64x32xbf16, #tpu.memory_space<vmem>>, vector<64x32xbf16>
    %cst = arith.constant dense<0.000000e+00> : vector<64x32xf32>
    %4 = tpu.matmul %2, %3, %cst {dimension_numbers = #tpu.dot_dimension_numbers<[1], [0], [0], [1], [0, 0, 1, 1], [], []>} : vector<64x64xbf16>, vector<64x32xbf16>, vector<64x32xf32> -> vector<64x32xf32>
    %cst_4 = arith.constant dense<0.000000e+00> : vector<32xf32>
    %5 = vector.multi_reduction <add>, %4, %cst_4 [0] : vector<64x32xf32> to vector<32xf32>
    %6 = vector.shape_cast %5 : vector<32xf32> to vector<1x32xf32>
    %cst_5 = arith.constant 6.400000e+01 : f32
    %7 = vector.broadcast %cst_5 : f32 to vector<1x32xf32>
    %8 = arith.divf %6, %7 : vector<1x32xf32>
    %c0_6 = arith.constant 0 : index
    %c0_7 = arith.constant 0 : index
    %9 = vector.load %arg3[%c0_6, %c0_7] : memref<1x32xf32, #tpu.memory_space<vmem>>, vector<1x32xf32>
    %10 = arith.mulf %8, %9 : vector<1x32xf32>
    %cst_8 = arith.constant dense<0.000000e+00> : vector<1xf32>
    %11 = vector.multi_reduction <add>, %10, %cst_8 [1] : vector<1x32xf32> to vector<1xf32>
    %12 = vector.shape_cast %11 : vector<1xf32> to vector<1x1xf32>
    %c0_9 = arith.constant 0 : index
    %c0_10 = arith.constant 0 : index
    %13 = vector.load %arg4[%c0_9, %c0_10] : memref<1x1xf32, #tpu.memory_space<vmem>>, vector<1x1xf32>
    %14 = arith.addf %12, %13 : vector<1x1xf32>
    %cst_11 = arith.constant 0.000000e+00 : f32
    %15 = vector.broadcast %cst_11 : f32 to vector<1x1xf32>
    %16 = arith.maximumf %14, %15 : vector<1x1xf32>
    %c0_12 = arith.constant 0 : index
    %c0_13 = arith.constant 0 : index
    %17 = vector.load %arg5[%c0_12, %c0_13] : memref<1x32xf32, #tpu.memory_space<vmem>>, vector<1x32xf32>
    %18 = vector.broadcast %16 : vector<1x1xf32> to vector<1x32xf32>
    %19 = arith.mulf %18, %17 : vector<1x32xf32>
    %cst_14 = arith.constant dense<0.000000e+00> : vector<32xf32>
    %20 = vector.multi_reduction <add>, %19, %cst_14 [0] : vector<1x32xf32> to vector<32xf32>
    %21 = vector.shape_cast %20 : vector<32xf32> to vector<1x32xf32>
    %c0_15 = arith.constant 0 : index
    %c0_16 = arith.constant 0 : index
    %22 = vector.load %arg6[%c0_15, %c0_16] : memref<1x32xf32, #tpu.memory_space<vmem>>, vector<1x32xf32>
    %23 = arith.addf %21, %22 : vector<1x32xf32>
    %24 = arith.negf %23 : vector<1x32xf32>
    %25 = math.exp %24 : vector<1x32xf32>
    %cst_17 = arith.constant 1.000000e+00 : f32
    %26 = vector.broadcast %cst_17 : f32 to vector<1x32xf32>
    %27 = arith.addf %26, %25 : vector<1x32xf32>
    %28 = arith.divf %26, %27 : vector<1x32xf32>
    %c0_18 = arith.constant 0 : index
    %c0_19 = arith.constant 0 : index
    %c0_20 = arith.constant 0 : index
    %29 = vector.load %arg7[%c0_18, %c0_19, %c0_20] : memref<1x64x32xf32, #tpu.memory_space<vmem>>, vector<1x64x32xf32>
    %30 = vector.shape_cast %29 : vector<1x64x32xf32> to vector<64x32xf32>
    %c0_21 = arith.constant 0 : index
    %c0_22 = arith.constant 0 : index
    %31 = vector.load %arg8[%c0_21, %c0_22] : memref<1x32xf32, #tpu.memory_space<vmem>>, vector<1x32xf32>
    %32 = vector.broadcast %31 : vector<1x32xf32> to vector<64x32xf32>
    %33 = arith.mulf %30, %32 : vector<64x32xf32>
    %34 = vector.broadcast %28 : vector<1x32xf32> to vector<64x32xf32>
    %35 = arith.mulf %4, %34 : vector<64x32xf32>
    %36 = arith.addf %33, %35 : vector<64x32xf32>
    %c0_23 = arith.constant 0 : index
    %c0_24 = arith.constant 0 : index
    %c0_25 = arith.constant 0 : index
    %37 = vector.load %arg9[%c0_23, %c0_24, %c0_25] : memref<1x64x32xf32, #tpu.memory_space<vmem>>, vector<1x64x32xf32>
    %38 = vector.shape_cast %37 : vector<1x64x32xf32> to vector<64x32xf32>
    %39 = vector.shape_cast %36 : vector<64x32xf32> to vector<1x64x32xf32>
    tpu.vector_store %arg9[%c0_23, %c0_24, %c0_25], %39 {strides = array<i32>} : memref<1x64x32xf32, #tpu.memory_space<vmem>>, vector<1x64x32xf32>,
    return
  }
  func.func @transform_0(%arg0: i32) -> (i32, i32, i32) {
    %c0_i32 = arith.constant 0 : i32
    %c0_i32_0 = arith.constant 0 : i32
    %c0_i32_1 = arith.constant 0 : i32
    return %arg0, %c0_i32, %c0_i32_0 : i32, i32, i32
  }
  func.func @transform_1(%arg0: i32) -> (i32, i32) {
    %c0_i32 = arith.constant 0 : i32
    %c0_i32_0 = arith.constant 0 : i32
    %c0_i32_1 = arith.constant 0 : i32
    return %c0_i32, %c0_i32_0 : i32, i32
  }
  func.func @transform_2(%arg0: i32) -> (i32, i32) {
    %c0_i32 = arith.constant 0 : i32
    %c0_i32_0 = arith.constant 0 : i32
    %c0_i32_1 = arith.constant 0 : i32
    return %c0_i32, %c0_i32_0 : i32, i32
  }
  func.func @transform_3(%arg0: i32) -> (i32, i32) {
    %c0_i32 = arith.constant 0 : i32
    %c0_i32_0 = arith.constant 0 : i32
    %c0_i32_1 = arith.constant 0 : i32
    return %c0_i32, %c0_i32_0 : i32, i32
  }
  func.func @transform_4(%arg0: i32) -> (i32, i32) {
    %c0_i32 = arith.constant 0 : i32
    %c0_i32_0 = arith.constant 0 : i32
    %c0_i32_1 = arith.constant 0 : i32
    return %c0_i32, %c0_i32_0 : i32, i32
  }
  func.func @transform_5(%arg0: i32) -> (i32, i32) {
    %c0_i32 = arith.constant 0 : i32
    %c0_i32_0 = arith.constant 0 : i32
    %c0_i32_1 = arith.constant 0 : i32
    return %c0_i32, %c0_i32_0 : i32, i32
  }
  func.func @transform_6(%arg0: i32) -> (i32, i32, i32) {
    %c0_i32 = arith.constant 0 : i32
    %c0_i32_0 = arith.constant 0 : i32
    %c0_i32_1 = arith.constant 0 : i32
    return %arg0, %c0_i32, %c0_i32_0 : i32, i32, i32
  }
  func.func @transform_7(%arg0: i32) -> (i32, i32) {
    %c0_i32 = arith.constant 0 : i32
    %c0_i32_0 = arith.constant 0 : i32
    %c0_i32_1 = arith.constant 0 : i32
    return %c0_i32, %c0_i32_0 : i32, i32
  }
  func.func @transform_8(%arg0: i32) -> (i32, i32, i32) {
    %c0_i32 = arith.constant 0 : i32
    %c0_i32_0 = arith.constant 0 : i32
    %c0_i32_1 = arith.constant 0 : i32
    return %arg0, %c0_i32, %c0_i32_0 : i32, i32, i32
  }
}

</mosaic_0001>

<llo_original>
// kernel: _lambda_.8
$region0: #{_lambda_.8}
  #allocation0 [shape = 'u32[]', space=smem, size = 0x4, offset = 0x4, fixed_abs, tag = 'smem constant byte address 0x4 - core index']
  #allocation1 [shape = 'u32[144,128]{1,0:T(1,128)}', space=vmem, size = 0x12000, scoped, tag = 'internal scratch']
  %s0 = inlined_call_operand.vmem [shape: f32[128,32], index: 0, kind: input, shape index: {}]
  %s1 = inlined_call_operand.vmem [shape: f32[1,32], index: 1, kind: input, shape index: {}]
  %s2 = inlined_call_operand.vmem [shape: f32[1,32], index: 2, kind: input, shape index: {}]
  %s3 = inlined_call_operand.vmem [shape: bf16[32,128], index: 3, kind: input, shape index: {}]
  %s4 = inlined_call_operand.vmem [shape: f32[128,128], index: 4, kind: output, shape index: {}]
  %s5 = sld [smem:[#allocation0]]
  $region49: #{_lambda_.8} parent=0
    _
  %s7 = ssub.s32 1, %s5
  %s8 = scalar_select 0, %s7, %s5
  loop: start=0, step=1, limit=4
  $region2: #{_lambda_.8} parent=0 // loop_pre_header
    _
  $region3: #{_lambda_.8} parent=0 // loop_header
    %s10 = sphi 0, %s14
    %p11 = scmp.ge.s32.totalorder %s10, 4
    %s20 = sphi 0, %s22
    %s23 = sphi 0, %s20
    %s24 = sphi 0, %s23
    %s40 = sphi 0, %s24
    %s44 = sphi 0, %s44
    %s46 = sphi 0, %s44
    %s47 = sphi 0, %s46
    %s61 = sphi 0, %s47
    %s65 = sphi 0, %s65
    %s67 = sphi 0, %s65
    %s68 = sphi 0, %s67
    %s82 = sphi 0, %s68
    %s86 = sphi 0, %s86
    %s88 = sphi 0, %s86
    %s89 = sphi 0, %s88
    %s103 = sphi 0, %s89
    %s109 = sphi 0, %s111
    %s112 = sphi 0, %s109
    %s113 = sphi 0, %s112
    %s129 = sphi 0, %s113
  $region4: #{_lambda_.8} parent=0 // loop_header_branch
    %13 = sbr.rel (%p11) target = $region8
  $region5: #{_lambda_.8} parent=0 // loop_body
    %s15 = ssub.s32 %s10, 1
    %s16 = ssub.s32 %s10, 2
    %s17 = sadd.s32 %s10, 1
    %s18 = ssub.s32 %s10, %s17
    %p19 = scmp.eq.s32.totalorder %s18, 0
    %s21 = sadd.s32 %s20, 1
    %s22 = scalar_select %p19, %s20, %s21
    %p25 = pneg %p19
    %p26 = scmp.eq.s32.totalorder %s10, 1
    %p27 = por %p25, %p26
    %p28 = scmp.ne.s32.totalorder %s20, %s23
    %p29 = scmp.eq.s32.totalorder %s10, 0
    %p30 = por %p28, %p29
    %p31 = scmp.ne.s32.totalorder %s20, %s23
    %p32 = scmp.eq.s32.totalorder %s15, 1
    %p33 = por %p31, %p32
    %p34 = scmp.ne.s32.totalorder %s23, %s24
    %p35 = scmp.eq.s32.totalorder %s15, 0
    %p36 = por %p34, %p35
    %p37 = scmp.ne.s32.totalorder %s23, %s24
    %p38 = scmp.eq.s32.totalorder %s16, 1
    %p39 = por %p37, %p38
    %p41 = scmp.ne.s32.totalorder %s24, %s40
    %p42 = scmp.eq.s32.totalorder %s16, 0
    %p43 = por %p41, %p42
    %s45 = sadd.s32 %s44, 1
    %p48 = scmp.eq.s32.totalorder %s10, 1
    %p49 = scmp.ne.s32.totalorder %s44, %s46
    %p50 = scmp.eq.s32.totalorder %s10, 0
    %p51 = por %p49, %p50
    %p52 = scmp.ne.s32.totalorder %s44, %s46
    %p53 = scmp.eq.s32.totalorder %s15, 1
    %p54 = por %p52, %p53
    %p55 = scmp.ne.s32.totalorder %s46, %s47
    %p56 = scmp.eq.s32.totalorder %s15, 0
    %p57 = por %p55, %p56
    %p58 = scmp.ne.s32.totalorder %s46, %s47
    %p59 = scmp.eq.s32.totalorder %s16, 1
    %p60 = por %p58, %p59
    %p62 = scmp.ne.s32.totalorder %s47, %s61
    %p63 = scmp.eq.s32.totalorder %s16, 0
    %p64 = por %p62, %p63
    %s66 = sadd.s32 %s65, 1
    %p69 = scmp.eq.s32.totalorder %s10, 1
    %p70 = scmp.ne.s32.totalorder %s65, %s67
    %p71 = scmp.eq.s32.totalorder %s10, 0
    %p72 = por %p70, %p71
    %p73 = scmp.ne.s32.totalorder %s65, %s67
    %p74 = scmp.eq.s32.totalorder %s15, 1
    %p75 = por %p73, %p74
    %p76 = scmp.ne.s32.totalorder %s67, %s68
    %p77 = scmp.eq.s32.totalorder %s15, 0
    %p78 = por %p76, %p77
    %p79 = scmp.ne.s32.totalorder %s67, %s68
    %p80 = scmp.eq.s32.totalorder %s16, 1
    %p81 = por %p79, %p80
    %p83 = scmp.ne.s32.totalorder %s68, %s82
    %p84 = scmp.eq.s32.totalorder %s16, 0
    %p85 = por %p83, %p84
    %s87 = sadd.s32 %s86, 1
    %p90 = scmp.eq.s32.totalorder %s10, 1
    %p91 = scmp.ne.s32.totalorder %s86, %s88
    %p92 = scmp.eq.s32.totalorder %s10, 0
    %p93 = por %p91, %p92
    %p94 = scmp.ne.s32.totalorder %s86, %s88
    %p95 = scmp.eq.s32.totalorder %s15, 1
    %p96 = por %p94, %p95
    %p97 = scmp.ne.s32.totalorder %s88, %s89
    %p98 = scmp.eq.s32.totalorder %s15, 0
    %p99 = por %p97, %p98
    %p100 = scmp.ne.s32.totalorder %s88, %s89
    %p101 = scmp.eq.s32.totalorder %s16, 1
    %p102 = por %p100, %p101
    %p104 = scmp.ne.s32.totalorder %s89, %s103
    %p105 = scmp.eq.s32.totalorder %s16, 0
    %p106 = por %p104, %p105
    %s107 = ssub.s32 %s10, %s17
    %p108 = scmp.eq.s32.totalorder %s107, 0
    %s110 = sadd.s32 %s109, 1
    %s111 = scalar_select %p108, %s109, %s110
    %p114 = pneg %p108
    %p115 = scmp.eq.s32.totalorder %s10, 1
    %p116 = por %p114, %p115
    %p117 = scmp.ne.s32.totalorder %s109, %s112
    %p118 = scmp.eq.s32.totalorder %s10, 0
    %p119 = por %p117, %p118
    %p120 = scmp.ne.s32.totalorder %s109, %s112
    %p121 = scmp.eq.s32.totalorder %s15, 1
    %p122 = por %p120, %p121
    %p123 = scmp.ne.s32.totalorder %s112, %s113
    %p124 = scmp.eq.s32.totalorder %s15, 0
    %p125 = por %p123, %p124
    %p126 = scmp.ne.s32.totalorder %s112, %s113
    %p127 = scmp.eq.s32.totalorder %s16, 1
    %p128 = por %p126, %p127
    %p130 = scmp.ne.s32.totalorder %s113, %s129
    %p131 = scmp.eq.s32.totalorder %s16, 0
    %p132 = por %p130, %p131
    %p133 = scmp.le.s32.totalorder 1, %s10
    %p134 = scmp.lt.s32.totalorder %s10, 3
    %p135 = pnand %p133, %p134
    %p136 = pneg %p135
    // Predicated region
    $region9: #{_lambda_.8} parent=5 // pred_check
      _
    $region10: #{_lambda_.8} parent=5 // pred_check_branch
      %138 = sbr.rel (%p135) target = $region12
    $region11: #{_lambda_.8} parent=5 // pred_region
      %s139 = ssub.s32 %s10, 1
      // Predicated region
      $region13: #{_lambda_.8} parent=11 // pred_check
        %p140 = pneg %p57
      $region14: #{_lambda_.8} parent=11 // pred_check_branch
        %142 = sbr.rel (%p140) target = $region16
      $region15: #{_lambda_.8} parent=11 // pred_region
        _
      $region16: #{_lambda_.8} parent=11 // pred_fallthru
        _
      // Predicated region
      $region17: #{_lambda_.8} parent=11 // pred_check
        %p143 = pneg %p78
      $region18: #{_lambda_.8} parent=11 // pred_check_branch
        %145 = sbr.rel (%p143) target = $region20
      $region19: #{_lambda_.8} parent=11 // pred_region
        _
      $region20: #{_lambda_.8} parent=11 // pred_fallthru
        _
      // Predicated region
      $region21: #{_lambda_.8} parent=11 // pred_check
        %p146 = pneg %p99
      $region22: #{_lambda_.8} parent=11 // pred_check_branch
        %148 = sbr.rel (%p146) target = $region24
      $region23: #{_lambda_.8} parent=11 // pred_region
        _
      $region24: #{_lambda_.8} parent=11 // pred_fallthru
        _
    $region12: #{_lambda_.8} parent=5 // pred_fallthru
      _
    %p149 = scmp.lt.s32.totalorder %s10, 2
    // Predicated region
    $region25: #{_lambda_.8} parent=5 // pred_check
      %p150 = pneg %p149
    $region26: #{_lambda_.8} parent=5 // pred_check_branch
      %152 = sbr.rel (%p150) target = $region28
    $region27: #{_lambda_.8} parent=5 // pred_region
      // Predicated region
      $region29: #{_lambda_.8} parent=27 // pred_check
        %p153 = pneg %p30
      $region30: #{_lambda_.8} parent=27 // pred_check_branch
        %155 = sbr.rel (%p153) target = $region32
      $region31: #{_lambda_.8} parent=27 // pred_region
        %s156 = smul.u32 8, %s10
        %p157 = scmp.lt.s32.totalorder %s156, 15
        %s158 = scalar_select %p157, %s156, 15
        %s159 = smul.addr %s158, 8
        %s160 = scalar_lea.vmem %s0, %s159
        %s161 = smul.u32 8, %s10
      $region32: #{_lambda_.8} parent=27 // pred_fallthru
        _
    $region28: #{_lambda_.8} parent=5 // pred_fallthru
      _
    %p162 = scmp.le.s32.totalorder 1, %s10
    %p163 = scmp.lt.s32.totalorder %s10, 3
    %p164 = pnand %p162, %p163
    %p165 = pneg %p164
    // Predicated region
    $region33: #{_lambda_.8} parent=5 // pred_check
      _
    $region34: #{_lambda_.8} parent=5 // pred_check_branch
      %167 = sbr.rel (%p164) target = $region36
    $region35: #{_lambda_.8} parent=5 // pred_region
      %s168 = ssub.s32 %s10, 1
      %s169 = smul.u32 8, %s15
      %p170 = scmp.lt.s32.totalorder %s169, 15
      %s171 = scalar_select %p170, %s169, 15
      %s172 = smul.addr %s171, 8
      %s173 = scalar_lea.vmem %s0, %s172
      %p174 = pneg %p36
      %p175 = pneg %p33
      %p176 = pneg %p57
      %p177 = pneg %p54
      %p178 = pneg %p78
      %p179 = pneg %p75
      %p180 = pneg %p99
      %p181 = pneg %p96
      %p182 = pneg %p125
      %p183 = pneg %p122
      %s184 = smul.u32 8, %s15
      %p185 = scmp.lt.s32.totalorder %s184, 15
      %s186 = scalar_select %p185, %s184, 15
      %s187 = smul.addr %s186, 8
      %s188 = scalar_lea.vmem %s4, %s187
      %s189 = smul.u32 8, %s15
      %p190 = scmp.lt.s32.totalorder %s189, 15
      %s191 = scalar_select %p190, %s189, 15
      %s192 = smul.addr %s191, 8
      %s193 = scalar_lea.vmem %s0, %s192
      %s194 = smul.u32 8, %s15
      %s195 = smul.u32 8, %s15
      %p196 = scmp.lt.s32.totalorder %s195, 15
      %s197 = scalar_select %p196, %s195, 15
      %s198 = smul.addr %s197, 8
      %s199 = scalar_lea.vmem %s4, %s198
      %s200 = smul.u32 8, %s15
      %v202 = vld [vmem:[%s193] sm:$0xff]
      %v203 = vld [vmem:[%s193 + $0x8] sm:$0xff]
      %v204 = vld [vmem:[%s193 + $0x10] sm:$0xff]
      %v205 = vld [vmem:[%s193 + $0x18] sm:$0xff]
      %v206 = vld [vmem:[%s193 + $0x20] sm:$0xff]
      %v207 = vld [vmem:[%s193 + $0x28] sm:$0xff]
      %v208 = vld [vmem:[%s193 + $0x30] sm:$0xff]
      %v209 = vld [vmem:[%s193 + $0x38] sm:$0xff]
      %v210 = vld [vmem:[%s1] sm:$0x1]
      %v211 = vld [vmem:[%s2] sm:$0x1]
      %vm212 = vcmask 261120
      %v213 = vsel %vm212, %v202, 0.0
      %214 = vadd.xlane.f32.xlu0 %v213
      %v215 = vpop.xlane.xlu0 %214
      %v216 = vsel %vm212, %v203, 0.0
      %217 = vadd.xlane.f32.xlu0 %v216
      %v218 = vpop.xlane.xlu0 %217
      %v219 = vsel %vm212, %v204, 0.0
      %220 = vadd.xlane.f32.xlu0 %v219
      %v221 = vpop.xlane.xlu0 %220
      %v222 = vsel %vm212, %v205, 0.0
      %223 = vadd.xlane.f32.xlu0 %v222
      %v224 = vpop.xlane.xlu0 %223
      %v225 = vsel %vm212, %v206, 0.0
      %226 = vadd.xlane.f32.xlu0 %v225
      %v227 = vpop.xlane.xlu0 %226
      %v228 = vsel %vm212, %v207, 0.0
      %229 = vadd.xlane.f32.xlu0 %v228
      %v230 = vpop.xlane.xlu0 %229
      %v231 = vsel %vm212, %v208, 0.0
      %232 = vadd.xlane.f32.xlu0 %v231
      %v233 = vpop.xlane.xlu0 %232
      %v234 = vsel %vm212, %v209, 0.0
      %235 = vadd.xlane.f32.xlu0 %v234
      %v236 = vpop.xlane.xlu0 %235
      %v237 = vrcp.pop 32.0
      %v238 = vmul.f32 %v215, %v237
      %v239 = vmul.f32 %v218, %v237
      %v240 = vmul.f32 %v221, %v237
      %v241 = vmul.f32 %v224, %v237
      %v242 = vmul.f32 %v227, %v237
      %v243 = vmul.f32 %v230, %v237
      %v244 = vmul.f32 %v233, %v237
      %v245 = vmul.f32 %v236, %v237
      %v246 = vsub.f32 %v202, %v238
      %v247 = vsub.f32 %v203, %v239
      %v248 = vsub.f32 %v204, %v240
      %v249 = vsub.f32 %v205, %v241
      %v250 = vsub.f32 %v206, %v242
      %v251 = vsub.f32 %v207, %v243
      %v252 = vsub.f32 %v208, %v244
      %v253 = vsub.f32 %v209, %v245
      %v254 = vmul.f32 %v246, %v246
      %v255 = vmul.f32 %v247, %v247
      %v256 = vmul.f32 %v248, %v248
      %v257 = vmul.f32 %v249, %v249
      %v258 = vmul.f32 %v250, %v250
      %v259 = vmul.f32 %v251, %v251
      %v260 = vmul.f32 %v252, %v252
      %v261 = vmul.f32 %v253, %v253
      %v262 = vsel %vm212, %v254, 0.0
      %263 = vadd.xlane.f32.xlu0 %v262
      %v264 = vpop.xlane.xlu0 %263
      %v265 = vsel %vm212, %v255, 0.0
      %266 = vadd.xlane.f32.xlu0 %v265
      %v267 = vpop.xlane.xlu0 %266
      %v268 = vsel %vm212, %v256, 0.0
      %269 = vadd.xlane.f32.xlu0 %v268
      %v270 = vpop.xlane.xlu0 %269
      %v271 = vsel %vm212, %v257, 0.0
      %272 = vadd.xlane.f32.xlu0 %v271
      %v273 = vpop.xlane.xlu0 %272
      %v274 = vsel %vm212, %v258, 0.0
      %275 = vadd.xlane.f32.xlu0 %v274
      %v276 = vpop.xlane.xlu0 %275
      %v277 = vsel %vm212, %v259, 0.0
      %278 = vadd.xlane.f32.xlu0 %v277
      %v279 = vpop.xlane.xlu0 %278
      %v280 = vsel %vm212, %v260, 0.0
      %281 = vadd.xlane.f32.xlu0 %v280
      %v282 = vpop.xlane.xlu0 %281
      %v283 = vsel %vm212, %v261, 0.0
      %284 = vadd.xlane.f32.xlu0 %v283
      %v285 = vpop.xlane.xlu0 %284
      %v286 = vmul.f32 %v264, %v237
      %v287 = vmul.f32 %v267, %v237
      %v288 = vmul.f32 %v270, %v237
      %v289 = vmul.f32 %v273, %v237
      %v290 = vmul.f32 %v276, %v237
      %v291 = vmul.f32 %v279, %v237
      %v292 = vmul.f32 %v282, %v237
      %v293 = vmul.f32 %v285, %v237
      %v294 = vadd.f32 %v286, 1e-06
      %v295 = vadd.f32 %v287, 1e-06
      %v296 = vadd.f32 %v288, 1e-06
      %v297 = vadd.f32 %v289, 1e-06
      %v298 = vadd.f32 %v290, 1e-06
      %v299 = vadd.f32 %v291, 1e-06
      %v300 = vadd.f32 %v292, 1e-06
      %v301 = vadd.f32 %v293, 1e-06
      %v302 = vrsqrt.pop %v294
      %v303 = vrsqrt.pop %v295
      %v304 = vrsqrt.pop %v296
      %v305 = vrsqrt.pop %v297
      %v306 = vrsqrt.pop %v298
      %v307 = vrsqrt.pop %v299
      %v308 = vrsqrt.pop %v300
      %v309 = vrsqrt.pop %v301
      %v310 = vmul.f32 %v246, %v302
      %v311 = vmul.f32 %v247, %v303
      %v312 = vmul.f32 %v248, %v304
      %v313 = vmul.f32 %v249, %v305
      %v314 = vmul.f32 %v250, %v306
      %v315 = vmul.f32 %v251, %v307
      %v316 = vmul.f32 %v252, %v308
      %v317 = vmul.f32 %v253, %v309
      %v319 = vlaneseq
      %v320 = vshrl.u32 %v319, 7
      %v321 = vsub.s32 0, %v320
      %v322 = vrot.slane %v210, %v321
      %v324 = vmul.f32 %v310, %v322
      %v325 = vmul.f32 %v311, %v322
      %v326 = vmul.f32 %v312, %v322
      %v327 = vmul.f32 %v313, %v322
      %v328 = vmul.f32 %v314, %v322
      %v329 = vmul.f32 %v315, %v322
      %v330 = vmul.f32 %v316, %v322
      %v331 = vmul.f32 %v317, %v322
      %v333 = vlaneseq
      %v334 = vshrl.u32 %v333, 7
      %v335 = vsub.s32 0, %v334
      %v336 = vrot.slane %v211, %v335
      %v338 = vadd.f32 %v324, %v336
      %v339 = vadd.f32 %v325, %v336
      %v340 = vadd.f32 %v326, %v336
      %v341 = vadd.f32 %v327, %v336
      %v342 = vadd.f32 %v328, %v336
      %v343 = vadd.f32 %v329, %v336
      %v344 = vadd.f32 %v330, %v336
      %v345 = vadd.f32 %v331, %v336
      %v346 = vpack.c.bf16 %v339, %v338
      %v347 = vpack.c.bf16 %v341, %v340
      %v348 = vpack.c.bf16 %v343, %v342
      %v349 = vpack.c.bf16 %v345, %v344
      %v350 = vld [vmem:[%s3] sm:$0xf]
      %v351 = vld [vmem:[%s3 + $0x4] sm:$0xf]
      %v352 = vld [vmem:[%s3 + $0x8] sm:$0xf]
      %v353 = vld [vmem:[%s3 + $0xc] sm:$0xf]
      %v358 = vunpack.c.l.b16 %v350
      %v359 = vunpack.c.l.b16 %v351
      %v360 = vunpack.c.l.b16 %v352
      %v361 = vunpack.c.l.b16 %v353
      %v362 = vpack.c.b16 %v359, %v358
      %v363 = vpack.c.b16 %v361, %v360
      %v367 = vsel %vm212, %v346, 0
      %v370 = vsel %vm212, %v347, 0
      %v373 = vsel %vm212, %v348, 0
      %v376 = vsel %vm212, %v349, 0
      %378 = vmatprep.subr.bf16.mxu0 0
      %379 = vmatpush1.bf16.msra.mxu0 %v362
      %380 = vmatprep.subr.bf16.mxu0 0
      %381 = vmatpush1.bf16.msra.mxu0 %v363
      %382 = vmatprep.subr.bf16.mxu0 0
      %383 = vmatpush1.bf16.msra.mxu0 0
      %384 = vmatprep.subr.bf16.mxu0 0
      %385 = vmatpush1.bf16.msra.mxu0 0
      %386 = vmatprep.subr.bf16.mxu0 0
      %387 = vmatpush1.bf16.msra.mxu0 0
      %388 = vmatprep.subr.bf16.mxu0 0
      %389 = vmatpush1.bf16.msra.mxu0 0
      %390 = vmatprep.subr.bf16.mxu0 0
      %391 = vmatpush1.bf16.msra.mxu0 0
      %392 = vmatprep.subr.bf16.mxu0 0
      %393 = vmatpush1.bf16.msra.mxu0 0
      %394 = vmatprep.subr.bf16.mxu0 0
      %395 = vmatpush1.bf16.msra.mxu0 0
      %396 = vmatprep.subr.bf16.mxu0 0
      %397 = vmatpush1.bf16.msra.mxu0 0
      %398 = vmatprep.subr.bf16.mxu0 0
      %399 = vmatpush1.bf16.msra.mxu0 0
      %400 = vmatprep.subr.bf16.mxu0 0
      %401 = vmatpush1.bf16.msra.mxu0 0
      %402 = vmatprep.subr.bf16.mxu0 0
      %403 = vmatpush1.bf16.msra.mxu0 0
      %404 = vmatprep.subr.bf16.mxu0 0
      %405 = vmatpush1.bf16.msra.mxu0 0
      %406 = vmatprep.subr.bf16.mxu0 0
      %407 = vmatpush1.bf16.msra.mxu0 0
      %408 = vmatprep.subr.bf16.mxu0 0
      %409 = vmatpush1.bf16.msra.mxu0 0
      %410 = vmatprep.mubr.bf16.mxu0 0
      %411 = vmatmul.mubr.bf16.gmra.mrb[0].mxu0 %v367
      %v412 = vpop.f32.mrb[0].mxu0
      %v413 = vadd.f32 0.0, %v412
      %v414 = vpop.f32.mrb[0].mxu0
      %v415 = vpop.f32.mrb[0].mxu0
      %v416 = vadd.f32 0.0, %v415
      %v417 = vpop.f32.mrb[0].mxu0
      %418 = vmatprep.mubr.bf16.mxu0 0
      %419 = vmatmul.mubr.bf16.gmra.mrb[0].mxu0 %v370
      %v420 = vpop.f32.mrb[0].mxu0
      %v421 = vadd.f32 0.0, %v420
      %v422 = vpop.f32.mrb[0].mxu0
      %v423 = vpop.f32.mrb[0].mxu0
      %v424 = vadd.f32 0.0, %v423
      %v425 = vpop.f32.mrb[0].mxu0
      %426 = vmatprep.mubr.bf16.mxu0 0
      %427 = vmatmul.mubr.bf16.gmra.mrb[0].mxu0 %v373
      %v428 = vpop.f32.mrb[0].mxu0
      %v429 = vadd.f32 0.0, %v428
      %v430 = vpop.f32.mrb[0].mxu0
      %v431 = vpop.f32.mrb[0].mxu0
      %v432 = vadd.f32 0.0, %v431
      %v433 = vpop.f32.mrb[0].mxu0
      %434 = vmatprep.mubr.bf16.mxu0 0
      %435 = vmatmul.mubr.bf16.gmra.mrb[0].mxu0 %v376
      %v436 = vpop.f32.mrb[0].mxu0
      %v437 = vadd.f32 0.0, %v436
      %v438 = vpop.f32.mrb[0].mxu0
      %v439 = vpop.f32.mrb[0].mxu0
      %v440 = vadd.f32 0.0, %v439
      %v441 = vpop.f32.mrb[0].mxu0
      %442 = vdwg.mxu0
      %443 = vst [vmem:[%s199] sm:$0xff] %v413
      %444 = vst [vmem:[%s199 + $0x8] sm:$0xff] %v416
      %445 = vst [vmem:[%s199 + $0x10] sm:$0xff] %v421
      %446 = vst [vmem:[%s199 + $0x18] sm:$0xff] %v424
      %447 = vst [vmem:[%s199 + $0x20] sm:$0xff] %v429
      %448 = vst [vmem:[%s199 + $0x28] sm:$0xff] %v432
      %449 = vst [vmem:[%s199 + $0x30] sm:$0xff] %v437
      %450 = vst [vmem:[%s199 + $0x38] sm:$0xff] %v440
      %s451 = smul.u32 8, %s15
      %p452 = scmp.lt.s32.totalorder %s451, 15
      %s453 = scalar_select %p452, %s451, 15
      %s454 = smul.addr %s453, 8
      %s455 = scalar_lea.vmem %s4, %s454
      // Predicated region
      $region37: #{_lambda_.8} parent=35 // pred_check
        %p456 = pneg %p122
      $region38: #{_lambda_.8} parent=35 // pred_check_branch
        %458 = sbr.rel (%p456) target = $region40
      $region39: #{_lambda_.8} parent=35 // pred_region
        %s459 = smul.u32 8, %s15
      $region40: #{_lambda_.8} parent=35 // pred_fallthru
        _
    $region36: #{_lambda_.8} parent=5 // pred_fallthru
      _
    %p460 = scmp.le.s32.totalorder 2, %s10
    // Predicated region
    $region41: #{_lambda_.8} parent=5 // pred_check
      %p461 = pneg %p460
    $region42: #{_lambda_.8} parent=5 // pred_check_branch
      %463 = sbr.rel (%p461) target = $region44
    $region43: #{_lambda_.8} parent=5 // pred_region
      %s464 = ssub.s32 %s10, 2
      // Predicated region
      $region45: #{_lambda_.8} parent=43 // pred_check
        %p465 = pneg %p128
      $region46: #{_lambda_.8} parent=43 // pred_check_branch
        %467 = sbr.rel (%p465) target = $region48
      $region47: #{_lambda_.8} parent=43 // pred_region
        %s468 = smul.u32 8, %s16
        %p469 = scmp.lt.s32.totalorder %s468, 15
        %s470 = scalar_select %p469, %s468, 15
        %s471 = smul.addr %s470, 8
        %s472 = scalar_lea.vmem %s4, %s471
      $region48: #{_lambda_.8} parent=43 // pred_fallthru
        _
    $region44: #{_lambda_.8} parent=5 // pred_fallthru
      _
  $region6: #{_lambda_.8} parent=0 // loop_footer
    %s14 = sadd.s32 1, %s10
  $region7: #{_lambda_.8} parent=0 // loop_footer_branch
    %9 = sbr.rel target = $region3
  $region8: #{_lambda_.8} parent=0 // loop_exit
    _

// kernel: _lambda_.9
$region0: #{_lambda_.9}
  #allocation0 [shape = 'u32[]', space=smem, size = 0x4, offset = 0x4, fixed_abs, tag = 'smem constant byte address 0x4 - core index']
  #allocation1 [shape = 'u32[144,128]{1,0:T(1,128)}', space=vmem, size = 0x12000, scoped, tag = 'internal scratch']
  %s0 = inlined_call_operand.vmem [shape: f32[2,10,10,64], index: 0, kind: input, shape index: {}]
  %s1 = inlined_call_operand.vmem [shape: f32[9,64], index: 1, kind: input, shape index: {}]
  %s2 = inlined_call_operand.vmem [shape: f32[1,64], index: 2, kind: input, shape index: {}]
  %s3 = inlined_call_operand.vmem [shape: f32[2,8,8,64], index: 3, kind: output, shape index: {}]
  %s4 = sld [smem:[#allocation0]]
  $region45: #{_lambda_.9} parent=0
    _
  %s6 = ssub.s32 1, %s4
  %s7 = scalar_select 0, %s6, %s4
  loop: start=0, step=1, limit=4
  $region2: #{_lambda_.9} parent=0 // loop_pre_header
    _
  $region3: #{_lambda_.9} parent=0 // loop_header
    %s9 = sphi 0, %s13
    %p10 = scmp.ge.s32.totalorder %s9, 4
    %s19 = sphi 0, %s21
    %s22 = sphi 0, %s19
    %s23 = sphi 0, %s22
    %s39 = sphi 0, %s23
    %s43 = sphi 0, %s43
    %s45 = sphi 0, %s43
    %s46 = sphi 0, %s45
    %s60 = sphi 0, %s46
    %s64 = sphi 0, %s64
    %s66 = sphi 0, %s64
    %s67 = sphi 0, %s66
    %s81 = sphi 0, %s67
    %s87 = sphi 0, %s89
    %s90 = sphi 0, %s87
    %s91 = sphi 0, %s90
    %s107 = sphi 0, %s91
  $region4: #{_lambda_.9} parent=0 // loop_header_branch
    %12 = sbr.rel (%p10) target = $region8
  $region5: #{_lambda_.9} parent=0 // loop_body
    %s14 = ssub.s32 %s9, 1
    %s15 = ssub.s32 %s9, 2
    %s16 = sadd.s32 %s9, 1
    %s17 = ssub.s32 %s9, %s16
    %p18 = scmp.eq.s32.totalorder %s17, 0
    %s20 = sadd.s32 %s19, 1
    %s21 = scalar_select %p18, %s19, %s20
    %p24 = pneg %p18
    %p25 = scmp.eq.s32.totalorder %s9, 1
    %p26 = por %p24, %p25
    %p27 = scmp.ne.s32.totalorder %s19, %s22
    %p28 = scmp.eq.s32.totalorder %s9, 0
    %p29 = por %p27, %p28
    %p30 = scmp.ne.s32.totalorder %s19, %s22
    %p31 = scmp.eq.s32.totalorder %s14, 1
    %p32 = por %p30, %p31
    %p33 = scmp.ne.s32.totalorder %s22, %s23
    %p34 = scmp.eq.s32.totalorder %s14, 0
    %p35 = por %p33, %p34
    %p36 = scmp.ne.s32.totalorder %s22, %s23
    %p37 = scmp.eq.s32.totalorder %s15, 1
    %p38 = por %p36, %p37
    %p40 = scmp.ne.s32.totalorder %s23, %s39
    %p41 = scmp.eq.s32.totalorder %s15, 0
    %p42 = por %p40, %p41
    %s44 = sadd.s32 %s43, 1
    %p47 = scmp.eq.s32.totalorder %s9, 1
    %p48 = scmp.ne.s32.totalorder %s43, %s45
    %p49 = scmp.eq.s32.totalorder %s9, 0
    %p50 = por %p48, %p49
    %p51 = scmp.ne.s32.totalorder %s43, %s45
    %p52 = scmp.eq.s32.totalorder %s14, 1
    %p53 = por %p51, %p52
    %p54 = scmp.ne.s32.totalorder %s45, %s46
    %p55 = scmp.eq.s32.totalorder %s14, 0
    %p56 = por %p54, %p55
    %p57 = scmp.ne.s32.totalorder %s45, %s46
    %p58 = scmp.eq.s32.totalorder %s15, 1
    %p59 = por %p57, %p58
    %p61 = scmp.ne.s32.totalorder %s46, %s60
    %p62 = scmp.eq.s32.totalorder %s15, 0
    %p63 = por %p61, %p62
    %s65 = sadd.s32 %s64, 1
    %p68 = scmp.eq.s32.totalorder %s9, 1
    %p69 = scmp.ne.s32.totalorder %s64, %s66
    %p70 = scmp.eq.s32.totalorder %s9, 0
    %p71 = por %p69, %p70
    %p72 = scmp.ne.s32.totalorder %s64, %s66
    %p73 = scmp.eq.s32.totalorder %s14, 1
    %p74 = por %p72, %p73
    %p75 = scmp.ne.s32.totalorder %s66, %s67
    %p76 = scmp.eq.s32.totalorder %s14, 0
    %p77 = por %p75, %p76
    %p78 = scmp.ne.s32.totalorder %s66, %s67
    %p79 = scmp.eq.s32.totalorder %s15, 1
    %p80 = por %p78, %p79
    %p82 = scmp.ne.s32.totalorder %s67, %s81
    %p83 = scmp.eq.s32.totalorder %s15, 0
    %p84 = por %p82, %p83
    %s85 = ssub.s32 %s9, %s16
    %p86 = scmp.eq.s32.totalorder %s85, 0
    %s88 = sadd.s32 %s87, 1
    %s89 = scalar_select %p86, %s87, %s88
    %p92 = pneg %p86
    %p93 = scmp.eq.s32.totalorder %s9, 1
    %p94 = por %p92, %p93
    %p95 = scmp.ne.s32.totalorder %s87, %s90
    %p96 = scmp.eq.s32.totalorder %s9, 0
    %p97 = por %p95, %p96
    %p98 = scmp.ne.s32.totalorder %s87, %s90
    %p99 = scmp.eq.s32.totalorder %s14, 1
    %p100 = por %p98, %p99
    %p101 = scmp.ne.s32.totalorder %s90, %s91
    %p102 = scmp.eq.s32.totalorder %s14, 0
    %p103 = por %p101, %p102
    %p104 = scmp.ne.s32.totalorder %s90, %s91
    %p105 = scmp.eq.s32.totalorder %s15, 1
    %p106 = por %p104, %p105
    %p108 = scmp.ne.s32.totalorder %s91, %s107
    %p109 = scmp.eq.s32.totalorder %s15, 0
    %p110 = por %p108, %p109
    %p111 = scmp.le.s32.totalorder 1, %s9
    %p112 = scmp.lt.s32.totalorder %s9, 3
    %p113 = pnand %p111, %p112
    %p114 = pneg %p113
    // Predicated region
    $region9: #{_lambda_.9} parent=5 // pred_check
      _
    $region10: #{_lambda_.9} parent=5 // pred_check_branch
      %116 = sbr.rel (%p113) target = $region12
    $region11: #{_lambda_.9} parent=5 // pred_region
      %s117 = ssub.s32 %s9, 1
      // Predicated region
      $region13: #{_lambda_.9} parent=11 // pred_check
        %p118 = pneg %p56
      $region14: #{_lambda_.9} parent=11 // pred_check_branch
        %120 = sbr.rel (%p118) target = $region16
      $region15: #{_lambda_.9} parent=11 // pred_region
        _
      $region16: #{_lambda_.9} parent=11 // pred_fallthru
        _
      // Predicated region
      $region17: #{_lambda_.9} parent=11 // pred_check
        %p121 = pneg %p77
      $region18: #{_lambda_.9} parent=11 // pred_check_branch
        %123 = sbr.rel (%p121) target = $region20
      $region19: #{_lambda_.9} parent=11 // pred_region
        _
      $region20: #{_lambda_.9} parent=11 // pred_fallthru
        _
    $region12: #{_lambda_.9} parent=5 // pred_fallthru
      _
    %p124 = scmp.lt.s32.totalorder %s9, 2
    // Predicated region
    $region21: #{_lambda_.9} parent=5 // pred_check
      %p125 = pneg %p124
    $region22: #{_lambda_.9} parent=5 // pred_check_branch
      %127 = sbr.rel (%p125) target = $region24
    $region23: #{_lambda_.9} parent=5 // pred_region
      // Predicated region
      $region25: #{_lambda_.9} parent=23 // pred_check
        %p128 = pneg %p29
      $region26: #{_lambda_.9} parent=23 // pred_check_branch
        %130 = sbr.rel (%p128) target = $region28
      $region27: #{_lambda_.9} parent=23 // pred_region
        %p131 = scmp.lt.s32.totalorder %s9, 1
        %s132 = scalar_select %p131, %s9, 1
        %s133 = smul.addr %s132, 20
        %s134 = smul.addr %s133, 8
        %s135 = scalar_lea.vmem %s0, %s134
      $region28: #{_lambda_.9} parent=23 // pred_fallthru
        _
    $region24: #{_lambda_.9} parent=5 // pred_fallthru
      _
    %p136 = scmp.le.s32.totalorder 1, %s9
    %p137 = scmp.lt.s32.totalorder %s9, 3
    %p138 = pnand %p136, %p137
    %p139 = pneg %p138
    // Predicated region
    $region29: #{_lambda_.9} parent=5 // pred_check
      _
    $region30: #{_lambda_.9} parent=5 // pred_check_branch
      %141 = sbr.rel (%p138) target = $region32
    $region31: #{_lambda_.9} parent=5 // pred_region
      %s142 = ssub.s32 %s9, 1
      %p143 = scmp.lt.s32.totalorder %s14, 1
      %s144 = scalar_select %p143, %s14, 1
      %s145 = smul.addr %s144, 20
      %s146 = smul.addr %s145, 8
      %s147 = scalar_lea.vmem %s0, %s146
      %p148 = pneg %p35
      %p149 = pneg %p32
      %p150 = pneg %p56
      %p151 = pneg %p53
      %p152 = pneg %p77
      %p153 = pneg %p74
      %p154 = pneg %p103
      %p155 = pneg %p100
      %p156 = scmp.lt.s32.totalorder %s14, 1
      %s157 = scalar_select %p156, %s14, 1
      %s158 = smul.addr %s157, 8
      %s159 = smul.addr %s158, 8
      %s160 = scalar_lea.vmem %s3, %s159
      %p161 = scmp.lt.s32.totalorder %s14, 1
      %s162 = scalar_select %p161, %s14, 1
      %s163 = smul.addr %s162, 20
      %s164 = smul.addr %s163, 8
      %s165 = scalar_lea.vmem %s0, %s164
      %p166 = scmp.lt.s32.totalorder %s14, 1
      %s167 = scalar_select %p166, %s14, 1
      %s168 = smul.addr %s167, 8
      %s169 = smul.addr %s168, 8
      %s170 = scalar_lea.vmem %s3, %s169
      %v171 = vld [vmem:[%s1] sm:$0x1]
      %v172 = vld [vmem:[%s165] sm:$0xff]
      %v173 = vld [vmem:[%s165 + $0x10] sm:$0xff]
      %v174 = vld [vmem:[%s165 + $0x20] sm:$0xff]
      %v175 = vld [vmem:[%s165 + $0x30] sm:$0xff]
      %v176 = vld [vmem:[%s165 + $0x40] sm:$0xff]
      %v177 = vld [vmem:[%s165 + $0x50] sm:$0xff]
      %v178 = vld [vmem:[%s165 + $0x60] sm:$0xff]
      %v179 = vld [vmem:[%s165 + $0x70] sm:$0xff]
      %v180 = vlaneseq
      %v181 = vshrl.u32 %v180, 7
      %v182 = vsub.s32 0, %v181
      %v183 = vrot.slane %v171, %v182
      %v184 = vmul.f32 %v172, %v183
      %v185 = vmul.f32 %v173, %v183
      %v186 = vmul.f32 %v174, %v183
      %v187 = vmul.f32 %v175, %v183
      %v188 = vmul.f32 %v176, %v183
      %v189 = vmul.f32 %v177, %v183
      %v190 = vmul.f32 %v178, %v183
      %v191 = vmul.f32 %v179, %v183
      %v192 = vadd.f32 %v184, 0.0
      %v193 = vadd.f32 %v185, 0.0
      %v194 = vadd.f32 %v186, 0.0
      %v195 = vadd.f32 %v187, 0.0
      %v196 = vadd.f32 %v188, 0.0
      %v197 = vadd.f32 %v189, 0.0
      %v198 = vadd.f32 %v190, 0.0
      %v199 = vadd.f32 %v191, 0.0
      %v200 = vld [vmem:[%s1 + $0x1] sm:$0x1]
      %v201 = vld [vmem:[%s165 + $0x1] sm:$0xff]
      %v202 = vld [vmem:[%s165 + $0x11] sm:$0xff]
      %v203 = vld [vmem:[%s165 + $0x21] sm:$0xff]
      %v204 = vld [vmem:[%s165 + $0x31] sm:$0xff]
      %v205 = vld [vmem:[%s165 + $0x41] sm:$0xff]
      %v206 = vld [vmem:[%s165 + $0x51] sm:$0xff]
      %v207 = vld [vmem:[%s165 + $0x61] sm:$0xff]
      %v208 = vld [vmem:[%s165 + $0x71] sm:$0xff]
      %v209 = vlaneseq
      %v210 = vshrl.u32 %v209, 7
      %v211 = vsub.s32 0, %v210
      %v212 = vrot.slane %v200, %v211
      %v213 = vmul.f32 %v201, %v212
      %v214 = vmul.f32 %v202, %v212
      %v215 = vmul.f32 %v203, %v212
      %v216 = vmul.f32 %v204, %v212
      %v217 = vmul.f32 %v205, %v212
      %v218 = vmul.f32 %v206, %v212
      %v219 = vmul.f32 %v207, %v212
      %v220 = vmul.f32 %v208, %v212
      %v221 = vadd.f32 %v192, %v213
      %v222 = vadd.f32 %v193, %v214
      %v223 = vadd.f32 %v194, %v215
      %v224 = vadd.f32 %v195, %v216
      %v225 = vadd.f32 %v196, %v217
      %v226 = vadd.f32 %v197, %v218
      %v227 = vadd.f32 %v198, %v219
      %v228 = vadd.f32 %v199, %v220
      %v229 = vld [vmem:[%s1 + $0x2] sm:$0x1]
      %v230 = vld [vmem:[%s165 + $0x2] sm:$0xff]
      %v231 = vld [vmem:[%s165 + $0x12] sm:$0xff]
      %v232 = vld [vmem:[%s165 + $0x22] sm:$0xff]
      %v233 = vld [vmem:[%s165 + $0x32] sm:$0xff]
      %v234 = vld [vmem:[%s165 + $0x42] sm:$0xff]
      %v235 = vld [vmem:[%s165 + $0x52] sm:$0xff]
      %v236 = vld [vmem:[%s165 + $0x62] sm:$0xff]
      %v237 = vld [vmem:[%s165 + $0x72] sm:$0xff]
      %v238 = vlaneseq
      %v239 = vshrl.u32 %v238, 7
      %v240 = vsub.s32 0, %v239
      %v241 = vrot.slane %v229, %v240
      %v242 = vmul.f32 %v230, %v241
      %v243 = vmul.f32 %v231, %v241
      %v244 = vmul.f32 %v232, %v241
      %v245 = vmul.f32 %v233, %v241
      %v246 = vmul.f32 %v234, %v241
      %v247 = vmul.f32 %v235, %v241
      %v248 = vmul.f32 %v236, %v241
      %v249 = vmul.f32 %v237, %v241
      %v250 = vadd.f32 %v221, %v242
      %v251 = vadd.f32 %v222, %v243
      %v252 = vadd.f32 %v223, %v244
      %v253 = vadd.f32 %v224, %v245
      %v254 = vadd.f32 %v225, %v246
      %v255 = vadd.f32 %v226, %v247
      %v256 = vadd.f32 %v227, %v248
      %v257 = vadd.f32 %v228, %v249
      %v258 = vld [vmem:[%s1 + $0x3] sm:$0x1]
      %s259 = scalar_lea.vmem %s165, 16
      %v260 = vld [vmem:[%s259] sm:$0xff]
      %v261 = vld [vmem:[%s259 + $0x10] sm:$0xff]
      %v262 = vld [vmem:[%s259 + $0x20] sm:$0xff]
      %v263 = vld [vmem:[%s259 + $0x30] sm:$0xff]
      %v264 = vld [vmem:[%s259 + $0x40] sm:$0xff]
      %v265 = vld [vmem:[%s259 + $0x50] sm:$0xff]
      %v266 = vld [vmem:[%s259 + $0x60] sm:$0xff]
      %v267 = vld [vmem:[%s259 + $0x70] sm:$0xff]
      %v268 = vlaneseq
      %v269 = vshrl.u32 %v268, 7
      %v270 = vsub.s32 0, %v269
      %v271 = vrot.slane %v258, %v270
      %v272 = vmul.f32 %v260, %v271
      %v273 = vmul.f32 %v261, %v271
      %v274 = vmul.f32 %v262, %v271
      %v275 = vmul.f32 %v263, %v271
      %v276 = vmul.f32 %v264, %v271
      %v277 = vmul.f32 %v265, %v271
      %v278 = vmul.f32 %v266, %v271
      %v279 = vmul.f32 %v267, %v271
      %v280 = vadd.f32 %v250, %v272
      %v281 = vadd.f32 %v251, %v273
      %v282 = vadd.f32 %v252, %v274
      %v283 = vadd.f32 %v253, %v275
      %v284 = vadd.f32 %v254, %v276
      %v285 = vadd.f32 %v255, %v277
      %v286 = vadd.f32 %v256, %v278
      %v287 = vadd.f32 %v257, %v279
      %v288 = vld [vmem:[%s1 + $0x4] sm:$0x1]
      %v289 = vld [vmem:[%s259 + $0x1] sm:$0xff]
      %v290 = vld [vmem:[%s259 + $0x11] sm:$0xff]
      %v291 = vld [vmem:[%s259 + $0x21] sm:$0xff]
      %v292 = vld [vmem:[%s259 + $0x31] sm:$0xff]
      %v293 = vld [vmem:[%s259 + $0x41] sm:$0xff]
      %v294 = vld [vmem:[%s259 + $0x51] sm:$0xff]
      %v295 = vld [vmem:[%s259 + $0x61] sm:$0xff]
      %v296 = vld [vmem:[%s259 + $0x71] sm:$0xff]
      %v297 = vlaneseq
      %v298 = vshrl.u32 %v297, 7
      %v299 = vsub.s32 0, %v298
      %v300 = vrot.slane %v288, %v299
      %v301 = vmul.f32 %v289, %v300
      %v302 = vmul.f32 %v290, %v300
      %v303 = vmul.f32 %v291, %v300
      %v304 = vmul.f32 %v292, %v300
      %v305 = vmul.f32 %v293, %v300
      %v306 = vmul.f32 %v294, %v300
      %v307 = vmul.f32 %v295, %v300
      %v308 = vmul.f32 %v296, %v300
      %v309 = vadd.f32 %v280, %v301
      %v310 = vadd.f32 %v281, %v302
      %v311 = vadd.f32 %v282, %v303
      %v312 = vadd.f32 %v283, %v304
      %v313 = vadd.f32 %v284, %v305
      %v314 = vadd.f32 %v285, %v306
      %v315 = vadd.f32 %v286, %v307
      %v316 = vadd.f32 %v287, %v308
      %v317 = vld [vmem:[%s1 + $0x5] sm:$0x1]
      %v318 = vld [vmem:[%s259 + $0x2] sm:$0xff]
      %v319 = vld [vmem:[%s259 + $0x12] sm:$0xff]
      %v320 = vld [vmem:[%s259 + $0x22] sm:$0xff]
      %v321 = vld [vmem:[%s259 + $0x32] sm:$0xff]
      %v322 = vld [vmem:[%s259 + $0x42] sm:$0xff]
      %v323 = vld [vmem:[%s259 + $0x52] sm:$0xff]
      %v324 = vld [vmem:[%s259 + $0x62] sm:$0xff]
      %v325 = vld [vmem:[%s259 + $0x72] sm:$0xff]
      %v326 = vlaneseq
      %v327 = vshrl.u32 %v326, 7
      %v328 = vsub.s32 0, %v327
      %v329 = vrot.slane %v317, %v328
      %v330 = vmul.f32 %v318, %v329
      %v331 = vmul.f32 %v319, %v329
      %v332 = vmul.f32 %v320, %v329
      %v333 = vmul.f32 %v321, %v329
      %v334 = vmul.f32 %v322, %v329
      %v335 = vmul.f32 %v323, %v329
      %v336 = vmul.f32 %v324, %v329
      %v337 = vmul.f32 %v325, %v329
      %v338 = vadd.f32 %v309, %v330
      %v339 = vadd.f32 %v310, %v331
      %v340 = vadd.f32 %v311, %v332
      %v341 = vadd.f32 %v312, %v333
      %v342 = vadd.f32 %v313, %v334
      %v343 = vadd.f32 %v314, %v335
      %v344 = vadd.f32 %v315, %v336
      %v345 = vadd.f32 %v316, %v337
      %v346 = vld [vmem:[%s1 + $0x6] sm:$0x1]
      %s347 = scalar_lea.vmem %s165, 32
      %v348 = vld [vmem:[%s347] sm:$0xff]
      %v349 = vld [vmem:[%s347 + $0x10] sm:$0xff]
      %v350 = vld [vmem:[%s347 + $0x20] sm:$0xff]
      %v351 = vld [vmem:[%s347 + $0x30] sm:$0xff]
      %v352 = vld [vmem:[%s347 + $0x40] sm:$0xff]
      %v353 = vld [vmem:[%s347 + $0x50] sm:$0xff]
      %v354 = vld [vmem:[%s347 + $0x60] sm:$0xff]
      %v355 = vld [vmem:[%s347 + $0x70] sm:$0xff]
      %v356 = vlaneseq
      %v357 = vshrl.u32 %v356, 7
      %v358 = vsub.s32 0, %v357
      %v359 = vrot.slane %v346, %v358
      %v360 = vmul.f32 %v348, %v359
      %v361 = vmul.f32 %v349, %v359
      %v362 = vmul.f32 %v350, %v359
      %v363 = vmul.f32 %v351, %v359
      %v364 = vmul.f32 %v352, %v359
      %v365 = vmul.f32 %v353, %v359
      %v366 = vmul.f32 %v354, %v359
      %v367 = vmul.f32 %v355, %v359
      %v368 = vadd.f32 %v338, %v360
      %v369 = vadd.f32 %v339, %v361
      %v370 = vadd.f32 %v340, %v362
      %v371 = vadd.f32 %v341, %v363
      %v372 = vadd.f32 %v342, %v364
      %v373 = vadd.f32 %v343, %v365
      %v374 = vadd.f32 %v344, %v366
      %v375 = vadd.f32 %v345, %v367
      %v376 = vld [vmem:[%s1 + $0x7] sm:$0x1]
      %v377 = vld [vmem:[%s347 + $0x1] sm:$0xff]
      %v378 = vld [vmem:[%s347 + $0x11] sm:$0xff]
      %v379 = vld [vmem:[%s347 + $0x21] sm:$0xff]
      %v380 = vld [vmem:[%s347 + $0x31] sm:$0xff]
      %v381 = vld [vmem:[%s347 + $0x41] sm:$0xff]
      %v382 = vld [vmem:[%s347 + $0x51] sm:$0xff]
      %v383 = vld [vmem:[%s347 + $0x61] sm:$0xff]
      %v384 = vld [vmem:[%s347 + $0x71] sm:$0xff]
      %v385 = vlaneseq
      %v386 = vshrl.u32 %v385, 7
      %v387 = vsub.s32 0, %v386
      %v388 = vrot.slane %v376, %v387
      %v389 = vmul.f32 %v377, %v388
      %v390 = vmul.f32 %v378, %v388
      %v391 = vmul.f32 %v379, %v388
      %v392 = vmul.f32 %v380, %v388
      %v393 = vmul.f32 %v381, %v388
      %v394 = vmul.f32 %v382, %v388
      %v395 = vmul.f32 %v383, %v388
      %v396 = vmul.f32 %v384, %v388
      %v397 = vadd.f32 %v368, %v389
      %v398 = vadd.f32 %v369, %v390
      %v399 = vadd.f32 %v370, %v391
      %v400 = vadd.f32 %v371, %v392
      %v401 = vadd.f32 %v372, %v393
      %v402 = vadd.f32 %v373, %v394
      %v403 = vadd.f32 %v374, %v395
      %v404 = vadd.f32 %v375, %v396
      %v405 = vld [vmem:[%s1 + $0x8] sm:$0x1]
      %v406 = vld [vmem:[%s347 + $0x2] sm:$0xff]
      %v407 = vld [vmem:[%s347 + $0x12] sm:$0xff]
      %v408 = vld [vmem:[%s347 + $0x22] sm:$0xff]
      %v409 = vld [vmem:[%s347 + $0x32] sm:$0xff]
      %v410 = vld [vmem:[%s347 + $0x42] sm:$0xff]
      %v411 = vld [vmem:[%s347 + $0x52] sm:$0xff]
      %v412 = vld [vmem:[%s347 + $0x62] sm:$0xff]
      %v413 = vld [vmem:[%s347 + $0x72] sm:$0xff]
      %v414 = vlaneseq
      %v415 = vshrl.u32 %v414, 7
      %v416 = vsub.s32 0, %v415
      %v417 = vrot.slane %v405, %v416
      %v418 = vmul.f32 %v406, %v417
      %v419 = vmul.f32 %v407, %v417
      %v420 = vmul.f32 %v408, %v417
      %v421 = vmul.f32 %v409, %v417
      %v422 = vmul.f32 %v410, %v417
      %v423 = vmul.f32 %v411, %v417
      %v424 = vmul.f32 %v412, %v417
      %v425 = vmul.f32 %v413, %v417
      %v426 = vadd.f32 %v397, %v418
      %v427 = vadd.f32 %v398, %v419
      %v428 = vadd.f32 %v399, %v420
      %v429 = vadd.f32 %v400, %v421
      %v430 = vadd.f32 %v401, %v422
      %v431 = vadd.f32 %v402, %v423
      %v432 = vadd.f32 %v403, %v424
      %v433 = vadd.f32 %v404, %v425
      %v434 = vld [vmem:[%s2] sm:$0x1]
      %v436 = vlaneseq
      %v437 = vshrl.u32 %v436, 7
      %v438 = vsub.s32 0, %v437
      %v439 = vrot.slane %v434, %v438
      %v441 = vadd.f32 %v426, %v439
      %v442 = vadd.f32 %v427, %v439
      %v443 = vadd.f32 %v428, %v439
      %v444 = vadd.f32 %v429, %v439
      %v445 = vadd.f32 %v430, %v439
      %v446 = vadd.f32 %v431, %v439
      %v447 = vadd.f32 %v432, %v439
      %v448 = vadd.f32 %v433, %v439
      %v449 = vxor.u32 %v441, 2147483648
      %v450 = vxor.u32 %v442, 2147483648
      %v451 = vxor.u32 %v443, 2147483648
      %v452 = vxor.u32 %v444, 2147483648
      %v453 = vxor.u32 %v445, 2147483648
      %v454 = vxor.u32 %v446, 2147483648
      %v455 = vxor.u32 %v447, 2147483648
      %v456 = vxor.u32 %v448, 2147483648
      %v457 = vmul.f32 %v449, 1.442695
      %v458 = vpow.pop %v457
      %v459 = vmul.f32 %v450, 1.442695
      %v460 = vpow.pop %v459
      %v461 = vmul.f32 %v451, 1.442695
      %v462 = vpow.pop %v461
      %v463 = vmul.f32 %v452, 1.442695
      %v464 = vpow.pop %v463
      %v465 = vmul.f32 %v453, 1.442695
      %v466 = vpow.pop %v465
      %v467 = vmul.f32 %v454, 1.442695
      %v468 = vpow.pop %v467
      %v469 = vmul.f32 %v455, 1.442695
      %v470 = vpow.pop %v469
      %v471 = vmul.f32 %v456, 1.442695
      %v472 = vpow.pop %v471
      %v473 = vadd.f32 %v458, 1.0
      %v474 = vadd.f32 %v460, 1.0
      %v475 = vadd.f32 %v462, 1.0
      %v476 = vadd.f32 %v464, 1.0
      %v477 = vadd.f32 %v466, 1.0
      %v478 = vadd.f32 %v468, 1.0
      %v479 = vadd.f32 %v470, 1.0
      %v480 = vadd.f32 %v472, 1.0
      %v481 = vrcp.pop %v473
      %v482 = vmul.f32 1.0, %v481
      %v483 = vrcp.pop %v474
      %v484 = vmul.f32 1.0, %v483
      %v485 = vrcp.pop %v475
      %v486 = vmul.f32 1.0, %v485
      %v487 = vrcp.pop %v476
      %v488 = vmul.f32 1.0, %v487
      %v489 = vrcp.pop %v477
      %v490 = vmul.f32 1.0, %v489
      %v491 = vrcp.pop %v478
      %v492 = vmul.f32 1.0, %v491
      %v493 = vrcp.pop %v479
      %v494 = vmul.f32 1.0, %v493
      %v495 = vrcp.pop %v480
      %v496 = vmul.f32 1.0, %v495
      %v497 = vmul.f32 %v441, %v482
      %v498 = vmul.f32 %v442, %v484
      %v499 = vmul.f32 %v443, %v486
      %v500 = vmul.f32 %v444, %v488
      %v501 = vmul.f32 %v445, %v490
      %v502 = vmul.f32 %v446, %v492
      %v503 = vmul.f32 %v447, %v494
      %v504 = vmul.f32 %v448, %v496
      %vm505 = vcmask 523264
      %506 = vst.msk [vmem:[%s170] sm:$0xff] %vm505, %v497
      %507 = vst.msk [vmem:[%s170 + $0x8] sm:$0xff] %vm505, %v498
      %508 = vst.msk [vmem:[%s170 + $0x10] sm:$0xff] %vm505, %v499
      %509 = vst.msk [vmem:[%s170 + $0x18] sm:$0xff] %vm505, %v500
      %510 = vst.msk [vmem:[%s170 + $0x20] sm:$0xff] %vm505, %v501
      %511 = vst.msk [vmem:[%s170 + $0x28] sm:$0xff] %vm505, %v502
      %512 = vst.msk [vmem:[%s170 + $0x30] sm:$0xff] %vm505, %v503
      %513 = vst.msk [vmem:[%s170 + $0x38] sm:$0xff] %vm505, %v504
      %p514 = scmp.lt.s32.totalorder %s14, 1
      %s515 = scalar_select %p514, %s14, 1
      %s516 = smul.addr %s515, 8
      %s517 = smul.addr %s516, 8
      %s518 = scalar_lea.vmem %s3, %s517
      // Predicated region
      $region33: #{_lambda_.9} parent=31 // pred_check
        %p519 = pneg %p100
      $region34: #{_lambda_.9} parent=31 // pred_check_branch
        %521 = sbr.rel (%p519) target = $region36
      $region35: #{_lambda_.9} parent=31 // pred_region
        _
      $region36: #{_lambda_.9} parent=31 // pred_fallthru
        _
    $region32: #{_lambda_.9} parent=5 // pred_fallthru
      _
    %p522 = scmp.le.s32.totalorder 2, %s9
    // Predicated region
    $region37: #{_lambda_.9} parent=5 // pred_check
      %p523 = pneg %p522
    $region38: #{_lambda_.9} parent=5 // pred_check_branch
      %525 = sbr.rel (%p523) target = $region40
    $region39: #{_lambda_.9} parent=5 // pred_region
      %s526 = ssub.s32 %s9, 2
      // Predicated region
      $region41: #{_lambda_.9} parent=39 // pred_check
        %p527 = pneg %p106
      $region42: #{_lambda_.9} parent=39 // pred_check_branch
        %529 = sbr.rel (%p527) target = $region44
      $region43: #{_lambda_.9} parent=39 // pred_region
        %p530 = scmp.lt.s32.totalorder %s15, 1
        %s531 = scalar_select %p530, %s15, 1
        %s532 = smul.addr %s531, 8
        %s533 = smul.addr %s532, 8
        %s534 = scalar_lea.vmem %s3, %s533
      $region44: #{_lambda_.9} parent=39 // pred_fallthru
        _
    $region40: #{_lambda_.9} parent=5 // pred_fallthru
      _
  $region6: #{_lambda_.9} parent=0 // loop_footer
    %s13 = sadd.s32 1, %s9
  $region7: #{_lambda_.9} parent=0 // loop_footer_branch
    %8 = sbr.rel target = $region3
  $region8: #{_lambda_.9} parent=0 // loop_exit
    _

// kernel: _lambda_.10
$region0: #{_lambda_.10}
  #allocation0 [shape = 'u32[]', space=smem, size = 0x4, offset = 0x4, fixed_abs, tag = 'smem constant byte address 0x4 - core index']
  #allocation1 [shape = 'u32[144,128]{1,0:T(1,128)}', space=vmem, size = 0x12000, scoped, tag = 'internal scratch']
  %s0 = inlined_call_operand.vmem [shape: f32[128,256], index: 0, kind: input, shape index: {}]
  %s1 = inlined_call_operand.vmem [shape: bf16[256,384], index: 1, kind: input, shape index: {}]
  %s2 = inlined_call_operand.vmem [shape: f32[128,384], index: 2, kind: output, shape index: {}]
  %s3 = sld [smem:[#allocation0]]
  $region41: #{_lambda_.10} parent=0
    _
  %s5 = ssub.s32 1, %s3
  %s6 = scalar_select 0, %s5, %s3
  loop: start=0, step=1, limit=4
  $region2: #{_lambda_.10} parent=0 // loop_pre_header
    _
  $region3: #{_lambda_.10} parent=0 // loop_header
    %s8 = sphi 0, %s12
    %p9 = scmp.ge.s32.totalorder %s8, 4
    %s18 = sphi 0, %s20
    %s21 = sphi 0, %s18
    %s22 = sphi 0, %s21
    %s38 = sphi 0, %s22
    %s42 = sphi 0, %s42
    %s44 = sphi 0, %s42
    %s45 = sphi 0, %s44
    %s59 = sphi 0, %s45
    %s65 = sphi 0, %s67
    %s68 = sphi 0, %s65
    %s69 = sphi 0, %s68
    %s85 = sphi 0, %s69
  $region4: #{_lambda_.10} parent=0 // loop_header_branch
    %11 = sbr.rel (%p9) target = $region8
  $region5: #{_lambda_.10} parent=0 // loop_body
    %s13 = ssub.s32 %s8, 1
    %s14 = ssub.s32 %s8, 2
    %s15 = sadd.s32 %s8, 1
    %s16 = ssub.s32 %s8, %s15
    %p17 = scmp.eq.s32.totalorder %s16, 0
    %s19 = sadd.s32 %s18, 1
    %s20 = scalar_select %p17, %s18, %s19
    %p23 = pneg %p17
    %p24 = scmp.eq.s32.totalorder %s8, 1
    %p25 = por %p23, %p24
    %p26 = scmp.ne.s32.totalorder %s18, %s21
    %p27 = scmp.eq.s32.totalorder %s8, 0
    %p28 = por %p26, %p27
    %p29 = scmp.ne.s32.totalorder %s18, %s21
    %p30 = scmp.eq.s32.totalorder %s13, 1
    %p31 = por %p29, %p30
    %p32 = scmp.ne.s32.totalorder %s21, %s22
    %p33 = scmp.eq.s32.totalorder %s13, 0
    %p34 = por %p32, %p33
    %p35 = scmp.ne.s32.totalorder %s21, %s22
    %p36 = scmp.eq.s32.totalorder %s14, 1
    %p37 = por %p35, %p36
    %p39 = scmp.ne.s32.totalorder %s22, %s38
    %p40 = scmp.eq.s32.totalorder %s14, 0
    %p41 = por %p39, %p40
    %s43 = sadd.s32 %s42, 1
    %p46 = scmp.eq.s32.totalorder %s8, 1
    %p47 = scmp.ne.s32.totalorder %s42, %s44
    %p48 = scmp.eq.s32.totalorder %s8, 0
    %p49 = por %p47, %p48
    %p50 = scmp.ne.s32.totalorder %s42, %s44
    %p51 = scmp.eq.s32.totalorder %s13, 1
    %p52 = por %p50, %p51
    %p53 = scmp.ne.s32.totalorder %s44, %s45
    %p54 = scmp.eq.s32.totalorder %s13, 0
    %p55 = por %p53, %p54
    %p56 = scmp.ne.s32.totalorder %s44, %s45
    %p57 = scmp.eq.s32.totalorder %s14, 1
    %p58 = por %p56, %p57
    %p60 = scmp.ne.s32.totalorder %s45, %s59
    %p61 = scmp.eq.s32.totalorder %s14, 0
    %p62 = por %p60, %p61
    %s63 = ssub.s32 %s8, %s15
    %p64 = scmp.eq.s32.totalorder %s63, 0
    %s66 = sadd.s32 %s65, 1
    %s67 = scalar_select %p64, %s65, %s66
    %p70 = pneg %p64
    %p71 = scmp.eq.s32.totalorder %s8, 1
    %p72 = por %p70, %p71
    %p73 = scmp.ne.s32.totalorder %s65, %s68
    %p74 = scmp.eq.s32.totalorder %s8, 0
    %p75 = por %p73, %p74
    %p76 = scmp.ne.s32.totalorder %s65, %s68
    %p77 = scmp.eq.s32.totalorder %s13, 1
    %p78 = por %p76, %p77
    %p79 = scmp.ne.s32.totalorder %s68, %s69
    %p80 = scmp.eq.s32.totalorder %s13, 0
    %p81 = por %p79, %p80
    %p82 = scmp.ne.s32.totalorder %s68, %s69
    %p83 = scmp.eq.s32.totalorder %s14, 1
    %p84 = por %p82, %p83
    %p86 = scmp.ne.s32.totalorder %s69, %s85
    %p87 = scmp.eq.s32.totalorder %s14, 0
    %p88 = por %p86, %p87
    %p89 = scmp.le.s32.totalorder 1, %s8
    %p90 = scmp.lt.s32.totalorder %s8, 3
    %p91 = pnand %p89, %p90
    %p92 = pneg %p91
    // Predicated region
    $region9: #{_lambda_.10} parent=5 // pred_check
      _
    $region10: #{_lambda_.10} parent=5 // pred_check_branch
      %94 = sbr.rel (%p91) target = $region12
    $region11: #{_lambda_.10} parent=5 // pred_region
      %s95 = ssub.s32 %s8, 1
      // Predicated region
      $region13: #{_lambda_.10} parent=11 // pred_check
        %p96 = pneg %p55
      $region14: #{_lambda_.10} parent=11 // pred_check_branch
        %98 = sbr.rel (%p96) target = $region16
      $region15: #{_lambda_.10} parent=11 // pred_region
        _
      $region16: #{_lambda_.10} parent=11 // pred_fallthru
        _
    $region12: #{_lambda_.10} parent=5 // pred_fallthru
      _
    %p99 = scmp.lt.s32.totalorder %s8, 2
    // Predicated region
    $region17: #{_lambda_.10} parent=5 // pred_check
      %p100 = pneg %p99
    $region18: #{_lambda_.10} parent=5 // pred_check_branch
      %102 = sbr.rel (%p100) target = $region20
    $region19: #{_lambda_.10} parent=5 // pred_region
      // Predicated region
      $region21: #{_lambda_.10} parent=19 // pred_check
        %p103 = pneg %p28
      $region22: #{_lambda_.10} parent=19 // pred_check_branch
        %105 = sbr.rel (%p103) target = $region24
      $region23: #{_lambda_.10} parent=19 // pred_region
        %s106 = smul.u32 8, %s8
        %p107 = scmp.lt.s32.totalorder %s106, 15
        %s108 = scalar_select %p107, %s106, 15
        %s109 = smul.addr %s108, 2
        %s110 = smul.addr %s109, 8
        %s111 = scalar_lea.vmem %s0, %s110
        %s112 = smul.u32 8, %s8
      $region24: #{_lambda_.10} parent=19 // pred_fallthru
        _
    $region20: #{_lambda_.10} parent=5 // pred_fallthru
      _
    %p113 = scmp.le.s32.totalorder 1, %s8
    %p114 = scmp.lt.s32.totalorder %s8, 3
    %p115 = pnand %p113, %p114
    %p116 = pneg %p115
    // Predicated region
    $region25: #{_lambda_.10} parent=5 // pred_check
      _
    $region26: #{_lambda_.10} parent=5 // pred_check_branch
      %118 = sbr.rel (%p115) target = $region28
    $region27: #{_lambda_.10} parent=5 // pred_region
      %s119 = ssub.s32 %s8, 1
      %s120 = smul.u32 8, %s13
      %p121 = scmp.lt.s32.totalorder %s120, 15
      %s122 = scalar_select %p121, %s120, 15
      %s123 = smul.addr %s122, 2
      %s124 = smul.addr %s123, 8
      %s125 = scalar_lea.vmem %s0, %s124
      %p126 = pneg %p34
      %p127 = pneg %p31
      %p128 = pneg %p55
      %p129 = pneg %p52
      %p130 = pneg %p81
      %p131 = pneg %p78
      %s132 = smul.u32 8, %s13
      %p133 = scmp.lt.s32.totalorder %s132, 15
      %s134 = scalar_select %p133, %s132, 15
      %s135 = smul.addr %s134, 3
      %s136 = smul.addr %s135, 8
      %s137 = scalar_lea.vmem %s2, %s136
      %s138 = smul.u32 8, %s13
      %p139 = scmp.lt.s32.totalorder %s138, 15
      %s140 = scalar_select %p139, %s138, 15
      %s141 = smul.addr %s140, 2
      %s142 = smul.addr %s141, 8
      %s143 = scalar_lea.vmem %s0, %s142
      %s144 = smul.u32 8, %s13
      %s145 = smul.u32 8, %s13
      %p146 = scmp.lt.s32.totalorder %s145, 15
      %s147 = scalar_select %p146, %s145, 15
      %s148 = smul.addr %s147, 3
      %s149 = smul.addr %s148, 8
      %s150 = scalar_lea.vmem %s2, %s149
      %s151 = smul.u32 8, %s13
      %v153 = vld [vmem:[%s143] sm:$0xff]
      %v154 = vld [vmem:[%s143 + $0x8] sm:$0xff]
      %v155 = vld [vmem:[%s143 + $0x10] sm:$0xff]
      %v156 = vld [vmem:[%s143 + $0x18] sm:$0xff]
      %v157 = vld [vmem:[%s143 + $0x20] sm:$0xff]
      %v158 = vld [vmem:[%s143 + $0x28] sm:$0xff]
      %v159 = vld [vmem:[%s143 + $0x30] sm:$0xff]
      %v160 = vld [vmem:[%s143 + $0x38] sm:$0xff]
      %v161 = vld [vmem:[%s143 + $0x40] sm:$0xff]
      %v162 = vld [vmem:[%s143 + $0x48] sm:$0xff]
      %v163 = vld [vmem:[%s143 + $0x50] sm:$0xff]
      %v164 = vld [vmem:[%s143 + $0x58] sm:$0xff]
      %v165 = vld [vmem:[%s143 + $0x60] sm:$0xff]
      %v166 = vld [vmem:[%s143 + $0x68] sm:$0xff]
      %v167 = vld [vmem:[%s143 + $0x70] sm:$0xff]
      %v168 = vld [vmem:[%s143 + $0x78] sm:$0xff]
      %v169 = vpack.c.bf16 %v155, %v153
      %v170 = vpack.c.bf16 %v156, %v154
      %v171 = vpack.c.bf16 %v159, %v157
      %v172 = vpack.c.bf16 %v160, %v158
      %v173 = vpack.c.bf16 %v163, %v161
      %v174 = vpack.c.bf16 %v164, %v162
      %v175 = vpack.c.bf16 %v167, %v165
      %v176 = vpack.c.bf16 %v168, %v166
      %v177 = vld [vmem:[%s1] sm:$0xff]
      %v178 = vld [vmem:[%s1 + $0x8] sm:$0xf]
      %v179 = vld [vmem:[%s1 + $0xc] sm:$0xff]
      %v180 = vld [vmem:[%s1 + $0x14] sm:$0xf]
      %v181 = vld [vmem:[%s1 + $0x18] sm:$0xff]
      %v182 = vld [vmem:[%s1 + $0x20] sm:$0xf]
      %v183 = vld [vmem:[%s1 + $0x24] sm:$0xff]
      %v184 = vld [vmem:[%s1 + $0x2c] sm:$0xf]
      %v185 = vld [vmem:[%s1 + $0x30] sm:$0xff]
      %v186 = vld [vmem:[%s1 + $0x38] sm:$0xf]
      %v187 = vld [vmem:[%s1 + $0x3c] sm:$0xff]
      %v188 = vld [vmem:[%s1 + $0x44] sm:$0xf]
      %v189 = vld [vmem:[%s1 + $0x48] sm:$0xff]
      %v190 = vld [vmem:[%s1 + $0x50] sm:$0xf]
      %v191 = vld [vmem:[%s1 + $0x54] sm:$0xff]
      %v192 = vld [vmem:[%s1 + $0x5c] sm:$0xf]
      %v193 = vld [vmem:[%s1 + $0x60] sm:$0xff]
      %v194 = vld [vmem:[%s1 + $0x68] sm:$0xf]
      %v195 = vld [vmem:[%s1 + $0x6c] sm:$0xff]
      %v196 = vld [vmem:[%s1 + $0x74] sm:$0xf]
      %v197 = vld [vmem:[%s1 + $0x78] sm:$0xff]
      %v198 = vld [vmem:[%s1 + $0x80] sm:$0xf]
      %v199 = vld [vmem:[%s1 + $0x84] sm:$0xff]
      %v200 = vld [vmem:[%s1 + $0x8c] sm:$0xf]
      %v201 = vld [vmem:[%s1 + $0x90] sm:$0xff]
      %v202 = vld [vmem:[%s1 + $0x98] sm:$0xf]
      %v203 = vld [vmem:[%s1 + $0x9c] sm:$0xff]
      %v204 = vld [vmem:[%s1 + $0xa4] sm:$0xf]
      %v205 = vld [vmem:[%s1 + $0xa8] sm:$0xff]
      %v206 = vld [vmem:[%s1 + $0xb0] sm:$0xf]
      %v207 = vld [vmem:[%s1 + $0xb4] sm:$0xff]
      %v208 = vld [vmem:[%s1 + $0xbc] sm:$0xf]
      %v209 = vld [vmem:[%s1 + $0xc0] sm:$0xff]
      %v210 = vld [vmem:[%s1 + $0xc8] sm:$0xf]
      %v211 = vld [vmem:[%s1 + $0xcc] sm:$0xff]
      %v212 = vld [vmem:[%s1 + $0xd4] sm:$0xf]
      %v213 = vld [vmem:[%s1 + $0xd8] sm:$0xff]
      %v214 = vld [vmem:[%s1 + $0xe0] sm:$0xf]
      %v215 = vld [vmem:[%s1 + $0xe4] sm:$0xff]
      %v216 = vld [vmem:[%s1 + $0xec] sm:$0xf]
      %v217 = vld [vmem:[%s1 + $0xf0] sm:$0xff]
      %v218 = vld [vmem:[%s1 + $0xf8] sm:$0xf]
      %v219 = vld [vmem:[%s1 + $0xfc] sm:$0xff]
      %v220 = vld [vmem:[%s1 + $0x104] sm:$0xf]
      %v221 = vld [vmem:[%s1 + $0x108] sm:$0xff]
      %v222 = vld [vmem:[%s1 + $0x110] sm:$0xf]
      %v223 = vld [vmem:[%s1 + $0x114] sm:$0xff]
      %v224 = vld [vmem:[%s1 + $0x11c] sm:$0xf]
      %v225 = vld [vmem:[%s1 + $0x120] sm:$0xff]
      %v226 = vld [vmem:[%s1 + $0x128] sm:$0xf]
      %v227 = vld [vmem:[%s1 + $0x12c] sm:$0xff]
      %v228 = vld [vmem:[%s1 + $0x134] sm:$0xf]
      %v229 = vld [vmem:[%s1 + $0x138] sm:$0xff]
      %v230 = vld [vmem:[%s1 + $0x140] sm:$0xf]
      %v231 = vld [vmem:[%s1 + $0x144] sm:$0xff]
      %v232 = vld [vmem:[%s1 + $0x14c] sm:$0xf]
      %v233 = vld [vmem:[%s1 + $0x150] sm:$0xff]
      %v234 = vld [vmem:[%s1 + $0x158] sm:$0xf]
      %v235 = vld [vmem:[%s1 + $0x15c] sm:$0xff]
      %v236 = vld [vmem:[%s1 + $0x164] sm:$0xf]
      %v237 = vld [vmem:[%s1 + $0x168] sm:$0xff]
      %v238 = vld [vmem:[%s1 + $0x170] sm:$0xf]
      %v239 = vld [vmem:[%s1 + $0x174] sm:$0xff]
      %v240 = vld [vmem:[%s1 + $0x17c] sm:$0xf]
      %v305 = vunpack.c.l.b16 %v177
      %v306 = vunpack.c.h.b16 %v177
      %v307 = vunpack.c.l.b16 %v178
      %v308 = vunpack.c.l.b16 %v179
      %v309 = vunpack.c.h.b16 %v179
      %v310 = vunpack.c.l.b16 %v180
      %v311 = vunpack.c.l.b16 %v181
      %v312 = vunpack.c.h.b16 %v181
      %v313 = vunpack.c.l.b16 %v182
      %v314 = vunpack.c.l.b16 %v183
      %v315 = vunpack.c.h.b16 %v183
      %v316 = vunpack.c.l.b16 %v184
      %v317 = vunpack.c.l.b16 %v185
      %v318 = vunpack.c.h.b16 %v185
      %v319 = vunpack.c.l.b16 %v186
      %v320 = vunpack.c.l.b16 %v187
      %v321 = vunpack.c.h.b16 %v187
      %v322 = vunpack.c.l.b16 %v188
      %v323 = vunpack.c.l.b16 %v189
      %v324 = vunpack.c.h.b16 %v189
      %v325 = vunpack.c.l.b16 %v190
      %v326 = vunpack.c.l.b16 %v191
      %v327 = vunpack.c.h.b16 %v191
      %v328 = vunpack.c.l.b16 %v192
      %v329 = vunpack.c.l.b16 %v193
      %v330 = vunpack.c.h.b16 %v193
      %v331 = vunpack.c.l.b16 %v194
      %v332 = vunpack.c.l.b16 %v195
      %v333 = vunpack.c.h.b16 %v195
      %v334 = vunpack.c.l.b16 %v196
      %v335 = vunpack.c.l.b16 %v197
      %v336 = vunpack.c.h.b16 %v197
      %v337 = vunpack.c.l.b16 %v198
      %v338 = vunpack.c.l.b16 %v199
      %v339 = vunpack.c.h.b16 %v199
      %v340 = vunpack.c.l.b16 %v200
      %v341 = vunpack.c.l.b16 %v201
      %v342 = vunpack.c.h.b16 %v201
      %v343 = vunpack.c.l.b16 %v202
      %v344 = vunpack.c.l.b16 %v203
      %v345 = vunpack.c.h.b16 %v203
      %v346 = vunpack.c.l.b16 %v204
      %v347 = vunpack.c.l.b16 %v205
      %v348 = vunpack.c.h.b16 %v205
      %v349 = vunpack.c.l.b16 %v206
      %v350 = vunpack.c.l.b16 %v207
      %v351 = vunpack.c.h.b16 %v207
      %v352 = vunpack.c.l.b16 %v208
      %v353 = vunpack.c.l.b16 %v209
      %v354 = vunpack.c.h.b16 %v209
      %v355 = vunpack.c.l.b16 %v210
      %v356 = vunpack.c.l.b16 %v211
      %v357 = vunpack.c.h.b16 %v211
      %v358 = vunpack.c.l.b16 %v212
      %v359 = vunpack.c.l.b16 %v213
      %v360 = vunpack.c.h.b16 %v213
      %v361 = vunpack.c.l.b16 %v214
      %v362 = vunpack.c.l.b16 %v215
      %v363 = vunpack.c.h.b16 %v215
      %v364 = vunpack.c.l.b16 %v216
      %v365 = vunpack.c.l.b16 %v217
      %v366 = vunpack.c.h.b16 %v217
      %v367 = vunpack.c.l.b16 %v218
      %v368 = vunpack.c.l.b16 %v219
      %v369 = vunpack.c.h.b16 %v219
      %v370 = vunpack.c.l.b16 %v220
      %v371 = vunpack.c.l.b16 %v221
      %v372 = vunpack.c.h.b16 %v221
      %v373 = vunpack.c.l.b16 %v222
      %v374 = vunpack.c.l.b16 %v223
      %v375 = vunpack.c.h.b16 %v223
      %v376 = vunpack.c.l.b16 %v224
      %v377 = vunpack.c.l.b16 %v225
      %v378 = vunpack.c.h.b16 %v225
      %v379 = vunpack.c.l.b16 %v226
      %v380 = vunpack.c.l.b16 %v227
      %v381 = vunpack.c.h.b16 %v227
      %v382 = vunpack.c.l.b16 %v228
      %v383 = vunpack.c.l.b16 %v229
      %v384 = vunpack.c.h.b16 %v229
      %v385 = vunpack.c.l.b16 %v230
      %v386 = vunpack.c.l.b16 %v231
      %v387 = vunpack.c.h.b16 %v231
      %v388 = vunpack.c.l.b16 %v232
      %v389 = vunpack.c.l.b16 %v233
      %v390 = vunpack.c.h.b16 %v233
      %v391 = vunpack.c.l.b16 %v234
      %v392 = vunpack.c.l.b16 %v235
      %v393 = vunpack.c.h.b16 %v235
      %v394 = vunpack.c.l.b16 %v236
      %v395 = vunpack.c.l.b16 %v237
      %v396 = vunpack.c.h.b16 %v237
      %v397 = vunpack.c.l.b16 %v238
      %v398 = vunpack.c.l.b16 %v239
      %v399 = vunpack.c.h.b16 %v239
      %v400 = vunpack.c.l.b16 %v240
      %v401 = vpack.c.b16 %v308, %v305
      %v402 = vpack.c.b16 %v309, %v306
      %v403 = vpack.c.b16 %v310, %v307
      %v404 = vpack.c.b16 %v314, %v311
      %v405 = vpack.c.b16 %v315, %v312
      %v406 = vpack.c.b16 %v316, %v313
      %v407 = vpack.c.b16 %v320, %v317
      %v408 = vpack.c.b16 %v321, %v318
      %v409 = vpack.c.b16 %v322, %v319
      %v410 = vpack.c.b16 %v326, %v323
      %v411 = vpack.c.b16 %v327, %v324
      %v412 = vpack.c.b16 %v328, %v325
      %v413 = vpack.c.b16 %v332, %v329
      %v414 = vpack.c.b16 %v333, %v330
      %v415 = vpack.c.b16 %v334, %v331
      %v416 = vpack.c.b16 %v338, %v335
      %v417 = vpack.c.b16 %v339, %v336
      %v418 = vpack.c.b16 %v340, %v337
      %v419 = vpack.c.b16 %v344, %v341
      %v420 = vpack.c.b16 %v345, %v342
      %v421 = vpack.c.b16 %v346, %v343
      %v422 = vpack.c.b16 %v350, %v347
      %v423 = vpack.c.b16 %v351, %v348
      %v424 = vpack.c.b16 %v352, %v349
      %v425 = vpack.c.b16 %v356, %v353
      %v426 = vpack.c.b16 %v357, %v354
      %v427 = vpack.c.b16 %v358, %v355
      %v428 = vpack.c.b16 %v362, %v359
      %v429 = vpack.c.b16 %v363, %v360
      %v430 = vpack.c.b16 %v364, %v361
      %v431 = vpack.c.b16 %v368, %v365
      %v432 = vpack.c.b16 %v369, %v366
      %v433 = vpack.c.b16 %v370, %v367
      %v434 = vpack.c.b16 %v374, %v371
      %v435 = vpack.c.b16 %v375, %v372
      %v436 = vpack.c.b16 %v376, %v373
      %v437 = vpack.c.b16 %v380, %v377
      %v438 = vpack.c.b16 %v381, %v378
      %v439 = vpack.c.b16 %v382, %v379
      %v440 = vpack.c.b16 %v386, %v383
      %v441 = vpack.c.b16 %v387, %v384
      %v442 = vpack.c.b16 %v388, %v385
      %v443 = vpack.c.b16 %v392, %v389
      %v444 = vpack.c.b16 %v393, %v390
      %v445 = vpack.c.b16 %v394, %v391
      %v446 = vpack.c.b16 %v398, %v395
      %v447 = vpack.c.b16 %v399, %v396
      %v448 = vpack.c.b16 %v400, %v397
      %497 = vmatprep.subr.bf16.mxu0 %v402
      %498 = vmatpush1.bf16.msra.mxu0 %v401
      %499 = vmatprep.subr.bf16.mxu0 %v405
      %500 = vmatpush1.bf16.msra.mxu0 %v404
      %501 = vmatprep.subr.bf16.mxu0 %v408
      %502 = vmatpush1.bf16.msra.mxu0 %v407
      %503 = vmatprep.subr.bf16.mxu0 %v411
      %504 = vmatpush1.bf16.msra.mxu0 %v410
      %505 = vmatprep.subr.bf16.mxu0 %v414
      %506 = vmatpush1.bf16.msra.mxu0 %v413
      %507 = vmatprep.subr.bf16.mxu0 %v417
      %508 = vmatpush1.bf16.msra.mxu0 %v416
      %509 = vmatprep.subr.bf16.mxu0 %v420
      %510 = vmatpush1.bf16.msra.mxu0 %v419
      %511 = vmatprep.subr.bf16.mxu0 %v423
      %512 = vmatpush1.bf16.msra.mxu0 %v422
      %513 = vmatprep.subr.bf16.mxu0 %v426
      %514 = vmatpush1.bf16.msra.mxu0 %v425
      %515 = vmatprep.subr.bf16.mxu0 %v429
      %516 = vmatpush1.bf16.msra.mxu0 %v428
      %517 = vmatprep.subr.bf16.mxu0 %v432
      %518 = vmatpush1.bf16.msra.mxu0 %v431
      %519 = vmatprep.subr.bf16.mxu0 %v435
      %520 = vmatpush1.bf16.msra.mxu0 %v434
      %521 = vmatprep.subr.bf16.mxu0 %v438
      %522 = vmatpush1.bf16.msra.mxu0 %v437
      %523 = vmatprep.subr.bf16.mxu0 %v441
      %524 = vmatpush1.bf16.msra.mxu0 %v440
      %525 = vmatprep.subr.bf16.mxu0 %v444
      %526 = vmatpush1.bf16.msra.mxu0 %v443
      %527 = vmatprep.subr.bf16.mxu0 %v447
      %528 = vmatpush1.bf16.msra.mxu0 %v446
      %529 = vmatprep.mubr.bf16.mxu0 %v170
      %530 = vmatmul.mubr.bf16.gmra.mrb[0].mxu0 %v169
      %v531 = vpop.f32.mrb[0].mxu0
      %v532 = vadd.f32 0.0, %v531
      %v533 = vpop.f32.mrb[0].mxu0
      %v534 = vadd.f32 0.0, %v533
      %v535 = vpop.f32.mrb[0].mxu0
      %v536 = vadd.f32 0.0, %v535
      %v537 = vpop.f32.mrb[0].mxu0
      %v538 = vadd.f32 0.0, %v537
      %539 = vmatprep.mubr.bf16.mxu0 %v172
      %540 = vmatmul.mubr.bf16.gmra.mrb[0].mxu0 %v171
      %v541 = vpop.f32.mrb[0].mxu0
      %v542 = vadd.f32 0.0, %v541
      %v543 = vpop.f32.mrb[0].mxu0
      %v544 = vadd.f32 0.0, %v543
      %v545 = vpop.f32.mrb[0].mxu0
      %v546 = vadd.f32 0.0, %v545
      %v547 = vpop.f32.mrb[0].mxu0
      %v548 = vadd.f32 0.0, %v547
      %549 = vmatprep.mubr.bf16.mxu0 %v174
      %550 = vmatmul.mubr.bf16.gmra.mrb[0].mxu0 %v173
      %v551 = vpop.f32.mrb[0].mxu0
      %v552 = vadd.f32 0.0, %v551
      %v553 = vpop.f32.mrb[0].mxu0
      %v554 = vadd.f32 0.0, %v553
      %v555 = vpop.f32.mrb[0].mxu0
      %v556 = vadd.f32 0.0, %v555
      %v557 = vpop.f32.mrb[0].mxu0
      %v558 = vadd.f32 0.0, %v557
      %559 = vmatprep.mubr.bf16.mxu0 %v176
      %560 = vmatmul.mubr.bf16.gmra.mrb[0].mxu0 %v175
      %v561 = vpop.f32.mrb[0].mxu0
      %v562 = vadd.f32 0.0, %v561
      %v563 = vpop.f32.mrb[0].mxu0
      %v564 = vadd.f32 0.0, %v563
      %v565 = vpop.f32.mrb[0].mxu0
      %v566 = vadd.f32 0.0, %v565
      %v567 = vpop.f32.mrb[0].mxu0
      %v568 = vadd.f32 0.0, %v567
      %569 = vdwg.mxu0
      %570 = vmatprep.subr.bf16.mxu0 0
      %571 = vmatpush1.bf16.msra.mxu0 %v403
      %572 = vmatprep.subr.bf16.mxu0 0
      %573 = vmatpush1.bf16.msra.mxu0 %v406
      %574 = vmatprep.subr.bf16.mxu0 0
      %575 = vmatpush1.bf16.msra.mxu0 %v409
      %576 = vmatprep.subr.bf16.mxu0 0
      %577 = vmatpush1.bf16.msra.mxu0 %v412
      %578 = vmatprep.subr.bf16.mxu0 0
      %579 = vmatpush1.bf16.msra.mxu0 %v415
      %580 = vmatprep.subr.bf16.mxu0 0
      %581 = vmatpush1.bf16.msra.mxu0 %v418
      %582 = vmatprep.subr.bf16.mxu0 0
      %583 = vmatpush1.bf16.msra.mxu0 %v421
      %584 = vmatprep.subr.bf16.mxu0 0
      %585 = vmatpush1.bf16.msra.mxu0 %v424
      %586 = vmatprep.subr.bf16.mxu0 0
      %587 = vmatpush1.bf16.msra.mxu0 %v427
      %588 = vmatprep.subr.bf16.mxu0 0
      %589 = vmatpush1.bf16.msra.mxu0 %v430
      %590 = vmatprep.subr.bf16.mxu0 0
      %591 = vmatpush1.bf16.msra.mxu0 %v433
      %592 = vmatprep.subr.bf16.mxu0 0
      %593 = vmatpush1.bf16.msra.mxu0 %v436
      %594 = vmatprep.subr.bf16.mxu0 0
      %595 = vmatpush1.bf16.msra.mxu0 %v439
      %596 = vmatprep.subr.bf16.mxu0 0
      %597 = vmatpush1.bf16.msra.mxu0 %v442
      %598 = vmatprep.subr.bf16.mxu0 0
      %599 = vmatpush1.bf16.msra.mxu0 %v445
      %600 = vmatprep.subr.bf16.mxu0 0
      %601 = vmatpush1.bf16.msra.mxu0 %v448
      %602 = vmatprep.mubr.bf16.mxu0 %v170
      %603 = vmatmul.mubr.bf16.gmra.mrb[0].mxu0 %v169
      %v604 = vpop.f32.mrb[0].mxu0
      %v605 = vadd.f32 0.0, %v604
      %v606 = vpop.f32.mrb[0].mxu0
      %v607 = vpop.f32.mrb[0].mxu0
      %v608 = vadd.f32 0.0, %v607
      %v609 = vpop.f32.mrb[0].mxu0
      %610 = vmatprep.mubr.bf16.mxu0 %v172
      %611 = vmatmul.mubr.bf16.gmra.mrb[0].mxu0 %v171
      %v612 = vpop.f32.mrb[0].mxu0
      %v613 = vadd.f32 0.0, %v612
      %v614 = vpop.f32.mrb[0].mxu0
      %v615 = vpop.f32.mrb[0].mxu0
      %v616 = vadd.f32 0.0, %v615
      %v617 = vpop.f32.mrb[0].mxu0
      %618 = vmatprep.mubr.bf16.mxu0 %v174
      %619 = vmatmul.mubr.bf16.gmra.mrb[0].mxu0 %v173
      %v620 = vpop.f32.mrb[0].mxu0
      %v621 = vadd.f32 0.0, %v620
      %v622 = vpop.f32.mrb[0].mxu0
      %v623 = vpop.f32.mrb[0].mxu0
      %v624 = vadd.f32 0.0, %v623
      %v625 = vpop.f32.mrb[0].mxu0
      %626 = vmatprep.mubr.bf16.mxu0 %v176
      %627 = vmatmul.mubr.bf16.gmra.mrb[0].mxu0 %v175
      %v628 = vpop.f32.mrb[0].mxu0
      %v629 = vadd.f32 0.0, %v628
      %v630 = vpop.f32.mrb[0].mxu0
      %v631 = vpop.f32.mrb[0].mxu0
      %v632 = vadd.f32 0.0, %v631
      %v633 = vpop.f32.mrb[0].mxu0
      %634 = vdwg.mxu0
      %635 = vst [vmem:[%s150] sm:$0xff] %v532
      %636 = vst [vmem:[%s150 + $0x8] sm:$0xff] %v534
      %637 = vst [vmem:[%s150 + $0x10] sm:$0xff] %v605
      %638 = vst [vmem:[%s150 + $0x18] sm:$0xff] %v536
      %639 = vst [vmem:[%s150 + $0x20] sm:$0xff] %v538
      %640 = vst [vmem:[%s150 + $0x28] sm:$0xff] %v608
      %641 = vst [vmem:[%s150 + $0x30] sm:$0xff] %v542
      %642 = vst [vmem:[%s150 + $0x38] sm:$0xff] %v544
      %643 = vst [vmem:[%s150 + $0x40] sm:$0xff] %v613
      %644 = vst [vmem:[%s150 + $0x48] sm:$0xff] %v546
      %645 = vst [vmem:[%s150 + $0x50] sm:$0xff] %v548
      %646 = vst [vmem:[%s150 + $0x58] sm:$0xff] %v616
      %647 = vst [vmem:[%s150 + $0x60] sm:$0xff] %v552
      %648 = vst [vmem:[%s150 + $0x68] sm:$0xff] %v554
      %649 = vst [vmem:[%s150 + $0x70] sm:$0xff] %v621
      %650 = vst [vmem:[%s150 + $0x78] sm:$0xff] %v556
      %651 = vst [vmem:[%s150 + $0x80] sm:$0xff] %v558
      %652 = vst [vmem:[%s150 + $0x88] sm:$0xff] %v624
      %653 = vst [vmem:[%s150 + $0x90] sm:$0xff] %v562
      %654 = vst [vmem:[%s150 + $0x98] sm:$0xff] %v564
      %655 = vst [vmem:[%s150 + $0xa0] sm:$0xff] %v629
      %656 = vst [vmem:[%s150 + $0xa8] sm:$0xff] %v566
      %657 = vst [vmem:[%s150 + $0xb0] sm:$0xff] %v568
      %658 = vst [vmem:[%s150 + $0xb8] sm:$0xff] %v632
      %s659 = smul.u32 8, %s13
      %p660 = scmp.lt.s32.totalorder %s659, 15
      %s661 = scalar_select %p660, %s659, 15
      %s662 = smul.addr %s661, 3
      %s663 = smul.addr %s662, 8
      %s664 = scalar_lea.vmem %s2, %s663
      // Predicated region
      $region29: #{_lambda_.10} parent=27 // pred_check
        %p665 = pneg %p78
      $region30: #{_lambda_.10} parent=27 // pred_check_branch
        %667 = sbr.rel (%p665) target = $region32
      $region31: #{_lambda_.10} parent=27 // pred_region
        %s668 = smul.u32 8, %s13
      $region32: #{_lambda_.10} parent=27 // pred_fallthru
        _
    $region28: #{_lambda_.10} parent=5 // pred_fallthru
      _
    %p669 = scmp.le.s32.totalorder 2, %s8
    // Predicated region
    $region33: #{_lambda_.10} parent=5 // pred_check
      %p670 = pneg %p669
    $region34: #{_lambda_.10} parent=5 // pred_check_branch
      %672 = sbr.rel (%p670) target = $region36
    $region35: #{_lambda_.10} parent=5 // pred_region
      %s673 = ssub.s32 %s8, 2
      // Predicated region
      $region37: #{_lambda_.10} parent=35 // pred_check
        %p674 = pneg %p84
      $region38: #{_lambda_.10} parent=35 // pred_check_branch
        %676 = sbr.rel (%p674) target = $region40
      $region39: #{_lambda_.10} parent=35 // pred_region
        %s677 = smul.u32 8, %s14
        %p678 = scmp.lt.s32.totalorder %s677, 15
        %s679 = scalar_select %p678, %s677, 15
        %s680 = smul.addr %s679, 3
        %s681 = smul.addr %s680, 8
        %s682 = scalar_lea.vmem %s2, %s681
      $region40: #{_lambda_.10} parent=35 // pred_fallthru
        _
    $region36: #{_lambda_.10} parent=5 // pred_fallthru
      _
  $region6: #{_lambda_.10} parent=0 // loop_footer
    %s12 = sadd.s32 1, %s8
  $region7: #{_lambda_.10} parent=0 // loop_footer_branch
    %7 = sbr.rel target = $region3
  $region8: #{_lambda_.10} parent=0 // loop_exit
    _

// kernel: _lambda_.11
$region0: #{_lambda_.11}
  #allocation0 [shape = 'u32[]', space=smem, size = 0x4, offset = 0x4, fixed_abs, tag = 'smem constant byte address 0x4 - core index']
  #allocation1 [shape = 'u32[144,128]{1,0:T(1,128)}', space=vmem, size = 0x12000, scoped, tag = 'internal scratch']
  #allocation2 [shape = 'f32[64,256]{1,0:T(8,128)}', space=vmem, size = 0x10000, scoped, tag = 'scratch operand']
  #allocation3 [shape = 'f32[64,256]{1,0:T(8,128)}', space=vmem, size = 0x10000, scoped, tag = 'scratch operand']
  #allocation4 [shape = 'f32[64,16,256]{2,1,0:T(8,128)}', space=vmem, size = 0x100000, scoped, tag = 'scratch operand']
  #allocation5 [shape = 'f32[64,16,256]{2,1,0:T(8,128)}', space=vmem, size = 0x100000, scoped, tag = 'scratch operand']
  %s0 = inlined_call_operand.vmem [shape: f32[2,64,256], index: 0, kind: input, shape index: {}]
  %s1 = inlined_call_operand.vmem [shape: f32[2,64,256], index: 1, kind: input, shape index: {}]
  %s2 = inlined_call_operand.vmem [shape: f32[16,256], index: 2, kind: input, shape index: {}]
  %s3 = inlined_call_operand.vmem [shape: f32[2,64,16,8], index: 3, kind: input, shape index: {}]
  %s4 = inlined_call_operand.vmem [shape: f32[1,256], index: 4, kind: input, shape index: {}]
  %s5 = inlined_call_operand.vmem [shape: f32[1,256], index: 5, kind: input, shape index: {}]
  %s6 = inlined_call_operand.vmem [shape: f32[2,64,256], index: 6, kind: output, shape index: {}]
  %s7 = sld [smem:[#allocation0]]
  $region78: #{_lambda_.11} parent=0
    _
  %s9 = ssub.s32 1, %s7
  %s10 = scalar_select 0, %s9, %s7
  loop: start=0, step=1, limit=4
  $region2: #{_lambda_.11} parent=0 // loop_pre_header
    _
  $region3: #{_lambda_.11} parent=0 // loop_header
    %s12 = sphi 0, %s16
    %p13 = scmp.ge.s32.totalorder %s12, 4
    %s22 = sphi 0, %s24
    %s25 = sphi 0, %s22
    %s26 = sphi 0, %s25
    %s42 = sphi 0, %s26
    %s48 = sphi 0, %s50
    %s51 = sphi 0, %s48
    %s52 = sphi 0, %s51
    %s68 = sphi 0, %s52
    %s72 = sphi 0, %s72
    %s74 = sphi 0, %s72
    %s75 = sphi 0, %s74
    %s89 = sphi 0, %s75
    %s95 = sphi 0, %s97
    %s98 = sphi 0, %s95
    %s99 = sphi 0, %s98
    %s115 = sphi 0, %s99
    %s119 = sphi 0, %s119
    %s121 = sphi 0, %s119
    %s122 = sphi 0, %s121
    %s136 = sphi 0, %s122
    %s140 = sphi 0, %s140
    %s142 = sphi 0, %s140
    %s143 = sphi 0, %s142
    %s157 = sphi 0, %s143
    %s163 = sphi 0, %s165
    %s166 = sphi 0, %s163
    %s167 = sphi 0, %s166
    %s183 = sphi 0, %s167
  $region4: #{_lambda_.11} parent=0 // loop_header_branch
    %15 = sbr.rel (%p13) target = $region8
  $region5: #{_lambda_.11} parent=0 // loop_body
    %s17 = ssub.s32 %s12, 1
    %s18 = ssub.s32 %s12, 2
    %s19 = sadd.s32 %s12, 1
    %s20 = ssub.s32 %s12, %s19
    %p21 = scmp.eq.s32.totalorder %s20, 0
    %s23 = sadd.s32 %s22, 1
    %s24 = scalar_select %p21, %s22, %s23
    %p27 = pneg %p21
    %p28 = scmp.eq.s32.totalorder %s12, 1
    %p29 = por %p27, %p28
    %p30 = scmp.ne.s32.totalorder %s22, %s25
    %p31 = scmp.eq.s32.totalorder %s12, 0
    %p32 = por %p30, %p31
    %p33 = scmp.ne.s32.totalorder %s22, %s25
    %p34 = scmp.eq.s32.totalorder %s17, 1
    %p35 = por %p33, %p34
    %p36 = scmp.ne.s32.totalorder %s25, %s26
    %p37 = scmp.eq.s32.totalorder %s17, 0
    %p38 = por %p36, %p37
    %p39 = scmp.ne.s32.totalorder %s25, %s26
    %p40 = scmp.eq.s32.totalorder %s18, 1
    %p41 = por %p39, %p40
    %p43 = scmp.ne.s32.totalorder %s26, %s42
    %p44 = scmp.eq.s32.totalorder %s18, 0
    %p45 = por %p43, %p44
    %s46 = ssub.s32 %s12, %s19
    %p47 = scmp.eq.s32.totalorder %s46, 0
    %s49 = sadd.s32 %s48, 1
    %s50 = scalar_select %p47, %s48, %s49
    %p53 = pneg %p47
    %p54 = scmp.eq.s32.totalorder %s12, 1
    %p55 = por %p53, %p54
    %p56 = scmp.ne.s32.totalorder %s48, %s51
    %p57 = scmp.eq.s32.totalorder %s12, 0
    %p58 = por %p56, %p57
    %p59 = scmp.ne.s32.totalorder %s48, %s51
    %p60 = scmp.eq.s32.totalorder %s17, 1
    %p61 = por %p59, %p60
    %p62 = scmp.ne.s32.totalorder %s51, %s52
    %p63 = scmp.eq.s32.totalorder %s17, 0
    %p64 = por %p62, %p63
    %p65 = scmp.ne.s32.totalorder %s51, %s52
    %p66 = scmp.eq.s32.totalorder %s18, 1
    %p67 = por %p65, %p66
    %p69 = scmp.ne.s32.totalorder %s52, %s68
    %p70 = scmp.eq.s32.totalorder %s18, 0
    %p71 = por %p69, %p70
    %s73 = sadd.s32 %s72, 1
    %p76 = scmp.eq.s32.totalorder %s12, 1
    %p77 = scmp.ne.s32.totalorder %s72, %s74
    %p78 = scmp.eq.s32.totalorder %s12, 0
    %p79 = por %p77, %p78
    %p80 = scmp.ne.s32.totalorder %s72, %s74
    %p81 = scmp.eq.s32.totalorder %s17, 1
    %p82 = por %p80, %p81
    %p83 = scmp.ne.s32.totalorder %s74, %s75
    %p84 = scmp.eq.s32.totalorder %s17, 0
    %p85 = por %p83, %p84
    %p86 = scmp.ne.s32.totalorder %s74, %s75
    %p87 = scmp.eq.s32.totalorder %s18, 1
    %p88 = por %p86, %p87
    %p90 = scmp.ne.s32.totalorder %s75, %s89
    %p91 = scmp.eq.s32.totalorder %s18, 0
    %p92 = por %p90, %p91
    %s93 = ssub.s32 %s12, %s19
    %p94 = scmp.eq.s32.totalorder %s93, 0
    %s96 = sadd.s32 %s95, 1
    %s97 = scalar_select %p94, %s95, %s96
    %p100 = pneg %p94
    %p101 = scmp.eq.s32.totalorder %s12, 1
    %p102 = por %p100, %p101
    %p103 = scmp.ne.s32.totalorder %s95, %s98
    %p104 = scmp.eq.s32.totalorder %s12, 0
    %p105 = por %p103, %p104
    %p106 = scmp.ne.s32.totalorder %s95, %s98
    %p107 = scmp.eq.s32.totalorder %s17, 1
    %p108 = por %p106, %p107
    %p109 = scmp.ne.s32.totalorder %s98, %s99
    %p110 = scmp.eq.s32.totalorder %s17, 0
    %p111 = por %p109, %p110
    %p112 = scmp.ne.s32.totalorder %s98, %s99
    %p113 = scmp.eq.s32.totalorder %s18, 1
    %p114 = por %p112, %p113
    %p116 = scmp.ne.s32.totalorder %s99, %s115
    %p117 = scmp.eq.s32.totalorder %s18, 0
    %p118 = por %p116, %p117
    %s120 = sadd.s32 %s119, 1
    %p123 = scmp.eq.s32.totalorder %s12, 1
    %p124 = scmp.ne.s32.totalorder %s119, %s121
    %p125 = scmp.eq.s32.totalorder %s12, 0
    %p126 = por %p124, %p125
    %p127 = scmp.ne.s32.totalorder %s119, %s121
    %p128 = scmp.eq.s32.totalorder %s17, 1
    %p129 = por %p127, %p128
    %p130 = scmp.ne.s32.totalorder %s121, %s122
    %p131 = scmp.eq.s32.totalorder %s17, 0
    %p132 = por %p130, %p131
    %p133 = scmp.ne.s32.totalorder %s121, %s122
    %p134 = scmp.eq.s32.totalorder %s18, 1
    %p135 = por %p133, %p134
    %p137 = scmp.ne.s32.totalorder %s122, %s136
    %p138 = scmp.eq.s32.totalorder %s18, 0
    %p139 = por %p137, %p138
    %s141 = sadd.s32 %s140, 1
    %p144 = scmp.eq.s32.totalorder %s12, 1
    %p145 = scmp.ne.s32.totalorder %s140, %s142
    %p146 = scmp.eq.s32.totalorder %s12, 0
    %p147 = por %p145, %p146
    %p148 = scmp.ne.s32.totalorder %s140, %s142
    %p149 = scmp.eq.s32.totalorder %s17, 1
    %p150 = por %p148, %p149
    %p151 = scmp.ne.s32.totalorder %s142, %s143
    %p152 = scmp.eq.s32.totalorder %s17, 0
    %p153 = por %p151, %p152
    %p154 = scmp.ne.s32.totalorder %s142, %s143
    %p155 = scmp.eq.s32.totalorder %s18, 1
    %p156 = por %p154, %p155
    %p158 = scmp.ne.s32.totalorder %s143, %s157
    %p159 = scmp.eq.s32.totalorder %s18, 0
    %p160 = por %p158, %p159
    %s161 = ssub.s32 %s12, %s19
    %p162 = scmp.eq.s32.totalorder %s161, 0
    %s164 = sadd.s32 %s163, 1
    %s165 = scalar_select %p162, %s163, %s164
    %p168 = pneg %p162
    %p169 = scmp.eq.s32.totalorder %s12, 1
    %p170 = por %p168, %p169
    %p171 = scmp.ne.s32.totalorder %s163, %s166
    %p172 = scmp.eq.s32.totalorder %s12, 0
    %p173 = por %p171, %p172
    %p174 = scmp.ne.s32.totalorder %s163, %s166
    %p175 = scmp.eq.s32.totalorder %s17, 1
    %p176 = por %p174, %p175
    %p177 = scmp.ne.s32.totalorder %s166, %s167
    %p178 = scmp.eq.s32.totalorder %s17, 0
    %p179 = por %p177, %p178
    %p180 = scmp.ne.s32.totalorder %s166, %s167
    %p181 = scmp.eq.s32.totalorder %s18, 1
    %p182 = por %p180, %p181
    %p184 = scmp.ne.s32.totalorder %s167, %s183
    %p185 = scmp.eq.s32.totalorder %s18, 0
    %p186 = por %p184, %p185
    %p187 = scmp.le.s32.totalorder 1, %s12
    %p188 = scmp.lt.s32.totalorder %s12, 3
    %p189 = pnand %p187, %p188
    %p190 = pneg %p189
    // Predicated region
    $region9: #{_lambda_.11} parent=5 // pred_check
      _
    $region10: #{_lambda_.11} parent=5 // pred_check_branch
      %192 = sbr.rel (%p189) target = $region12
    $region11: #{_lambda_.11} parent=5 // pred_region
      %s193 = ssub.s32 %s12, 1
      // Predicated region
      $region13: #{_lambda_.11} parent=11 // pred_check
        %p194 = pneg %p85
      $region14: #{_lambda_.11} parent=11 // pred_check_branch
        %196 = sbr.rel (%p194) target = $region16
      $region15: #{_lambda_.11} parent=11 // pred_region
        _
      $region16: #{_lambda_.11} parent=11 // pred_fallthru
        _
      // Predicated region
      $region17: #{_lambda_.11} parent=11 // pred_check
        %p197 = pneg %p132
      $region18: #{_lambda_.11} parent=11 // pred_check_branch
        %199 = sbr.rel (%p197) target = $region20
      $region19: #{_lambda_.11} parent=11 // pred_region
        _
      $region20: #{_lambda_.11} parent=11 // pred_fallthru
        _
      // Predicated region
      $region21: #{_lambda_.11} parent=11 // pred_check
        %p200 = pneg %p153
      $region22: #{_lambda_.11} parent=11 // pred_check_branch
        %202 = sbr.rel (%p200) target = $region24
      $region23: #{_lambda_.11} parent=11 // pred_region
        _
      $region24: #{_lambda_.11} parent=11 // pred_fallthru
        _
    $region12: #{_lambda_.11} parent=5 // pred_fallthru
      _
    %p203 = scmp.lt.s32.totalorder %s12, 2
    // Predicated region
    $region25: #{_lambda_.11} parent=5 // pred_check
      %p204 = pneg %p203
    $region26: #{_lambda_.11} parent=5 // pred_check_branch
      %206 = sbr.rel (%p204) target = $region28
    $region27: #{_lambda_.11} parent=5 // pred_region
      // Predicated region
      $region29: #{_lambda_.11} parent=27 // pred_check
        %p207 = pneg %p32
      $region30: #{_lambda_.11} parent=27 // pred_check_branch
        %209 = sbr.rel (%p207) target = $region32
      $region31: #{_lambda_.11} parent=27 // pred_region
        %p210 = scmp.lt.s32.totalorder %s12, 1
        %s211 = scalar_select %p210, %s12, 1
        %s212 = smul.addr %s211, 16
        %s213 = smul.addr %s212, 8
        %s214 = scalar_lea.vmem %s0, %s213
      $region32: #{_lambda_.11} parent=27 // pred_fallthru
        _
      // Predicated region
      $region33: #{_lambda_.11} parent=27 // pred_check
        %p215 = pneg %p58
      $region34: #{_lambda_.11} parent=27 // pred_check_branch
        %217 = sbr.rel (%p215) target = $region36
      $region35: #{_lambda_.11} parent=27 // pred_region
        %p218 = scmp.lt.s32.totalorder %s12, 1
        %s219 = scalar_select %p218, %s12, 1
        %s220 = smul.addr %s219, 16
        %s221 = smul.addr %s220, 8
        %s222 = scalar_lea.vmem %s1, %s221
      $region36: #{_lambda_.11} parent=27 // pred_fallthru
        _
      // Predicated region
      $region37: #{_lambda_.11} parent=27 // pred_check
        %p223 = pneg %p105
      $region38: #{_lambda_.11} parent=27 // pred_check_branch
        %225 = sbr.rel (%p223) target = $region40
      $region39: #{_lambda_.11} parent=27 // pred_region
        %p226 = scmp.lt.s32.totalorder %s12, 1
        %s227 = scalar_select %p226, %s12, 1
        %s228 = smul.addr %s227, 128
        %s229 = smul.addr %s228, 8
        %s230 = scalar_lea.vmem %s3, %s229
      $region40: #{_lambda_.11} parent=27 // pred_fallthru
        _
    $region28: #{_lambda_.11} parent=5 // pred_fallthru
      _
    %p231 = scmp.le.s32.totalorder 1, %s12
    %p232 = scmp.lt.s32.totalorder %s12, 3
    %p233 = pnand %p231, %p232
    %p234 = pneg %p233
    // Predicated region
    $region41: #{_lambda_.11} parent=5 // pred_check
      _
    $region42: #{_lambda_.11} parent=5 // pred_check_branch
      %236 = sbr.rel (%p233) target = $region44
    $region43: #{_lambda_.11} parent=5 // pred_region
      %s237 = ssub.s32 %s12, 1
      %p238 = scmp.lt.s32.totalorder %s17, 1
      %s239 = scalar_select %p238, %s17, 1
      %s240 = smul.addr %s239, 16
      %s241 = smul.addr %s240, 8
      %s242 = scalar_lea.vmem %s0, %s241
      %p243 = pneg %p38
      %p244 = pneg %p35
      %p245 = scmp.lt.s32.totalorder %s17, 1
      %s246 = scalar_select %p245, %s17, 1
      %s247 = smul.addr %s246, 16
      %s248 = smul.addr %s247, 8
      %s249 = scalar_lea.vmem %s1, %s248
      %p250 = pneg %p64
      %p251 = pneg %p61
      %p252 = pneg %p85
      %p253 = pneg %p82
      %p254 = scmp.lt.s32.totalorder %s17, 1
      %s255 = scalar_select %p254, %s17, 1
      %s256 = smul.addr %s255, 128
      %s257 = smul.addr %s256, 8
      %s258 = scalar_lea.vmem %s3, %s257
      %p259 = pneg %p111
      %p260 = pneg %p108
      %p261 = pneg %p132
      %p262 = pneg %p129
      %p263 = pneg %p153
      %p264 = pneg %p150
      %p265 = pneg %p179
      %p266 = pneg %p176
      %p267 = scmp.lt.s32.totalorder %s17, 1
      %s268 = scalar_select %p267, %s17, 1
      %s269 = smul.addr %s268, 16
      %s270 = smul.addr %s269, 8
      %s271 = scalar_lea.vmem %s6, %s270
      %p272 = scmp.lt.s32.totalorder %s17, 1
      %s273 = scalar_select %p272, %s17, 1
      %s274 = smul.addr %s273, 16
      %s275 = smul.addr %s274, 8
      %s276 = scalar_lea.vmem %s0, %s275
      %p277 = scmp.lt.s32.totalorder %s17, 1
      %s278 = scalar_select %p277, %s17, 1
      %s279 = smul.addr %s278, 16
      %s280 = smul.addr %s279, 8
      %s281 = scalar_lea.vmem %s1, %s280
      %p282 = scmp.lt.s32.totalorder %s17, 1
      %s283 = scalar_select %p282, %s17, 1
      %s284 = smul.addr %s283, 128
      %s285 = smul.addr %s284, 8
      %s286 = scalar_lea.vmem %s3, %s285
      %p287 = scmp.lt.s32.totalorder %s17, 1
      %s288 = scalar_select %p287, %s17, 1
      %s289 = smul.addr %s288, 16
      %s290 = smul.addr %s289, 8
      %s291 = scalar_lea.vmem %s6, %s290
      %v292 = vld [vmem:[%s276] sm:$0xff]
      %v293 = vld [vmem:[%s276 + $0x8] sm:$0xff]
      %v294 = vld [vmem:[%s276 + $0x10] sm:$0xff]
      %v295 = vld [vmem:[%s276 + $0x18] sm:$0xff]
      %v296 = vld [vmem:[%s276 + $0x20] sm:$0xff]
      %v297 = vld [vmem:[%s276 + $0x28] sm:$0xff]
      %v298 = vld [vmem:[%s276 + $0x30] sm:$0xff]
      %v299 = vld [vmem:[%s276 + $0x38] sm:$0xff]
      %v300 = vld [vmem:[%s276 + $0x40] sm:$0xff]
      %v301 = vld [vmem:[%s276 + $0x48] sm:$0xff]
      %v302 = vld [vmem:[%s276 + $0x50] sm:$0xff]
      %v303 = vld [vmem:[%s276 + $0x58] sm:$0xff]
      %v304 = vld [vmem:[%s276 + $0x60] sm:$0xff]
      %v305 = vld [vmem:[%s276 + $0x68] sm:$0xff]
      %v306 = vld [vmem:[%s276 + $0x70] sm:$0xff]
      %v307 = vld [vmem:[%s276 + $0x78] sm:$0xff]
      %v308 = vld [vmem:[%s281] sm:$0xff]
      %v309 = vld [vmem:[%s281 + $0x8] sm:$0xff]
      %v310 = vld [vmem:[%s281 + $0x10] sm:$0xff]
      %v311 = vld [vmem:[%s281 + $0x18] sm:$0xff]
      %v312 = vld [vmem:[%s281 + $0x20] sm:$0xff]
      %v313 = vld [vmem:[%s281 + $0x28] sm:$0xff]
      %v314 = vld [vmem:[%s281 + $0x30] sm:$0xff]
      %v315 = vld [vmem:[%s281 + $0x38] sm:$0xff]
      %v316 = vld [vmem:[%s281 + $0x40] sm:$0xff]
      %v317 = vld [vmem:[%s281 + $0x48] sm:$0xff]
      %v318 = vld [vmem:[%s281 + $0x50] sm:$0xff]
      %v319 = vld [vmem:[%s281 + $0x58] sm:$0xff]
      %v320 = vld [vmem:[%s281 + $0x60] sm:$0xff]
      %v321 = vld [vmem:[%s281 + $0x68] sm:$0xff]
      %v322 = vld [vmem:[%s281 + $0x70] sm:$0xff]
      %v323 = vld [vmem:[%s281 + $0x78] sm:$0xff]
      %v324 = vld [vmem:[%s5] sm:$0x3]
      %v326 = vlaneseq
      %v327 = vshrl.u32 %v326, 7
      %v328 = vsub.s32 0, %v327
      %v329 = vrot.slane %v324, %v328
      %v330 = vlaneseq
      %v331 = vshrl.u32 %v330, 7
      %v332 = vsub.s32 1, %v331
      %v333 = vrot.slane %v324, %v332
      %v336 = vadd.f32 %v308, %v329
      %v337 = vadd.f32 %v309, %v333
      %v338 = vadd.f32 %v310, %v329
      %v339 = vadd.f32 %v311, %v333
      %v340 = vadd.f32 %v312, %v329
      %v341 = vadd.f32 %v313, %v333
      %v342 = vadd.f32 %v314, %v329
      %v343 = vadd.f32 %v315, %v333
      %v344 = vadd.f32 %v316, %v329
      %v345 = vadd.f32 %v317, %v333
      %v346 = vadd.f32 %v318, %v329
      %v347 = vadd.f32 %v319, %v333
      %v348 = vadd.f32 %v320, %v329
      %v349 = vadd.f32 %v321, %v333
      %v350 = vadd.f32 %v322, %v329
      %v351 = vadd.f32 %v323, %v333
      %vm352 = vcmp.gt.f32.partialorder %v336, 20.0
      %vm353 = vcmp.gt.f32.partialorder %v337, 20.0
      %vm354 = vcmp.gt.f32.partialorder %v338, 20.0
      %vm355 = vcmp.gt.f32.partialorder %v339, 20.0
      %vm356 = vcmp.gt.f32.partialorder %v340, 20.0
      %vm357 = vcmp.gt.f32.partialorder %v341, 20.0
      %vm358 = vcmp.gt.f32.partialorder %v342, 20.0
      %vm359 = vcmp.gt.f32.partialorder %v343, 20.0
      %vm360 = vcmp.gt.f32.partialorder %v344, 20.0
      %vm361 = vcmp.gt.f32.partialorder %v345, 20.0
      %vm362 = vcmp.gt.f32.partialorder %v346, 20.0
      %vm363 = vcmp.gt.f32.partialorder %v347, 20.0
      %vm364 = vcmp.gt.f32.partialorder %v348, 20.0
      %vm365 = vcmp.gt.f32.partialorder %v349, 20.0
      %vm366 = vcmp.gt.f32.partialorder %v350, 20.0
      %vm367 = vcmp.gt.f32.partialorder %v351, 20.0
      %v368 = vmul.f32 %v336, 1.442695
      %v369 = vpow.pop %v368
      %v370 = vmul.f32 %v337, 1.442695
      %v371 = vpow.pop %v370
      %v372 = vmul.f32 %v338, 1.442695
      %v373 = vpow.pop %v372
      %v374 = vmul.f32 %v339, 1.442695
      %v375 = vpow.pop %v374
      %v376 = vmul.f32 %v340, 1.442695
      %v377 = vpow.pop %v376
      %v378 = vmul.f32 %v341, 1.442695
      %v379 = vpow.pop %v378
      %v380 = vmul.f32 %v342, 1.442695
      %v381 = vpow.pop %v380
      %v382 = vmul.f32 %v343, 1.442695
      %v383 = vpow.pop %v382
      %v384 = vmul.f32 %v344, 1.442695
      %v385 = vpow.pop %v384
      %v386 = vmul.f32 %v345, 1.442695
      %v387 = vpow.pop %v386
      %v388 = vmul.f32 %v346, 1.442695
      %v389 = vpow.pop %v388
      %v390 = vmul.f32 %v347, 1.442695
      %v391 = vpow.pop %v390
      %v392 = vmul.f32 %v348, 1.442695
      %v393 = vpow.pop %v392
      %v394 = vmul.f32 %v349, 1.442695
      %v395 = vpow.pop %v394
      %v396 = vmul.f32 %v350, 1.442695
      %v397 = vpow.pop %v396
      %v398 = vmul.f32 %v351, 1.442695
      %v399 = vpow.pop %v398
      %v400 = vadd.f32 %v369, 1.0
      %v401 = vlog2.pop %v400
      %v402 = vmul.f32 %v401, 0.6931472
      %v403 = vmul.f32 -0.5, %v369
      %v404 = vadd.f32 %v403, 1.0
      %v405 = vmul.f32 %v404, %v369
      %v406 = vand.u32 2147483647, %v369
      %vm407 = vcmp.lt.f32.partialorder %v406, 0.0004427343
      %v408 = vsel %vm407, %v405, %v402
      %v409 = vadd.f32 %v371, 1.0
      %v410 = vlog2.pop %v409
      %v411 = vmul.f32 %v410, 0.6931472
      %v412 = vmul.f32 -0.5, %v371
      %v413 = vadd.f32 %v412, 1.0
      %v414 = vmul.f32 %v413, %v371
      %v415 = vand.u32 2147483647, %v371
      %vm416 = vcmp.lt.f32.partialorder %v415, 0.0004427343
      %v417 = vsel %vm416, %v414, %v411
      %v418 = vadd.f32 %v373, 1.0
      %v419 = vlog2.pop %v418
      %v420 = vmul.f32 %v419, 0.6931472
      %v421 = vmul.f32 -0.5, %v373
      %v422 = vadd.f32 %v421, 1.0
      %v423 = vmul.f32 %v422, %v373
      %v424 = vand.u32 2147483647, %v373
      %vm425 = vcmp.lt.f32.partialorder %v424, 0.0004427343
      %v426 = vsel %vm425, %v423, %v420
      %v427 = vadd.f32 %v375, 1.0
      %v428 = vlog2.pop %v427
      %v429 = vmul.f32 %v428, 0.6931472
      %v430 = vmul.f32 -0.5, %v375
      %v431 = vadd.f32 %v430, 1.0
      %v432 = vmul.f32 %v431, %v375
      %v433 = vand.u32 2147483647, %v375
      %vm434 = vcmp.lt.f32.partialorder %v433, 0.0004427343
      %v435 = vsel %vm434, %v432, %v429
      %v436 = vadd.f32 %v377, 1.0
      %v437 = vlog2.pop %v436
      %v438 = vmul.f32 %v437, 0.6931472
      %v439 = vmul.f32 -0.5, %v377
      %v440 = vadd.f32 %v439, 1.0
      %v441 = vmul.f32 %v440, %v377
      %v442 = vand.u32 2147483647, %v377
      %vm443 = vcmp.lt.f32.partialorder %v442, 0.0004427343
      %v444 = vsel %vm443, %v441, %v438
      %v445 = vadd.f32 %v379, 1.0
      %v446 = vlog2.pop %v445
      %v447 = vmul.f32 %v446, 0.6931472
      %v448 = vmul.f32 -0.5, %v379
      %v449 = vadd.f32 %v448, 1.0
      %v450 = vmul.f32 %v449, %v379
      %v451 = vand.u32 2147483647, %v379
      %vm452 = vcmp.lt.f32.partialorder %v451, 0.0004427343
      %v453 = vsel %vm452, %v450, %v447
      %v454 = vadd.f32 %v381, 1.0
      %v455 = vlog2.pop %v454
      %v456 = vmul.f32 %v455, 0.6931472
      %v457 = vmul.f32 -0.5, %v381
      %v458 = vadd.f32 %v457, 1.0
      %v459 = vmul.f32 %v458, %v381
      %v460 = vand.u32 2147483647, %v381
      %vm461 = vcmp.lt.f32.partialorder %v460, 0.0004427343
      %v462 = vsel %vm461, %v459, %v456
      %v463 = vadd.f32 %v383, 1.0
      %v464 = vlog2.pop %v463
      %v465 = vmul.f32 %v464, 0.6931472
      %v466 = vmul.f32 -0.5, %v383
      %v467 = vadd.f32 %v466, 1.0
      %v468 = vmul.f32 %v467, %v383
      %v469 = vand.u32 2147483647, %v383
      %vm470 = vcmp.lt.f32.partialorder %v469, 0.0004427343
      %v471 = vsel %vm470, %v468, %v465
      %v472 = vadd.f32 %v385, 1.0
      %v473 = vlog2.pop %v472
      %v474 = vmul.f32 %v473, 0.6931472
      %v475 = vmul.f32 -0.5, %v385
      %v476 = vadd.f32 %v475, 1.0
      %v477 = vmul.f32 %v476, %v385
      %v478 = vand.u32 2147483647, %v385
      %vm479 = vcmp.lt.f32.partialorder %v478, 0.0004427343
      %v480 = vsel %vm479, %v477, %v474
      %v481 = vadd.f32 %v387, 1.0
      %v482 = vlog2.pop %v481
      %v483 = vmul.f32 %v482, 0.6931472
      %v484 = vmul.f32 -0.5, %v387
      %v485 = vadd.f32 %v484, 1.0
      %v486 = vmul.f32 %v485, %v387
      %v487 = vand.u32 2147483647, %v387
      %vm488 = vcmp.lt.f32.partialorder %v487, 0.0004427343
      %v489 = vsel %vm488, %v486, %v483
      %v490 = vadd.f32 %v389, 1.0
      %v491 = vlog2.pop %v490
      %v492 = vmul.f32 %v491, 0.6931472
      %v493 = vmul.f32 -0.5, %v389
      %v494 = vadd.f32 %v493, 1.0
      %v495 = vmul.f32 %v494, %v389
      %v496 = vand.u32 2147483647, %v389
      %vm497 = vcmp.lt.f32.partialorder %v496, 0.0004427343
      %v498 = vsel %vm497, %v495, %v492
      %v499 = vadd.f32 %v391, 1.0
      %v500 = vlog2.pop %v499
      %v501 = vmul.f32 %v500, 0.6931472
      %v502 = vmul.f32 -0.5, %v391
      %v503 = vadd.f32 %v502, 1.0
      %v504 = vmul.f32 %v503, %v391
      %v505 = vand.u32 2147483647, %v391
      %vm506 = vcmp.lt.f32.partialorder %v505, 0.0004427343
      %v507 = vsel %vm506, %v504, %v501
      %v508 = vadd.f32 %v393, 1.0
      %v509 = vlog2.pop %v508
      %v510 = vmul.f32 %v509, 0.6931472
      %v511 = vmul.f32 -0.5, %v393
      %v512 = vadd.f32 %v511, 1.0
      %v513 = vmul.f32 %v512, %v393
      %v514 = vand.u32 2147483647, %v393
      %vm515 = vcmp.lt.f32.partialorder %v514, 0.0004427343
      %v516 = vsel %vm515, %v513, %v510
      %v517 = vadd.f32 %v395, 1.0
      %v518 = vlog2.pop %v517
      %v519 = vmul.f32 %v518, 0.6931472
      %v520 = vmul.f32 -0.5, %v395
      %v521 = vadd.f32 %v520, 1.0
      %v522 = vmul.f32 %v521, %v395
      %v523 = vand.u32 2147483647, %v395
      %vm524 = vcmp.lt.f32.partialorder %v523, 0.0004427343
      %v525 = vsel %vm524, %v522, %v519
      %v526 = vadd.f32 %v397, 1.0
      %v527 = vlog2.pop %v526
      %v528 = vmul.f32 %v527, 0.6931472
      %v529 = vmul.f32 -0.5, %v397
      %v530 = vadd.f32 %v529, 1.0
      %v531 = vmul.f32 %v530, %v397
      %v532 = vand.u32 2147483647, %v397
      %vm533 = vcmp.lt.f32.partialorder %v532, 0.0004427343
      %v534 = vsel %vm533, %v531, %v528
      %v535 = vadd.f32 %v399, 1.0
      %v536 = vlog2.pop %v535
      %v537 = vmul.f32 %v536, 0.6931472
      %v538 = vmul.f32 -0.5, %v399
      %v539 = vadd.f32 %v538, 1.0
      %v540 = vmul.f32 %v539, %v399
      %v541 = vand.u32 2147483647, %v399
      %vm542 = vcmp.lt.f32.partialorder %v541, 0.0004427343
      %v543 = vsel %vm542, %v540, %v537
      %v544 = vsel %vm352, %v336, %v408
      %v545 = vsel %vm353, %v337, %v417
      %v546 = vsel %vm354, %v338, %v426
      %v547 = vsel %vm355, %v339, %v435
      %v548 = vsel %vm356, %v340, %v444
      %v549 = vsel %vm357, %v341, %v453
      %v550 = vsel %vm358, %v342, %v462
      %v551 = vsel %vm359, %v343, %v471
      %v552 = vsel %vm360, %v344, %v480
      %v553 = vsel %vm361, %v345, %v489
      %v554 = vsel %vm362, %v346, %v498
      %v555 = vsel %vm363, %v347, %v507
      %v556 = vsel %vm364, %v348, %v516
      %v557 = vsel %vm365, %v349, %v525
      %v558 = vsel %vm366, %v350, %v534
      %v559 = vsel %vm367, %v351, %v543
      %560 = vst [vmem:[#allocation2] sm:$0xff] %v544
      %561 = vst [vmem:[#allocation2 + $0x8] sm:$0xff] %v545
      %562 = vst [vmem:[#allocation2 + $0x10] sm:$0xff] %v546
      %563 = vst [vmem:[#allocation2 + $0x18] sm:$0xff] %v547
      %564 = vst [vmem:[#allocation2 + $0x20] sm:$0xff] %v548
      %565 = vst [vmem:[#allocation2 + $0x28] sm:$0xff] %v549
      %566 = vst [vmem:[#allocation2 + $0x30] sm:$0xff] %v550
      %567 = vst [vmem:[#allocation2 + $0x38] sm:$0xff] %v551
      %568 = vst [vmem:[#allocation2 + $0x40] sm:$0xff] %v552
      %569 = vst [vmem:[#allocation2 + $0x48] sm:$0xff] %v553
      %570 = vst [vmem:[#allocation2 + $0x50] sm:$0xff] %v554
      %571 = vst [vmem:[#allocation2 + $0x58] sm:$0xff] %v555
      %572 = vst [vmem:[#allocation2 + $0x60] sm:$0xff] %v556
      %573 = vst [vmem:[#allocation2 + $0x68] sm:$0xff] %v557
      %574 = vst [vmem:[#allocation2 + $0x70] sm:$0xff] %v558
      %575 = vst [vmem:[#allocation2 + $0x78] sm:$0xff] %v559
      %v576 = vmul.f32 %v544, %v292
      %v577 = vmul.f32 %v545, %v293
      %v578 = vmul.f32 %v546, %v294
      %v579 = vmul.f32 %v547, %v295
      %v580 = vmul.f32 %v548, %v296
      %v581 = vmul.f32 %v549, %v297
      %v582 = vmul.f32 %v550, %v298
      %v583 = vmul.f32 %v551, %v299
      %v584 = vmul.f32 %v552, %v300
      %v585 = vmul.f32 %v553, %v301
      %v586 = vmul.f32 %v554, %v302
      %v587 = vmul.f32 %v555, %v303
      %v588 = vmul.f32 %v556, %v304
      %v589 = vmul.f32 %v557, %v305
      %v590 = vmul.f32 %v558, %v306
      %v591 = vmul.f32 %v559, %v307
      %592 = vst [vmem:[#allocation3] sm:$0xff] %v576
      %593 = vst [vmem:[#allocation3 + $0x8] sm:$0xff] %v577
      %594 = vst [vmem:[#allocation3 + $0x10] sm:$0xff] %v578
      %595 = vst [vmem:[#allocation3 + $0x18] sm:$0xff] %v579
      %596 = vst [vmem:[#allocation3 + $0x20] sm:$0xff] %v580
      %597 = vst [vmem:[#allocation3 + $0x28] sm:$0xff] %v581
      %598 = vst [vmem:[#allocation3 + $0x30] sm:$0xff] %v582
      %599 = vst [vmem:[#allocation3 + $0x38] sm:$0xff] %v583
      %600 = vst [vmem:[#allocation3 + $0x40] sm:$0xff] %v584
      %601 = vst [vmem:[#allocation3 + $0x48] sm:$0xff] %v585
      %602 = vst [vmem:[#allocation3 + $0x50] sm:$0xff] %v586
      %603 = vst [vmem:[#allocation3 + $0x58] sm:$0xff] %v587
      %604 = vst [vmem:[#allocation3 + $0x60] sm:$0xff] %v588
      %605 = vst [vmem:[#allocation3 + $0x68] sm:$0xff] %v589
      %606 = vst [vmem:[#allocation3 + $0x70] sm:$0xff] %v590
      %607 = vst [vmem:[#allocation3 + $0x78] sm:$0xff] %v591
      %v608 = vld [vmem:[%s2] sm:$0xff]
      %v609 = vld [vmem:[%s2 + $0x8] sm:$0xff]
      %v610 = vld [vmem:[%s2 + $0x10] sm:$0xff]
      %v611 = vld [vmem:[%s2 + $0x18] sm:$0xff]
      loop: start=0, step=1, limit=64
      $region45: #{_lambda_.11} parent=43 // loop_pre_header
        _
      $region46: #{_lambda_.11} parent=43 // loop_header
        %s613 = sphi 0, %s617
        %p614 = scmp.ge.s32.totalorder %s613, 64
      $region47: #{_lambda_.11} parent=43 // loop_header_branch
        %616 = sbr.rel (%p614) target = $region51
      $region48: #{_lambda_.11} parent=43 // loop_body
        %s618 = sshra.s32 %s613, 3
        %s619 = sand.u32 %s613, 7
        %s620 = sshra.s32 %s613, 3
        %s621 = sand.u32 %s613, 7
        %s622 = smul.u32 %s618, 2
        %s623 = smul.u32 %s622, 8
        %s624 = sadd.s32 %s623, %s621
        %s625 = scalar_lea.vmem [#allocation2], %s624
        %v626 = vld [vmem:[%s625] ss:$8 sm:$0x3]
        %s627 = scalar_lea.vmem [#allocation3], %s624
        %v628 = vld [vmem:[%s627] ss:$8 sm:$0x3]
        %v630 = vlaneseq
        %v631 = vshrl.u32 %v630, 7
        %v632 = vsub.s32 0, %v631
        %v633 = vrot.slane %v626, %v632
        %v634 = vlaneseq
        %v635 = vshrl.u32 %v634, 7
        %v636 = vsub.s32 1, %v635
        %v637 = vrot.slane %v626, %v636
        %v640 = vmul.f32 %v608, %v633
        %v641 = vmul.f32 %v609, %v637
        %v642 = vmul.f32 %v610, %v633
        %v643 = vmul.f32 %v611, %v637
        %v644 = vmul.f32 %v640, 1.442695
        %v645 = vpow.pop %v644
        %v646 = vmul.f32 %v641, 1.442695
        %v647 = vpow.pop %v646
        %v648 = vmul.f32 %v642, 1.442695
        %v649 = vpow.pop %v648
        %v650 = vmul.f32 %v643, 1.442695
        %v651 = vpow.pop %v650
        %s652 = smul.u32 %s613, 4
        %s653 = smul.addr %s652, 8
        %s654 = scalar_lea.vmem [#allocation4], %s653
        %655 = vst [vmem:[%s654] sm:$0xff] %v645
        %656 = vst [vmem:[%s654 + $0x8] sm:$0xff] %v647
        %657 = vst [vmem:[%s654 + $0x10] sm:$0xff] %v649
        %658 = vst [vmem:[%s654 + $0x18] sm:$0xff] %v651
        %s659 = smul.u32 %s613, 16
        %s660 = scalar_lea.vmem %s286, %s659
        %v661 = vld [vmem:[%s660] sm:$0xff]
        %v662 = vld [vmem:[%s660 + $0x8] sm:$0xff]
        %664 = vset.pattern.permute.xlu0 0
        %665 = vperm.xlu0 %664, %v661
        %v666 = vpop.permute.xlu0 %665
        %669 = vset.pattern.permute.xlu0 0
        %670 = vperm.xlu0 %669, %v662
        %v671 = vpop.permute.xlu0 %670
        %673 = vset.pattern.permute.xlu0 1
        %674 = vperm.xlu0 %673, %v661
        %v675 = vpop.permute.xlu0 %674
        %677 = vset.pattern.permute.xlu0 1
        %678 = vperm.xlu0 %677, %v662
        %v679 = vpop.permute.xlu0 %678
        %681 = vset.pattern.permute.xlu0 2
        %682 = vperm.xlu0 %681, %v661
        %v683 = vpop.permute.xlu0 %682
        %685 = vset.pattern.permute.xlu0 2
        %686 = vperm.xlu0 %685, %v662
        %v687 = vpop.permute.xlu0 %686
        %689 = vset.pattern.permute.xlu0 3
        %690 = vperm.xlu0 %689, %v661
        %v691 = vpop.permute.xlu0 %690
        %693 = vset.pattern.permute.xlu0 3
        %694 = vperm.xlu0 %693, %v662
        %v695 = vpop.permute.xlu0 %694
        %vm697 = vcmask 523264
        %v698 = vsel %vm697, %v666, %v675
        %v699 = vsel %vm697, %v671, %v679
        %v700 = vsel %vm697, %v683, %v691
        %v701 = vsel %vm697, %v687, %v695
        %v703 = vlaneseq
        %v704 = vshrl.u32 %v703, 7
        %v705 = vsub.s32 0, %v704
        %v706 = vrot.slane %v628, %v705
        %v707 = vlaneseq
        %v708 = vshrl.u32 %v707, 7
        %v709 = vsub.s32 1, %v708
        %v710 = vrot.slane %v628, %v709
        %v713 = vmul.f32 %v698, %v706
        %v714 = vmul.f32 %v700, %v710
        %v715 = vmul.f32 %v699, %v706
        %v716 = vmul.f32 %v701, %v710
        %s717 = smul.addr %s652, 8
        %s718 = scalar_lea.vmem [#allocation5], %s717
        %719 = vst [vmem:[%s718] sm:$0xff] %v713
        %720 = vst [vmem:[%s718 + $0x8] sm:$0xff] %v714
        %721 = vst [vmem:[%s718 + $0x10] sm:$0xff] %v715
        %722 = vst [vmem:[%s718 + $0x18] sm:$0xff] %v716
      $region49: #{_lambda_.11} parent=43 // loop_footer
        %s617 = sadd.s32 1, %s613
      $region50: #{_lambda_.11} parent=43 // loop_footer_branch
        %612 = sbr.rel target = $region46
      $region51: #{_lambda_.11} parent=43 // loop_exit
        _
      loop: start=0, step=1, limit=64
      $region52: #{_lambda_.11} parent=43 // loop_pre_header
        _
      $region53: #{_lambda_.11} parent=43 // loop_header
        %s724 = sphi 0, %s728
        %p725 = scmp.ge.s32.totalorder %s724, 64
        %v729 = vphi 0.0, %v750
        %v730 = vphi 0.0, %v751
        %v731 = vphi 0.0, %v752
        %v732 = vphi 0.0, %v753
      $region54: #{_lambda_.11} parent=43 // loop_header_branch
        %727 = sbr.rel (%p725) target = $region58
      $region55: #{_lambda_.11} parent=43 // loop_body
        %s733 = smul.u32 %s724, 4
        %s734 = smul.addr %s733, 8
        %s735 = scalar_lea.vmem [#allocation4], %s734
        %v736 = vld [vmem:[%s735] sm:$0xff]
        %v737 = vld [vmem:[%s735 + $0x8] sm:$0xff]
        %v738 = vld [vmem:[%s735 + $0x10] sm:$0xff]
        %v739 = vld [vmem:[%s735 + $0x18] sm:$0xff]
        %v740 = vmul.f32 %v736, %v729
        %v741 = vmul.f32 %v737, %v730
        %v742 = vmul.f32 %v738, %v731
        %v743 = vmul.f32 %v739, %v732
        %s744 = smul.addr %s733, 8
        %s745 = scalar_lea.vmem [#allocation5], %s744
        %v746 = vld [vmem:[%s745] sm:$0xff]
        %v747 = vld [vmem:[%s745 + $0x8] sm:$0xff]
        %v748 = vld [vmem:[%s745 + $0x10] sm:$0xff]
        %v749 = vld [vmem:[%s745 + $0x18] sm:$0xff]
        %v750 = vadd.f32 %v740, %v746
        %v751 = vadd.f32 %v741, %v747
        %v752 = vadd.f32 %v742, %v748
        %v753 = vadd.f32 %v743, %v749
        %754 = vst [vmem:[%s745] sm:$0xff] %v750
        %755 = vst [vmem:[%s745 + $0x8] sm:$0xff] %v751
        %756 = vst [vmem:[%s745 + $0x10] sm:$0xff] %v752
        %757 = vst [vmem:[%s745 + $0x18] sm:$0xff] %v753
      $region56: #{_lambda_.11} parent=43 // loop_footer
        %s728 = sadd.s32 1, %s724
      $region57: #{_lambda_.11} parent=43 // loop_footer_branch
        %723 = sbr.rel target = $region53
      $region58: #{_lambda_.11} parent=43 // loop_exit
        _
      %v758 = vld [vmem:[%s4] sm:$0x3]
      loop: start=0, step=1, limit=64
      $region59: #{_lambda_.11} parent=43 // loop_pre_header
        _
      $region60: #{_lambda_.11} parent=43 // loop_header
        %s760 = sphi 0, %s764
        %p761 = scmp.ge.s32.totalorder %s760, 64
      $region61: #{_lambda_.11} parent=43 // loop_header_branch
        %763 = sbr.rel (%p761) target = $region65
      $region62: #{_lambda_.11} parent=43 // loop_body
        %s765 = smul.u32 %s760, 16
        %s766 = scalar_lea.vmem %s286, %s765
        %v767 = vld [vmem:[%s766] sm:$0xff]
        %v768 = vld [vmem:[%s766 + $0x8] sm:$0xff]
        %s769 = smul.u32 %s760, 4
        %s770 = smul.addr %s769, 8
        %s771 = scalar_lea.vmem [#allocation5], %s770
        %v772 = vld [vmem:[%s771] sm:$0xff]
        %v773 = vld [vmem:[%s771 + $0x8] sm:$0xff]
        %v774 = vld [vmem:[%s771 + $0x10] sm:$0xff]
        %v775 = vld [vmem:[%s771 + $0x18] sm:$0xff]
        %777 = vset.pattern.permute.xlu0 4
        %778 = vperm.xlu0 %777, %v767
        %v779 = vpop.permute.xlu0 %778
        %782 = vset.pattern.permute.xlu0 4
        %783 = vperm.xlu0 %782, %v768
        %v784 = vpop.permute.xlu0 %783
        %786 = vset.pattern.permute.xlu0 5
        %787 = vperm.xlu0 %786, %v767
        %v788 = vpop.permute.xlu0 %787
        %790 = vset.pattern.permute.xlu0 5
        %791 = vperm.xlu0 %790, %v768
        %v792 = vpop.permute.xlu0 %791
        %794 = vset.pattern.permute.xlu0 6
        %795 = vperm.xlu0 %794, %v767
        %v796 = vpop.permute.xlu0 %795
        %798 = vset.pattern.permute.xlu0 6
        %799 = vperm.xlu0 %798, %v768
        %v800 = vpop.permute.xlu0 %799
        %802 = vset.pattern.permute.xlu0 7
        %803 = vperm.xlu0 %802, %v767
        %v804 = vpop.permute.xlu0 %803
        %806 = vset.pattern.permute.xlu0 7
        %807 = vperm.xlu0 %806, %v768
        %v808 = vpop.permute.xlu0 %807
        %vm810 = vcmask 523264
        %v811 = vsel %vm810, %v779, %v788
        %v812 = vsel %vm810, %v784, %v792
        %v813 = vsel %vm810, %v796, %v804
        %v814 = vsel %vm810, %v800, %v808
        %v815 = vmul.f32 %v772, %v811
        %v816 = vmul.f32 %v773, %v813
        %v817 = vmul.f32 %v774, %v812
        %v818 = vmul.f32 %v775, %v814
        %v819 = vadd.f32 %v815, %v817
        %v820 = vrot.slane %v819, 4
        %v821 = vadd.f32 %v819, %v820
        %v822 = vrot.slane %v821, 2
        %v823 = vadd.f32 %v821, %v822
        %v824 = vrot.slane %v823, 1
        %v825 = vadd.f32 %v823, %v824
        %v826 = vadd.f32 %v816, %v818
        %v827 = vrot.slane %v826, 4
        %v828 = vadd.f32 %v826, %v827
        %v829 = vrot.slane %v828, 2
        %v830 = vadd.f32 %v828, %v829
        %v831 = vrot.slane %v830, 1
        %v832 = vadd.f32 %v830, %v831
        %s833 = sshra.s32 %s760, 3
        %s834 = sand.u32 %s760, 7
        %s835 = sshra.s32 %s760, 3
        %s836 = sand.u32 %s760, 7
        %s837 = smul.u32 %s833, 2
        %s838 = smul.u32 %s837, 8
        %s839 = sadd.s32 %s838, %s836
        %s840 = scalar_lea.vmem %s276, %s839
        %v841 = vld [vmem:[%s840] ss:$8 sm:$0x3]
        %v842 = vmul.f32 %v758, %v841
        %v844 = vlaneseq
        %v845 = vshrl.u32 %v844, 7
        %v846 = vsub.s32 0, %v845
        %v847 = vrot.slane %v842, %v846
        %v848 = vlaneseq
        %v849 = vshrl.u32 %v848, 7
        %v850 = vsub.s32 1, %v849
        %v851 = vrot.slane %v842, %v850
        %v854 = vadd.f32 %v825, %v847
        %v855 = vadd.f32 %v832, %v851
        %v858 = vcombine.low %v854, %v855
        %v860 = vunpack.c.l.s4 1966171168
        %v861 = vunpack.c.0.s8 %v860
        %v862 = vlaneseq
        %v863 = vshrl.u32 %v862, 7
        %v864 = vsub.s32 %v861, %v863
        %v865 = vrot.slane %v858, %v864
        %v867 = vunpack.c.l.s4 1966171168
        %v868 = vunpack.c.0.s8 %v867
        %v869 = vlaneseq
        %v870 = vshrl.u32 %v869, 7
        %v871 = vsub.s32 %v868, %v870
        %v872 = vrot.slane %v865, %v871
        %v874 = vlaneseq
        %vm875 = vcmp.ge.s32.totalorder %v874, 0
        %vm876 = vcmp.lt.s32.totalorder %v874, 256
        %vm877 = vmand %vm875, %vm876
        %s878 = scalar_lea.vmem %s291, %s839
        %879 = vst.msk [vmem:[%s878] ss:$8 sm:$0x3] %vm877, %v872
        %880 = vst.msk [vmem:[%s878] ss:$8 sm:$0x0] %vm877, %v872
      $region63: #{_lambda_.11} parent=43 // loop_footer
        %s764 = sadd.s32 1, %s760
      $region64: #{_lambda_.11} parent=43 // loop_footer_branch
        %759 = sbr.rel target = $region60
      $region65: #{_lambda_.11} parent=43 // loop_exit
        _
      %p881 = scmp.lt.s32.totalorder %s17, 1
      %s882 = scalar_select %p881, %s17, 1
      %s883 = smul.addr %s882, 16
      %s884 = smul.addr %s883, 8
      %s885 = scalar_lea.vmem %s6, %s884
      // Predicated region
      $region66: #{_lambda_.11} parent=43 // pred_check
        %p886 = pneg %p176
      $region67: #{_lambda_.11} parent=43 // pred_check_branch
        %888 = sbr.rel (%p886) target = $region69
      $region68: #{_lambda_.11} parent=43 // pred_region
        _
      $region69: #{_lambda_.11} parent=43 // pred_fallthru
        _
    $region44: #{_lambda_.11} parent=5 // pred_fallthru
      _
    %p889 = scmp.le.s32.totalorder 2, %s12
    // Predicated region
    $region70: #{_lambda_.11} parent=5 // pred_check
      %p890 = pneg %p889
    $region71: #{_lambda_.11} parent=5 // pred_check_branch
      %892 = sbr.rel (%p890) target = $region73
    $region72: #{_lambda_.11} parent=5 // pred_region
      %s893 = ssub.s32 %s12, 2
      // Predicated region
      $region74: #{_lambda_.11} parent=72 // pred_check
        %p894 = pneg %p182
      $region75: #{_lambda_.11} parent=72 // pred_check_branch
        %896 = sbr.rel (%p894) target = $region77
      $region76: #{_lambda_.11} parent=72 // pred_region
        %p897 = scmp.lt.s32.totalorder %s18, 1
        %s898 = scalar_select %p897, %s18, 1
        %s899 = smul.addr %s898, 16
        %s900 = smul.addr %s899, 8
        %s901 = scalar_lea.vmem %s6, %s900
      $region77: #{_lambda_.11} parent=72 // pred_fallthru
        _
    $region73: #{_lambda_.11} parent=5 // pred_fallthru
      _
  $region6: #{_lambda_.11} parent=0 // loop_footer
    %s16 = sadd.s32 1, %s12
  $region7: #{_lambda_.11} parent=0 // loop_footer_branch
    %11 = sbr.rel target = $region3
  $region8: #{_lambda_.11} parent=0 // loop_exit
    _

// kernel: _lambda_.12
$region0: #{_lambda_.12}
  #allocation0 [shape = 'u32[]', space=smem, size = 0x4, offset = 0x4, fixed_abs, tag = 'smem constant byte address 0x4 - core index']
  #allocation1 [shape = 'u32[144,128]{1,0:T(1,128)}', space=vmem, size = 0x12000, scoped, tag = 'internal scratch']
  %s0 = inlined_call_operand.vmem [shape: f32[128,64], index: 0, kind: input, shape index: {}]
  %s1 = inlined_call_operand.vmem [shape: f32[128,64], index: 1, kind: input, shape index: {}]
  %s2 = inlined_call_operand.vmem [shape: f32[1,64], index: 2, kind: input, shape index: {}]
  %s3 = inlined_call_operand.vmem [shape: f32[1,64], index: 3, kind: input, shape index: {}]
  %s4 = inlined_call_operand.vmem [shape: bf16[64,32], index: 4, kind: input, shape index: {}]
  %s5 = inlined_call_operand.vmem [shape: f32[128,32], index: 5, kind: output, shape index: {}]
  %s6 = sld [smem:[#allocation0]]
  $region53: #{_lambda_.12} parent=0
    _
  %s8 = ssub.s32 1, %s6
  %s9 = scalar_select 0, %s8, %s6
  loop: start=0, step=1, limit=4
  $region2: #{_lambda_.12} parent=0 // loop_pre_header
    _
  $region3: #{_lambda_.12} parent=0 // loop_header
    %s11 = sphi 0, %s15
    %p12 = scmp.ge.s32.totalorder %s11, 4
    %s21 = sphi 0, %s23
    %s24 = sphi 0, %s21
    %s25 = sphi 0, %s24
    %s41 = sphi 0, %s25
    %s47 = sphi 0, %s49
    %s50 = sphi 0, %s47
    %s51 = sphi 0, %s50
    %s67 = sphi 0, %s51
    %s71 = sphi 0, %s71
    %s73 = sphi 0, %s71
    %s74 = sphi 0, %s73
    %s88 = sphi 0, %s74
    %s92 = sphi 0, %s92
    %s94 = sphi 0, %s92
    %s95 = sphi 0, %s94
    %s109 = sphi 0, %s95
    %s113 = sphi 0, %s113
    %s115 = sphi 0, %s113
    %s116 = sphi 0, %s115
    %s130 = sphi 0, %s116
    %s136 = sphi 0, %s138
    %s139 = sphi 0, %s136
    %s140 = sphi 0, %s139
    %s156 = sphi 0, %s140
  $region4: #{_lambda_.12} parent=0 // loop_header_branch
    %14 = sbr.rel (%p12) target = $region8
  $region5: #{_lambda_.12} parent=0 // loop_body
    %s16 = ssub.s32 %s11, 1
    %s17 = ssub.s32 %s11, 2
    %s18 = sadd.s32 %s11, 1
    %s19 = ssub.s32 %s11, %s18
    %p20 = scmp.eq.s32.totalorder %s19, 0
    %s22 = sadd.s32 %s21, 1
    %s23 = scalar_select %p20, %s21, %s22
    %p26 = pneg %p20
    %p27 = scmp.eq.s32.totalorder %s11, 1
    %p28 = por %p26, %p27
    %p29 = scmp.ne.s32.totalorder %s21, %s24
    %p30 = scmp.eq.s32.totalorder %s11, 0
    %p31 = por %p29, %p30
    %p32 = scmp.ne.s32.totalorder %s21, %s24
    %p33 = scmp.eq.s32.totalorder %s16, 1
    %p34 = por %p32, %p33
    %p35 = scmp.ne.s32.totalorder %s24, %s25
    %p36 = scmp.eq.s32.totalorder %s16, 0
    %p37 = por %p35, %p36
    %p38 = scmp.ne.s32.totalorder %s24, %s25
    %p39 = scmp.eq.s32.totalorder %s17, 1
    %p40 = por %p38, %p39
    %p42 = scmp.ne.s32.totalorder %s25, %s41
    %p43 = scmp.eq.s32.totalorder %s17, 0
    %p44 = por %p42, %p43
    %s45 = ssub.s32 %s11, %s18
    %p46 = scmp.eq.s32.totalorder %s45, 0
    %s48 = sadd.s32 %s47, 1
    %s49 = scalar_select %p46, %s47, %s48
    %p52 = pneg %p46
    %p53 = scmp.eq.s32.totalorder %s11, 1
    %p54 = por %p52, %p53
    %p55 = scmp.ne.s32.totalorder %s47, %s50
    %p56 = scmp.eq.s32.totalorder %s11, 0
    %p57 = por %p55, %p56
    %p58 = scmp.ne.s32.totalorder %s47, %s50
    %p59 = scmp.eq.s32.totalorder %s16, 1
    %p60 = por %p58, %p59
    %p61 = scmp.ne.s32.totalorder %s50, %s51
    %p62 = scmp.eq.s32.totalorder %s16, 0
    %p63 = por %p61, %p62
    %p64 = scmp.ne.s32.totalorder %s50, %s51
    %p65 = scmp.eq.s32.totalorder %s17, 1
    %p66 = por %p64, %p65
    %p68 = scmp.ne.s32.totalorder %s51, %s67
    %p69 = scmp.eq.s32.totalorder %s17, 0
    %p70 = por %p68, %p69
    %s72 = sadd.s32 %s71, 1
    %p75 = scmp.eq.s32.totalorder %s11, 1
    %p76 = scmp.ne.s32.totalorder %s71, %s73
    %p77 = scmp.eq.s32.totalorder %s11, 0
    %p78 = por %p76, %p77
    %p79 = scmp.ne.s32.totalorder %s71, %s73
    %p80 = scmp.eq.s32.totalorder %s16, 1
    %p81 = por %p79, %p80
    %p82 = scmp.ne.s32.totalorder %s73, %s74
    %p83 = scmp.eq.s32.totalorder %s16, 0
    %p84 = por %p82, %p83
    %p85 = scmp.ne.s32.totalorder %s73, %s74
    %p86 = scmp.eq.s32.totalorder %s17, 1
    %p87 = por %p85, %p86
    %p89 = scmp.ne.s32.totalorder %s74, %s88
    %p90 = scmp.eq.s32.totalorder %s17, 0
    %p91 = por %p89, %p90
    %s93 = sadd.s32 %s92, 1
    %p96 = scmp.eq.s32.totalorder %s11, 1
    %p97 = scmp.ne.s32.totalorder %s92, %s94
    %p98 = scmp.eq.s32.totalorder %s11, 0
    %p99 = por %p97, %p98
    %p100 = scmp.ne.s32.totalorder %s92, %s94
    %p101 = scmp.eq.s32.totalorder %s16, 1
    %p102 = por %p100, %p101
    %p103 = scmp.ne.s32.totalorder %s94, %s95
    %p104 = scmp.eq.s32.totalorder %s16, 0
    %p105 = por %p103, %p104
    %p106 = scmp.ne.s32.totalorder %s94, %s95
    %p107 = scmp.eq.s32.totalorder %s17, 1
    %p108 = por %p106, %p107
    %p110 = scmp.ne.s32.totalorder %s95, %s109
    %p111 = scmp.eq.s32.totalorder %s17, 0
    %p112 = por %p110, %p111
    %s114 = sadd.s32 %s113, 1
    %p117 = scmp.eq.s32.totalorder %s11, 1
    %p118 = scmp.ne.s32.totalorder %s113, %s115
    %p119 = scmp.eq.s32.totalorder %s11, 0
    %p120 = por %p118, %p119
    %p121 = scmp.ne.s32.totalorder %s113, %s115
    %p122 = scmp.eq.s32.totalorder %s16, 1
    %p123 = por %p121, %p122
    %p124 = scmp.ne.s32.totalorder %s115, %s116
    %p125 = scmp.eq.s32.totalorder %s16, 0
    %p126 = por %p124, %p125
    %p127 = scmp.ne.s32.totalorder %s115, %s116
    %p128 = scmp.eq.s32.totalorder %s17, 1
    %p129 = por %p127, %p128
    %p131 = scmp.ne.s32.totalorder %s116, %s130
    %p132 = scmp.eq.s32.totalorder %s17, 0
    %p133 = por %p131, %p132
    %s134 = ssub.s32 %s11, %s18
    %p135 = scmp.eq.s32.totalorder %s134, 0
    %s137 = sadd.s32 %s136, 1
    %s138 = scalar_select %p135, %s136, %s137
    %p141 = pneg %p135
    %p142 = scmp.eq.s32.totalorder %s11, 1
    %p143 = por %p141, %p142
    %p144 = scmp.ne.s32.totalorder %s136, %s139
    %p145 = scmp.eq.s32.totalorder %s11, 0
    %p146 = por %p144, %p145
    %p147 = scmp.ne.s32.totalorder %s136, %s139
    %p148 = scmp.eq.s32.totalorder %s16, 1
    %p149 = por %p147, %p148
    %p150 = scmp.ne.s32.totalorder %s139, %s140
    %p151 = scmp.eq.s32.totalorder %s16, 0
    %p152 = por %p150, %p151
    %p153 = scmp.ne.s32.totalorder %s139, %s140
    %p154 = scmp.eq.s32.totalorder %s17, 1
    %p155 = por %p153, %p154
    %p157 = scmp.ne.s32.totalorder %s140, %s156
    %p158 = scmp.eq.s32.totalorder %s17, 0
    %p159 = por %p157, %p158
    %p160 = scmp.le.s32.totalorder 1, %s11
    %p161 = scmp.lt.s32.totalorder %s11, 3
    %p162 = pnand %p160, %p161
    %p163 = pneg %p162
    // Predicated region
    $region9: #{_lambda_.12} parent=5 // pred_check
      _
    $region10: #{_lambda_.12} parent=5 // pred_check_branch
      %165 = sbr.rel (%p162) target = $region12
    $region11: #{_lambda_.12} parent=5 // pred_region
      %s166 = ssub.s32 %s11, 1
      // Predicated region
      $region13: #{_lambda_.12} parent=11 // pred_check
        %p167 = pneg %p84
      $region14: #{_lambda_.12} parent=11 // pred_check_branch
        %169 = sbr.rel (%p167) target = $region16
      $region15: #{_lambda_.12} parent=11 // pred_region
        _
      $region16: #{_lambda_.12} parent=11 // pred_fallthru
        _
      // Predicated region
      $region17: #{_lambda_.12} parent=11 // pred_check
        %p170 = pneg %p105
      $region18: #{_lambda_.12} parent=11 // pred_check_branch
        %172 = sbr.rel (%p170) target = $region20
      $region19: #{_lambda_.12} parent=11 // pred_region
        _
      $region20: #{_lambda_.12} parent=11 // pred_fallthru
        _
      // Predicated region
      $region21: #{_lambda_.12} parent=11 // pred_check
        %p173 = pneg %p126
      $region22: #{_lambda_.12} parent=11 // pred_check_branch
        %175 = sbr.rel (%p173) target = $region24
      $region23: #{_lambda_.12} parent=11 // pred_region
        _
      $region24: #{_lambda_.12} parent=11 // pred_fallthru
        _
    $region12: #{_lambda_.12} parent=5 // pred_fallthru
      _
    %p176 = scmp.lt.s32.totalorder %s11, 2
    // Predicated region
    $region25: #{_lambda_.12} parent=5 // pred_check
      %p177 = pneg %p176
    $region26: #{_lambda_.12} parent=5 // pred_check_branch
      %179 = sbr.rel (%p177) target = $region28
    $region27: #{_lambda_.12} parent=5 // pred_region
      // Predicated region
      $region29: #{_lambda_.12} parent=27 // pred_check
        %p180 = pneg %p31
      $region30: #{_lambda_.12} parent=27 // pred_check_branch
        %182 = sbr.rel (%p180) target = $region32
      $region31: #{_lambda_.12} parent=27 // pred_region
        %s183 = smul.u32 8, %s11
        %p184 = scmp.lt.s32.totalorder %s183, 15
        %s185 = scalar_select %p184, %s183, 15
        %s186 = smul.addr %s185, 8
        %s187 = scalar_lea.vmem %s0, %s186
        %s188 = smul.u32 8, %s11
      $region32: #{_lambda_.12} parent=27 // pred_fallthru
        _
      // Predicated region
      $region33: #{_lambda_.12} parent=27 // pred_check
        %p189 = pneg %p57
      $region34: #{_lambda_.12} parent=27 // pred_check_branch
        %191 = sbr.rel (%p189) target = $region36
      $region35: #{_lambda_.12} parent=27 // pred_region
        %s192 = smul.u32 8, %s11
        %p193 = scmp.lt.s32.totalorder %s192, 15
        %s194 = scalar_select %p193, %s192, 15
        %s195 = smul.addr %s194, 8
        %s196 = scalar_lea.vmem %s1, %s195
        %s197 = smul.u32 8, %s11
      $region36: #{_lambda_.12} parent=27 // pred_fallthru
        _
    $region28: #{_lambda_.12} parent=5 // pred_fallthru
      _
    %p198 = scmp.le.s32.totalorder 1, %s11
    %p199 = scmp.lt.s32.totalorder %s11, 3
    %p200 = pnand %p198, %p199
    %p201 = pneg %p200
    // Predicated region
    $region37: #{_lambda_.12} parent=5 // pred_check
      _
    $region38: #{_lambda_.12} parent=5 // pred_check_branch
      %203 = sbr.rel (%p200) target = $region40
    $region39: #{_lambda_.12} parent=5 // pred_region
      %s204 = ssub.s32 %s11, 1
      %s205 = smul.u32 8, %s16
      %p206 = scmp.lt.s32.totalorder %s205, 15
      %s207 = scalar_select %p206, %s205, 15
      %s208 = smul.addr %s207, 8
      %s209 = scalar_lea.vmem %s0, %s208
      %p210 = pneg %p37
      %p211 = pneg %p34
      %s212 = smul.u32 8, %s16
      %p213 = scmp.lt.s32.totalorder %s212, 15
      %s214 = scalar_select %p213, %s212, 15
      %s215 = smul.addr %s214, 8
      %s216 = scalar_lea.vmem %s1, %s215
      %p217 = pneg %p63
      %p218 = pneg %p60
      %p219 = pneg %p84
      %p220 = pneg %p81
      %p221 = pneg %p105
      %p222 = pneg %p102
      %p223 = pneg %p126
      %p224 = pneg %p123
      %p225 = pneg %p152
      %p226 = pneg %p149
      %s227 = smul.u32 8, %s16
      %p228 = scmp.lt.s32.totalorder %s227, 15
      %s229 = scalar_select %p228, %s227, 15
      %s230 = smul.addr %s229, 8
      %s231 = scalar_lea.vmem %s5, %s230
      %s232 = smul.u32 8, %s16
      %p233 = scmp.lt.s32.totalorder %s232, 15
      %s234 = scalar_select %p233, %s232, 15
      %s235 = smul.addr %s234, 8
      %s236 = scalar_lea.vmem %s0, %s235
      %s237 = smul.u32 8, %s16
      %s238 = smul.u32 8, %s16
      %p239 = scmp.lt.s32.totalorder %s238, 15
      %s240 = scalar_select %p239, %s238, 15
      %s241 = smul.addr %s240, 8
      %s242 = scalar_lea.vmem %s1, %s241
      %s243 = smul.u32 8, %s16
      %s244 = smul.u32 8, %s16
      %p245 = scmp.lt.s32.totalorder %s244, 15
      %s246 = scalar_select %p245, %s244, 15
      %s247 = smul.addr %s246, 8
      %s248 = scalar_lea.vmem %s5, %s247
      %s249 = smul.u32 8, %s16
      %v251 = vld [vmem:[%s236] sm:$0xff]
      %v252 = vld [vmem:[%s236 + $0x8] sm:$0xff]
      %v253 = vld [vmem:[%s236 + $0x10] sm:$0xff]
      %v254 = vld [vmem:[%s236 + $0x18] sm:$0xff]
      %v255 = vld [vmem:[%s236 + $0x20] sm:$0xff]
      %v256 = vld [vmem:[%s236 + $0x28] sm:$0xff]
      %v257 = vld [vmem:[%s236 + $0x30] sm:$0xff]
      %v258 = vld [vmem:[%s236 + $0x38] sm:$0xff]
      %v259 = vld [vmem:[%s2] sm:$0x1]
      %v260 = vld [vmem:[%s3] sm:$0x1]
      %vm261 = vcmask 523264
      %v262 = vsel %vm261, %v251, 0.0
      %263 = vadd.xlane.f32.xlu0 %v262
      %v264 = vpop.xlane.xlu0 %263
      %v265 = vsel %vm261, %v252, 0.0
      %266 = vadd.xlane.f32.xlu0 %v265
      %v267 = vpop.xlane.xlu0 %266
      %v268 = vsel %vm261, %v253, 0.0
      %269 = vadd.xlane.f32.xlu0 %v268
      %v270 = vpop.xlane.xlu0 %269
      %v271 = vsel %vm261, %v254, 0.0
      %272 = vadd.xlane.f32.xlu0 %v271
      %v273 = vpop.xlane.xlu0 %272
      %v274 = vsel %vm261, %v255, 0.0
      %275 = vadd.xlane.f32.xlu0 %v274
      %v276 = vpop.xlane.xlu0 %275
      %v277 = vsel %vm261, %v256, 0.0
      %278 = vadd.xlane.f32.xlu0 %v277
      %v279 = vpop.xlane.xlu0 %278
      %v280 = vsel %vm261, %v257, 0.0
      %281 = vadd.xlane.f32.xlu0 %v280
      %v282 = vpop.xlane.xlu0 %281
      %v283 = vsel %vm261, %v258, 0.0
      %284 = vadd.xlane.f32.xlu0 %v283
      %v285 = vpop.xlane.xlu0 %284
      %v286 = vrcp.pop 64.0
      %v287 = vmul.f32 %v264, %v286
      %v288 = vmul.f32 %v267, %v286
      %v289 = vmul.f32 %v270, %v286
      %v290 = vmul.f32 %v273, %v286
      %v291 = vmul.f32 %v276, %v286
      %v292 = vmul.f32 %v279, %v286
      %v293 = vmul.f32 %v282, %v286
      %v294 = vmul.f32 %v285, %v286
      %v295 = vsub.f32 %v251, %v287
      %v296 = vsub.f32 %v252, %v288
      %v297 = vsub.f32 %v253, %v289
      %v298 = vsub.f32 %v254, %v290
      %v299 = vsub.f32 %v255, %v291
      %v300 = vsub.f32 %v256, %v292
      %v301 = vsub.f32 %v257, %v293
      %v302 = vsub.f32 %v258, %v294
      %v303 = vmul.f32 %v295, %v295
      %v304 = vmul.f32 %v296, %v296
      %v305 = vmul.f32 %v297, %v297
      %v306 = vmul.f32 %v298, %v298
      %v307 = vmul.f32 %v299, %v299
      %v308 = vmul.f32 %v300, %v300
      %v309 = vmul.f32 %v301, %v301
      %v310 = vmul.f32 %v302, %v302
      %v311 = vsel %vm261, %v303, 0.0
      %312 = vadd.xlane.f32.xlu0 %v311
      %v313 = vpop.xlane.xlu0 %312
      %v314 = vsel %vm261, %v304, 0.0
      %315 = vadd.xlane.f32.xlu0 %v314
      %v316 = vpop.xlane.xlu0 %315
      %v317 = vsel %vm261, %v305, 0.0
      %318 = vadd.xlane.f32.xlu0 %v317
      %v319 = vpop.xlane.xlu0 %318
      %v320 = vsel %vm261, %v306, 0.0
      %321 = vadd.xlane.f32.xlu0 %v320
      %v322 = vpop.xlane.xlu0 %321
      %v323 = vsel %vm261, %v307, 0.0
      %324 = vadd.xlane.f32.xlu0 %v323
      %v325 = vpop.xlane.xlu0 %324
      %v326 = vsel %vm261, %v308, 0.0
      %327 = vadd.xlane.f32.xlu0 %v326
      %v328 = vpop.xlane.xlu0 %327
      %v329 = vsel %vm261, %v309, 0.0
      %330 = vadd.xlane.f32.xlu0 %v329
      %v331 = vpop.xlane.xlu0 %330
      %v332 = vsel %vm261, %v310, 0.0
      %333 = vadd.xlane.f32.xlu0 %v332
      %v334 = vpop.xlane.xlu0 %333
      %v335 = vmul.f32 %v313, %v286
      %v336 = vmul.f32 %v316, %v286
      %v337 = vmul.f32 %v319, %v286
      %v338 = vmul.f32 %v322, %v286
      %v339 = vmul.f32 %v325, %v286
      %v340 = vmul.f32 %v328, %v286
      %v341 = vmul.f32 %v331, %v286
      %v342 = vmul.f32 %v334, %v286
      %v343 = vadd.f32 %v335, 1e-05
      %v344 = vadd.f32 %v336, 1e-05
      %v345 = vadd.f32 %v337, 1e-05
      %v346 = vadd.f32 %v338, 1e-05
      %v347 = vadd.f32 %v339, 1e-05
      %v348 = vadd.f32 %v340, 1e-05
      %v349 = vadd.f32 %v341, 1e-05
      %v350 = vadd.f32 %v342, 1e-05
      %v351 = vrsqrt.pop %v343
      %v352 = vrsqrt.pop %v344
      %v353 = vrsqrt.pop %v345
      %v354 = vrsqrt.pop %v346
      %v355 = vrsqrt.pop %v347
      %v356 = vrsqrt.pop %v348
      %v357 = vrsqrt.pop %v349
      %v358 = vrsqrt.pop %v350
      %v359 = vmul.f32 %v295, %v351
      %v360 = vmul.f32 %v296, %v352
      %v361 = vmul.f32 %v297, %v353
      %v362 = vmul.f32 %v298, %v354
      %v363 = vmul.f32 %v299, %v355
      %v364 = vmul.f32 %v300, %v356
      %v365 = vmul.f32 %v301, %v357
      %v366 = vmul.f32 %v302, %v358
      %v368 = vlaneseq
      %v369 = vshrl.u32 %v368, 7
      %v370 = vsub.s32 0, %v369
      %v371 = vrot.slane %v259, %v370
      %v373 = vmul.f32 %v359, %v371
      %v374 = vmul.f32 %v360, %v371
      %v375 = vmul.f32 %v361, %v371
      %v376 = vmul.f32 %v362, %v371
      %v377 = vmul.f32 %v363, %v371
      %v378 = vmul.f32 %v364, %v371
      %v379 = vmul.f32 %v365, %v371
      %v380 = vmul.f32 %v366, %v371
      %v382 = vlaneseq
      %v383 = vshrl.u32 %v382, 7
      %v384 = vsub.s32 0, %v383
      %v385 = vrot.slane %v260, %v384
      %v387 = vadd.f32 %v373, %v385
      %v388 = vadd.f32 %v374, %v385
      %v389 = vadd.f32 %v375, %v385
      %v390 = vadd.f32 %v376, %v385
      %v391 = vadd.f32 %v377, %v385
      %v392 = vadd.f32 %v378, %v385
      %v393 = vadd.f32 %v379, %v385
      %v394 = vadd.f32 %v380, %v385
      %v395 = vld [vmem:[%s242] sm:$0xff]
      %v396 = vld [vmem:[%s242 + $0x8] sm:$0xff]
      %v397 = vld [vmem:[%s242 + $0x10] sm:$0xff]
      %v398 = vld [vmem:[%s242 + $0x18] sm:$0xff]
      %v399 = vld [vmem:[%s242 + $0x20] sm:$0xff]
      %v400 = vld [vmem:[%s242 + $0x28] sm:$0xff]
      %v401 = vld [vmem:[%s242 + $0x30] sm:$0xff]
      %v402 = vld [vmem:[%s242 + $0x38] sm:$0xff]
      %v403 = vxor.u32 %v395, 2147483648
      %v404 = vxor.u32 %v396, 2147483648
      %v405 = vxor.u32 %v397, 2147483648
      %v406 = vxor.u32 %v398, 2147483648
      %v407 = vxor.u32 %v399, 2147483648
      %v408 = vxor.u32 %v400, 2147483648
      %v409 = vxor.u32 %v401, 2147483648
      %v410 = vxor.u32 %v402, 2147483648
      %v411 = vmul.f32 %v403, 1.442695
      %v412 = vpow.pop %v411
      %v413 = vmul.f32 %v404, 1.442695
      %v414 = vpow.pop %v413
      %v415 = vmul.f32 %v405, 1.442695
      %v416 = vpow.pop %v415
      %v417 = vmul.f32 %v406, 1.442695
      %v418 = vpow.pop %v417
      %v419 = vmul.f32 %v407, 1.442695
      %v420 = vpow.pop %v419
      %v421 = vmul.f32 %v408, 1.442695
      %v422 = vpow.pop %v421
      %v423 = vmul.f32 %v409, 1.442695
      %v424 = vpow.pop %v423
      %v425 = vmul.f32 %v410, 1.442695
      %v426 = vpow.pop %v425
      %v427 = vadd.f32 %v412, 1.0
      %v428 = vadd.f32 %v414, 1.0
      %v429 = vadd.f32 %v416, 1.0
      %v430 = vadd.f32 %v418, 1.0
      %v431 = vadd.f32 %v420, 1.0
      %v432 = vadd.f32 %v422, 1.0
      %v433 = vadd.f32 %v424, 1.0
      %v434 = vadd.f32 %v426, 1.0
      %v435 = vrcp.pop %v427
      %v436 = vmul.f32 1.0, %v435
      %v437 = vrcp.pop %v428
      %v438 = vmul.f32 1.0, %v437
      %v439 = vrcp.pop %v429
      %v440 = vmul.f32 1.0, %v439
      %v441 = vrcp.pop %v430
      %v442 = vmul.f32 1.0, %v441
      %v443 = vrcp.pop %v431
      %v444 = vmul.f32 1.0, %v443
      %v445 = vrcp.pop %v432
      %v446 = vmul.f32 1.0, %v445
      %v447 = vrcp.pop %v433
      %v448 = vmul.f32 1.0, %v447
      %v449 = vrcp.pop %v434
      %v450 = vmul.f32 1.0, %v449
      %v451 = vmul.f32 %v395, %v436
      %v452 = vmul.f32 %v396, %v438
      %v453 = vmul.f32 %v397, %v440
      %v454 = vmul.f32 %v398, %v442
      %v455 = vmul.f32 %v399, %v444
      %v456 = vmul.f32 %v400, %v446
      %v457 = vmul.f32 %v401, %v448
      %v458 = vmul.f32 %v402, %v450
      %v459 = vmul.f32 %v387, %v451
      %v460 = vmul.f32 %v388, %v452
      %v461 = vmul.f32 %v389, %v453
      %v462 = vmul.f32 %v390, %v454
      %v463 = vmul.f32 %v391, %v455
      %v464 = vmul.f32 %v392, %v456
      %v465 = vmul.f32 %v393, %v457
      %v466 = vmul.f32 %v394, %v458
      %v467 = vpack.c.bf16 %v460, %v459
      %v468 = vpack.c.bf16 %v462, %v461
      %v469 = vpack.c.bf16 %v464, %v463
      %v470 = vpack.c.bf16 %v466, %v465
      %v471 = vld [vmem:[%s4] sm:$0xf]
      %v472 = vld [vmem:[%s4 + $0x4] sm:$0xf]
      %v473 = vld [vmem:[%s4 + $0x8] sm:$0xf]
      %v474 = vld [vmem:[%s4 + $0xc] sm:$0xf]
      %v475 = vld [vmem:[%s4 + $0x10] sm:$0xf]
      %v476 = vld [vmem:[%s4 + $0x14] sm:$0xf]
      %v477 = vld [vmem:[%s4 + $0x18] sm:$0xf]
      %v478 = vld [vmem:[%s4 + $0x1c] sm:$0xf]
      %v487 = vunpack.c.l.b16 %v471
      %v488 = vunpack.c.l.b16 %v472
      %v489 = vunpack.c.l.b16 %v473
      %v490 = vunpack.c.l.b16 %v474
      %v491 = vunpack.c.l.b16 %v475
      %v492 = vunpack.c.l.b16 %v476
      %v493 = vunpack.c.l.b16 %v477
      %v494 = vunpack.c.l.b16 %v478
      %v495 = vpack.c.b16 %v488, %v487
      %v496 = vpack.c.b16 %v490, %v489
      %v497 = vpack.c.b16 %v492, %v491
      %v498 = vpack.c.b16 %v494, %v493
      %v504 = vsel %vm261, %v467, 0
      %v507 = vsel %vm261, %v468, 0
      %v510 = vsel %vm261, %v469, 0
      %v513 = vsel %vm261, %v470, 0
      %515 = vmatprep.subr.bf16.mxu0 0
      %516 = vmatpush1.bf16.msra.mxu0 %v495
      %517 = vmatprep.subr.bf16.mxu0 0
      %518 = vmatpush1.bf16.msra.mxu0 %v496
      %519 = vmatprep.subr.bf16.mxu0 0
      %520 = vmatpush1.bf16.msra.mxu0 %v497
      %521 = vmatprep.subr.bf16.mxu0 0
      %522 = vmatpush1.bf16.msra.mxu0 %v498
      %523 = vmatprep.subr.bf16.mxu0 0
      %524 = vmatpush1.bf16.msra.mxu0 0
      %525 = vmatprep.subr.bf16.mxu0 0
      %526 = vmatpush1.bf16.msra.mxu0 0
      %527 = vmatprep.subr.bf16.mxu0 0
      %528 = vmatpush1.bf16.msra.mxu0 0
      %529 = vmatprep.subr.bf16.mxu0 0
      %530 = vmatpush1.bf16.msra.mxu0 0
      %531 = vmatprep.subr.bf16.mxu0 0
      %532 = vmatpush1.bf16.msra.mxu0 0
      %533 = vmatprep.subr.bf16.mxu0 0
      %534 = vmatpush1.bf16.msra.mxu0 0
      %535 = vmatprep.subr.bf16.mxu0 0
      %536 = vmatpush1.bf16.msra.mxu0 0
      %537 = vmatprep.subr.bf16.mxu0 0
      %538 = vmatpush1.bf16.msra.mxu0 0
      %539 = vmatprep.subr.bf16.mxu0 0
      %540 = vmatpush1.bf16.msra.mxu0 0
      %541 = vmatprep.subr.bf16.mxu0 0
      %542 = vmatpush1.bf16.msra.mxu0 0
      %543 = vmatprep.subr.bf16.mxu0 0
      %544 = vmatpush1.bf16.msra.mxu0 0
      %545 = vmatprep.subr.bf16.mxu0 0
      %546 = vmatpush1.bf16.msra.mxu0 0
      %547 = vmatprep.mubr.bf16.mxu0 0
      %548 = vmatmul.mubr.bf16.gmra.mrb[0].mxu0 %v504
      %v549 = vpop.f32.mrb[0].mxu0
      %v550 = vadd.f32 0.0, %v549
      %v551 = vpop.f32.mrb[0].mxu0
      %v552 = vpop.f32.mrb[0].mxu0
      %v553 = vadd.f32 0.0, %v552
      %v554 = vpop.f32.mrb[0].mxu0
      %555 = vmatprep.mubr.bf16.mxu0 0
      %556 = vmatmul.mubr.bf16.gmra.mrb[0].mxu0 %v507
      %v557 = vpop.f32.mrb[0].mxu0
      %v558 = vadd.f32 0.0, %v557
      %v559 = vpop.f32.mrb[0].mxu0
      %v560 = vpop.f32.mrb[0].mxu0
      %v561 = vadd.f32 0.0, %v560
      %v562 = vpop.f32.mrb[0].mxu0
      %563 = vmatprep.mubr.bf16.mxu0 0
      %564 = vmatmul.mubr.bf16.gmra.mrb[0].mxu0 %v510
      %v565 = vpop.f32.mrb[0].mxu0
      %v566 = vadd.f32 0.0, %v565
      %v567 = vpop.f32.mrb[0].mxu0
      %v568 = vpop.f32.mrb[0].mxu0
      %v569 = vadd.f32 0.0, %v568
      %v570 = vpop.f32.mrb[0].mxu0
      %571 = vmatprep.mubr.bf16.mxu0 0
      %572 = vmatmul.mubr.bf16.gmra.mrb[0].mxu0 %v513
      %v573 = vpop.f32.mrb[0].mxu0
      %v574 = vadd.f32 0.0, %v573
      %v575 = vpop.f32.mrb[0].mxu0
      %v576 = vpop.f32.mrb[0].mxu0
      %v577 = vadd.f32 0.0, %v576
      %v578 = vpop.f32.mrb[0].mxu0
      %579 = vdwg.mxu0
      %vm580 = vcmask 261120
      %581 = vst.msk [vmem:[%s248] sm:$0xff] %vm580, %v550
      %582 = vst.msk [vmem:[%s248 + $0x8] sm:$0xff] %vm580, %v553
      %583 = vst.msk [vmem:[%s248 + $0x10] sm:$0xff] %vm580, %v558
      %584 = vst.msk [vmem:[%s248 + $0x18] sm:$0xff] %vm580, %v561
      %585 = vst.msk [vmem:[%s248 + $0x20] sm:$0xff] %vm580, %v566
      %586 = vst.msk [vmem:[%s248 + $0x28] sm:$0xff] %vm580, %v569
      %587 = vst.msk [vmem:[%s248 + $0x30] sm:$0xff] %vm580, %v574
      %588 = vst.msk [vmem:[%s248 + $0x38] sm:$0xff] %vm580, %v577
      %s589 = smul.u32 8, %s16
      %p590 = scmp.lt.s32.totalorder %s589, 15
      %s591 = scalar_select %p590, %s589, 15
      %s592 = smul.addr %s591, 8
      %s593 = scalar_lea.vmem %s5, %s592
      // Predicated region
      $region41: #{_lambda_.12} parent=39 // pred_check
        %p594 = pneg %p149
      $region42: #{_lambda_.12} parent=39 // pred_check_branch
        %596 = sbr.rel (%p594) target = $region44
      $region43: #{_lambda_.12} parent=39 // pred_region
        %s597 = smul.u32 8, %s16
      $region44: #{_lambda_.12} parent=39 // pred_fallthru
        _
    $region40: #{_lambda_.12} parent=5 // pred_fallthru
      _
    %p598 = scmp.le.s32.totalorder 2, %s11
    // Predicated region
    $region45: #{_lambda_.12} parent=5 // pred_check
      %p599 = pneg %p598
    $region46: #{_lambda_.12} parent=5 // pred_check_branch
      %601 = sbr.rel (%p599) target = $region48
    $region47: #{_lambda_.12} parent=5 // pred_region
      %s602 = ssub.s32 %s11, 2
      // Predicated region
      $region49: #{_lambda_.12} parent=47 // pred_check
        %p603 = pneg %p155
      $region50: #{_lambda_.12} parent=47 // pred_check_branch
        %605 = sbr.rel (%p603) target = $region52
      $region51: #{_lambda_.12} parent=47 // pred_region
        %s606 = smul.u32 8, %s17
        %p607 = scmp.lt.s32.totalorder %s606, 15
        %s608 = scalar_select %p607, %s606, 15
        %s609 = smul.addr %s608, 8
        %s610 = scalar_lea.vmem %s5, %s609
      $region52: #{_lambda_.12} parent=47 // pred_fallthru
        _
    $region48: #{_lambda_.12} parent=5 // pred_fallthru
      _
  $region6: #{_lambda_.12} parent=0 // loop_footer
    %s15 = sadd.s32 1, %s11
  $region7: #{_lambda_.12} parent=0 // loop_footer_branch
    %10 = sbr.rel target = $region3
  $region8: #{_lambda_.12} parent=0 // loop_exit
    _

// kernel: _lambda_.13
$region0: #{_lambda_.13}
  #allocation0 [shape = 'u32[]', space=smem, size = 0x4, offset = 0x4, fixed_abs, tag = 'smem constant byte address 0x4 - core index']
  #allocation1 [shape = 'u32[144,128]{1,0:T(1,128)}', space=vmem, size = 0x12000, scoped, tag = 'internal scratch']
  %s0 = inlined_call_operand.vmem [shape: f32[128,32], index: 0, kind: input, shape index: {}]
  %s1 = inlined_call_operand.vmem [shape: f32[1,32], index: 1, kind: input, shape index: {}, may-alias: {1,3}]
  %s2 = inlined_call_operand.vmem [shape: f32[128,32], index: 2, kind: input, shape index: {}]
  %s3 = inlined_call_operand.vmem [shape: f32[1,32], index: 3, kind: input, shape index: {}, may-alias: {1,3}]
  %s4 = inlined_call_operand.vmem [shape: f32[1,32], index: 4, kind: input, shape index: {}]
  %s5 = inlined_call_operand.vmem [shape: bf16[32,128], index: 5, kind: input, shape index: {}]
  %s6 = inlined_call_operand.vmem [shape: f32[128,32], index: 6, kind: output, shape index: {0}]
  %s7 = inlined_call_operand.vmem [shape: f32[128,128], index: 7, kind: output, shape index: {1}]
  %8 = xla_tuple %s6, %s7
  %s9 = sld [smem:[#allocation0]]
  $region65: #{_lambda_.13} parent=0
    _
  %s11 = ssub.s32 1, %s9
  %s12 = scalar_select 0, %s11, %s9
  loop: start=0, step=1, limit=4
  $region2: #{_lambda_.13} parent=0 // loop_pre_header
    _
  $region3: #{_lambda_.13} parent=0 // loop_header
    %s14 = sphi 0, %s18
    %p15 = scmp.ge.s32.totalorder %s14, 4
    %s24 = sphi 0, %s26
    %s27 = sphi 0, %s24
    %s28 = sphi 0, %s27
    %s44 = sphi 0, %s28
    %s48 = sphi 0, %s48
    %s50 = sphi 0, %s48
    %s51 = sphi 0, %s50
    %s65 = sphi 0, %s51
    %s71 = sphi 0, %s73
    %s74 = sphi 0, %s71
    %s75 = sphi 0, %s74
    %s91 = sphi 0, %s75
    %s95 = sphi 0, %s95
    %s97 = sphi 0, %s95
    %s98 = sphi 0, %s97
    %s112 = sphi 0, %s98
    %s116 = sphi 0, %s116
    %s118 = sphi 0, %s116
    %s119 = sphi 0, %s118
    %s133 = sphi 0, %s119
    %s137 = sphi 0, %s137
    %s139 = sphi 0, %s137
    %s140 = sphi 0, %s139
    %s154 = sphi 0, %s140
    %s160 = sphi 0, %s162
    %s163 = sphi 0, %s160
    %s164 = sphi 0, %s163
    %s180 = sphi 0, %s164
    %s186 = sphi 0, %s188
    %s189 = sphi 0, %s186
    %s190 = sphi 0, %s189
    %s206 = sphi 0, %s190
  $region4: #{_lambda_.13} parent=0 // loop_header_branch
    %17 = sbr.rel (%p15) target = $region8
  $region5: #{_lambda_.13} parent=0 // loop_body
    %s19 = ssub.s32 %s14, 1
    %s20 = ssub.s32 %s14, 2
    %s21 = sadd.s32 %s14, 1
    %s22 = ssub.s32 %s14, %s21
    %p23 = scmp.eq.s32.totalorder %s22, 0
    %s25 = sadd.s32 %s24, 1
    %s26 = scalar_select %p23, %s24, %s25
    %p29 = pneg %p23
    %p30 = scmp.eq.s32.totalorder %s14, 1
    %p31 = por %p29, %p30
    %p32 = scmp.ne.s32.totalorder %s24, %s27
    %p33 = scmp.eq.s32.totalorder %s14, 0
    %p34 = por %p32, %p33
    %p35 = scmp.ne.s32.totalorder %s24, %s27
    %p36 = scmp.eq.s32.totalorder %s19, 1
    %p37 = por %p35, %p36
    %p38 = scmp.ne.s32.totalorder %s27, %s28
    %p39 = scmp.eq.s32.totalorder %s19, 0
    %p40 = por %p38, %p39
    %p41 = scmp.ne.s32.totalorder %s27, %s28
    %p42 = scmp.eq.s32.totalorder %s20, 1
    %p43 = por %p41, %p42
    %p45 = scmp.ne.s32.totalorder %s28, %s44
    %p46 = scmp.eq.s32.totalorder %s20, 0
    %p47 = por %p45, %p46
    %s49 = sadd.s32 %s48, 1
    %p52 = scmp.eq.s32.totalorder %s14, 1
    %p53 = scmp.ne.s32.totalorder %s48, %s50
    %p54 = scmp.eq.s32.totalorder %s14, 0
    %p55 = por %p53, %p54
    %p56 = scmp.ne.s32.totalorder %s48, %s50
    %p57 = scmp.eq.s32.totalorder %s19, 1
    %p58 = por %p56, %p57
    %p59 = scmp.ne.s32.totalorder %s50, %s51
    %p60 = scmp.eq.s32.totalorder %s19, 0
    %p61 = por %p59, %p60
    %p62 = scmp.ne.s32.totalorder %s50, %s51
    %p63 = scmp.eq.s32.totalorder %s20, 1
    %p64 = por %p62, %p63
    %p66 = scmp.ne.s32.totalorder %s51, %s65
    %p67 = scmp.eq.s32.totalorder %s20, 0
    %p68 = por %p66, %p67
    %s69 = ssub.s32 %s14, %s21
    %p70 = scmp.eq.s32.totalorder %s69, 0
    %s72 = sadd.s32 %s71, 1
    %s73 = scalar_select %p70, %s71, %s72
    %p76 = pneg %p70
    %p77 = scmp.eq.s32.totalorder %s14, 1
    %p78 = por %p76, %p77
    %p79 = scmp.ne.s32.totalorder %s71, %s74
    %p80 = scmp.eq.s32.totalorder %s14, 0
    %p81 = por %p79, %p80
    %p82 = scmp.ne.s32.totalorder %s71, %s74
    %p83 = scmp.eq.s32.totalorder %s19, 1
    %p84 = por %p82, %p83
    %p85 = scmp.ne.s32.totalorder %s74, %s75
    %p86 = scmp.eq.s32.totalorder %s19, 0
    %p87 = por %p85, %p86
    %p88 = scmp.ne.s32.totalorder %s74, %s75
    %p89 = scmp.eq.s32.totalorder %s20, 1
    %p90 = por %p88, %p89
    %p92 = scmp.ne.s32.totalorder %s75, %s91
    %p93 = scmp.eq.s32.totalorder %s20, 0
    %p94 = por %p92, %p93
    %s96 = sadd.s32 %s95, 1
    %p99 = scmp.eq.s32.totalorder %s14, 1
    %p100 = scmp.ne.s32.totalorder %s95, %s97
    %p101 = scmp.eq.s32.totalorder %s14, 0
    %p102 = por %p100, %p101
    %p103 = scmp.ne.s32.totalorder %s95, %s97
    %p104 = scmp.eq.s32.totalorder %s19, 1
    %p105 = por %p103, %p104
    %p106 = scmp.ne.s32.totalorder %s97, %s98
    %p107 = scmp.eq.s32.totalorder %s19, 0
    %p108 = por %p106, %p107
    %p109 = scmp.ne.s32.totalorder %s97, %s98
    %p110 = scmp.eq.s32.totalorder %s20, 1
    %p111 = por %p109, %p110
    %p113 = scmp.ne.s32.totalorder %s98, %s112
    %p114 = scmp.eq.s32.totalorder %s20, 0
    %p115 = por %p113, %p114
    %s117 = sadd.s32 %s116, 1
    %p120 = scmp.eq.s32.totalorder %s14, 1
    %p121 = scmp.ne.s32.totalorder %s116, %s118
    %p122 = scmp.eq.s32.totalorder %s14, 0
    %p123 = por %p121, %p122
    %p124 = scmp.ne.s32.totalorder %s116, %s118
    %p125 = scmp.eq.s32.totalorder %s19, 1
    %p126 = por %p124, %p125
    %p127 = scmp.ne.s32.totalorder %s118, %s119
    %p128 = scmp.eq.s32.totalorder %s19, 0
    %p129 = por %p127, %p128
    %p130 = scmp.ne.s32.totalorder %s118, %s119
    %p131 = scmp.eq.s32.totalorder %s20, 1
    %p132 = por %p130, %p131
    %p134 = scmp.ne.s32.totalorder %s119, %s133
    %p135 = scmp.eq.s32.totalorder %s20, 0
    %p136 = por %p134, %p135
    %s138 = sadd.s32 %s137, 1
    %p141 = scmp.eq.s32.totalorder %s14, 1
    %p142 = scmp.ne.s32.totalorder %s137, %s139
    %p143 = scmp.eq.s32.totalorder %s14, 0
    %p144 = por %p142, %p143
    %p145 = scmp.ne.s32.totalorder %s137, %s139
    %p146 = scmp.eq.s32.totalorder %s19, 1
    %p147 = por %p145, %p146
    %p148 = scmp.ne.s32.totalorder %s139, %s140
    %p149 = scmp.eq.s32.totalorder %s19, 0
    %p150 = por %p148, %p149
    %p151 = scmp.ne.s32.totalorder %s139, %s140
    %p152 = scmp.eq.s32.totalorder %s20, 1
    %p153 = por %p151, %p152
    %p155 = scmp.ne.s32.totalorder %s140, %s154
    %p156 = scmp.eq.s32.totalorder %s20, 0
    %p157 = por %p155, %p156
    %s158 = ssub.s32 %s14, %s21
    %p159 = scmp.eq.s32.totalorder %s158, 0
    %s161 = sadd.s32 %s160, 1
    %s162 = scalar_select %p159, %s160, %s161
    %p165 = pneg %p159
    %p166 = scmp.eq.s32.totalorder %s14, 1
    %p167 = por %p165, %p166
    %p168 = scmp.ne.s32.totalorder %s160, %s163
    %p169 = scmp.eq.s32.totalorder %s14, 0
    %p170 = por %p168, %p169
    %p171 = scmp.ne.s32.totalorder %s160, %s163
    %p172 = scmp.eq.s32.totalorder %s19, 1
    %p173 = por %p171, %p172
    %p174 = scmp.ne.s32.totalorder %s163, %s164
    %p175 = scmp.eq.s32.totalorder %s19, 0
    %p176 = por %p174, %p175
    %p177 = scmp.ne.s32.totalorder %s163, %s164
    %p178 = scmp.eq.s32.totalorder %s20, 1
    %p179 = por %p177, %p178
    %p181 = scmp.ne.s32.totalorder %s164, %s180
    %p182 = scmp.eq.s32.totalorder %s20, 0
    %p183 = por %p181, %p182
    %s184 = ssub.s32 %s14, %s21
    %p185 = scmp.eq.s32.totalorder %s184, 0
    %s187 = sadd.s32 %s186, 1
    %s188 = scalar_select %p185, %s186, %s187
    %p191 = pneg %p185
    %p192 = scmp.eq.s32.totalorder %s14, 1
    %p193 = por %p191, %p192
    %p194 = scmp.ne.s32.totalorder %s186, %s189
    %p195 = scmp.eq.s32.totalorder %s14, 0
    %p196 = por %p194, %p195
    %p197 = scmp.ne.s32.totalorder %s186, %s189
    %p198 = scmp.eq.s32.totalorder %s19, 1
    %p199 = por %p197, %p198
    %p200 = scmp.ne.s32.totalorder %s189, %s190
    %p201 = scmp.eq.s32.totalorder %s19, 0
    %p202 = por %p200, %p201
    %p203 = scmp.ne.s32.totalorder %s189, %s190
    %p204 = scmp.eq.s32.totalorder %s20, 1
    %p205 = por %p203, %p204
    %p207 = scmp.ne.s32.totalorder %s190, %s206
    %p208 = scmp.eq.s32.totalorder %s20, 0
    %p209 = por %p207, %p208
    %p210 = scmp.le.s32.totalorder 1, %s14
    %p211 = scmp.lt.s32.totalorder %s14, 3
    %p212 = pnand %p210, %p211
    %p213 = pneg %p212
    // Predicated region
    $region9: #{_lambda_.13} parent=5 // pred_check
      _
    $region10: #{_lambda_.13} parent=5 // pred_check_branch
      %215 = sbr.rel (%p212) target = $region12
    $region11: #{_lambda_.13} parent=5 // pred_region
      %s216 = ssub.s32 %s14, 1
      // Predicated region
      $region13: #{_lambda_.13} parent=11 // pred_check
        %p217 = pneg %p61
      $region14: #{_lambda_.13} parent=11 // pred_check_branch
        %219 = sbr.rel (%p217) target = $region16
      $region15: #{_lambda_.13} parent=11 // pred_region
        _
      $region16: #{_lambda_.13} parent=11 // pred_fallthru
        _
      // Predicated region
      $region17: #{_lambda_.13} parent=11 // pred_check
        %p220 = pneg %p108
      $region18: #{_lambda_.13} parent=11 // pred_check_branch
        %222 = sbr.rel (%p220) target = $region20
      $region19: #{_lambda_.13} parent=11 // pred_region
        _
      $region20: #{_lambda_.13} parent=11 // pred_fallthru
        _
      // Predicated region
      $region21: #{_lambda_.13} parent=11 // pred_check
        %p223 = pneg %p129
      $region22: #{_lambda_.13} parent=11 // pred_check_branch
        %225 = sbr.rel (%p223) target = $region24
      $region23: #{_lambda_.13} parent=11 // pred_region
        _
      $region24: #{_lambda_.13} parent=11 // pred_fallthru
        _
      // Predicated region
      $region25: #{_lambda_.13} parent=11 // pred_check
        %p226 = pneg %p150
      $region26: #{_lambda_.13} parent=11 // pred_check_branch
        %228 = sbr.rel (%p226) target = $region28
      $region27: #{_lambda_.13} parent=11 // pred_region
        _
      $region28: #{_lambda_.13} parent=11 // pred_fallthru
        _
    $region12: #{_lambda_.13} parent=5 // pred_fallthru
      _
    %p229 = scmp.lt.s32.totalorder %s14, 2
    // Predicated region
    $region29: #{_lambda_.13} parent=5 // pred_check
      %p230 = pneg %p229
    $region30: #{_lambda_.13} parent=5 // pred_check_branch
      %232 = sbr.rel (%p230) target = $region32
    $region31: #{_lambda_.13} parent=5 // pred_region
      // Predicated region
      $region33: #{_lambda_.13} parent=31 // pred_check
        %p233 = pneg %p34
      $region34: #{_lambda_.13} parent=31 // pred_check_branch
        %235 = sbr.rel (%p233) target = $region36
      $region35: #{_lambda_.13} parent=31 // pred_region
        %s236 = smul.u32 8, %s14
        %p237 = scmp.lt.s32.totalorder %s236, 15
        %s238 = scalar_select %p237, %s236, 15
        %s239 = smul.addr %s238, 8
        %s240 = scalar_lea.vmem %s0, %s239
        %s241 = smul.u32 8, %s14
      $region36: #{_lambda_.13} parent=31 // pred_fallthru
        _
      // Predicated region
      $region37: #{_lambda_.13} parent=31 // pred_check
        %p242 = pneg %p81
      $region38: #{_lambda_.13} parent=31 // pred_check_branch
        %244 = sbr.rel (%p242) target = $region40
      $region39: #{_lambda_.13} parent=31 // pred_region
        %s245 = smul.u32 8, %s14
        %p246 = scmp.lt.s32.totalorder %s245, 15
        %s247 = scalar_select %p246, %s245, 15
        %s248 = smul.addr %s247, 8
        %s249 = scalar_lea.vmem %s2, %s248
        %s250 = smul.u32 8, %s14
      $region40: #{_lambda_.13} parent=31 // pred_fallthru
        _
    $region32: #{_lambda_.13} parent=5 // pred_fallthru
      _
    %p251 = scmp.le.s32.totalorder 1, %s14
    %p252 = scmp.lt.s32.totalorder %s14, 3
    %p253 = pnand %p251, %p252
    %p254 = pneg %p253
    // Predicated region
    $region41: #{_lambda_.13} parent=5 // pred_check
      _
    $region42: #{_lambda_.13} parent=5 // pred_check_branch
      %256 = sbr.rel (%p253) target = $region44
    $region43: #{_lambda_.13} parent=5 // pred_region
      %s257 = ssub.s32 %s14, 1
      %s258 = smul.u32 8, %s19
      %p259 = scmp.lt.s32.totalorder %s258, 15
      %s260 = scalar_select %p259, %s258, 15
      %s261 = smul.addr %s260, 8
      %s262 = scalar_lea.vmem %s0, %s261
      %p263 = pneg %p40
      %p264 = pneg %p37
      %p265 = pneg %p61
      %p266 = pneg %p58
      %s267 = smul.u32 8, %s19
      %p268 = scmp.lt.s32.totalorder %s267, 15
      %s269 = scalar_select %p268, %s267, 15
      %s270 = smul.addr %s269, 8
      %s271 = scalar_lea.vmem %s2, %s270
      %p272 = pneg %p87
      %p273 = pneg %p84
      %p274 = pneg %p108
      %p275 = pneg %p105
      %p276 = pneg %p129
      %p277 = pneg %p126
      %p278 = pneg %p150
      %p279 = pneg %p147
      %p280 = pneg %p176
      %p281 = pneg %p173
      %s282 = smul.u32 8, %s19
      %p283 = scmp.lt.s32.totalorder %s282, 15
      %s284 = scalar_select %p283, %s282, 15
      %s285 = smul.addr %s284, 8
      %s286 = scalar_lea.vmem %s6, %s285
      %p287 = pneg %p202
      %p288 = pneg %p199
      %s289 = smul.u32 8, %s19
      %p290 = scmp.lt.s32.totalorder %s289, 15
      %s291 = scalar_select %p290, %s289, 15
      %s292 = smul.addr %s291, 8
      %s293 = scalar_lea.vmem %s7, %s292
      %s294 = smul.u32 8, %s19
      %p295 = scmp.lt.s32.totalorder %s294, 15
      %s296 = scalar_select %p295, %s294, 15
      %s297 = smul.addr %s296, 8
      %s298 = scalar_lea.vmem %s0, %s297
      %s299 = smul.u32 8, %s19
      %s300 = smul.u32 8, %s19
      %p301 = scmp.lt.s32.totalorder %s300, 15
      %s302 = scalar_select %p301, %s300, 15
      %s303 = smul.addr %s302, 8
      %s304 = scalar_lea.vmem %s2, %s303
      %s305 = smul.u32 8, %s19
      %s306 = smul.u32 8, %s19
      %p307 = scmp.lt.s32.totalorder %s306, 15
      %s308 = scalar_select %p307, %s306, 15
      %s309 = smul.addr %s308, 8
      %s310 = scalar_lea.vmem %s6, %s309
      %s311 = smul.u32 8, %s19
      %s312 = smul.u32 8, %s19
      %p313 = scmp.lt.s32.totalorder %s312, 15
      %s314 = scalar_select %p313, %s312, 15
      %s315 = smul.addr %s314, 8
      %s316 = scalar_lea.vmem %s7, %s315
      %s317 = smul.u32 8, %s19
      %v319 = vld [vmem:[%s298] sm:$0xff]
      %v320 = vld [vmem:[%s298 + $0x8] sm:$0xff]
      %v321 = vld [vmem:[%s298 + $0x10] sm:$0xff]
      %v322 = vld [vmem:[%s298 + $0x18] sm:$0xff]
      %v323 = vld [vmem:[%s298 + $0x20] sm:$0xff]
      %v324 = vld [vmem:[%s298 + $0x28] sm:$0xff]
      %v325 = vld [vmem:[%s298 + $0x30] sm:$0xff]
      %v326 = vld [vmem:[%s298 + $0x38] sm:$0xff]
      %v327 = vld [vmem:[%s1] sm:$0x1]
      %v329 = vlaneseq
      %v330 = vshrl.u32 %v329, 7
      %v331 = vsub.s32 0, %v330
      %v332 = vrot.slane %v327, %v331
      %v334 = vmul.f32 %v319, %v332
      %v335 = vmul.f32 %v320, %v332
      %v336 = vmul.f32 %v321, %v332
      %v337 = vmul.f32 %v322, %v332
      %v338 = vmul.f32 %v323, %v332
      %v339 = vmul.f32 %v324, %v332
      %v340 = vmul.f32 %v325, %v332
      %v341 = vmul.f32 %v326, %v332
      %v342 = vld [vmem:[%s304] sm:$0xff]
      %v343 = vld [vmem:[%s304 + $0x8] sm:$0xff]
      %v344 = vld [vmem:[%s304 + $0x10] sm:$0xff]
      %v345 = vld [vmem:[%s304 + $0x18] sm:$0xff]
      %v346 = vld [vmem:[%s304 + $0x20] sm:$0xff]
      %v347 = vld [vmem:[%s304 + $0x28] sm:$0xff]
      %v348 = vld [vmem:[%s304 + $0x30] sm:$0xff]
      %v349 = vld [vmem:[%s304 + $0x38] sm:$0xff]
      %v350 = vadd.f32 %v334, %v342
      %v351 = vadd.f32 %v335, %v343
      %v352 = vadd.f32 %v336, %v344
      %v353 = vadd.f32 %v337, %v345
      %v354 = vadd.f32 %v338, %v346
      %v355 = vadd.f32 %v339, %v347
      %v356 = vadd.f32 %v340, %v348
      %v357 = vadd.f32 %v341, %v349
      %vm358 = vcmask 261120
      %359 = vst.msk [vmem:[%s310] sm:$0xff] %vm358, %v350
      %360 = vst.msk [vmem:[%s310 + $0x8] sm:$0xff] %vm358, %v351
      %361 = vst.msk [vmem:[%s310 + $0x10] sm:$0xff] %vm358, %v352
      %362 = vst.msk [vmem:[%s310 + $0x18] sm:$0xff] %vm358, %v353
      %363 = vst.msk [vmem:[%s310 + $0x20] sm:$0xff] %vm358, %v354
      %364 = vst.msk [vmem:[%s310 + $0x28] sm:$0xff] %vm358, %v355
      %365 = vst.msk [vmem:[%s310 + $0x30] sm:$0xff] %vm358, %v356
      %366 = vst.msk [vmem:[%s310 + $0x38] sm:$0xff] %vm358, %v357
      %v367 = vld [vmem:[%s3] sm:$0x1]
      %v368 = vld [vmem:[%s4] sm:$0x1]
      %v369 = vsel %vm358, %v350, 0.0
      %370 = vadd.xlane.f32.xlu0 %v369
      %v371 = vpop.xlane.xlu0 %370
      %v372 = vsel %vm358, %v351, 0.0
      %373 = vadd.xlane.f32.xlu0 %v372
      %v374 = vpop.xlane.xlu0 %373
      %v375 = vsel %vm358, %v352, 0.0
      %376 = vadd.xlane.f32.xlu0 %v375
      %v377 = vpop.xlane.xlu0 %376
      %v378 = vsel %vm358, %v353, 0.0
      %379 = vadd.xlane.f32.xlu0 %v378
      %v380 = vpop.xlane.xlu0 %379
      %v381 = vsel %vm358, %v354, 0.0
      %382 = vadd.xlane.f32.xlu0 %v381
      %v383 = vpop.xlane.xlu0 %382
      %v384 = vsel %vm358, %v355, 0.0
      %385 = vadd.xlane.f32.xlu0 %v384
      %v386 = vpop.xlane.xlu0 %385
      %v387 = vsel %vm358, %v356, 0.0
      %388 = vadd.xlane.f32.xlu0 %v387
      %v389 = vpop.xlane.xlu0 %388
      %v390 = vsel %vm358, %v357, 0.0
      %391 = vadd.xlane.f32.xlu0 %v390
      %v392 = vpop.xlane.xlu0 %391
      %v393 = vrcp.pop 32.0
      %v394 = vmul.f32 %v371, %v393
      %v395 = vmul.f32 %v374, %v393
      %v396 = vmul.f32 %v377, %v393
      %v397 = vmul.f32 %v380, %v393
      %v398 = vmul.f32 %v383, %v393
      %v399 = vmul.f32 %v386, %v393
      %v400 = vmul.f32 %v389, %v393
      %v401 = vmul.f32 %v392, %v393
      %v402 = vsub.f32 %v350, %v394
      %v403 = vsub.f32 %v351, %v395
      %v404 = vsub.f32 %v352, %v396
      %v405 = vsub.f32 %v353, %v397
      %v406 = vsub.f32 %v354, %v398
      %v407 = vsub.f32 %v355, %v399
      %v408 = vsub.f32 %v356, %v400
      %v409 = vsub.f32 %v357, %v401
      %v410 = vmul.f32 %v402, %v402
      %v411 = vmul.f32 %v403, %v403
      %v412 = vmul.f32 %v404, %v404
      %v413 = vmul.f32 %v405, %v405
      %v414 = vmul.f32 %v406, %v406
      %v415 = vmul.f32 %v407, %v407
      %v416 = vmul.f32 %v408, %v408
      %v417 = vmul.f32 %v409, %v409
      %v418 = vsel %vm358, %v410, 0.0
      %419 = vadd.xlane.f32.xlu0 %v418
      %v420 = vpop.xlane.xlu0 %419
      %v421 = vsel %vm358, %v411, 0.0
      %422 = vadd.xlane.f32.xlu0 %v421
      %v423 = vpop.xlane.xlu0 %422
      %v424 = vsel %vm358, %v412, 0.0
      %425 = vadd.xlane.f32.xlu0 %v424
      %v426 = vpop.xlane.xlu0 %425
      %v427 = vsel %vm358, %v413, 0.0
      %428 = vadd.xlane.f32.xlu0 %v427
      %v429 = vpop.xlane.xlu0 %428
      %v430 = vsel %vm358, %v414, 0.0
      %431 = vadd.xlane.f32.xlu0 %v430
      %v432 = vpop.xlane.xlu0 %431
      %v433 = vsel %vm358, %v415, 0.0
      %434 = vadd.xlane.f32.xlu0 %v433
      %v435 = vpop.xlane.xlu0 %434
      %v436 = vsel %vm358, %v416, 0.0
      %437 = vadd.xlane.f32.xlu0 %v436
      %v438 = vpop.xlane.xlu0 %437
      %v439 = vsel %vm358, %v417, 0.0
      %440 = vadd.xlane.f32.xlu0 %v439
      %v441 = vpop.xlane.xlu0 %440
      %v442 = vmul.f32 %v420, %v393
      %v443 = vmul.f32 %v423, %v393
      %v444 = vmul.f32 %v426, %v393
      %v445 = vmul.f32 %v429, %v393
      %v446 = vmul.f32 %v432, %v393
      %v447 = vmul.f32 %v435, %v393
      %v448 = vmul.f32 %v438, %v393
      %v449 = vmul.f32 %v441, %v393
      %v450 = vadd.f32 %v442, 1e-05
      %v451 = vadd.f32 %v443, 1e-05
      %v452 = vadd.f32 %v444, 1e-05
      %v453 = vadd.f32 %v445, 1e-05
      %v454 = vadd.f32 %v446, 1e-05
      %v455 = vadd.f32 %v447, 1e-05
      %v456 = vadd.f32 %v448, 1e-05
      %v457 = vadd.f32 %v449, 1e-05
      %v458 = vrsqrt.pop %v450
      %v459 = vrsqrt.pop %v451
      %v460 = vrsqrt.pop %v452
      %v461 = vrsqrt.pop %v453
      %v462 = vrsqrt.pop %v454
      %v463 = vrsqrt.pop %v455
      %v464 = vrsqrt.pop %v456
      %v465 = vrsqrt.pop %v457
      %v466 = vmul.f32 %v402, %v458
      %v467 = vmul.f32 %v403, %v459
      %v468 = vmul.f32 %v404, %v460
      %v469 = vmul.f32 %v405, %v461
      %v470 = vmul.f32 %v406, %v462
      %v471 = vmul.f32 %v407, %v463
      %v472 = vmul.f32 %v408, %v464
      %v473 = vmul.f32 %v409, %v465
      %v475 = vlaneseq
      %v476 = vshrl.u32 %v475, 7
      %v477 = vsub.s32 0, %v476
      %v478 = vrot.slane %v367, %v477
      %v480 = vmul.f32 %v466, %v478
      %v481 = vmul.f32 %v467, %v478
      %v482 = vmul.f32 %v468, %v478
      %v483 = vmul.f32 %v469, %v478
      %v484 = vmul.f32 %v470, %v478
      %v485 = vmul.f32 %v471, %v478
      %v486 = vmul.f32 %v472, %v478
      %v487 = vmul.f32 %v473, %v478
      %v489 = vlaneseq
      %v490 = vshrl.u32 %v489, 7
      %v491 = vsub.s32 0, %v490
      %v492 = vrot.slane %v368, %v491
      %v494 = vadd.f32 %v480, %v492
      %v495 = vadd.f32 %v481, %v492
      %v496 = vadd.f32 %v482, %v492
      %v497 = vadd.f32 %v483, %v492
      %v498 = vadd.f32 %v484, %v492
      %v499 = vadd.f32 %v485, %v492
      %v500 = vadd.f32 %v486, %v492
      %v501 = vadd.f32 %v487, %v492
      %v502 = vpack.c.bf16 %v495, %v494
      %v503 = vpack.c.bf16 %v497, %v496
      %v504 = vpack.c.bf16 %v499, %v498
      %v505 = vpack.c.bf16 %v501, %v500
      %v506 = vld [vmem:[%s5] sm:$0xf]
      %v507 = vld [vmem:[%s5 + $0x4] sm:$0xf]
      %v508 = vld [vmem:[%s5 + $0x8] sm:$0xf]
      %v509 = vld [vmem:[%s5 + $0xc] sm:$0xf]
      %v514 = vunpack.c.l.b16 %v506
      %v515 = vunpack.c.l.b16 %v507
      %v516 = vunpack.c.l.b16 %v508
      %v517 = vunpack.c.l.b16 %v509
      %v518 = vpack.c.b16 %v515, %v514
      %v519 = vpack.c.b16 %v517, %v516
      %v523 = vsel %vm358, %v502, 0
      %v526 = vsel %vm358, %v503, 0
      %v529 = vsel %vm358, %v504, 0
      %v532 = vsel %vm358, %v505, 0
      %534 = vmatprep.subr.bf16.mxu0 0
      %535 = vmatpush1.bf16.msra.mxu0 %v518
      %536 = vmatprep.subr.bf16.mxu0 0
      %537 = vmatpush1.bf16.msra.mxu0 %v519
      %538 = vmatprep.subr.bf16.mxu0 0
      %539 = vmatpush1.bf16.msra.mxu0 0
      %540 = vmatprep.subr.bf16.mxu0 0
      %541 = vmatpush1.bf16.msra.mxu0 0
      %542 = vmatprep.subr.bf16.mxu0 0
      %543 = vmatpush1.bf16.msra.mxu0 0
      %544 = vmatprep.subr.bf16.mxu0 0
      %545 = vmatpush1.bf16.msra.mxu0 0
      %546 = vmatprep.subr.bf16.mxu0 0
      %547 = vmatpush1.bf16.msra.mxu0 0
      %548 = vmatprep.subr.bf16.mxu0 0
      %549 = vmatpush1.bf16.msra.mxu0 0
      %550 = vmatprep.subr.bf16.mxu0 0
      %551 = vmatpush1.bf16.msra.mxu0 0
      %552 = vmatprep.subr.bf16.mxu0 0
      %553 = vmatpush1.bf16.msra.mxu0 0
      %554 = vmatprep.subr.bf16.mxu0 0
      %555 = vmatpush1.bf16.msra.mxu0 0
      %556 = vmatprep.subr.bf16.mxu0 0
      %557 = vmatpush1.bf16.msra.mxu0 0
      %558 = vmatprep.subr.bf16.mxu0 0
      %559 = vmatpush1.bf16.msra.mxu0 0
      %560 = vmatprep.subr.bf16.mxu0 0
      %561 = vmatpush1.bf16.msra.mxu0 0
      %562 = vmatprep.subr.bf16.mxu0 0
      %563 = vmatpush1.bf16.msra.mxu0 0
      %564 = vmatprep.subr.bf16.mxu0 0
      %565 = vmatpush1.bf16.msra.mxu0 0
      %566 = vmatprep.mubr.bf16.mxu0 0
      %567 = vmatmul.mubr.bf16.gmra.mrb[0].mxu0 %v523
      %v568 = vpop.f32.mrb[0].mxu0
      %v569 = vadd.f32 0.0, %v568
      %v570 = vpop.f32.mrb[0].mxu0
      %v571 = vpop.f32.mrb[0].mxu0
      %v572 = vadd.f32 0.0, %v571
      %v573 = vpop.f32.mrb[0].mxu0
      %574 = vmatprep.mubr.bf16.mxu0 0
      %575 = vmatmul.mubr.bf16.gmra.mrb[0].mxu0 %v526
      %v576 = vpop.f32.mrb[0].mxu0
      %v577 = vadd.f32 0.0, %v576
      %v578 = vpop.f32.mrb[0].mxu0
      %v579 = vpop.f32.mrb[0].mxu0
      %v580 = vadd.f32 0.0, %v579
      %v581 = vpop.f32.mrb[0].mxu0
      %582 = vmatprep.mubr.bf16.mxu0 0
      %583 = vmatmul.mubr.bf16.gmra.mrb[0].mxu0 %v529
      %v584 = vpop.f32.mrb[0].mxu0
      %v585 = vadd.f32 0.0, %v584
      %v586 = vpop.f32.mrb[0].mxu0
      %v587 = vpop.f32.mrb[0].mxu0
      %v588 = vadd.f32 0.0, %v587
      %v589 = vpop.f32.mrb[0].mxu0
      %590 = vmatprep.mubr.bf16.mxu0 0
      %591 = vmatmul.mubr.bf16.gmra.mrb[0].mxu0 %v532
      %v592 = vpop.f32.mrb[0].mxu0
      %v593 = vadd.f32 0.0, %v592
      %v594 = vpop.f32.mrb[0].mxu0
      %v595 = vpop.f32.mrb[0].mxu0
      %v596 = vadd.f32 0.0, %v595
      %v597 = vpop.f32.mrb[0].mxu0
      %598 = vdwg.mxu0
      %599 = vst [vmem:[%s316] sm:$0xff] %v569
      %600 = vst [vmem:[%s316 + $0x8] sm:$0xff] %v572
      %601 = vst [vmem:[%s316 + $0x10] sm:$0xff] %v577
      %602 = vst [vmem:[%s316 + $0x18] sm:$0xff] %v580
      %603 = vst [vmem:[%s316 + $0x20] sm:$0xff] %v585
      %604 = vst [vmem:[%s316 + $0x28] sm:$0xff] %v588
      %605 = vst [vmem:[%s316 + $0x30] sm:$0xff] %v593
      %606 = vst [vmem:[%s316 + $0x38] sm:$0xff] %v596
      %s607 = smul.u32 8, %s19
      %p608 = scmp.lt.s32.totalorder %s607, 15
      %s609 = scalar_select %p608, %s607, 15
      %s610 = smul.addr %s609, 8
      %s611 = scalar_lea.vmem %s6, %s610
      %s612 = smul.u32 8, %s19
      %p613 = scmp.lt.s32.totalorder %s612, 15
      %s614 = scalar_select %p613, %s612, 15
      %s615 = smul.addr %s614, 8
      %s616 = scalar_lea.vmem %s7, %s615
      // Predicated region
      $region45: #{_lambda_.13} parent=43 // pred_check
        %p617 = pneg %p173
      $region46: #{_lambda_.13} parent=43 // pred_check_branch
        %619 = sbr.rel (%p617) target = $region48
      $region47: #{_lambda_.13} parent=43 // pred_region
        %s620 = smul.u32 8, %s19
      $region48: #{_lambda_.13} parent=43 // pred_fallthru
        _
      // Predicated region
      $region49: #{_lambda_.13} parent=43 // pred_check
        %p621 = pneg %p199
      $region50: #{_lambda_.13} parent=43 // pred_check_branch
        %623 = sbr.rel (%p621) target = $region52
      $region51: #{_lambda_.13} parent=43 // pred_region
        %s624 = smul.u32 8, %s19
      $region52: #{_lambda_.13} parent=43 // pred_fallthru
        _
    $region44: #{_lambda_.13} parent=5 // pred_fallthru
      _
    %p625 = scmp.le.s32.totalorder 2, %s14
    // Predicated region
    $region53: #{_lambda_.13} parent=5 // pred_check
      %p626 = pneg %p625
    $region54: #{_lambda_.13} parent=5 // pred_check_branch
      %628 = sbr.rel (%p626) target = $region56
    $region55: #{_lambda_.13} parent=5 // pred_region
      %s629 = ssub.s32 %s14, 2
      // Predicated region
      $region57: #{_lambda_.13} parent=55 // pred_check
        %p630 = pneg %p179
      $region58: #{_lambda_.13} parent=55 // pred_check_branch
        %632 = sbr.rel (%p630) target = $region60
      $region59: #{_lambda_.13} parent=55 // pred_region
        %s633 = smul.u32 8, %s20
        %p634 = scmp.lt.s32.totalorder %s633, 15
        %s635 = scalar_select %p634, %s633, 15
        %s636 = smul.addr %s635, 8
        %s637 = scalar_lea.vmem %s6, %s636
      $region60: #{_lambda_.13} parent=55 // pred_fallthru
        _
      // Predicated region
      $region61: #{_lambda_.13} parent=55 // pred_check
        %p638 = pneg %p205
      $region62: #{_lambda_.13} parent=55 // pred_check_branch
        %640 = sbr.rel (%p638) target = $region64
      $region63: #{_lambda_.13} parent=55 // pred_region
        %s641 = smul.u32 8, %s20
        %p642 = scmp.lt.s32.totalorder %s641, 15
        %s643 = scalar_select %p642, %s641, 15
        %s644 = smul.addr %s643, 8
        %s645 = scalar_lea.vmem %s7, %s644
      $region64: #{_lambda_.13} parent=55 // pred_fallthru
        _
    $region56: #{_lambda_.13} parent=5 // pred_fallthru
      _
  $region6: #{_lambda_.13} parent=0 // loop_footer
    %s18 = sadd.s32 1, %s14
  $region7: #{_lambda_.13} parent=0 // loop_footer_branch
    %13 = sbr.rel target = $region3
  $region8: #{_lambda_.13} parent=0 // loop_exit
    _

// kernel: _lambda_.14
$region0: #{_lambda_.14}
  #allocation0 [shape = 'u32[]', space=smem, size = 0x4, offset = 0x4, fixed_abs, tag = 'smem constant byte address 0x4 - core index']
  #allocation1 [shape = 'u32[144,128]{1,0:T(1,128)}', space=vmem, size = 0x12000, scoped, tag = 'internal scratch']
  %s0 = inlined_call_operand.vmem [shape: f32[2,12,12,128], index: 0, kind: input, shape index: {}]
  %s1 = inlined_call_operand.vmem [shape: f32[25,128], index: 1, kind: input, shape index: {}]
  %s2 = inlined_call_operand.vmem [shape: f32[1,128], index: 2, kind: input, shape index: {}]
  %s3 = inlined_call_operand.vmem [shape: f32[2,8,8,128], index: 3, kind: output, shape index: {}]
  %s4 = sld [smem:[#allocation0]]
  $region45: #{_lambda_.14} parent=0
    _
  %s6 = ssub.s32 1, %s4
  %s7 = scalar_select 0, %s6, %s4
  loop: start=0, step=1, limit=4
  $region2: #{_lambda_.14} parent=0 // loop_pre_header
    _
  $region3: #{_lambda_.14} parent=0 // loop_header
    %s9 = sphi 0, %s13
    %p10 = scmp.ge.s32.totalorder %s9, 4
    %s19 = sphi 0, %s21
    %s22 = sphi 0, %s19
    %s23 = sphi 0, %s22
    %s39 = sphi 0, %s23
    %s43 = sphi 0, %s43
    %s45 = sphi 0, %s43
    %s46 = sphi 0, %s45
    %s60 = sphi 0, %s46
    %s64 = sphi 0, %s64
    %s66 = sphi 0, %s64
    %s67 = sphi 0, %s66
    %s81 = sphi 0, %s67
    %s87 = sphi 0, %s89
    %s90 = sphi 0, %s87
    %s91 = sphi 0, %s90
    %s107 = sphi 0, %s91
  $region4: #{_lambda_.14} parent=0 // loop_header_branch
    %12 = sbr.rel (%p10) target = $region8
  $region5: #{_lambda_.14} parent=0 // loop_body
    %s14 = ssub.s32 %s9, 1
    %s15 = ssub.s32 %s9, 2
    %s16 = sadd.s32 %s9, 1
    %s17 = ssub.s32 %s9, %s16
    %p18 = scmp.eq.s32.totalorder %s17, 0
    %s20 = sadd.s32 %s19, 1
    %s21 = scalar_select %p18, %s19, %s20
    %p24 = pneg %p18
    %p25 = scmp.eq.s32.totalorder %s9, 1
    %p26 = por %p24, %p25
    %p27 = scmp.ne.s32.totalorder %s19, %s22
    %p28 = scmp.eq.s32.totalorder %s9, 0
    %p29 = por %p27, %p28
    %p30 = scmp.ne.s32.totalorder %s19, %s22
    %p31 = scmp.eq.s32.totalorder %s14, 1
    %p32 = por %p30, %p31
    %p33 = scmp.ne.s32.totalorder %s22, %s23
    %p34 = scmp.eq.s32.totalorder %s14, 0
    %p35 = por %p33, %p34
    %p36 = scmp.ne.s32.totalorder %s22, %s23
    %p37 = scmp.eq.s32.totalorder %s15, 1
    %p38 = por %p36, %p37
    %p40 = scmp.ne.s32.totalorder %s23, %s39
    %p41 = scmp.eq.s32.totalorder %s15, 0
    %p42 = por %p40, %p41
    %s44 = sadd.s32 %s43, 1
    %p47 = scmp.eq.s32.totalorder %s9, 1
    %p48 = scmp.ne.s32.totalorder %s43, %s45
    %p49 = scmp.eq.s32.totalorder %s9, 0
    %p50 = por %p48, %p49
    %p51 = scmp.ne.s32.totalorder %s43, %s45
    %p52 = scmp.eq.s32.totalorder %s14, 1
    %p53 = por %p51, %p52
    %p54 = scmp.ne.s32.totalorder %s45, %s46
    %p55 = scmp.eq.s32.totalorder %s14, 0
    %p56 = por %p54, %p55
    %p57 = scmp.ne.s32.totalorder %s45, %s46
    %p58 = scmp.eq.s32.totalorder %s15, 1
    %p59 = por %p57, %p58
    %p61 = scmp.ne.s32.totalorder %s46, %s60
    %p62 = scmp.eq.s32.totalorder %s15, 0
    %p63 = por %p61, %p62
    %s65 = sadd.s32 %s64, 1
    %p68 = scmp.eq.s32.totalorder %s9, 1
    %p69 = scmp.ne.s32.totalorder %s64, %s66
    %p70 = scmp.eq.s32.totalorder %s9, 0
    %p71 = por %p69, %p70
    %p72 = scmp.ne.s32.totalorder %s64, %s66
    %p73 = scmp.eq.s32.totalorder %s14, 1
    %p74 = por %p72, %p73
    %p75 = scmp.ne.s32.totalorder %s66, %s67
    %p76 = scmp.eq.s32.totalorder %s14, 0
    %p77 = por %p75, %p76
    %p78 = scmp.ne.s32.totalorder %s66, %s67
    %p79 = scmp.eq.s32.totalorder %s15, 1
    %p80 = por %p78, %p79
    %p82 = scmp.ne.s32.totalorder %s67, %s81
    %p83 = scmp.eq.s32.totalorder %s15, 0
    %p84 = por %p82, %p83
    %s85 = ssub.s32 %s9, %s16
    %p86 = scmp.eq.s32.totalorder %s85, 0
    %s88 = sadd.s32 %s87, 1
    %s89 = scalar_select %p86, %s87, %s88
    %p92 = pneg %p86
    %p93 = scmp.eq.s32.totalorder %s9, 1
    %p94 = por %p92, %p93
    %p95 = scmp.ne.s32.totalorder %s87, %s90
    %p96 = scmp.eq.s32.totalorder %s9, 0
    %p97 = por %p95, %p96
    %p98 = scmp.ne.s32.totalorder %s87, %s90
    %p99 = scmp.eq.s32.totalorder %s14, 1
    %p100 = por %p98, %p99
    %p101 = scmp.ne.s32.totalorder %s90, %s91
    %p102 = scmp.eq.s32.totalorder %s14, 0
    %p103 = por %p101, %p102
    %p104 = scmp.ne.s32.totalorder %s90, %s91
    %p105 = scmp.eq.s32.totalorder %s15, 1
    %p106 = por %p104, %p105
    %p108 = scmp.ne.s32.totalorder %s91, %s107
    %p109 = scmp.eq.s32.totalorder %s15, 0
    %p110 = por %p108, %p109
    %p111 = scmp.le.s32.totalorder 1, %s9
    %p112 = scmp.lt.s32.totalorder %s9, 3
    %p113 = pnand %p111, %p112
    %p114 = pneg %p113
    // Predicated region
    $region9: #{_lambda_.14} parent=5 // pred_check
      _
    $region10: #{_lambda_.14} parent=5 // pred_check_branch
      %116 = sbr.rel (%p113) target = $region12
    $region11: #{_lambda_.14} parent=5 // pred_region
      %s117 = ssub.s32 %s9, 1
      // Predicated region
      $region13: #{_lambda_.14} parent=11 // pred_check
        %p118 = pneg %p56
      $region14: #{_lambda_.14} parent=11 // pred_check_branch
        %120 = sbr.rel (%p118) target = $region16
      $region15: #{_lambda_.14} parent=11 // pred_region
        _
      $region16: #{_lambda_.14} parent=11 // pred_fallthru
        _
      // Predicated region
      $region17: #{_lambda_.14} parent=11 // pred_check
        %p121 = pneg %p77
      $region18: #{_lambda_.14} parent=11 // pred_check_branch
        %123 = sbr.rel (%p121) target = $region20
      $region19: #{_lambda_.14} parent=11 // pred_region
        _
      $region20: #{_lambda_.14} parent=11 // pred_fallthru
        _
    $region12: #{_lambda_.14} parent=5 // pred_fallthru
      _
    %p124 = scmp.lt.s32.totalorder %s9, 2
    // Predicated region
    $region21: #{_lambda_.14} parent=5 // pred_check
      %p125 = pneg %p124
    $region22: #{_lambda_.14} parent=5 // pred_check_branch
      %127 = sbr.rel (%p125) target = $region24
    $region23: #{_lambda_.14} parent=5 // pred_region
      // Predicated region
      $region25: #{_lambda_.14} parent=23 // pred_check
        %p128 = pneg %p29
      $region26: #{_lambda_.14} parent=23 // pred_check_branch
        %130 = sbr.rel (%p128) target = $region28
      $region27: #{_lambda_.14} parent=23 // pred_region
        %p131 = scmp.lt.s32.totalorder %s9, 1
        %s132 = scalar_select %p131, %s9, 1
        %s133 = smul.addr %s132, 24
        %s134 = smul.addr %s133, 8
        %s135 = scalar_lea.vmem %s0, %s134
      $region28: #{_lambda_.14} parent=23 // pred_fallthru
        _
    $region24: #{_lambda_.14} parent=5 // pred_fallthru
      _
    %p136 = scmp.le.s32.totalorder 1, %s9
    %p137 = scmp.lt.s32.totalorder %s9, 3
    %p138 = pnand %p136, %p137
    %p139 = pneg %p138
    // Predicated region
    $region29: #{_lambda_.14} parent=5 // pred_check
      _
    $region30: #{_lambda_.14} parent=5 // pred_check_branch
      %141 = sbr.rel (%p138) target = $region32
    $region31: #{_lambda_.14} parent=5 // pred_region
      %s142 = ssub.s32 %s9, 1
      %p143 = scmp.lt.s32.totalorder %s14, 1
      %s144 = scalar_select %p143, %s14, 1
      %s145 = smul.addr %s144, 24
      %s146 = smul.addr %s145, 8
      %s147 = scalar_lea.vmem %s0, %s146
      %p148 = pneg %p35
      %p149 = pneg %p32
      %p150 = pneg %p56
      %p151 = pneg %p53
      %p152 = pneg %p77
      %p153 = pneg %p74
      %p154 = pneg %p103
      %p155 = pneg %p100
      %p156 = scmp.lt.s32.totalorder %s14, 1
      %s157 = scalar_select %p156, %s14, 1
      %s158 = smul.addr %s157, 8
      %s159 = smul.addr %s158, 8
      %s160 = scalar_lea.vmem %s3, %s159
      %p161 = scmp.lt.s32.totalorder %s14, 1
      %s162 = scalar_select %p161, %s14, 1
      %s163 = smul.addr %s162, 24
      %s164 = smul.addr %s163, 8
      %s165 = scalar_lea.vmem %s0, %s164
      %p166 = scmp.lt.s32.totalorder %s14, 1
      %s167 = scalar_select %p166, %s14, 1
      %s168 = smul.addr %s167, 8
      %s169 = smul.addr %s168, 8
      %s170 = scalar_lea.vmem %s3, %s169
      %v171 = vld [vmem:[%s1] sm:$0x1]
      %v172 = vld [vmem:[%s165] sm:$0xff]
      %v173 = vld [vmem:[%s165 + $0x10] sm:$0xff]
      %v174 = vld [vmem:[%s165 + $0x20] sm:$0xff]
      %v175 = vld [vmem:[%s165 + $0x30] sm:$0xff]
      %v176 = vld [vmem:[%s165 + $0x40] sm:$0xff]
      %v177 = vld [vmem:[%s165 + $0x50] sm:$0xff]
      %v178 = vld [vmem:[%s165 + $0x60] sm:$0xff]
      %v179 = vld [vmem:[%s165 + $0x70] sm:$0xff]
      %v180 = vlaneseq
      %v181 = vshrl.u32 %v180, 7
      %v182 = vsub.s32 0, %v181
      %v183 = vrot.slane %v171, %v182
      %v184 = vmul.f32 %v172, %v183
      %v185 = vmul.f32 %v173, %v183
      %v186 = vmul.f32 %v174, %v183
      %v187 = vmul.f32 %v175, %v183
      %v188 = vmul.f32 %v176, %v183
      %v189 = vmul.f32 %v177, %v183
      %v190 = vmul.f32 %v178, %v183
      %v191 = vmul.f32 %v179, %v183
      %v192 = vadd.f32 %v184, 0.0
      %v193 = vadd.f32 %v185, 0.0
      %v194 = vadd.f32 %v186, 0.0
      %v195 = vadd.f32 %v187, 0.0
      %v196 = vadd.f32 %v188, 0.0
      %v197 = vadd.f32 %v189, 0.0
      %v198 = vadd.f32 %v190, 0.0
      %v199 = vadd.f32 %v191, 0.0
      %v200 = vld [vmem:[%s1 + $0x1] sm:$0x1]
      %v201 = vld [vmem:[%s165 + $0x1] sm:$0xff]
      %v202 = vld [vmem:[%s165 + $0x11] sm:$0xff]
      %v203 = vld [vmem:[%s165 + $0x21] sm:$0xff]
      %v204 = vld [vmem:[%s165 + $0x31] sm:$0xff]
      %v205 = vld [vmem:[%s165 + $0x41] sm:$0xff]
      %v206 = vld [vmem:[%s165 + $0x51] sm:$0xff]
      %v207 = vld [vmem:[%s165 + $0x61] sm:$0xff]
      %v208 = vld [vmem:[%s165 + $0x71] sm:$0xff]
      %v209 = vlaneseq
      %v210 = vshrl.u32 %v209, 7
      %v211 = vsub.s32 0, %v210
      %v212 = vrot.slane %v200, %v211
      %v213 = vmul.f32 %v201, %v212
      %v214 = vmul.f32 %v202, %v212
      %v215 = vmul.f32 %v203, %v212
      %v216 = vmul.f32 %v204, %v212
      %v217 = vmul.f32 %v205, %v212
      %v218 = vmul.f32 %v206, %v212
      %v219 = vmul.f32 %v207, %v212
      %v220 = vmul.f32 %v208, %v212
      %v221 = vadd.f32 %v192, %v213
      %v222 = vadd.f32 %v193, %v214
      %v223 = vadd.f32 %v194, %v215
      %v224 = vadd.f32 %v195, %v216
      %v225 = vadd.f32 %v196, %v217
      %v226 = vadd.f32 %v197, %v218
      %v227 = vadd.f32 %v198, %v219
      %v228 = vadd.f32 %v199, %v220
      %v229 = vld [vmem:[%s1 + $0x2] sm:$0x1]
      %v230 = vld [vmem:[%s165 + $0x2] sm:$0xff]
      %v231 = vld [vmem:[%s165 + $0x12] sm:$0xff]
      %v232 = vld [vmem:[%s165 + $0x22] sm:$0xff]
      %v233 = vld [vmem:[%s165 + $0x32] sm:$0xff]
      %v234 = vld [vmem:[%s165 + $0x42] sm:$0xff]
      %v235 = vld [vmem:[%s165 + $0x52] sm:$0xff]
      %v236 = vld [vmem:[%s165 + $0x62] sm:$0xff]
      %v237 = vld [vmem:[%s165 + $0x72] sm:$0xff]
      %v238 = vlaneseq
      %v239 = vshrl.u32 %v238, 7
      %v240 = vsub.s32 0, %v239
      %v241 = vrot.slane %v229, %v240
      %v242 = vmul.f32 %v230, %v241
      %v243 = vmul.f32 %v231, %v241
      %v244 = vmul.f32 %v232, %v241
      %v245 = vmul.f32 %v233, %v241
      %v246 = vmul.f32 %v234, %v241
      %v247 = vmul.f32 %v235, %v241
      %v248 = vmul.f32 %v236, %v241
      %v249 = vmul.f32 %v237, %v241
      %v250 = vadd.f32 %v221, %v242
      %v251 = vadd.f32 %v222, %v243
      %v252 = vadd.f32 %v223, %v244
      %v253 = vadd.f32 %v224, %v245
      %v254 = vadd.f32 %v225, %v246
      %v255 = vadd.f32 %v226, %v247
      %v256 = vadd.f32 %v227, %v248
      %v257 = vadd.f32 %v228, %v249
      %v258 = vld [vmem:[%s1 + $0x3] sm:$0x1]
      %v259 = vld [vmem:[%s165 + $0x3] sm:$0xff]
      %v260 = vld [vmem:[%s165 + $0x13] sm:$0xff]
      %v261 = vld [vmem:[%s165 + $0x23] sm:$0xff]
      %v262 = vld [vmem:[%s165 + $0x33] sm:$0xff]
      %v263 = vld [vmem:[%s165 + $0x43] sm:$0xff]
      %v264 = vld [vmem:[%s165 + $0x53] sm:$0xff]
      %v265 = vld [vmem:[%s165 + $0x63] sm:$0xff]
      %v266 = vld [vmem:[%s165 + $0x73] sm:$0xff]
      %v267 = vlaneseq
      %v268 = vshrl.u32 %v267, 7
      %v269 = vsub.s32 0, %v268
      %v270 = vrot.slane %v258, %v269
      %v271 = vmul.f32 %v259, %v270
      %v272 = vmul.f32 %v260, %v270
      %v273 = vmul.f32 %v261, %v270
      %v274 = vmul.f32 %v262, %v270
      %v275 = vmul.f32 %v263, %v270
      %v276 = vmul.f32 %v264, %v270
      %v277 = vmul.f32 %v265, %v270
      %v278 = vmul.f32 %v266, %v270
      %v279 = vadd.f32 %v250, %v271
      %v280 = vadd.f32 %v251, %v272
      %v281 = vadd.f32 %v252, %v273
      %v282 = vadd.f32 %v253, %v274
      %v283 = vadd.f32 %v254, %v275
      %v284 = vadd.f32 %v255, %v276
      %v285 = vadd.f32 %v256, %v277
      %v286 = vadd.f32 %v257, %v278
      %v287 = vld [vmem:[%s1 + $0x4] sm:$0x1]
      %v288 = vld [vmem:[%s165 + $0x4] sm:$0xff]
      %v289 = vld [vmem:[%s165 + $0x14] sm:$0xff]
      %v290 = vld [vmem:[%s165 + $0x24] sm:$0xff]
      %v291 = vld [vmem:[%s165 + $0x34] sm:$0xff]
      %v292 = vld [vmem:[%s165 + $0x44] sm:$0xff]
      %v293 = vld [vmem:[%s165 + $0x54] sm:$0xff]
      %v294 = vld [vmem:[%s165 + $0x64] sm:$0xff]
      %v295 = vld [vmem:[%s165 + $0x74] sm:$0xff]
      %v296 = vlaneseq
      %v297 = vshrl.u32 %v296, 7
      %v298 = vsub.s32 0, %v297
      %v299 = vrot.slane %v287, %v298
      %v300 = vmul.f32 %v288, %v299
      %v301 = vmul.f32 %v289, %v299
      %v302 = vmul.f32 %v290, %v299
      %v303 = vmul.f32 %v291, %v299
      %v304 = vmul.f32 %v292, %v299
      %v305 = vmul.f32 %v293, %v299
      %v306 = vmul.f32 %v294, %v299
      %v307 = vmul.f32 %v295, %v299
      %v308 = vadd.f32 %v279, %v300
      %v309 = vadd.f32 %v280, %v301
      %v310 = vadd.f32 %v281, %v302
      %v311 = vadd.f32 %v282, %v303
      %v312 = vadd.f32 %v283, %v304
      %v313 = vadd.f32 %v284, %v305
      %v314 = vadd.f32 %v285, %v306
      %v315 = vadd.f32 %v286, %v307
      %v316 = vld [vmem:[%s1 + $0x5] sm:$0x1]
      %s317 = scalar_lea.vmem %s165, 16
      %v318 = vld [vmem:[%s317] sm:$0xff]
      %v319 = vld [vmem:[%s317 + $0x10] sm:$0xff]
      %v320 = vld [vmem:[%s317 + $0x20] sm:$0xff]
      %v321 = vld [vmem:[%s317 + $0x30] sm:$0xff]
      %v322 = vld [vmem:[%s317 + $0x40] sm:$0xff]
      %v323 = vld [vmem:[%s317 + $0x50] sm:$0xff]
      %v324 = vld [vmem:[%s317 + $0x60] sm:$0xff]
      %v325 = vld [vmem:[%s317 + $0x70] sm:$0xff]
      %v326 = vlaneseq
      %v327 = vshrl.u32 %v326, 7
      %v328 = vsub.s32 0, %v327
      %v329 = vrot.slane %v316, %v328
      %v330 = vmul.f32 %v318, %v329
      %v331 = vmul.f32 %v319, %v329
      %v332 = vmul.f32 %v320, %v329
      %v333 = vmul.f32 %v321, %v329
      %v334 = vmul.f32 %v322, %v329
      %v335 = vmul.f32 %v323, %v329
      %v336 = vmul.f32 %v324, %v329
      %v337 = vmul.f32 %v325, %v329
      %v338 = vadd.f32 %v308, %v330
      %v339 = vadd.f32 %v309, %v331
      %v340 = vadd.f32 %v310, %v332
      %v341 = vadd.f32 %v311, %v333
      %v342 = vadd.f32 %v312, %v334
      %v343 = vadd.f32 %v313, %v335
      %v344 = vadd.f32 %v314, %v336
      %v345 = vadd.f32 %v315, %v337
      %v346 = vld [vmem:[%s1 + $0x6] sm:$0x1]
      %v347 = vld [vmem:[%s317 + $0x1] sm:$0xff]
      %v348 = vld [vmem:[%s317 + $0x11] sm:$0xff]
      %v349 = vld [vmem:[%s317 + $0x21] sm:$0xff]
      %v350 = vld [vmem:[%s317 + $0x31] sm:$0xff]
      %v351 = vld [vmem:[%s317 + $0x41] sm:$0xff]
      %v352 = vld [vmem:[%s317 + $0x51] sm:$0xff]
      %v353 = vld [vmem:[%s317 + $0x61] sm:$0xff]
      %v354 = vld [vmem:[%s317 + $0x71] sm:$0xff]
      %v355 = vlaneseq
      %v356 = vshrl.u32 %v355, 7
      %v357 = vsub.s32 0, %v356
      %v358 = vrot.slane %v346, %v357
      %v359 = vmul.f32 %v347, %v358
      %v360 = vmul.f32 %v348, %v358
      %v361 = vmul.f32 %v349, %v358
      %v362 = vmul.f32 %v350, %v358
      %v363 = vmul.f32 %v351, %v358
      %v364 = vmul.f32 %v352, %v358
      %v365 = vmul.f32 %v353, %v358
      %v366 = vmul.f32 %v354, %v358
      %v367 = vadd.f32 %v338, %v359
      %v368 = vadd.f32 %v339, %v360
      %v369 = vadd.f32 %v340, %v361
      %v370 = vadd.f32 %v341, %v362
      %v371 = vadd.f32 %v342, %v363
      %v372 = vadd.f32 %v343, %v364
      %v373 = vadd.f32 %v344, %v365
      %v374 = vadd.f32 %v345, %v366
      %v375 = vld [vmem:[%s1 + $0x7] sm:$0x1]
      %v376 = vld [vmem:[%s317 + $0x2] sm:$0xff]
      %v377 = vld [vmem:[%s317 + $0x12] sm:$0xff]
      %v378 = vld [vmem:[%s317 + $0x22] sm:$0xff]
      %v379 = vld [vmem:[%s317 + $0x32] sm:$0xff]
      %v380 = vld [vmem:[%s317 + $0x42] sm:$0xff]
      %v381 = vld [vmem:[%s317 + $0x52] sm:$0xff]
      %v382 = vld [vmem:[%s317 + $0x62] sm:$0xff]
      %v383 = vld [vmem:[%s317 + $0x72] sm:$0xff]
      %v384 = vlaneseq
      %v385 = vshrl.u32 %v384, 7
      %v386 = vsub.s32 0, %v385
      %v387 = vrot.slane %v375, %v386
      %v388 = vmul.f32 %v376, %v387
      %v389 = vmul.f32 %v377, %v387
      %v390 = vmul.f32 %v378, %v387
      %v391 = vmul.f32 %v379, %v387
      %v392 = vmul.f32 %v380, %v387
      %v393 = vmul.f32 %v381, %v387
      %v394 = vmul.f32 %v382, %v387
      %v395 = vmul.f32 %v383, %v387
      %v396 = vadd.f32 %v367, %v388
      %v397 = vadd.f32 %v368, %v389
      %v398 = vadd.f32 %v369, %v390
      %v399 = vadd.f32 %v370, %v391
      %v400 = vadd.f32 %v371, %v392
      %v401 = vadd.f32 %v372, %v393
      %v402 = vadd.f32 %v373, %v394
      %v403 = vadd.f32 %v374, %v395
      %v404 = vld [vmem:[%s1 + $0x8] sm:$0x1]
      %v405 = vld [vmem:[%s317 + $0x3] sm:$0xff]
      %v406 = vld [vmem:[%s317 + $0x13] sm:$0xff]
      %v407 = vld [vmem:[%s317 + $0x23] sm:$0xff]
      %v408 = vld [vmem:[%s317 + $0x33] sm:$0xff]
      %v409 = vld [vmem:[%s317 + $0x43] sm:$0xff]
      %v410 = vld [vmem:[%s317 + $0x53] sm:$0xff]
      %v411 = vld [vmem:[%s317 + $0x63] sm:$0xff]
      %v412 = vld [vmem:[%s317 + $0x73] sm:$0xff]
      %v413 = vlaneseq
      %v414 = vshrl.u32 %v413, 7
      %v415 = vsub.s32 0, %v414
      %v416 = vrot.slane %v404, %v415
      %v417 = vmul.f32 %v405, %v416
      %v418 = vmul.f32 %v406, %v416
      %v419 = vmul.f32 %v407, %v416
      %v420 = vmul.f32 %v408, %v416
      %v421 = vmul.f32 %v409, %v416
      %v422 = vmul.f32 %v410, %v416
      %v423 = vmul.f32 %v411, %v416
      %v424 = vmul.f32 %v412, %v416
      %v425 = vadd.f32 %v396, %v417
      %v426 = vadd.f32 %v397, %v418
      %v427 = vadd.f32 %v398, %v419
      %v428 = vadd.f32 %v399, %v420
      %v429 = vadd.f32 %v400, %v421
      %v430 = vadd.f32 %v401, %v422
      %v431 = vadd.f32 %v402, %v423
      %v432 = vadd.f32 %v403, %v424
      %v433 = vld [vmem:[%s1 + $0x9] sm:$0x1]
      %v434 = vld [vmem:[%s317 + $0x4] sm:$0xff]
      %v435 = vld [vmem:[%s317 + $0x14] sm:$0xff]
      %v436 = vld [vmem:[%s317 + $0x24] sm:$0xff]
      %v437 = vld [vmem:[%s317 + $0x34] sm:$0xff]
      %v438 = vld [vmem:[%s317 + $0x44] sm:$0xff]
      %v439 = vld [vmem:[%s317 + $0x54] sm:$0xff]
      %v440 = vld [vmem:[%s317 + $0x64] sm:$0xff]
      %v441 = vld [vmem:[%s317 + $0x74] sm:$0xff]
      %v442 = vlaneseq
      %v443 = vshrl.u32 %v442, 7
      %v444 = vsub.s32 0, %v443
      %v445 = vrot.slane %v433, %v444
      %v446 = vmul.f32 %v434, %v445
      %v447 = vmul.f32 %v435, %v445
      %v448 = vmul.f32 %v436, %v445
      %v449 = vmul.f32 %v437, %v445
      %v450 = vmul.f32 %v438, %v445
      %v451 = vmul.f32 %v439, %v445
      %v452 = vmul.f32 %v440, %v445
      %v453 = vmul.f32 %v441, %v445
      %v454 = vadd.f32 %v425, %v446
      %v455 = vadd.f32 %v426, %v447
      %v456 = vadd.f32 %v427, %v448
      %v457 = vadd.f32 %v428, %v449
      %v458 = vadd.f32 %v429, %v450
      %v459 = vadd.f32 %v430, %v451
      %v460 = vadd.f32 %v431, %v452
      %v461 = vadd.f32 %v432, %v453
      %v462 = vld [vmem:[%s1 + $0xa] sm:$0x1]
      %s463 = scalar_lea.vmem %s165, 32
      %v464 = vld [vmem:[%s463] sm:$0xff]
      %v465 = vld [vmem:[%s463 + $0x10] sm:$0xff]
      %v466 = vld [vmem:[%s463 + $0x20] sm:$0xff]
      %v467 = vld [vmem:[%s463 + $0x30] sm:$0xff]
      %v468 = vld [vmem:[%s463 + $0x40] sm:$0xff]
      %v469 = vld [vmem:[%s463 + $0x50] sm:$0xff]
      %v470 = vld [vmem:[%s463 + $0x60] sm:$0xff]
      %v471 = vld [vmem:[%s463 + $0x70] sm:$0xff]
      %v472 = vlaneseq
      %v473 = vshrl.u32 %v472, 7
      %v474 = vsub.s32 0, %v473
      %v475 = vrot.slane %v462, %v474
      %v476 = vmul.f32 %v464, %v475
      %v477 = vmul.f32 %v465, %v475
      %v478 = vmul.f32 %v466, %v475
      %v479 = vmul.f32 %v467, %v475
      %v480 = vmul.f32 %v468, %v475
      %v481 = vmul.f32 %v469, %v475
      %v482 = vmul.f32 %v470, %v475
      %v483 = vmul.f32 %v471, %v475
      %v484 = vadd.f32 %v454, %v476
      %v485 = vadd.f32 %v455, %v477
      %v486 = vadd.f32 %v456, %v478
      %v487 = vadd.f32 %v457, %v479
      %v488 = vadd.f32 %v458, %v480
      %v489 = vadd.f32 %v459, %v481
      %v490 = vadd.f32 %v460, %v482
      %v491 = vadd.f32 %v461, %v483
      %v492 = vld [vmem:[%s1 + $0xb] sm:$0x1]
      %v493 = vld [vmem:[%s463 + $0x1] sm:$0xff]
      %v494 = vld [vmem:[%s463 + $0x11] sm:$0xff]
      %v495 = vld [vmem:[%s463 + $0x21] sm:$0xff]
      %v496 = vld [vmem:[%s463 + $0x31] sm:$0xff]
      %v497 = vld [vmem:[%s463 + $0x41] sm:$0xff]
      %v498 = vld [vmem:[%s463 + $0x51] sm:$0xff]
      %v499 = vld [vmem:[%s463 + $0x61] sm:$0xff]
      %v500 = vld [vmem:[%s463 + $0x71] sm:$0xff]
      %v501 = vlaneseq
      %v502 = vshrl.u32 %v501, 7
      %v503 = vsub.s32 0, %v502
      %v504 = vrot.slane %v492, %v503
      %v505 = vmul.f32 %v493, %v504
      %v506 = vmul.f32 %v494, %v504
      %v507 = vmul.f32 %v495, %v504
      %v508 = vmul.f32 %v496, %v504
      %v509 = vmul.f32 %v497, %v504
      %v510 = vmul.f32 %v498, %v504
      %v511 = vmul.f32 %v499, %v504
      %v512 = vmul.f32 %v500, %v504
      %v513 = vadd.f32 %v484, %v505
      %v514 = vadd.f32 %v485, %v506
      %v515 = vadd.f32 %v486, %v507
      %v516 = vadd.f32 %v487, %v508
      %v517 = vadd.f32 %v488, %v509
      %v518 = vadd.f32 %v489, %v510
      %v519 = vadd.f32 %v490, %v511
      %v520 = vadd.f32 %v491, %v512
      %v521 = vld [vmem:[%s1 + $0xc] sm:$0x1]
      %v522 = vld [vmem:[%s463 + $0x2] sm:$0xff]
      %v523 = vld [vmem:[%s463 + $0x12] sm:$0xff]
      %v524 = vld [vmem:[%s463 + $0x22] sm:$0xff]
      %v525 = vld [vmem:[%s463 + $0x32] sm:$0xff]
      %v526 = vld [vmem:[%s463 + $0x42] sm:$0xff]
      %v527 = vld [vmem:[%s463 + $0x52] sm:$0xff]
      %v528 = vld [vmem:[%s463 + $0x62] sm:$0xff]
      %v529 = vld [vmem:[%s463 + $0x72] sm:$0xff]
      %v530 = vlaneseq
      %v531 = vshrl.u32 %v530, 7
      %v532 = vsub.s32 0, %v531
      %v533 = vrot.slane %v521, %v532
      %v534 = vmul.f32 %v522, %v533
      %v535 = vmul.f32 %v523, %v533
      %v536 = vmul.f32 %v524, %v533
      %v537 = vmul.f32 %v525, %v533
      %v538 = vmul.f32 %v526, %v533
      %v539 = vmul.f32 %v527, %v533
      %v540 = vmul.f32 %v528, %v533
      %v541 = vmul.f32 %v529, %v533
      %v542 = vadd.f32 %v513, %v534
      %v543 = vadd.f32 %v514, %v535
      %v544 = vadd.f32 %v515, %v536
      %v545 = vadd.f32 %v516, %v537
      %v546 = vadd.f32 %v517, %v538
      %v547 = vadd.f32 %v518, %v539
      %v548 = vadd.f32 %v519, %v540
      %v549 = vadd.f32 %v520, %v541
      %v550 = vld [vmem:[%s1 + $0xd] sm:$0x1]
      %v551 = vld [vmem:[%s463 + $0x3] sm:$0xff]
      %v552 = vld [vmem:[%s463 + $0x13] sm:$0xff]
      %v553 = vld [vmem:[%s463 + $0x23] sm:$0xff]
      %v554 = vld [vmem:[%s463 + $0x33] sm:$0xff]
      %v555 = vld [vmem:[%s463 + $0x43] sm:$0xff]
      %v556 = vld [vmem:[%s463 + $0x53] sm:$0xff]
      %v557 = vld [vmem:[%s463 + $0x63] sm:$0xff]
      %v558 = vld [vmem:[%s463 + $0x73] sm:$0xff]
      %v559 = vlaneseq
      %v560 = vshrl.u32 %v559, 7
      %v561 = vsub.s32 0, %v560
      %v562 = vrot.slane %v550, %v561
      %v563 = vmul.f32 %v551, %v562
      %v564 = vmul.f32 %v552, %v562
      %v565 = vmul.f32 %v553, %v562
      %v566 = vmul.f32 %v554, %v562
      %v567 = vmul.f32 %v555, %v562
      %v568 = vmul.f32 %v556, %v562
      %v569 = vmul.f32 %v557, %v562
      %v570 = vmul.f32 %v558, %v562
      %v571 = vadd.f32 %v542, %v563
      %v572 = vadd.f32 %v543, %v564
      %v573 = vadd.f32 %v544, %v565
      %v574 = vadd.f32 %v545, %v566
      %v575 = vadd.f32 %v546, %v567
      %v576 = vadd.f32 %v547, %v568
      %v577 = vadd.f32 %v548, %v569
      %v578 = vadd.f32 %v549, %v570
      %v579 = vld [vmem:[%s1 + $0xe] sm:$0x1]
      %v580 = vld [vmem:[%s463 + $0x4] sm:$0xff]
      %v581 = vld [vmem:[%s463 + $0x14] sm:$0xff]
      %v582 = vld [vmem:[%s463 + $0x24] sm:$0xff]
      %v583 = vld [vmem:[%s463 + $0x34] sm:$0xff]
      %v584 = vld [vmem:[%s463 + $0x44] sm:$0xff]
      %v585 = vld [vmem:[%s463 + $0x54] sm:$0xff]
      %v586 = vld [vmem:[%s463 + $0x64] sm:$0xff]
      %v587 = vld [vmem:[%s463 + $0x74] sm:$0xff]
      %v588 = vlaneseq
      %v589 = vshrl.u32 %v588, 7
      %v590 = vsub.s32 0, %v589
      %v591 = vrot.slane %v579, %v590
      %v592 = vmul.f32 %v580, %v591
      %v593 = vmul.f32 %v581, %v591
      %v594 = vmul.f32 %v582, %v591
      %v595 = vmul.f32 %v583, %v591
      %v596 = vmul.f32 %v584, %v591
      %v597 = vmul.f32 %v585, %v591
      %v598 = vmul.f32 %v586, %v591
      %v599 = vmul.f32 %v587, %v591
      %v600 = vadd.f32 %v571, %v592
      %v601 = vadd.f32 %v572, %v593
      %v602 = vadd.f32 %v573, %v594
      %v603 = vadd.f32 %v574, %v595
      %v604 = vadd.f32 %v575, %v596
      %v605 = vadd.f32 %v576, %v597
      %v606 = vadd.f32 %v577, %v598
      %v607 = vadd.f32 %v578, %v599
      %v608 = vld [vmem:[%s1 + $0xf] sm:$0x1]
      %s609 = scalar_lea.vmem %s165, 48
      %v610 = vld [vmem:[%s609] sm:$0xff]
      %v611 = vld [vmem:[%s609 + $0x10] sm:$0xff]
      %v612 = vld [vmem:[%s609 + $0x20] sm:$0xff]
      %v613 = vld [vmem:[%s609 + $0x30] sm:$0xff]
      %v614 = vld [vmem:[%s609 + $0x40] sm:$0xff]
      %v615 = vld [vmem:[%s609 + $0x50] sm:$0xff]
      %v616 = vld [vmem:[%s609 + $0x60] sm:$0xff]
      %v617 = vld [vmem:[%s609 + $0x70] sm:$0xff]
      %v618 = vlaneseq
      %v619 = vshrl.u32 %v618, 7
      %v620 = vsub.s32 0, %v619
      %v621 = vrot.slane %v608, %v620
      %v622 = vmul.f32 %v610, %v621
      %v623 = vmul.f32 %v611, %v621
      %v624 = vmul.f32 %v612, %v621
      %v625 = vmul.f32 %v613, %v621
      %v626 = vmul.f32 %v614, %v621
      %v627 = vmul.f32 %v615, %v621
      %v628 = vmul.f32 %v616, %v621
      %v629 = vmul.f32 %v617, %v621
      %v630 = vadd.f32 %v600, %v622
      %v631 = vadd.f32 %v601, %v623
      %v632 = vadd.f32 %v602, %v624
      %v633 = vadd.f32 %v603, %v625
      %v634 = vadd.f32 %v604, %v626
      %v635 = vadd.f32 %v605, %v627
      %v636 = vadd.f32 %v606, %v628
      %v637 = vadd.f32 %v607, %v629
      %v638 = vld [vmem:[%s1 + $0x10] sm:$0x1]
      %v639 = vld [vmem:[%s609 + $0x1] sm:$0xff]
      %v640 = vld [vmem:[%s609 + $0x11] sm:$0xff]
      %v641 = vld [vmem:[%s609 + $0x21] sm:$0xff]
      %v642 = vld [vmem:[%s609 + $0x31] sm:$0xff]
      %v643 = vld [vmem:[%s609 + $0x41] sm:$0xff]
      %v644 = vld [vmem:[%s609 + $0x51] sm:$0xff]
      %v645 = vld [vmem:[%s609 + $0x61] sm:$0xff]
      %v646 = vld [vmem:[%s609 + $0x71] sm:$0xff]
      %v647 = vlaneseq
      %v648 = vshrl.u32 %v647, 7
      %v649 = vsub.s32 0, %v648
      %v650 = vrot.slane %v638, %v649
      %v651 = vmul.f32 %v639, %v650
      %v652 = vmul.f32 %v640, %v650
      %v653 = vmul.f32 %v641, %v650
      %v654 = vmul.f32 %v642, %v650
      %v655 = vmul.f32 %v643, %v650
      %v656 = vmul.f32 %v644, %v650
      %v657 = vmul.f32 %v645, %v650
      %v658 = vmul.f32 %v646, %v650
      %v659 = vadd.f32 %v630, %v651
      %v660 = vadd.f32 %v631, %v652
      %v661 = vadd.f32 %v632, %v653
      %v662 = vadd.f32 %v633, %v654
      %v663 = vadd.f32 %v634, %v655
      %v664 = vadd.f32 %v635, %v656
      %v665 = vadd.f32 %v636, %v657
      %v666 = vadd.f32 %v637, %v658
      %v667 = vld [vmem:[%s1 + $0x11] sm:$0x1]
      %v668 = vld [vmem:[%s609 + $0x2] sm:$0xff]
      %v669 = vld [vmem:[%s609 + $0x12] sm:$0xff]
      %v670 = vld [vmem:[%s609 + $0x22] sm:$0xff]
      %v671 = vld [vmem:[%s609 + $0x32] sm:$0xff]
      %v672 = vld [vmem:[%s609 + $0x42] sm:$0xff]
      %v673 = vld [vmem:[%s609 + $0x52] sm:$0xff]
      %v674 = vld [vmem:[%s609 + $0x62] sm:$0xff]
      %v675 = vld [vmem:[%s609 + $0x72] sm:$0xff]
      %v676 = vlaneseq
      %v677 = vshrl.u32 %v676, 7
      %v678 = vsub.s32 0, %v677
      %v679 = vrot.slane %v667, %v678
      %v680 = vmul.f32 %v668, %v679
      %v681 = vmul.f32 %v669, %v679
      %v682 = vmul.f32 %v670, %v679
      %v683 = vmul.f32 %v671, %v679
      %v684 = vmul.f32 %v672, %v679
      %v685 = vmul.f32 %v673, %v679
      %v686 = vmul.f32 %v674, %v679
      %v687 = vmul.f32 %v675, %v679
      %v688 = vadd.f32 %v659, %v680
      %v689 = vadd.f32 %v660, %v681
      %v690 = vadd.f32 %v661, %v682
      %v691 = vadd.f32 %v662, %v683
      %v692 = vadd.f32 %v663, %v684
      %v693 = vadd.f32 %v664, %v685
      %v694 = vadd.f32 %v665, %v686
      %v695 = vadd.f32 %v666, %v687
      %v696 = vld [vmem:[%s1 + $0x12] sm:$0x1]
      %v697 = vld [vmem:[%s609 + $0x3] sm:$0xff]
      %v698 = vld [vmem:[%s609 + $0x13] sm:$0xff]
      %v699 = vld [vmem:[%s609 + $0x23] sm:$0xff]
      %v700 = vld [vmem:[%s609 + $0x33] sm:$0xff]
      %v701 = vld [vmem:[%s609 + $0x43] sm:$0xff]
      %v702 = vld [vmem:[%s609 + $0x53] sm:$0xff]
      %v703 = vld [vmem:[%s609 + $0x63] sm:$0xff]
      %v704 = vld [vmem:[%s609 + $0x73] sm:$0xff]
      %v705 = vlaneseq
      %v706 = vshrl.u32 %v705, 7
      %v707 = vsub.s32 0, %v706
      %v708 = vrot.slane %v696, %v707
      %v709 = vmul.f32 %v697, %v708
      %v710 = vmul.f32 %v698, %v708
      %v711 = vmul.f32 %v699, %v708
      %v712 = vmul.f32 %v700, %v708
      %v713 = vmul.f32 %v701, %v708
      %v714 = vmul.f32 %v702, %v708
      %v715 = vmul.f32 %v703, %v708
      %v716 = vmul.f32 %v704, %v708
      %v717 = vadd.f32 %v688, %v709
      %v718 = vadd.f32 %v689, %v710
      %v719 = vadd.f32 %v690, %v711
      %v720 = vadd.f32 %v691, %v712
      %v721 = vadd.f32 %v692, %v713
      %v722 = vadd.f32 %v693, %v714
      %v723 = vadd.f32 %v694, %v715
      %v724 = vadd.f32 %v695, %v716
      %v725 = vld [vmem:[%s1 + $0x13] sm:$0x1]
      %v726 = vld [vmem:[%s609 + $0x4] sm:$0xff]
      %v727 = vld [vmem:[%s609 + $0x14] sm:$0xff]
      %v728 = vld [vmem:[%s609 + $0x24] sm:$0xff]
      %v729 = vld [vmem:[%s609 + $0x34] sm:$0xff]
      %v730 = vld [vmem:[%s609 + $0x44] sm:$0xff]
      %v731 = vld [vmem:[%s609 + $0x54] sm:$0xff]
      %v732 = vld [vmem:[%s609 + $0x64] sm:$0xff]
      %v733 = vld [vmem:[%s609 + $0x74] sm:$0xff]
      %v734 = vlaneseq
      %v735 = vshrl.u32 %v734, 7
      %v736 = vsub.s32 0, %v735
      %v737 = vrot.slane %v725, %v736
      %v738 = vmul.f32 %v726, %v737
      %v739 = vmul.f32 %v727, %v737
      %v740 = vmul.f32 %v728, %v737
      %v741 = vmul.f32 %v729, %v737
      %v742 = vmul.f32 %v730, %v737
      %v743 = vmul.f32 %v731, %v737
      %v744 = vmul.f32 %v732, %v737
      %v745 = vmul.f32 %v733, %v737
      %v746 = vadd.f32 %v717, %v738
      %v747 = vadd.f32 %v718, %v739
      %v748 = vadd.f32 %v719, %v740
      %v749 = vadd.f32 %v720, %v741
      %v750 = vadd.f32 %v721, %v742
      %v751 = vadd.f32 %v722, %v743
      %v752 = vadd.f32 %v723, %v744
      %v753 = vadd.f32 %v724, %v745
      %v754 = vld [vmem:[%s1 + $0x14] sm:$0x1]
      %s755 = scalar_lea.vmem %s165, 64
      %v756 = vld [vmem:[%s755] sm:$0xff]
      %v757 = vld [vmem:[%s755 + $0x10] sm:$0xff]
      %v758 = vld [vmem:[%s755 + $0x20] sm:$0xff]
      %v759 = vld [vmem:[%s755 + $0x30] sm:$0xff]
      %v760 = vld [vmem:[%s755 + $0x40] sm:$0xff]
      %v761 = vld [vmem:[%s755 + $0x50] sm:$0xff]
      %v762 = vld [vmem:[%s755 + $0x60] sm:$0xff]
      %v763 = vld [vmem:[%s755 + $0x70] sm:$0xff]
      %v764 = vlaneseq
      %v765 = vshrl.u32 %v764, 7
      %v766 = vsub.s32 0, %v765
      %v767 = vrot.slane %v754, %v766
      %v768 = vmul.f32 %v756, %v767
      %v769 = vmul.f32 %v757, %v767
      %v770 = vmul.f32 %v758, %v767
      %v771 = vmul.f32 %v759, %v767
      %v772 = vmul.f32 %v760, %v767
      %v773 = vmul.f32 %v761, %v767
      %v774 = vmul.f32 %v762, %v767
      %v775 = vmul.f32 %v763, %v767
      %v776 = vadd.f32 %v746, %v768
      %v777 = vadd.f32 %v747, %v769
      %v778 = vadd.f32 %v748, %v770
      %v779 = vadd.f32 %v749, %v771
      %v780 = vadd.f32 %v750, %v772
      %v781 = vadd.f32 %v751, %v773
      %v782 = vadd.f32 %v752, %v774
      %v783 = vadd.f32 %v753, %v775
      %v784 = vld [vmem:[%s1 + $0x15] sm:$0x1]
      %v785 = vld [vmem:[%s755 + $0x1] sm:$0xff]
      %v786 = vld [vmem:[%s755 + $0x11] sm:$0xff]
      %v787 = vld [vmem:[%s755 + $0x21] sm:$0xff]
      %v788 = vld [vmem:[%s755 + $0x31] sm:$0xff]
      %v789 = vld [vmem:[%s755 + $0x41] sm:$0xff]
      %v790 = vld [vmem:[%s755 + $0x51] sm:$0xff]
      %v791 = vld [vmem:[%s755 + $0x61] sm:$0xff]
      %v792 = vld [vmem:[%s755 + $0x71] sm:$0xff]
      %v793 = vlaneseq
      %v794 = vshrl.u32 %v793, 7
      %v795 = vsub.s32 0, %v794
      %v796 = vrot.slane %v784, %v795
      %v797 = vmul.f32 %v785, %v796
      %v798 = vmul.f32 %v786, %v796
      %v799 = vmul.f32 %v787, %v796
      %v800 = vmul.f32 %v788, %v796
      %v801 = vmul.f32 %v789, %v796
      %v802 = vmul.f32 %v790, %v796
      %v803 = vmul.f32 %v791, %v796
      %v804 = vmul.f32 %v792, %v796
      %v805 = vadd.f32 %v776, %v797
      %v806 = vadd.f32 %v777, %v798
      %v807 = vadd.f32 %v778, %v799
      %v808 = vadd.f32 %v779, %v800
      %v809 = vadd.f32 %v780, %v801
      %v810 = vadd.f32 %v781, %v802
      %v811 = vadd.f32 %v782, %v803
      %v812 = vadd.f32 %v783, %v804
      %v813 = vld [vmem:[%s1 + $0x16] sm:$0x1]
      %v814 = vld [vmem:[%s755 + $0x2] sm:$0xff]
      %v815 = vld [vmem:[%s755 + $0x12] sm:$0xff]
      %v816 = vld [vmem:[%s755 + $0x22] sm:$0xff]
      %v817 = vld [vmem:[%s755 + $0x32] sm:$0xff]
      %v818 = vld [vmem:[%s755 + $0x42] sm:$0xff]
      %v819 = vld [vmem:[%s755 + $0x52] sm:$0xff]
      %v820 = vld [vmem:[%s755 + $0x62] sm:$0xff]
      %v821 = vld [vmem:[%s755 + $0x72] sm:$0xff]
      %v822 = vlaneseq
      %v823 = vshrl.u32 %v822, 7
      %v824 = vsub.s32 0, %v823
      %v825 = vrot.slane %v813, %v824
      %v826 = vmul.f32 %v814, %v825
      %v827 = vmul.f32 %v815, %v825
      %v828 = vmul.f32 %v816, %v825
      %v829 = vmul.f32 %v817, %v825
      %v830 = vmul.f32 %v818, %v825
      %v831 = vmul.f32 %v819, %v825
      %v832 = vmul.f32 %v820, %v825
      %v833 = vmul.f32 %v821, %v825
      %v834 = vadd.f32 %v805, %v826
      %v835 = vadd.f32 %v806, %v827
      %v836 = vadd.f32 %v807, %v828
      %v837 = vadd.f32 %v808, %v829
      %v838 = vadd.f32 %v809, %v830
      %v839 = vadd.f32 %v810, %v831
      %v840 = vadd.f32 %v811, %v832
      %v841 = vadd.f32 %v812, %v833
      %v842 = vld [vmem:[%s1 + $0x17] sm:$0x1]
      %v843 = vld [vmem:[%s755 + $0x3] sm:$0xff]
      %v844 = vld [vmem:[%s755 + $0x13] sm:$0xff]
      %v845 = vld [vmem:[%s755 + $0x23] sm:$0xff]
      %v846 = vld [vmem:[%s755 + $0x33] sm:$0xff]
      %v847 = vld [vmem:[%s755 + $0x43] sm:$0xff]
      %v848 = vld [vmem:[%s755 + $0x53] sm:$0xff]
      %v849 = vld [vmem:[%s755 + $0x63] sm:$0xff]
      %v850 = vld [vmem:[%s755 + $0x73] sm:$0xff]
      %v851 = vlaneseq
      %v852 = vshrl.u32 %v851, 7
      %v853 = vsub.s32 0, %v852
      %v854 = vrot.slane %v842, %v853
      %v855 = vmul.f32 %v843, %v854
      %v856 = vmul.f32 %v844, %v854
      %v857 = vmul.f32 %v845, %v854
      %v858 = vmul.f32 %v846, %v854
      %v859 = vmul.f32 %v847, %v854
      %v860 = vmul.f32 %v848, %v854
      %v861 = vmul.f32 %v849, %v854
      %v862 = vmul.f32 %v850, %v854
      %v863 = vadd.f32 %v834, %v855
      %v864 = vadd.f32 %v835, %v856
      %v865 = vadd.f32 %v836, %v857
      %v866 = vadd.f32 %v837, %v858
      %v867 = vadd.f32 %v838, %v859
      %v868 = vadd.f32 %v839, %v860
      %v869 = vadd.f32 %v840, %v861
      %v870 = vadd.f32 %v841, %v862
      %v871 = vld [vmem:[%s1 + $0x18] sm:$0x1]
      %v872 = vld [vmem:[%s755 + $0x4] sm:$0xff]
      %v873 = vld [vmem:[%s755 + $0x14] sm:$0xff]
      %v874 = vld [vmem:[%s755 + $0x24] sm:$0xff]
      %v875 = vld [vmem:[%s755 + $0x34] sm:$0xff]
      %v876 = vld [vmem:[%s755 + $0x44] sm:$0xff]
      %v877 = vld [vmem:[%s755 + $0x54] sm:$0xff]
      %v878 = vld [vmem:[%s755 + $0x64] sm:$0xff]
      %v879 = vld [vmem:[%s755 + $0x74] sm:$0xff]
      %v880 = vlaneseq
      %v881 = vshrl.u32 %v880, 7
      %v882 = vsub.s32 0, %v881
      %v883 = vrot.slane %v871, %v882
      %v884 = vmul.f32 %v872, %v883
      %v885 = vmul.f32 %v873, %v883
      %v886 = vmul.f32 %v874, %v883
      %v887 = vmul.f32 %v875, %v883
      %v888 = vmul.f32 %v876, %v883
      %v889 = vmul.f32 %v877, %v883
      %v890 = vmul.f32 %v878, %v883
      %v891 = vmul.f32 %v879, %v883
      %v892 = vadd.f32 %v863, %v884
      %v893 = vadd.f32 %v864, %v885
      %v894 = vadd.f32 %v865, %v886
      %v895 = vadd.f32 %v866, %v887
      %v896 = vadd.f32 %v867, %v888
      %v897 = vadd.f32 %v868, %v889
      %v898 = vadd.f32 %v869, %v890
      %v899 = vadd.f32 %v870, %v891
      %v900 = vld [vmem:[%s2] sm:$0x1]
      %v902 = vlaneseq
      %v903 = vshrl.u32 %v902, 7
      %v904 = vsub.s32 0, %v903
      %v905 = vrot.slane %v900, %v904
      %v907 = vadd.f32 %v892, %v905
      %v908 = vadd.f32 %v893, %v905
      %v909 = vadd.f32 %v894, %v905
      %v910 = vadd.f32 %v895, %v905
      %v911 = vadd.f32 %v896, %v905
      %v912 = vadd.f32 %v897, %v905
      %v913 = vadd.f32 %v898, %v905
      %v914 = vadd.f32 %v899, %v905
      %915 = vst [vmem:[%s170] sm:$0xff] %v907
      %916 = vst [vmem:[%s170 + $0x8] sm:$0xff] %v908
      %917 = vst [vmem:[%s170 + $0x10] sm:$0xff] %v909
      %918 = vst [vmem:[%s170 + $0x18] sm:$0xff] %v910
      %919 = vst [vmem:[%s170 + $0x20] sm:$0xff] %v911
      %920 = vst [vmem:[%s170 + $0x28] sm:$0xff] %v912
      %921 = vst [vmem:[%s170 + $0x30] sm:$0xff] %v913
      %922 = vst [vmem:[%s170 + $0x38] sm:$0xff] %v914
      %p923 = scmp.lt.s32.totalorder %s14, 1
      %s924 = scalar_select %p923, %s14, 1
      %s925 = smul.addr %s924, 8
      %s926 = smul.addr %s925, 8
      %s927 = scalar_lea.vmem %s3, %s926
      // Predicated region
      $region33: #{_lambda_.14} parent=31 // pred_check
        %p928 = pneg %p100
      $region34: #{_lambda_.14} parent=31 // pred_check_branch
        %930 = sbr.rel (%p928) target = $region36
      $region35: #{_lambda_.14} parent=31 // pred_region
        _
      $region36: #{_lambda_.14} parent=31 // pred_fallthru
        _
    $region32: #{_lambda_.14} parent=5 // pred_fallthru
      _
    %p931 = scmp.le.s32.totalorder 2, %s9
    // Predicated region
    $region37: #{_lambda_.14} parent=5 // pred_check
      %p932 = pneg %p931
    $region38: #{_lambda_.14} parent=5 // pred_check_branch
      %934 = sbr.rel (%p932) target = $region40
    $region39: #{_lambda_.14} parent=5 // pred_region
      %s935 = ssub.s32 %s9, 2
      // Predicated region
      $region41: #{_lambda_.14} parent=39 // pred_check
        %p936 = pneg %p106
      $region42: #{_lambda_.14} parent=39 // pred_check_branch
        %938 = sbr.rel (%p936) target = $region44
      $region43: #{_lambda_.14} parent=39 // pred_region
        %p939 = scmp.lt.s32.totalorder %s15, 1
        %s940 = scalar_select %p939, %s15, 1
        %s941 = smul.addr %s940, 8
        %s942 = smul.addr %s941, 8
        %s943 = scalar_lea.vmem %s3, %s942
      $region44: #{_lambda_.14} parent=39 // pred_fallthru
        _
    $region40: #{_lambda_.14} parent=5 // pred_fallthru
      _
  $region6: #{_lambda_.14} parent=0 // loop_footer
    %s13 = sadd.s32 1, %s9
  $region7: #{_lambda_.14} parent=0 // loop_footer_branch
    %8 = sbr.rel target = $region3
  $region8: #{_lambda_.14} parent=0 // loop_exit
    _

// kernel: _lambda_.15
$region0: #{_lambda_.15}
  #allocation0 [shape = 'u32[]', space=smem, size = 0x4, offset = 0x4, fixed_abs, tag = 'smem constant byte address 0x4 - core index']
  #allocation1 [shape = 'u32[144,128]{1,0:T(1,128)}', space=vmem, size = 0x12000, scoped, tag = 'internal scratch']
  #allocation2 [shape = 'f32[1,1]{1,0:T(1,128)S(1)}', space=vmem, size = 0x200, scoped, tag = 'scoped memory for _lambda_.15']
  %s0 = inlined_call_operand.vmem [shape: f32[2,64,64], index: 0, kind: input, shape index: {}]
  %s1 = inlined_call_operand.vmem [shape: bf16[64,32], index: 1, kind: input, shape index: {}]
  %s2 = inlined_call_operand.vmem [shape: f32[1,32], index: 2, kind: input, shape index: {}]
  %s3 = inlined_call_operand.<no memory space> [shape: f32[1,1], index: 3, kind: input, shape index: {}]
  %s4 = inlined_call_operand.vmem [shape: f32[1,32], index: 4, kind: input, shape index: {}]
  %s5 = inlined_call_operand.vmem [shape: f32[1,32], index: 5, kind: input, shape index: {}]
  %s6 = inlined_call_operand.vmem [shape: f32[2,64,32], index: 6, kind: input, shape index: {}]
  %s7 = inlined_call_operand.vmem [shape: f32[1,32], index: 7, kind: input, shape index: {}]
  %s8 = inlined_call_operand.vmem [shape: f32[2,64,32], index: 8, kind: output, shape index: {}]
  %s9 = sld [smem:[#allocation0]]
  $region65: #{_lambda_.15} parent=0
    _
  %s11 = ssub.s32 1, %s9
  %s12 = scalar_select 0, %s11, %s9
  %v13 = vstv %s3
  %14 = vst [vmem:[#allocation2] sm:$0x1] %v13
  loop: start=0, step=1, limit=4
  $region2: #{_lambda_.15} parent=0 // loop_pre_header
    _
  $region3: #{_lambda_.15} parent=0 // loop_header
    %s16 = sphi 0, %s20
    %p17 = scmp.ge.s32.totalorder %s16, 4
    %s26 = sphi 0, %s28
    %s29 = sphi 0, %s26
    %s30 = sphi 0, %s29
    %s46 = sphi 0, %s30
    %s50 = sphi 0, %s50
    %s52 = sphi 0, %s50
    %s53 = sphi 0, %s52
    %s67 = sphi 0, %s53
    %s71 = sphi 0, %s71
    %s73 = sphi 0, %s71
    %s74 = sphi 0, %s73
    %s88 = sphi 0, %s74
    %s92 = sphi 0, %s92
    %s94 = sphi 0, %s92
    %s95 = sphi 0, %s94
    %s109 = sphi 0, %s95
    %s113 = sphi 0, %s113
    %s115 = sphi 0, %s113
    %s116 = sphi 0, %s115
    %s130 = sphi 0, %s116
    %s134 = sphi 0, %s134
    %s136 = sphi 0, %s134
    %s137 = sphi 0, %s136
    %s151 = sphi 0, %s137
    %s157 = sphi 0, %s159
    %s160 = sphi 0, %s157
    %s161 = sphi 0, %s160
    %s177 = sphi 0, %s161
    %s181 = sphi 0, %s181
    %s183 = sphi 0, %s181
    %s184 = sphi 0, %s183
    %s198 = sphi 0, %s184
    %s204 = sphi 0, %s206
    %s207 = sphi 0, %s204
    %s208 = sphi 0, %s207
    %s224 = sphi 0, %s208
  $region4: #{_lambda_.15} parent=0 // loop_header_branch
    %19 = sbr.rel (%p17) target = $region8
  $region5: #{_lambda_.15} parent=0 // loop_body
    %s21 = ssub.s32 %s16, 1
    %s22 = ssub.s32 %s16, 2
    %s23 = sadd.s32 %s16, 1
    %s24 = ssub.s32 %s16, %s23
    %p25 = scmp.eq.s32.totalorder %s24, 0
    %s27 = sadd.s32 %s26, 1
    %s28 = scalar_select %p25, %s26, %s27
    %p31 = pneg %p25
    %p32 = scmp.eq.s32.totalorder %s16, 1
    %p33 = por %p31, %p32
    %p34 = scmp.ne.s32.totalorder %s26, %s29
    %p35 = scmp.eq.s32.totalorder %s16, 0
    %p36 = por %p34, %p35
    %p37 = scmp.ne.s32.totalorder %s26, %s29
    %p38 = scmp.eq.s32.totalorder %s21, 1
    %p39 = por %p37, %p38
    %p40 = scmp.ne.s32.totalorder %s29, %s30
    %p41 = scmp.eq.s32.totalorder %s21, 0
    %p42 = por %p40, %p41
    %p43 = scmp.ne.s32.totalorder %s29, %s30
    %p44 = scmp.eq.s32.totalorder %s22, 1
    %p45 = por %p43, %p44
    %p47 = scmp.ne.s32.totalorder %s30, %s46
    %p48 = scmp.eq.s32.totalorder %s22, 0
    %p49 = por %p47, %p48
    %s51 = sadd.s32 %s50, 1
    %p54 = scmp.eq.s32.totalorder %s16, 1
    %p55 = scmp.ne.s32.totalorder %s50, %s52
    %p56 = scmp.eq.s32.totalorder %s16, 0
    %p57 = por %p55, %p56
    %p58 = scmp.ne.s32.totalorder %s50, %s52
    %p59 = scmp.eq.s32.totalorder %s21, 1
    %p60 = por %p58, %p59
    %p61 = scmp.ne.s32.totalorder %s52, %s53
    %p62 = scmp.eq.s32.totalorder %s21, 0
    %p63 = por %p61, %p62
    %p64 = scmp.ne.s32.totalorder %s52, %s53
    %p65 = scmp.eq.s32.totalorder %s22, 1
    %p66 = por %p64, %p65
    %p68 = scmp.ne.s32.totalorder %s53, %s67
    %p69 = scmp.eq.s32.totalorder %s22, 0
    %p70 = por %p68, %p69
    %s72 = sadd.s32 %s71, 1
    %p75 = scmp.eq.s32.totalorder %s16, 1
    %p76 = scmp.ne.s32.totalorder %s71, %s73
    %p77 = scmp.eq.s32.totalorder %s16, 0
    %p78 = por %p76, %p77
    %p79 = scmp.ne.s32.totalorder %s71, %s73
    %p80 = scmp.eq.s32.totalorder %s21, 1
    %p81 = por %p79, %p80
    %p82 = scmp.ne.s32.totalorder %s73, %s74
    %p83 = scmp.eq.s32.totalorder %s21, 0
    %p84 = por %p82, %p83
    %p85 = scmp.ne.s32.totalorder %s73, %s74
    %p86 = scmp.eq.s32.totalorder %s22, 1
    %p87 = por %p85, %p86
    %p89 = scmp.ne.s32.totalorder %s74, %s88
    %p90 = scmp.eq.s32.totalorder %s22, 0
    %p91 = por %p89, %p90
    %s93 = sadd.s32 %s92, 1
    %p96 = scmp.eq.s32.totalorder %s16, 1
    %p97 = scmp.ne.s32.totalorder %s92, %s94
    %p98 = scmp.eq.s32.totalorder %s16, 0
    %p99 = por %p97, %p98
    %p100 = scmp.ne.s32.totalorder %s92, %s94
    %p101 = scmp.eq.s32.totalorder %s21, 1
    %p102 = por %p100, %p101
    %p103 = scmp.ne.s32.totalorder %s94, %s95
    %p104 = scmp.eq.s32.totalorder %s21, 0
    %p105 = por %p103, %p104
    %p106 = scmp.ne.s32.totalorder %s94, %s95
    %p107 = scmp.eq.s32.totalorder %s22, 1
    %p108 = por %p106, %p107
    %p110 = scmp.ne.s32.totalorder %s95, %s109
    %p111 = scmp.eq.s32.totalorder %s22, 0
    %p112 = por %p110, %p111
    %s114 = sadd.s32 %s113, 1
    %p117 = scmp.eq.s32.totalorder %s16, 1
    %p118 = scmp.ne.s32.totalorder %s113, %s115
    %p119 = scmp.eq.s32.totalorder %s16, 0
    %p120 = por %p118, %p119
    %p121 = scmp.ne.s32.totalorder %s113, %s115
    %p122 = scmp.eq.s32.totalorder %s21, 1
    %p123 = por %p121, %p122
    %p124 = scmp.ne.s32.totalorder %s115, %s116
    %p125 = scmp.eq.s32.totalorder %s21, 0
    %p126 = por %p124, %p125
    %p127 = scmp.ne.s32.totalorder %s115, %s116
    %p128 = scmp.eq.s32.totalorder %s22, 1
    %p129 = por %p127, %p128
    %p131 = scmp.ne.s32.totalorder %s116, %s130
    %p132 = scmp.eq.s32.totalorder %s22, 0
    %p133 = por %p131, %p132
    %s135 = sadd.s32 %s134, 1
    %p138 = scmp.eq.s32.totalorder %s16, 1
    %p139 = scmp.ne.s32.totalorder %s134, %s136
    %p140 = scmp.eq.s32.totalorder %s16, 0
    %p141 = por %p139, %p140
    %p142 = scmp.ne.s32.totalorder %s134, %s136
    %p143 = scmp.eq.s32.totalorder %s21, 1
    %p144 = por %p142, %p143
    %p145 = scmp.ne.s32.totalorder %s136, %s137
    %p146 = scmp.eq.s32.totalorder %s21, 0
    %p147 = por %p145, %p146
    %p148 = scmp.ne.s32.totalorder %s136, %s137
    %p149 = scmp.eq.s32.totalorder %s22, 1
    %p150 = por %p148, %p149
    %p152 = scmp.ne.s32.totalorder %s137, %s151
    %p153 = scmp.eq.s32.totalorder %s22, 0
    %p154 = por %p152, %p153
    %s155 = ssub.s32 %s16, %s23
    %p156 = scmp.eq.s32.totalorder %s155, 0
    %s158 = sadd.s32 %s157, 1
    %s159 = scalar_select %p156, %s157, %s158
    %p162 = pneg %p156
    %p163 = scmp.eq.s32.totalorder %s16, 1
    %p164 = por %p162, %p163
    %p165 = scmp.ne.s32.totalorder %s157, %s160
    %p166 = scmp.eq.s32.totalorder %s16, 0
    %p167 = por %p165, %p166
    %p168 = scmp.ne.s32.totalorder %s157, %s160
    %p169 = scmp.eq.s32.totalorder %s21, 1
    %p170 = por %p168, %p169
    %p171 = scmp.ne.s32.totalorder %s160, %s161
    %p172 = scmp.eq.s32.totalorder %s21, 0
    %p173 = por %p171, %p172
    %p174 = scmp.ne.s32.totalorder %s160, %s161
    %p175 = scmp.eq.s32.totalorder %s22, 1
    %p176 = por %p174, %p175
    %p178 = scmp.ne.s32.totalorder %s161, %s177
    %p179 = scmp.eq.s32.totalorder %s22, 0
    %p180 = por %p178, %p179
    %s182 = sadd.s32 %s181, 1
    %p185 = scmp.eq.s32.totalorder %s16, 1
    %p186 = scmp.ne.s32.totalorder %s181, %s183
    %p187 = scmp.eq.s32.totalorder %s16, 0
    %p188 = por %p186, %p187
    %p189 = scmp.ne.s32.totalorder %s181, %s183
    %p190 = scmp.eq.s32.totalorder %s21, 1
    %p191 = por %p189, %p190
    %p192 = scmp.ne.s32.totalorder %s183, %s184
    %p193 = scmp.eq.s32.totalorder %s21, 0
    %p194 = por %p192, %p193
    %p195 = scmp.ne.s32.totalorder %s183, %s184
    %p196 = scmp.eq.s32.totalorder %s22, 1
    %p197 = por %p195, %p196
    %p199 = scmp.ne.s32.totalorder %s184, %s198
    %p200 = scmp.eq.s32.totalorder %s22, 0
    %p201 = por %p199, %p200
    %s202 = ssub.s32 %s16, %s23
    %p203 = scmp.eq.s32.totalorder %s202, 0
    %s205 = sadd.s32 %s204, 1
    %s206 = scalar_select %p203, %s204, %s205
    %p209 = pneg %p203
    %p210 = scmp.eq.s32.totalorder %s16, 1
    %p211 = por %p209, %p210
    %p212 = scmp.ne.s32.totalorder %s204, %s207
    %p213 = scmp.eq.s32.totalorder %s16, 0
    %p214 = por %p212, %p213
    %p215 = scmp.ne.s32.totalorder %s204, %s207
    %p216 = scmp.eq.s32.totalorder %s21, 1
    %p217 = por %p215, %p216
    %p218 = scmp.ne.s32.totalorder %s207, %s208
    %p219 = scmp.eq.s32.totalorder %s21, 0
    %p220 = por %p218, %p219
    %p221 = scmp.ne.s32.totalorder %s207, %s208
    %p222 = scmp.eq.s32.totalorder %s22, 1
    %p223 = por %p221, %p222
    %p225 = scmp.ne.s32.totalorder %s208, %s224
    %p226 = scmp.eq.s32.totalorder %s22, 0
    %p227 = por %p225, %p226
    %p228 = scmp.le.s32.totalorder 1, %s16
    %p229 = scmp.lt.s32.totalorder %s16, 3
    %p230 = pnand %p228, %p229
    %p231 = pneg %p230
    // Predicated region
    $region9: #{_lambda_.15} parent=5 // pred_check
      _
    $region10: #{_lambda_.15} parent=5 // pred_check_branch
      %233 = sbr.rel (%p230) target = $region12
    $region11: #{_lambda_.15} parent=5 // pred_region
      %s234 = ssub.s32 %s16, 1
      // Predicated region
      $region13: #{_lambda_.15} parent=11 // pred_check
        %p235 = pneg %p63
      $region14: #{_lambda_.15} parent=11 // pred_check_branch
        %237 = sbr.rel (%p235) target = $region16
      $region15: #{_lambda_.15} parent=11 // pred_region
        _
      $region16: #{_lambda_.15} parent=11 // pred_fallthru
        _
      // Predicated region
      $region17: #{_lambda_.15} parent=11 // pred_check
        %p238 = pneg %p84
      $region18: #{_lambda_.15} parent=11 // pred_check_branch
        %240 = sbr.rel (%p238) target = $region20
      $region19: #{_lambda_.15} parent=11 // pred_region
        _
      $region20: #{_lambda_.15} parent=11 // pred_fallthru
        _
      // Predicated region
      $region21: #{_lambda_.15} parent=11 // pred_check
        %p241 = pneg %p105
      $region22: #{_lambda_.15} parent=11 // pred_check_branch
        %243 = sbr.rel (%p241) target = $region24
      $region23: #{_lambda_.15} parent=11 // pred_region
        _
      $region24: #{_lambda_.15} parent=11 // pred_fallthru
        _
      // Predicated region
      $region25: #{_lambda_.15} parent=11 // pred_check
        %p244 = pneg %p126
      $region26: #{_lambda_.15} parent=11 // pred_check_branch
        %246 = sbr.rel (%p244) target = $region28
      $region27: #{_lambda_.15} parent=11 // pred_region
        _
      $region28: #{_lambda_.15} parent=11 // pred_fallthru
        _
      // Predicated region
      $region29: #{_lambda_.15} parent=11 // pred_check
        %p247 = pneg %p147
      $region30: #{_lambda_.15} parent=11 // pred_check_branch
        %249 = sbr.rel (%p247) target = $region32
      $region31: #{_lambda_.15} parent=11 // pred_region
        _
      $region32: #{_lambda_.15} parent=11 // pred_fallthru
        _
      // Predicated region
      $region33: #{_lambda_.15} parent=11 // pred_check
        %p250 = pneg %p194
      $region34: #{_lambda_.15} parent=11 // pred_check_branch
        %252 = sbr.rel (%p250) target = $region36
      $region35: #{_lambda_.15} parent=11 // pred_region
        _
      $region36: #{_lambda_.15} parent=11 // pred_fallthru
        _
    $region12: #{_lambda_.15} parent=5 // pred_fallthru
      _
    %p253 = scmp.lt.s32.totalorder %s16, 2
    // Predicated region
    $region37: #{_lambda_.15} parent=5 // pred_check
      %p254 = pneg %p253
    $region38: #{_lambda_.15} parent=5 // pred_check_branch
      %256 = sbr.rel (%p254) target = $region40
    $region39: #{_lambda_.15} parent=5 // pred_region
      // Predicated region
      $region41: #{_lambda_.15} parent=39 // pred_check
        %p257 = pneg %p36
      $region42: #{_lambda_.15} parent=39 // pred_check_branch
        %259 = sbr.rel (%p257) target = $region44
      $region43: #{_lambda_.15} parent=39 // pred_region
        %p260 = scmp.lt.s32.totalorder %s16, 1
        %s261 = scalar_select %p260, %s16, 1
        %s262 = smul.addr %s261, 8
        %s263 = smul.addr %s262, 8
        %s264 = scalar_lea.vmem %s0, %s263
      $region44: #{_lambda_.15} parent=39 // pred_fallthru
        _
      // Predicated region
      $region45: #{_lambda_.15} parent=39 // pred_check
        %p265 = pneg %p167
      $region46: #{_lambda_.15} parent=39 // pred_check_branch
        %267 = sbr.rel (%p265) target = $region48
      $region47: #{_lambda_.15} parent=39 // pred_region
        %p268 = scmp.lt.s32.totalorder %s16, 1
        %s269 = scalar_select %p268, %s16, 1
        %s270 = smul.addr %s269, 8
        %s271 = smul.addr %s270, 8
        %s272 = scalar_lea.vmem %s6, %s271
      $region48: #{_lambda_.15} parent=39 // pred_fallthru
        _
    $region40: #{_lambda_.15} parent=5 // pred_fallthru
      _
    %p273 = scmp.le.s32.totalorder 1, %s16
    %p274 = scmp.lt.s32.totalorder %s16, 3
    %p275 = pnand %p273, %p274
    %p276 = pneg %p275
    // Predicated region
    $region49: #{_lambda_.15} parent=5 // pred_check
      _
    $region50: #{_lambda_.15} parent=5 // pred_check_branch
      %278 = sbr.rel (%p275) target = $region52
    $region51: #{_lambda_.15} parent=5 // pred_region
      %s279 = ssub.s32 %s16, 1
      %p280 = scmp.lt.s32.totalorder %s21, 1
      %s281 = scalar_select %p280, %s21, 1
      %s282 = smul.addr %s281, 8
      %s283 = smul.addr %s282, 8
      %s284 = scalar_lea.vmem %s0, %s283
      %p285 = pneg %p42
      %p286 = pneg %p39
      %p287 = pneg %p63
      %p288 = pneg %p60
      %p289 = pneg %p84
      %p290 = pneg %p81
      %p291 = pneg %p105
      %p292 = pneg %p102
      %p293 = pneg %p126
      %p294 = pneg %p123
      %p295 = pneg %p147
      %p296 = pneg %p144
      %p297 = scmp.lt.s32.totalorder %s21, 1
      %s298 = scalar_select %p297, %s21, 1
      %s299 = smul.addr %s298, 8
      %s300 = smul.addr %s299, 8
      %s301 = scalar_lea.vmem %s6, %s300
      %p302 = pneg %p173
      %p303 = pneg %p170
      %p304 = pneg %p194
      %p305 = pneg %p191
      %p306 = pneg %p220
      %p307 = pneg %p217
      %p308 = scmp.lt.s32.totalorder %s21, 1
      %s309 = scalar_select %p308, %s21, 1
      %s310 = smul.addr %s309, 8
      %s311 = smul.addr %s310, 8
      %s312 = scalar_lea.vmem %s8, %s311
      %p313 = scmp.lt.s32.totalorder %s21, 1
      %s314 = scalar_select %p313, %s21, 1
      %s315 = smul.addr %s314, 8
      %s316 = smul.addr %s315, 8
      %s317 = scalar_lea.vmem %s0, %s316
      %p318 = scmp.lt.s32.totalorder %s21, 1
      %s319 = scalar_select %p318, %s21, 1
      %s320 = smul.addr %s319, 8
      %s321 = smul.addr %s320, 8
      %s322 = scalar_lea.vmem %s6, %s321
      %p323 = scmp.lt.s32.totalorder %s21, 1
      %s324 = scalar_select %p323, %s21, 1
      %s325 = smul.addr %s324, 8
      %s326 = smul.addr %s325, 8
      %s327 = scalar_lea.vmem %s8, %s326
      %v329 = vld [vmem:[%s317] sm:$0xff]
      %v330 = vld [vmem:[%s317 + $0x8] sm:$0xff]
      %v331 = vld [vmem:[%s317 + $0x10] sm:$0xff]
      %v332 = vld [vmem:[%s317 + $0x18] sm:$0xff]
      %v333 = vld [vmem:[%s317 + $0x20] sm:$0xff]
      %v334 = vld [vmem:[%s317 + $0x28] sm:$0xff]
      %v335 = vld [vmem:[%s317 + $0x30] sm:$0xff]
      %v336 = vld [vmem:[%s317 + $0x38] sm:$0xff]
      %v337 = vpack.c.bf16 %v330, %v329
      %v338 = vpack.c.bf16 %v332, %v331
      %v339 = vpack.c.bf16 %v334, %v333
      %v340 = vpack.c.bf16 %v336, %v335
      %v341 = vld [vmem:[%s1] sm:$0xf]
      %v342 = vld [vmem:[%s1 + $0x4] sm:$0xf]
      %v343 = vld [vmem:[%s1 + $0x8] sm:$0xf]
      %v344 = vld [vmem:[%s1 + $0xc] sm:$0xf]
      %v345 = vld [vmem:[%s1 + $0x10] sm:$0xf]
      %v346 = vld [vmem:[%s1 + $0x14] sm:$0xf]
      %v347 = vld [vmem:[%s1 + $0x18] sm:$0xf]
      %v348 = vld [vmem:[%s1 + $0x1c] sm:$0xf]
      %v357 = vunpack.c.l.b16 %v341
      %v358 = vunpack.c.l.b16 %v342
      %v359 = vunpack.c.l.b16 %v343
      %v360 = vunpack.c.l.b16 %v344
      %v361 = vunpack.c.l.b16 %v345
      %v362 = vunpack.c.l.b16 %v346
      %v363 = vunpack.c.l.b16 %v347
      %v364 = vunpack.c.l.b16 %v348
      %v365 = vpack.c.b16 %v358, %v357
      %v366 = vpack.c.b16 %v360, %v359
      %v367 = vpack.c.b16 %v362, %v361
      %v368 = vpack.c.b16 %v364, %v363
      %vm373 = vcmask 523264
      %v375 = vsel %vm373, %v337, 0
      %v378 = vsel %vm373, %v338, 0
      %v381 = vsel %vm373, %v339, 0
      %v384 = vsel %vm373, %v340, 0
      %386 = vmatprep.subr.bf16.mxu0 0
      %387 = vmatpush1.bf16.msra.mxu0 %v365
      %388 = vmatprep.subr.bf16.mxu0 0
      %389 = vmatpush1.bf16.msra.mxu0 %v366
      %390 = vmatprep.subr.bf16.mxu0 0
      %391 = vmatpush1.bf16.msra.mxu0 %v367
      %392 = vmatprep.subr.bf16.mxu0 0
      %393 = vmatpush1.bf16.msra.mxu0 %v368
      %394 = vmatprep.subr.bf16.mxu0 0
      %395 = vmatpush1.bf16.msra.mxu0 0
      %396 = vmatprep.subr.bf16.mxu0 0
      %397 = vmatpush1.bf16.msra.mxu0 0
      %398 = vmatprep.subr.bf16.mxu0 0
      %399 = vmatpush1.bf16.msra.mxu0 0
      %400 = vmatprep.subr.bf16.mxu0 0
      %401 = vmatpush1.bf16.msra.mxu0 0
      %402 = vmatprep.subr.bf16.mxu0 0
      %403 = vmatpush1.bf16.msra.mxu0 0
      %404 = vmatprep.subr.bf16.mxu0 0
      %405 = vmatpush1.bf16.msra.mxu0 0
      %406 = vmatprep.subr.bf16.mxu0 0
      %407 = vmatpush1.bf16.msra.mxu0 0
      %408 = vmatprep.subr.bf16.mxu0 0
      %409 = vmatpush1.bf16.msra.mxu0 0
      %410 = vmatprep.subr.bf16.mxu0 0
      %411 = vmatpush1.bf16.msra.mxu0 0
      %412 = vmatprep.subr.bf16.mxu0 0
      %413 = vmatpush1.bf16.msra.mxu0 0
      %414 = vmatprep.subr.bf16.mxu0 0
      %415 = vmatpush1.bf16.msra.mxu0 0
      %416 = vmatprep.subr.bf16.mxu0 0
      %417 = vmatpush1.bf16.msra.mxu0 0
      %418 = vmatprep.mubr.bf16.mxu0 0
      %419 = vmatmul.mubr.bf16.gmra.mrb[0].mxu0 %v375
      %v420 = vpop.f32.mrb[0].mxu0
      %v421 = vadd.f32 0.0, %v420
      %v422 = vpop.f32.mrb[0].mxu0
      %v423 = vpop.f32.mrb[0].mxu0
      %v424 = vadd.f32 0.0, %v423
      %v425 = vpop.f32.mrb[0].mxu0
      %426 = vmatprep.mubr.bf16.mxu0 0
      %427 = vmatmul.mubr.bf16.gmra.mrb[0].mxu0 %v378
      %v428 = vpop.f32.mrb[0].mxu0
      %v429 = vadd.f32 0.0, %v428
      %v430 = vpop.f32.mrb[0].mxu0
      %v431 = vpop.f32.mrb[0].mxu0
      %v432 = vadd.f32 0.0, %v431
      %v433 = vpop.f32.mrb[0].mxu0
      %434 = vmatprep.mubr.bf16.mxu0 0
      %435 = vmatmul.mubr.bf16.gmra.mrb[0].mxu0 %v381
      %v436 = vpop.f32.mrb[0].mxu0
      %v437 = vadd.f32 0.0, %v436
      %v438 = vpop.f32.mrb[0].mxu0
      %v439 = vpop.f32.mrb[0].mxu0
      %v440 = vadd.f32 0.0, %v439
      %v441 = vpop.f32.mrb[0].mxu0
      %442 = vmatprep.mubr.bf16.mxu0 0
      %443 = vmatmul.mubr.bf16.gmra.mrb[0].mxu0 %v384
      %v444 = vpop.f32.mrb[0].mxu0
      %v445 = vadd.f32 0.0, %v444
      %v446 = vpop.f32.mrb[0].mxu0
      %v447 = vpop.f32.mrb[0].mxu0
      %v448 = vadd.f32 0.0, %v447
      %v449 = vpop.f32.mrb[0].mxu0
      %450 = vdwg.mxu0
      %vm451 = vcmask 261120
      %v452 = vsel %vm451, %v421, 0.0
      %v453 = vsel %vm451, %v424, 0.0
      %v454 = vadd.f32 %v452, %v453
      %v455 = vsel %vm451, %v429, 0.0
      %v456 = vadd.f32 %v454, %v455
      %v457 = vsel %vm451, %v432, 0.0
      %v458 = vadd.f32 %v456, %v457
      %v459 = vsel %vm451, %v437, 0.0
      %v460 = vadd.f32 %v458, %v459
      %v461 = vsel %vm451, %v440, 0.0
      %v462 = vadd.f32 %v460, %v461
      %v463 = vsel %vm451, %v445, 0.0
      %v464 = vadd.f32 %v462, %v463
      %v465 = vsel %vm451, %v448, 0.0
      %v466 = vadd.f32 %v464, %v465
      %v467 = vrot.slane %v466, 4
      %v468 = vadd.f32 %v466, %v467
      %v469 = vrot.slane %v468, 2
      %v470 = vadd.f32 %v468, %v469
      %v471 = vrot.slane %v470, 1
      %v472 = vadd.f32 %v470, %v471
      %v473 = vrcp.pop 64.0
      %v474 = vmul.f32 %v472, %v473
      %v475 = vld [vmem:[%s2] sm:$0x1]
      %v476 = vmul.f32 %v474, %v475
      %vm477 = vcmask 253952
      %v478 = vsel %vm477, %v476, 0.0
      %479 = vadd.xlane.f32.xlu0 %v478
      %v480 = vpop.xlane.xlu0 %479
      %v481 = vld [vmem:[#allocation2] sm:$0x1]
      %v482 = vadd.f32 %v480, %v481
      %v483 = vmax.f32 %v482, 0.0
      %v484 = vld [vmem:[%s4] sm:$0x1]
      %486 = vset.pattern.permute.xlu0 0
      %487 = vperm.xlu0 %486, %v483
      %v488 = vpop.permute.xlu0 %487
      %v490 = vmul.f32 %v488, %v484
      %v491 = vadd.f32 %v490, 0.0
      %v492 = vld [vmem:[%s5] sm:$0x1]
      %v493 = vadd.f32 %v491, %v492
      %v494 = vxor.u32 %v493, 2147483648
      %v495 = vmul.f32 %v494, 1.442695
      %v496 = vpow.pop %v495
      %v497 = vadd.f32 %v496, 1.0
      %v498 = vrcp.pop %v497
      %v499 = vmul.f32 1.0, %v498
      %v500 = vld [vmem:[%s322] sm:$0xff]
      %v501 = vld [vmem:[%s322 + $0x8] sm:$0xff]
      %v502 = vld [vmem:[%s322 + $0x10] sm:$0xff]
      %v503 = vld [vmem:[%s322 + $0x18] sm:$0xff]
      %v504 = vld [vmem:[%s322 + $0x20] sm:$0xff]
      %v505 = vld [vmem:[%s322 + $0x28] sm:$0xff]
      %v506 = vld [vmem:[%s322 + $0x30] sm:$0xff]
      %v507 = vld [vmem:[%s322 + $0x38] sm:$0xff]
      %v508 = vld [vmem:[%s7] sm:$0x1]
      %v510 = vlaneseq
      %v511 = vshrl.u32 %v510, 7
      %v512 = vsub.s32 0, %v511
      %v513 = vrot.slane %v508, %v512
      %v515 = vmul.f32 %v500, %v513
      %v516 = vmul.f32 %v501, %v513
      %v517 = vmul.f32 %v502, %v513
      %v518 = vmul.f32 %v503, %v513
      %v519 = vmul.f32 %v504, %v513
      %v520 = vmul.f32 %v505, %v513
      %v521 = vmul.f32 %v506, %v513
      %v522 = vmul.f32 %v507, %v513
      %v523 = vlaneseq
      %v524 = vshrl.u32 %v523, 7
      %v525 = vsub.s32 0, %v524
      %v526 = vrot.slane %v499, %v525
      %v527 = vmul.f32 %v421, %v526
      %v528 = vmul.f32 %v424, %v526
      %v529 = vmul.f32 %v429, %v526
      %v530 = vmul.f32 %v432, %v526
      %v531 = vmul.f32 %v437, %v526
      %v532 = vmul.f32 %v440, %v526
      %v533 = vmul.f32 %v445, %v526
      %v534 = vmul.f32 %v448, %v526
      %v535 = vadd.f32 %v515, %v527
      %v536 = vadd.f32 %v516, %v528
      %v537 = vadd.f32 %v517, %v529
      %v538 = vadd.f32 %v518, %v530
      %v539 = vadd.f32 %v519, %v531
      %v540 = vadd.f32 %v520, %v532
      %v541 = vadd.f32 %v521, %v533
      %v542 = vadd.f32 %v522, %v534
      %543 = vst.msk [vmem:[%s327] sm:$0xff] %vm451, %v535
      %544 = vst.msk [vmem:[%s327 + $0x8] sm:$0xff] %vm451, %v536
      %545 = vst.msk [vmem:[%s327 + $0x10] sm:$0xff] %vm451, %v537
      %546 = vst.msk [vmem:[%s327 + $0x18] sm:$0xff] %vm451, %v538
      %547 = vst.msk [vmem:[%s327 + $0x20] sm:$0xff] %vm451, %v539
      %548 = vst.msk [vmem:[%s327 + $0x28] sm:$0xff] %vm451, %v540
      %549 = vst.msk [vmem:[%s327 + $0x30] sm:$0xff] %vm451, %v541
      %550 = vst.msk [vmem:[%s327 + $0x38] sm:$0xff] %vm451, %v542
      %p551 = scmp.lt.s32.totalorder %s21, 1
      %s552 = scalar_select %p551, %s21, 1
      %s553 = smul.addr %s552, 8
      %s554 = smul.addr %s553, 8
      %s555 = scalar_lea.vmem %s8, %s554
      // Predicated region
      $region53: #{_lambda_.15} parent=51 // pred_check
        %p556 = pneg %p217
      $region54: #{_lambda_.15} parent=51 // pred_check_branch
        %558 = sbr.rel (%p556) target = $region56
      $region55: #{_lambda_.15} parent=51 // pred_region
        _
      $region56: #{_lambda_.15} parent=51 // pred_fallthru
        _
    $region52: #{_lambda_.15} parent=5 // pred_fallthru
      _
    %p559 = scmp.le.s32.totalorder 2, %s16
    // Predicated region
    $region57: #{_lambda_.15} parent=5 // pred_check
      %p560 = pneg %p559
    $region58: #{_lambda_.15} parent=5 // pred_check_branch
      %562 = sbr.rel (%p560) target = $region60
    $region59: #{_lambda_.15} parent=5 // pred_region
      %s563 = ssub.s32 %s16, 2
      // Predicated region
      $region61: #{_lambda_.15} parent=59 // pred_check
        %p564 = pneg %p223
      $region62: #{_lambda_.15} parent=59 // pred_check_branch
        %566 = sbr.rel (%p564) target = $region64
      $region63: #{_lambda_.15} parent=59 // pred_region
        %p567 = scmp.lt.s32.totalorder %s22, 1
        %s568 = scalar_select %p567, %s22, 1
        %s569 = smul.addr %s568, 8
        %s570 = smul.addr %s569, 8
        %s571 = scalar_lea.vmem %s8, %s570
      $region64: #{_lambda_.15} parent=59 // pred_fallthru
        _
    $region60: #{_lambda_.15} parent=5 // pred_fallthru
      _
  $region6: #{_lambda_.15} parent=0 // loop_footer
    %s20 = sadd.s32 1, %s16
  $region7: #{_lambda_.15} parent=0 // loop_footer_branch
    %15 = sbr.rel target = $region3
  $region8: #{_lambda_.15} parent=0 // loop_exit
    _

</llo_original>
